<compile_context>
chip_gen: v6e
topology: v6e:2x2x1
jax: 0.10.0
libtpu: 0.0.40
codegen_flags: <defaults>
</compile_context>

<pallas_src>
from functools import partial

import numpy as np
import jax
import jax.numpy as jnp
from jax.experimental import pallas as pl
from jax.experimental.pallas import tpu as pltpu

BN_EPS = 1e-5
ALPHA = 0.25                      # nn.PReLU() default (single shared weight)
ACT_DTYPE = jnp.bfloat16          # inter-layer activation / weight storage dtype
VMEM_LIMIT = 32 * 1024 * 1024     # safe on v5e(128M) / v6e(128M) / v7x(64M)


# --------------------------------------------------------------------------
# Pallas kernel: Y = act( (X @ W) * scale + shift [+ residual] )
#   X: (tm, K) bf16   W: (K, N) bf16   scale/shift: (1, N) f32
#   residual (optional): (tm, N)       epilogue in f32, stored as o_ref.dtype
# --------------------------------------------------------------------------
def _mm_bn_act_kernel(*refs, apply_prelu, has_residual):
    if has_residual:
        x_ref, w_ref, scale_ref, shift_ref, res_ref, o_ref = refs
    else:
        x_ref, w_ref, scale_ref, shift_ref, o_ref = refs
    y = jnp.dot(x_ref[...], w_ref[...], preferred_element_type=jnp.float32)
    y = y * scale_ref[...] + shift_ref[...]
    if has_residual:
        y = y + res_ref[...].astype(jnp.float32)
    if apply_prelu:
        y = jnp.where(y >= 0.0, y, ALPHA * y)
    o_ref[...] = y.astype(o_ref.dtype)


def _round_up(x, m):
    return (x + m - 1) // m * m


def _choose_tile(m):
    """Row-tile size + padded M. tm is a multiple of 8; prefer >=2 tiles."""
    if m <= 256:
        mp = _round_up(m, 8)
        return mp, mp
    for tm in (512, 256, 128):
        if m % tm == 0 and m // tm >= 2:
            return tm, m
    return 256, _round_up(m, 256)


def matmul_bn_act(x2d, w, scale, shift, *, apply_prelu,
                  residual=None, out_dtype=ACT_DTYPE):
    m, k = x2d.shape
    n = w.shape[1]
    tm, m_pad = _choose_tile(m)
    if m_pad != m:
        x2d = jnp.pad(x2d, ((0, m_pad - m), (0, 0)))
        if residual is not None:
            residual = jnp.pad(residual, ((0, m_pad - m), (0, 0)))

    in_specs = [
        pl.BlockSpec((tm, k), lambda i: (i, 0)),    # activation / patches tile
        pl.BlockSpec((k, n), lambda i: (0, 0)),     # full weight (stays resident)
        pl.BlockSpec((1, n), lambda i: (0, 0)),     # folded BN scale
        pl.BlockSpec((1, n), lambda i: (0, 0)),     # folded BN shift
    ]
    args = [x2d, w,
            scale.reshape(1, n).astype(jnp.float32),
            shift.reshape(1, n).astype(jnp.float32)]
    if residual is not None:
        in_specs.append(pl.BlockSpec((tm, n), lambda i: (i, 0)))
        args.append(residual)

    out = pl.pallas_call(
        partial(_mm_bn_act_kernel,
                apply_prelu=apply_prelu, has_residual=residual is not None),
        out_shape=jax.ShapeDtypeStruct((m_pad, n), out_dtype),
        grid=(m_pad // tm,),
        in_specs=in_specs,
        out_specs=pl.BlockSpec((tm, n), lambda i: (i, 0)),
        compiler_params=pltpu.CompilerParams(
            dimension_semantics=("parallel",),
            vmem_limit_bytes=VMEM_LIMIT),
    )(*args)
    return out[:m] if m_pad != m else out


# --------------------------------------------------------------------------
# Glue: im2col, pooling, conv wrappers (plain JAX, shapes are small)
# --------------------------------------------------------------------------
def im2col(x, kh, kw, stride, padding, dilation):
    B, H, W, C = x.shape
    ph, pw = padding
    sh, sw = stride
    dh, dw = dilation
    xpad = jnp.pad(x, ((0, 0), (ph, ph), (pw, pw), (0, 0)))
    Hout = (H + 2 * ph - dh * (kh - 1) - 1) // sh + 1
    Wout = (W + 2 * pw - dw * (kw - 1) - 1) // sw + 1
    cols = []
    for i in range(kh):
        for j in range(kw):
            patch = xpad[:,
                         i * dh: i * dh + sh * (Hout - 1) + 1: sh,
                         j * dw: j * dw + sw * (Wout - 1) + 1: sw,
                         :]
            cols.append(patch)
    return jnp.concatenate(cols, axis=-1)  # (B, Hout, Wout, kh*kw*C)


def conv2d_mm(x, w_mat, kh, kw, stride, padding, dilation,
              scale, shift, *, apply_prelu, residual=None, out_dtype=ACT_DTYPE):
    if kh == 1 and kw == 1:
        patches = x                                   # 1x1 conv: no im2col
    else:
        patches = im2col(x, kh, kw, stride, padding, dilation)
    B, Ho, Wo, K = patches.shape
    res2 = None if residual is None else residual.reshape(B * Ho * Wo, -1)
    y = matmul_bn_act(patches.reshape(B * Ho * Wo, K), w_mat, scale, shift,
                      apply_prelu=apply_prelu, residual=res2,
                      out_dtype=out_dtype)
    return y.reshape(B, Ho, Wo, -1)


def convtranspose2x2_mm(x, w_mat, scale, shift, *, apply_prelu,
                        out_dtype=ACT_DTYPE):
    # w_mat: (Cin, 4*Cout) with column order (di, dj, co)
    # equivalent to ConvTranspose2d(kernel=2, stride=2, bias=False)
    B, H, W, C = x.shape
    Cout = w_mat.shape[1] // 4
    y = matmul_bn_act(x.reshape(B * H * W, C), w_mat,
                      jnp.tile(scale, 4), jnp.tile(shift, 4),
                      apply_prelu=apply_prelu, out_dtype=out_dtype)
    y = y.reshape(B, H, W, 2, 2, Cout).transpose(0, 1, 3, 2, 4, 5)
    return y.reshape(B, 2 * H, 2 * W, Cout)


def maxpool2x2(x):
    # non-overlapping 2x2 windows, even H/W required (same as the torch model);
    # argmax tie-break = first max, matching torch MaxPool2d.
    B, H, W, C = x.shape
    x4 = x.reshape(B, H // 2, 2, W // 2, 2, C).transpose(0, 1, 3, 2, 4, 5)
    x4 = x4.reshape(B, H // 2, W // 2, 4, C)
    idx = jnp.argmax(x4, axis=3)
    val = jnp.max(x4, axis=3)
    return val, idx


def maxunpool2x2(x, idx):
    # select-based scatter (no one_hot float multiply)
    B, Ho, Wo, C = x.shape
    k = jax.lax.broadcasted_iota(jnp.int32, (1, 1, 1, 4, 1), 3)
    y = jnp.where(idx[:, :, :, None, :] == k, x[:, :, :, None, :],
                  jnp.zeros((), x.dtype))                       # (B,Ho,Wo,4,C)
    y = y.reshape(B, Ho, Wo, 2, 2, C).transpose(0, 1, 3, 2, 4, 5)
    return y.reshape(B, 2 * Ho, 2 * Wo, C)


def bn_pair(c):
    # eval-mode BN folded: running_mean=0, running_var=1, gamma=1, beta=0
    return (jnp.full((c,), 1.0 / np.sqrt(1.0 + BN_EPS), jnp.float32),
            jnp.zeros((c,), jnp.float32))


def id_pair(c):
    return jnp.ones((c,), jnp.float32), jnp.zeros((c,), jnp.float32)


# --------------------------------------------------------------------------
# ENet blocks
# --------------------------------------------------------------------------
def initial_block(x, p):
    # torch.cat([x,x,x], dim=1) -> conv(3x3,s2) || maxpool(2,2) -> BN -> PReLU.
    # The pool branch passes through identity columns of the augmented weight,
    # so conv + concat + BN + PReLU is one fused matmul kernel.
    x3 = jnp.concatenate([x, x, x], axis=-1)
    patches = im2col(x3, 3, 3, (2, 2), (1, 1), (1, 1))          # (B,Ho,Wo,27)
    pool, _ = maxpool2x2(x3)                                    # (B,Ho,Wo,3)
    feat = jnp.concatenate([patches, pool], axis=-1)            # (B,Ho,Wo,30)
    B, Ho, Wo, K = feat.shape
    s, b = bn_pair(16)
    y = matmul_bn_act(feat.reshape(B * Ho * Wo, K), p['w'], s, b,
                      apply_prelu=True)
    return y.reshape(B, Ho, Wo, 16)


def bottleneck(x, p, dilation=1, asymmetric=False):
    cmid = p['w1'].shape[1]
    cout = p['w3'].shape[1]
    s, b = bn_pair(cmid)
    out = conv2d_mm(x, p['w1'], 1, 1, (1, 1), (0, 0), (1, 1), s, b,
                    apply_prelu=True)
    if asymmetric:
        s_id, b_id = id_pair(cmid)
        out = conv2d_mm(out, p['w2a'], 5, 1, (1, 1), (2, 0), (1, 1),
                        s_id, b_id, apply_prelu=False)
        out = conv2d_mm(out, p['w2b'], 1, 5, (1, 1), (0, 2), (1, 1),
                        s, b, apply_prelu=True)
    else:
        out = conv2d_mm(out, p['w2'], 3, 3, (1, 1), (dilation, dilation),
                        (dilation, dilation), s, b, apply_prelu=True)
    so, bo = bn_pair(cout)
    # conv3 + BN + Dropout2d(identity, eval) + residual add + PReLU, fused.
    return conv2d_mm(out, p['w3'], 1, 1, (1, 1), (0, 0), (1, 1), so, bo,
                     apply_prelu=True, residual=x)


def bottleneck_down(x, p):
    cmid = p['w1'].shape[1]
    cout = p['w3'].shape[1]
    pooled, idx = maxpool2x2(x)
    sd, bd = bn_pair(cout)
    identity = conv2d_mm(pooled, p['w_down'], 1, 1, (1, 1), (0, 0), (1, 1),
                         sd, bd, apply_prelu=False)
    s, b = bn_pair(cmid)
    out = conv2d_mm(x, p['w1'], 1, 1, (1, 1), (0, 0), (1, 1), s, b,
                    apply_prelu=True)
    out = conv2d_mm(out, p['w2'], 2, 2, (2, 2), (0, 0), (1, 1), s, b,
                    apply_prelu=True)
    so, bo = bn_pair(cout)
    out = conv2d_mm(out, p['w3'], 1, 1, (1, 1), (0, 0), (1, 1), so, bo,
                    apply_prelu=True, residual=identity)
    return out, idx


def bottleneck_up(x, idx, p):
    cmid = p['wb1'].shape[1]
    cout = p['wconv'].shape[1]
    so, bo = bn_pair(cout)
    out_up = conv2d_mm(x, p['wconv'], 1, 1, (1, 1), (0, 0), (1, 1), so, bo,
                       apply_prelu=False)
    out_up = maxunpool2x2(out_up, idx)
    s, b = bn_pair(cmid)
    out = conv2d_mm(x, p['wb1'], 1, 1, (1, 1), (0, 0), (1, 1), s, b,
                    apply_prelu=True)
    out = convtranspose2x2_mm(out, p['wbt'], s, b, apply_prelu=True)
    out = conv2d_mm(out, p['wb3'], 1, 1, (1, 1), (0, 0), (1, 1), so, bo,
                    apply_prelu=True, residual=out_up)
    return out


# --------------------------------------------------------------------------
# Parameter init (deterministic, from PRNGKey(0)); weights stored in bf16
# --------------------------------------------------------------------------
def init_params(key, nclass):
    keys = iter(jax.random.split(key, 128))

    def conv_w(cin, cout, kh, kw):
        fan_in = cin * kh * kw
        w = jax.random.normal(next(keys), (kh * kw * cin, cout), jnp.float32)
        return (w * (1.0 / np.sqrt(fan_in))).astype(ACT_DTYPE)

    def convtrans_w(cin, cout):
        w = jax.random.normal(next(keys), (cin, 4 * cout), jnp.float32)
        return (w * (1.0 / np.sqrt(cin * 4))).astype(ACT_DTYPE)

    def bneck(cin, cmid, cout, kind='regular'):
        p = {'w1': conv_w(cin, cmid, 1, 1)}
        if kind == 'down':
            p['w_down'] = conv_w(cin, cout, 1, 1)
            p['w2'] = conv_w(cmid, cmid, 2, 2)
        elif kind == 'asym':
            p['w2a'] = conv_w(cmid, cmid, 5, 1)
            p['w2b'] = conv_w(cmid, cmid, 1, 5)
        else:
            p['w2'] = conv_w(cmid, cmid, 3, 3)
        p['w3'] = conv_w(cmid, cout, 1, 1)
        return p

    def upbneck(cin, cmid, cout):
        return {'wconv': conv_w(cin, cout, 1, 1),
                'wb1': conv_w(cin, cmid, 1, 1),
                'wbt': convtrans_w(cmid, cmid),
                'wb3': conv_w(cmid, cout, 1, 1)}

    # Initial block: conv weight (27,13), augmented with a 3x3 identity so the
    # maxpool branch (3 channels) passes through the same matmul -> columns 13..15.
    w_conv = (jax.random.normal(next(keys), (27, 13), jnp.float32)
              * (1.0 / np.sqrt(27.0)))
    w_aug = jnp.zeros((30, 16), jnp.float32)
    w_aug = w_aug.at[:27, :13].set(w_conv)
    w_aug = w_aug.at[27:, 13:].set(jnp.eye(3, dtype=jnp.float32))
    P = {'initial': {'w': w_aug.astype(ACT_DTYPE)}}

    P['b1_0'] = bneck(16, 16, 64, 'down')
    for i in range(1, 5):
        P[f'b1_{i}'] = bneck(64, 16, 64)
    P['b2_0'] = bneck(64, 32, 128, 'down')
    P['b2_1'] = bneck(128, 32, 128)
    P['b2_2'] = bneck(128, 32, 128)
    P['b2_3'] = bneck(128, 32, 128, 'asym')
    P['b2_4'] = bneck(128, 32, 128)
    P['b2_5'] = bneck(128, 32, 128)
    P['b2_6'] = bneck(128, 32, 128)
    P['b2_7'] = bneck(128, 32, 128, 'asym')
    P['b2_8'] = bneck(128, 32, 128)
    P['b3_1'] = bneck(128, 32, 128)
    P['b3_2'] = bneck(128, 32, 128)
    P['b3_3'] = bneck(128, 32, 128, 'asym')
    P['b3_4'] = bneck(128, 32, 128)
    P['b3_5'] = bneck(128, 32, 128)   # defined in __init__, skipped in forward
    P['b3_6'] = bneck(128, 32, 128)
    P['b3_7'] = bneck(128, 32, 128, 'asym')
    P['b3_8'] = bneck(128, 32, 128)
    P['b4_0'] = upbneck(128, 16, 64)
    P['b4_1'] = bneck(64, 16, 64)
    P['b4_2'] = bneck(64, 16, 64)
    P['b5_0'] = upbneck(64, 4, 16)
    P['b5_1'] = bneck(16, 4, 16)
    P['fullconv'] = {'w': convtrans_w(16, nclass)}
    return P


# --------------------------------------------------------------------------
# Full ENet forward (eval mode: returns segmentation logits only)
# --------------------------------------------------------------------------
@jax.jit
def enet_forward(x_nchw, P):
    x = jnp.transpose(x_nchw, (0, 2, 3, 1)).astype(ACT_DTYPE)   # NCHW -> NHWC

    x = initial_block(x, P['initial'])
    x, idx1 = bottleneck_down(x, P['b1_0'])
    x = bottleneck(x, P['b1_1'])
    x = bottleneck(x, P['b1_2'])
    x = bottleneck(x, P['b1_3'])
    x = bottleneck(x, P['b1_4'])

    x, idx2 = bottleneck_down(x, P['b2_0'])
    x = bottleneck(x, P['b2_1'])
    x = bottleneck(x, P['b2_2'], dilation=2)
    x = bottleneck(x, P['b2_3'], asymmetric=True)
    x = bottleneck(x, P['b2_4'], dilation=4)
    x = bottleneck(x, P['b2_5'])
    x = bottleneck(x, P['b2_6'], dilation=8)
    x = bottleneck(x, P['b2_7'], asymmetric=True)
    x = bottleneck(x, P['b2_8'], dilation=16)

    x = bottleneck(x, P['b3_1'])
    x = bottleneck(x, P['b3_2'], dilation=2)
    x = bottleneck(x, P['b3_3'], asymmetric=True)
    x = bottleneck(x, P['b3_4'], dilation=4)
    # NOTE: reference forward skips bottleneck3_5
    x = bottleneck(x, P['b3_6'], dilation=8)
    x = bottleneck(x, P['b3_7'], asymmetric=True)
    x = bottleneck(x, P['b3_8'], dilation=16)

    x = bottleneck_up(x, idx2, P['b4_0'])
    x = bottleneck(x, P['b4_1'])
    x = bottleneck(x, P['b4_2'])

    x = bottleneck_up(x, idx1, P['b5_0'])
    x = bottleneck(x, P['b5_1'])

    nclass = P['fullconv']['w'].shape[1] // 4
    s_id, b_id = id_pair(nclass)
    x = convtranspose2x2_mm(x, P['fullconv']['w'], s_id, b_id,
                            apply_prelu=False, out_dtype=jnp.float32)

    return jnp.transpose(x, (0, 3, 1, 2))   # NHWC -> NCHW


if __name__ == "__main__":
    key = jax.random.PRNGKey(0)
    k_param, k_input = jax.random.split(key)

    nclass = 4
    B, C, H, W = 2, 1, 32, 32   # spatial must be divisible by 8 (3x downsample)
    x = jax.random.normal(k_input, (B, C, H, W), dtype=jnp.float32)

    params = init_params(k_param, nclass)
    out = enet_forward(x, params)
    out = jax.block_until_ready(out)

    assert out.shape == (B, nclass, H, W), out.shape
    assert bool(jnp.all(jnp.isfinite(out)))
    print("KERNEL_OK")
</pallas_src>

<mosaic_0001>
module attributes {stable_mosaic.version = 11 : i64} {
  func.func @_mm_bn_act_kernel(%arg0: i32, %arg1: memref<256x30xbf16, #tpu.memory_space<vmem>>, %arg2: memref<30x16xbf16, #tpu.memory_space<vmem>>, %arg3: memref<1x16xf32, #tpu.memory_space<vmem>>, %arg4: memref<1x16xf32, #tpu.memory_space<vmem>>, %arg5: memref<256x16xbf16, #tpu.memory_space<vmem>>) attributes {dimension_semantics = [#tpu.dimension_semantics<parallel>], iteration_bounds = array<i64: 2>, scalar_prefetch = 0 : i64, scratch_operands = 0 : i64, tpu.core_type = #tpu.core_type<tc>, window_params = [{transform_indices = @transform_0, window_bounds = array<i64: 256, 30>}, {pipeline_mode = #tpu.pipeline_mode<synchronous>, transform_indices = @transform_1, window_bounds = array<i64: 30, 16>}, {pipeline_mode = #tpu.pipeline_mode<synchronous>, transform_indices = @transform_2, window_bounds = array<i64: 1, 16>}, {pipeline_mode = #tpu.pipeline_mode<synchronous>, transform_indices = @transform_3, window_bounds = array<i64: 1, 16>}, {transform_indices = @transform_4, window_bounds = array<i64: 256, 16>}]} {
    %c0 = arith.constant 0 : index
    %c0_0 = arith.constant 0 : index
    %0 = vector.load %arg1[%c0, %c0_0] : memref<256x30xbf16, #tpu.memory_space<vmem>>, vector<256x30xbf16>
    %c0_1 = arith.constant 0 : index
    %c0_2 = arith.constant 0 : index
    %1 = vector.load %arg2[%c0_1, %c0_2] : memref<30x16xbf16, #tpu.memory_space<vmem>>, vector<30x16xbf16>
    %cst = arith.constant dense<0.000000e+00> : vector<256x16xf32>
    %2 = tpu.matmul %0, %1, %cst {dimension_numbers = #tpu.dot_dimension_numbers<[1], [0], [0], [1], [0, 0, 1, 1], [], []>} : vector<256x30xbf16>, vector<30x16xbf16>, vector<256x16xf32> -> vector<256x16xf32>
    %c0_3 = arith.constant 0 : index
    %c0_4 = arith.constant 0 : index
    %3 = vector.load %arg3[%c0_3, %c0_4] : memref<1x16xf32, #tpu.memory_space<vmem>>, vector<1x16xf32>
    %4 = vector.broadcast %3 : vector<1x16xf32> to vector<256x16xf32>
    %5 = arith.mulf %2, %4 : vector<256x16xf32>
    %c0_5 = arith.constant 0 : index
    %c0_6 = arith.constant 0 : index
    %6 = vector.load %arg4[%c0_5, %c0_6] : memref<1x16xf32, #tpu.memory_space<vmem>>, vector<1x16xf32>
    %7 = vector.broadcast %6 : vector<1x16xf32> to vector<256x16xf32>
    %8 = arith.addf %5, %7 : vector<256x16xf32>
    %cst_7 = arith.constant 0.000000e+00 : f32
    %9 = vector.broadcast %cst_7 : f32 to vector<256x16xf32>
    %10 = arith.cmpf oge, %8, %9 : vector<256x16xf32>
    %cst_8 = arith.constant 2.500000e-01 : f32
    %11 = vector.broadcast %cst_8 : f32 to vector<256x16xf32>
    %12 = arith.mulf %11, %8 : vector<256x16xf32>
    %13 = arith.select %10, %8, %12 : vector<256x16xi1>, vector<256x16xf32>
    %14 = arith.truncf %13 : vector<256x16xf32> to vector<256x16xbf16>
    %c0_9 = arith.constant 0 : index
    %c0_10 = arith.constant 0 : index
    %15 = vector.load %arg5[%c0_9, %c0_10] : memref<256x16xbf16, #tpu.memory_space<vmem>>, vector<256x16xbf16>
    tpu.vector_store %arg5[%c0_9, %c0_10], %14 {strides = array<i32>} : memref<256x16xbf16, #tpu.memory_space<vmem>>, vector<256x16xbf16>,
    return
  }
  func.func @transform_0(%arg0: i32) -> (i32, i32) {
    %c0_i32 = arith.constant 0 : i32
    %c0_i32_0 = arith.constant 0 : i32
    return %arg0, %c0_i32 : i32, i32
  }
  func.func @transform_1(%arg0: i32) -> (i32, i32) {
    %c0_i32 = arith.constant 0 : i32
    %c0_i32_0 = arith.constant 0 : i32
    %c0_i32_1 = arith.constant 0 : i32
    return %c0_i32, %c0_i32_0 : i32, i32
  }
  func.func @transform_2(%arg0: i32) -> (i32, i32) {
    %c0_i32 = arith.constant 0 : i32
    %c0_i32_0 = arith.constant 0 : i32
    %c0_i32_1 = arith.constant 0 : i32
    return %c0_i32, %c0_i32_0 : i32, i32
  }
  func.func @transform_3(%arg0: i32) -> (i32, i32) {
    %c0_i32 = arith.constant 0 : i32
    %c0_i32_0 = arith.constant 0 : i32
    %c0_i32_1 = arith.constant 0 : i32
    return %c0_i32, %c0_i32_0 : i32, i32
  }
  func.func @transform_4(%arg0: i32) -> (i32, i32) {
    %c0_i32 = arith.constant 0 : i32
    %c0_i32_0 = arith.constant 0 : i32
    return %arg0, %c0_i32 : i32, i32
  }
}

module attributes {stable_mosaic.version = 11 : i64} {
  func.func @_mm_bn_act_kernel(%arg0: i32, %arg1: memref<256x16xbf16, #tpu.memory_space<vmem>>, %arg2: memref<16x16xbf16, #tpu.memory_space<vmem>>, %arg3: memref<1x16xf32, #tpu.memory_space<vmem>>, %arg4: memref<1x16xf32, #tpu.memory_space<vmem>>, %arg5: memref<256x16xbf16, #tpu.memory_space<vmem>>) attributes {dimension_semantics = [#tpu.dimension_semantics<parallel>], iteration_bounds = array<i64: 2>, scalar_prefetch = 0 : i64, scratch_operands = 0 : i64, tpu.core_type = #tpu.core_type<tc>, window_params = [{transform_indices = @transform_0, window_bounds = array<i64: 256, 16>}, {pipeline_mode = #tpu.pipeline_mode<synchronous>, transform_indices = @transform_1, window_bounds = array<i64: 16, 16>}, {pipeline_mode = #tpu.pipeline_mode<synchronous>, transform_indices = @transform_2, window_bounds = array<i64: 1, 16>}, {pipeline_mode = #tpu.pipeline_mode<synchronous>, transform_indices = @transform_3, window_bounds = array<i64: 1, 16>}, {transform_indices = @transform_4, window_bounds = array<i64: 256, 16>}]} {
    %c0 = arith.constant 0 : index
    %c0_0 = arith.constant 0 : index
    %0 = vector.load %arg1[%c0, %c0_0] : memref<256x16xbf16, #tpu.memory_space<vmem>>, vector<256x16xbf16>
    %c0_1 = arith.constant 0 : index
    %c0_2 = arith.constant 0 : index
    %1 = vector.load %arg2[%c0_1, %c0_2] : memref<16x16xbf16, #tpu.memory_space<vmem>>, vector<16x16xbf16>
    %cst = arith.constant dense<0.000000e+00> : vector<256x16xf32>
    %2 = tpu.matmul %0, %1, %cst {dimension_numbers = #tpu.dot_dimension_numbers<[1], [0], [0], [1], [0, 0, 1, 1], [], []>} : vector<256x16xbf16>, vector<16x16xbf16>, vector<256x16xf32> -> vector<256x16xf32>
    %c0_3 = arith.constant 0 : index
    %c0_4 = arith.constant 0 : index
    %3 = vector.load %arg3[%c0_3, %c0_4] : memref<1x16xf32, #tpu.memory_space<vmem>>, vector<1x16xf32>
    %4 = vector.broadcast %3 : vector<1x16xf32> to vector<256x16xf32>
    %5 = arith.mulf %2, %4 : vector<256x16xf32>
    %c0_5 = arith.constant 0 : index
    %c0_6 = arith.constant 0 : index
    %6 = vector.load %arg4[%c0_5, %c0_6] : memref<1x16xf32, #tpu.memory_space<vmem>>, vector<1x16xf32>
    %7 = vector.broadcast %6 : vector<1x16xf32> to vector<256x16xf32>
    %8 = arith.addf %5, %7 : vector<256x16xf32>
    %cst_7 = arith.constant 0.000000e+00 : f32
    %9 = vector.broadcast %cst_7 : f32 to vector<256x16xf32>
    %10 = arith.cmpf oge, %8, %9 : vector<256x16xf32>
    %cst_8 = arith.constant 2.500000e-01 : f32
    %11 = vector.broadcast %cst_8 : f32 to vector<256x16xf32>
    %12 = arith.mulf %11, %8 : vector<256x16xf32>
    %13 = arith.select %10, %8, %12 : vector<256x16xi1>, vector<256x16xf32>
    %14 = arith.truncf %13 : vector<256x16xf32> to vector<256x16xbf16>
    %c0_9 = arith.constant 0 : index
    %c0_10 = arith.constant 0 : index
    %15 = vector.load %arg5[%c0_9, %c0_10] : memref<256x16xbf16, #tpu.memory_space<vmem>>, vector<256x16xbf16>
    tpu.vector_store %arg5[%c0_9, %c0_10], %14 {strides = array<i32>} : memref<256x16xbf16, #tpu.memory_space<vmem>>, vector<256x16xbf16>,
    return
  }
  func.func @transform_0(%arg0: i32) -> (i32, i32) {
    %c0_i32 = arith.constant 0 : i32
    %c0_i32_0 = arith.constant 0 : i32
    return %arg0, %c0_i32 : i32, i32
  }
  func.func @transform_1(%arg0: i32) -> (i32, i32) {
    %c0_i32 = arith.constant 0 : i32
    %c0_i32_0 = arith.constant 0 : i32
    %c0_i32_1 = arith.constant 0 : i32
    return %c0_i32, %c0_i32_0 : i32, i32
  }
  func.func @transform_2(%arg0: i32) -> (i32, i32) {
    %c0_i32 = arith.constant 0 : i32
    %c0_i32_0 = arith.constant 0 : i32
    %c0_i32_1 = arith.constant 0 : i32
    return %c0_i32, %c0_i32_0 : i32, i32
  }
  func.func @transform_3(%arg0: i32) -> (i32, i32) {
    %c0_i32 = arith.constant 0 : i32
    %c0_i32_0 = arith.constant 0 : i32
    %c0_i32_1 = arith.constant 0 : i32
    return %c0_i32, %c0_i32_0 : i32, i32
  }
  func.func @transform_4(%arg0: i32) -> (i32, i32) {
    %c0_i32 = arith.constant 0 : i32
    %c0_i32_0 = arith.constant 0 : i32
    return %arg0, %c0_i32 : i32, i32
  }
}

module attributes {stable_mosaic.version = 11 : i64} {
  func.func @_mm_bn_act_kernel(%arg0: i32, %arg1: memref<128x64xbf16, #tpu.memory_space<vmem>>, %arg2: memref<64x16xbf16, #tpu.memory_space<vmem>>, %arg3: memref<1x16xf32, #tpu.memory_space<vmem>>, %arg4: memref<1x16xf32, #tpu.memory_space<vmem>>, %arg5: memref<128x16xbf16, #tpu.memory_space<vmem>>) attributes {dimension_semantics = [#tpu.dimension_semantics<parallel>], iteration_bounds = array<i64: 1>, scalar_prefetch = 0 : i64, scratch_operands = 0 : i64, tpu.core_type = #tpu.core_type<tc>, window_params = [{transform_indices = @transform_0, window_bounds = array<i64: 128, 64>}, {pipeline_mode = #tpu.pipeline_mode<synchronous>, transform_indices = @transform_1, window_bounds = array<i64: 64, 16>}, {pipeline_mode = #tpu.pipeline_mode<synchronous>, transform_indices = @transform_2, window_bounds = array<i64: 1, 16>}, {pipeline_mode = #tpu.pipeline_mode<synchronous>, transform_indices = @transform_3, window_bounds = array<i64: 1, 16>}, {transform_indices = @transform_4, window_bounds = array<i64: 128, 16>}]} {
    %c0 = arith.constant 0 : index
    %c0_0 = arith.constant 0 : index
    %0 = vector.load %arg1[%c0, %c0_0] : memref<128x64xbf16, #tpu.memory_space<vmem>>, vector<128x64xbf16>
    %c0_1 = arith.constant 0 : index
    %c0_2 = arith.constant 0 : index
    %1 = vector.load %arg2[%c0_1, %c0_2] : memref<64x16xbf16, #tpu.memory_space<vmem>>, vector<64x16xbf16>
    %cst = arith.constant dense<0.000000e+00> : vector<128x16xf32>
    %2 = tpu.matmul %0, %1, %cst {dimension_numbers = #tpu.dot_dimension_numbers<[1], [0], [0], [1], [0, 0, 1, 1], [], []>} : vector<128x64xbf16>, vector<64x16xbf16>, vector<128x16xf32> -> vector<128x16xf32>
    %c0_3 = arith.constant 0 : index
    %c0_4 = arith.constant 0 : index
    %3 = vector.load %arg3[%c0_3, %c0_4] : memref<1x16xf32, #tpu.memory_space<vmem>>, vector<1x16xf32>
    %4 = vector.broadcast %3 : vector<1x16xf32> to vector<128x16xf32>
    %5 = arith.mulf %2, %4 : vector<128x16xf32>
    %c0_5 = arith.constant 0 : index
    %c0_6 = arith.constant 0 : index
    %6 = vector.load %arg4[%c0_5, %c0_6] : memref<1x16xf32, #tpu.memory_space<vmem>>, vector<1x16xf32>
    %7 = vector.broadcast %6 : vector<1x16xf32> to vector<128x16xf32>
    %8 = arith.addf %5, %7 : vector<128x16xf32>
    %cst_7 = arith.constant 0.000000e+00 : f32
    %9 = vector.broadcast %cst_7 : f32 to vector<128x16xf32>
    %10 = arith.cmpf oge, %8, %9 : vector<128x16xf32>
    %cst_8 = arith.constant 2.500000e-01 : f32
    %11 = vector.broadcast %cst_8 : f32 to vector<128x16xf32>
    %12 = arith.mulf %11, %8 : vector<128x16xf32>
    %13 = arith.select %10, %8, %12 : vector<128x16xi1>, vector<128x16xf32>
    %14 = arith.truncf %13 : vector<128x16xf32> to vector<128x16xbf16>
    %c0_9 = arith.constant 0 : index
    %c0_10 = arith.constant 0 : index
    %15 = vector.load %arg5[%c0_9, %c0_10] : memref<128x16xbf16, #tpu.memory_space<vmem>>, vector<128x16xbf16>
    tpu.vector_store %arg5[%c0_9, %c0_10], %14 {strides = array<i32>} : memref<128x16xbf16, #tpu.memory_space<vmem>>, vector<128x16xbf16>,
    return
  }
  func.func @transform_0(%arg0: i32) -> (i32, i32) {
    %c0_i32 = arith.constant 0 : i32
    %c0_i32_0 = arith.constant 0 : i32
    return %arg0, %c0_i32 : i32, i32
  }
  func.func @transform_1(%arg0: i32) -> (i32, i32) {
    %c0_i32 = arith.constant 0 : i32
    %c0_i32_0 = arith.constant 0 : i32
    %c0_i32_1 = arith.constant 0 : i32
    return %c0_i32, %c0_i32_0 : i32, i32
  }
  func.func @transform_2(%arg0: i32) -> (i32, i32) {
    %c0_i32 = arith.constant 0 : i32
    %c0_i32_0 = arith.constant 0 : i32
    %c0_i32_1 = arith.constant 0 : i32
    return %c0_i32, %c0_i32_0 : i32, i32
  }
  func.func @transform_3(%arg0: i32) -> (i32, i32) {
    %c0_i32 = arith.constant 0 : i32
    %c0_i32_0 = arith.constant 0 : i32
    %c0_i32_1 = arith.constant 0 : i32
    return %c0_i32, %c0_i32_0 : i32, i32
  }
  func.func @transform_4(%arg0: i32) -> (i32, i32) {
    %c0_i32 = arith.constant 0 : i32
    %c0_i32_0 = arith.constant 0 : i32
    return %arg0, %c0_i32 : i32, i32
  }
}

module attributes {stable_mosaic.version = 11 : i64} {
  func.func @_mm_bn_act_kernel(%arg0: i32, %arg1: memref<128x16xbf16, #tpu.memory_space<vmem>>, %arg2: memref<16x64xbf16, #tpu.memory_space<vmem>>, %arg3: memref<1x64xf32, #tpu.memory_space<vmem>>, %arg4: memref<1x64xf32, #tpu.memory_space<vmem>>, %arg5: memref<128x64xbf16, #tpu.memory_space<vmem>>) attributes {dimension_semantics = [#tpu.dimension_semantics<parallel>], iteration_bounds = array<i64: 1>, scalar_prefetch = 0 : i64, scratch_operands = 0 : i64, tpu.core_type = #tpu.core_type<tc>, window_params = [{transform_indices = @transform_0, window_bounds = array<i64: 128, 16>}, {pipeline_mode = #tpu.pipeline_mode<synchronous>, transform_indices = @transform_1, window_bounds = array<i64: 16, 64>}, {pipeline_mode = #tpu.pipeline_mode<synchronous>, transform_indices = @transform_2, window_bounds = array<i64: 1, 64>}, {pipeline_mode = #tpu.pipeline_mode<synchronous>, transform_indices = @transform_3, window_bounds = array<i64: 1, 64>}, {transform_indices = @transform_4, window_bounds = array<i64: 128, 64>}]} {
    %c0 = arith.constant 0 : index
    %c0_0 = arith.constant 0 : index
    %0 = vector.load %arg1[%c0, %c0_0] : memref<128x16xbf16, #tpu.memory_space<vmem>>, vector<128x16xbf16>
    %c0_1 = arith.constant 0 : index
    %c0_2 = arith.constant 0 : index
    %1 = vector.load %arg2[%c0_1, %c0_2] : memref<16x64xbf16, #tpu.memory_space<vmem>>, vector<16x64xbf16>
    %cst = arith.constant dense<0.000000e+00> : vector<128x64xf32>
    %2 = tpu.matmul %0, %1, %cst {dimension_numbers = #tpu.dot_dimension_numbers<[1], [0], [0], [1], [0, 0, 1, 1], [], []>} : vector<128x16xbf16>, vector<16x64xbf16>, vector<128x64xf32> -> vector<128x64xf32>
    %c0_3 = arith.constant 0 : index
    %c0_4 = arith.constant 0 : index
    %3 = vector.load %arg3[%c0_3, %c0_4] : memref<1x64xf32, #tpu.memory_space<vmem>>, vector<1x64xf32>
    %4 = vector.broadcast %3 : vector<1x64xf32> to vector<128x64xf32>
    %5 = arith.mulf %2, %4 : vector<128x64xf32>
    %c0_5 = arith.constant 0 : index
    %c0_6 = arith.constant 0 : index
    %6 = vector.load %arg4[%c0_5, %c0_6] : memref<1x64xf32, #tpu.memory_space<vmem>>, vector<1x64xf32>
    %7 = vector.broadcast %6 : vector<1x64xf32> to vector<128x64xf32>
    %8 = arith.addf %5, %7 : vector<128x64xf32>
    %9 = arith.truncf %8 : vector<128x64xf32> to vector<128x64xbf16>
    %c0_7 = arith.constant 0 : index
    %c0_8 = arith.constant 0 : index
    %10 = vector.load %arg5[%c0_7, %c0_8] : memref<128x64xbf16, #tpu.memory_space<vmem>>, vector<128x64xbf16>
    tpu.vector_store %arg5[%c0_7, %c0_8], %9 {strides = array<i32>} : memref<128x64xbf16, #tpu.memory_space<vmem>>, vector<128x64xbf16>,
    return
  }
  func.func @transform_0(%arg0: i32) -> (i32, i32) {
    %c0_i32 = arith.constant 0 : i32
    %c0_i32_0 = arith.constant 0 : i32
    return %arg0, %c0_i32 : i32, i32
  }
  func.func @transform_1(%arg0: i32) -> (i32, i32) {
    %c0_i32 = arith.constant 0 : i32
    %c0_i32_0 = arith.constant 0 : i32
    %c0_i32_1 = arith.constant 0 : i32
    return %c0_i32, %c0_i32_0 : i32, i32
  }
  func.func @transform_2(%arg0: i32) -> (i32, i32) {
    %c0_i32 = arith.constant 0 : i32
    %c0_i32_0 = arith.constant 0 : i32
    %c0_i32_1 = arith.constant 0 : i32
    return %c0_i32, %c0_i32_0 : i32, i32
  }
  func.func @transform_3(%arg0: i32) -> (i32, i32) {
    %c0_i32 = arith.constant 0 : i32
    %c0_i32_0 = arith.constant 0 : i32
    %c0_i32_1 = arith.constant 0 : i32
    return %c0_i32, %c0_i32_0 : i32, i32
  }
  func.func @transform_4(%arg0: i32) -> (i32, i32) {
    %c0_i32 = arith.constant 0 : i32
    %c0_i32_0 = arith.constant 0 : i32
    return %arg0, %c0_i32 : i32, i32
  }
}

module attributes {stable_mosaic.version = 11 : i64} {
  func.func @_mm_bn_act_kernel(%arg0: i32, %arg1: memref<128x16xbf16, #tpu.memory_space<vmem>>, %arg2: memref<16x64xbf16, #tpu.memory_space<vmem>>, %arg3: memref<1x64xf32, #tpu.memory_space<vmem>>, %arg4: memref<1x64xf32, #tpu.memory_space<vmem>>, %arg5: memref<128x64xbf16, #tpu.memory_space<vmem>>, %arg6: memref<128x64xbf16, #tpu.memory_space<vmem>>) attributes {dimension_semantics = [#tpu.dimension_semantics<parallel>], iteration_bounds = array<i64: 1>, scalar_prefetch = 0 : i64, scratch_operands = 0 : i64, tpu.core_type = #tpu.core_type<tc>, window_params = [{transform_indices = @transform_0, window_bounds = array<i64: 128, 16>}, {pipeline_mode = #tpu.pipeline_mode<synchronous>, transform_indices = @transform_1, window_bounds = array<i64: 16, 64>}, {pipeline_mode = #tpu.pipeline_mode<synchronous>, transform_indices = @transform_2, window_bounds = array<i64: 1, 64>}, {pipeline_mode = #tpu.pipeline_mode<synchronous>, transform_indices = @transform_3, window_bounds = array<i64: 1, 64>}, {transform_indices = @transform_4, window_bounds = array<i64: 128, 64>}, {transform_indices = @transform_5, window_bounds = array<i64: 128, 64>}]} {
    %c0 = arith.constant 0 : index
    %c0_0 = arith.constant 0 : index
    %0 = vector.load %arg1[%c0, %c0_0] : memref<128x16xbf16, #tpu.memory_space<vmem>>, vector<128x16xbf16>
    %c0_1 = arith.constant 0 : index
    %c0_2 = arith.constant 0 : index
    %1 = vector.load %arg2[%c0_1, %c0_2] : memref<16x64xbf16, #tpu.memory_space<vmem>>, vector<16x64xbf16>
    %cst = arith.constant dense<0.000000e+00> : vector<128x64xf32>
    %2 = tpu.matmul %0, %1, %cst {dimension_numbers = #tpu.dot_dimension_numbers<[1], [0], [0], [1], [0, 0, 1, 1], [], []>} : vector<128x16xbf16>, vector<16x64xbf16>, vector<128x64xf32> -> vector<128x64xf32>
    %c0_3 = arith.constant 0 : index
    %c0_4 = arith.constant 0 : index
    %3 = vector.load %arg3[%c0_3, %c0_4] : memref<1x64xf32, #tpu.memory_space<vmem>>, vector<1x64xf32>
    %4 = vector.broadcast %3 : vector<1x64xf32> to vector<128x64xf32>
    %5 = arith.mulf %2, %4 : vector<128x64xf32>
    %c0_5 = arith.constant 0 : index
    %c0_6 = arith.constant 0 : index
    %6 = vector.load %arg4[%c0_5, %c0_6] : memref<1x64xf32, #tpu.memory_space<vmem>>, vector<1x64xf32>
    %7 = vector.broadcast %6 : vector<1x64xf32> to vector<128x64xf32>
    %8 = arith.addf %5, %7 : vector<128x64xf32>
    %c0_7 = arith.constant 0 : index
    %c0_8 = arith.constant 0 : index
    %9 = vector.load %arg5[%c0_7, %c0_8] : memref<128x64xbf16, #tpu.memory_space<vmem>>, vector<128x64xbf16>
    %10 = arith.extf %9 : vector<128x64xbf16> to vector<128x64xf32>
    %11 = arith.addf %8, %10 : vector<128x64xf32>
    %cst_9 = arith.constant 0.000000e+00 : f32
    %12 = vector.broadcast %cst_9 : f32 to vector<128x64xf32>
    %13 = arith.cmpf oge, %11, %12 : vector<128x64xf32>
    %cst_10 = arith.constant 2.500000e-01 : f32
    %14 = vector.broadcast %cst_10 : f32 to vector<128x64xf32>
    %15 = arith.mulf %14, %11 : vector<128x64xf32>
    %16 = arith.select %13, %11, %15 : vector<128x64xi1>, vector<128x64xf32>
    %17 = arith.truncf %16 : vector<128x64xf32> to vector<128x64xbf16>
    %c0_11 = arith.constant 0 : index
    %c0_12 = arith.constant 0 : index
    %18 = vector.load %arg6[%c0_11, %c0_12] : memref<128x64xbf16, #tpu.memory_space<vmem>>, vector<128x64xbf16>
    tpu.vector_store %arg6[%c0_11, %c0_12], %17 {strides = array<i32>} : memref<128x64xbf16, #tpu.memory_space<vmem>>, vector<128x64xbf16>,
    return
  }
  func.func @transform_0(%arg0: i32) -> (i32, i32) {
    %c0_i32 = arith.constant 0 : i32
    %c0_i32_0 = arith.constant 0 : i32
    return %arg0, %c0_i32 : i32, i32
  }
  func.func @transform_1(%arg0: i32) -> (i32, i32) {
    %c0_i32 = arith.constant 0 : i32
    %c0_i32_0 = arith.constant 0 : i32
    %c0_i32_1 = arith.constant 0 : i32
    return %c0_i32, %c0_i32_0 : i32, i32
  }
  func.func @transform_2(%arg0: i32) -> (i32, i32) {
    %c0_i32 = arith.constant 0 : i32
    %c0_i32_0 = arith.constant 0 : i32
    %c0_i32_1 = arith.constant 0 : i32
    return %c0_i32, %c0_i32_0 : i32, i32
  }
  func.func @transform_3(%arg0: i32) -> (i32, i32) {
    %c0_i32 = arith.constant 0 : i32
    %c0_i32_0 = arith.constant 0 : i32
    %c0_i32_1 = arith.constant 0 : i32
    return %c0_i32, %c0_i32_0 : i32, i32
  }
  func.func @transform_4(%arg0: i32) -> (i32, i32) {
    %c0_i32 = arith.constant 0 : i32
    %c0_i32_0 = arith.constant 0 : i32
    return %arg0, %c0_i32 : i32, i32
  }
  func.func @transform_5(%arg0: i32) -> (i32, i32) {
    %c0_i32 = arith.constant 0 : i32
    %c0_i32_0 = arith.constant 0 : i32
    return %arg0, %c0_i32 : i32, i32
  }
}

module attributes {stable_mosaic.version = 11 : i64} {
  func.func @_mm_bn_act_kernel(%arg0: i32, %arg1: memref<128x64xbf16, #tpu.memory_space<vmem>>, %arg2: memref<64x32xbf16, #tpu.memory_space<vmem>>, %arg3: memref<1x32xf32, #tpu.memory_space<vmem>>, %arg4: memref<1x32xf32, #tpu.memory_space<vmem>>, %arg5: memref<128x32xbf16, #tpu.memory_space<vmem>>) attributes {dimension_semantics = [#tpu.dimension_semantics<parallel>], iteration_bounds = array<i64: 1>, scalar_prefetch = 0 : i64, scratch_operands = 0 : i64, tpu.core_type = #tpu.core_type<tc>, window_params = [{transform_indices = @transform_0, window_bounds = array<i64: 128, 64>}, {pipeline_mode = #tpu.pipeline_mode<synchronous>, transform_indices = @transform_1, window_bounds = array<i64: 64, 32>}, {pipeline_mode = #tpu.pipeline_mode<synchronous>, transform_indices = @transform_2, window_bounds = array<i64: 1, 32>}, {pipeline_mode = #tpu.pipeline_mode<synchronous>, transform_indices = @transform_3, window_bounds = array<i64: 1, 32>}, {transform_indices = @transform_4, window_bounds = array<i64: 128, 32>}]} {
    %c0 = arith.constant 0 : index
    %c0_0 = arith.constant 0 : index
    %0 = vector.load %arg1[%c0, %c0_0] : memref<128x64xbf16, #tpu.memory_space<vmem>>, vector<128x64xbf16>
    %c0_1 = arith.constant 0 : index
    %c0_2 = arith.constant 0 : index
    %1 = vector.load %arg2[%c0_1, %c0_2] : memref<64x32xbf16, #tpu.memory_space<vmem>>, vector<64x32xbf16>
    %cst = arith.constant dense<0.000000e+00> : vector<128x32xf32>
    %2 = tpu.matmul %0, %1, %cst {dimension_numbers = #tpu.dot_dimension_numbers<[1], [0], [0], [1], [0, 0, 1, 1], [], []>} : vector<128x64xbf16>, vector<64x32xbf16>, vector<128x32xf32> -> vector<128x32xf32>
    %c0_3 = arith.constant 0 : index
    %c0_4 = arith.constant 0 : index
    %3 = vector.load %arg3[%c0_3, %c0_4] : memref<1x32xf32, #tpu.memory_space<vmem>>, vector<1x32xf32>
    %4 = vector.broadcast %3 : vector<1x32xf32> to vector<128x32xf32>
    %5 = arith.mulf %2, %4 : vector<128x32xf32>
    %c0_5 = arith.constant 0 : index
    %c0_6 = arith.constant 0 : index
    %6 = vector.load %arg4[%c0_5, %c0_6] : memref<1x32xf32, #tpu.memory_space<vmem>>, vector<1x32xf32>
    %7 = vector.broadcast %6 : vector<1x32xf32> to vector<128x32xf32>
    %8 = arith.addf %5, %7 : vector<128x32xf32>
    %cst_7 = arith.constant 0.000000e+00 : f32
    %9 = vector.broadcast %cst_7 : f32 to vector<128x32xf32>
    %10 = arith.cmpf oge, %8, %9 : vector<128x32xf32>
    %cst_8 = arith.constant 2.500000e-01 : f32
    %11 = vector.broadcast %cst_8 : f32 to vector<128x32xf32>
    %12 = arith.mulf %11, %8 : vector<128x32xf32>
    %13 = arith.select %10, %8, %12 : vector<128x32xi1>, vector<128x32xf32>
    %14 = arith.truncf %13 : vector<128x32xf32> to vector<128x32xbf16>
    %c0_9 = arith.constant 0 : index
    %c0_10 = arith.constant 0 : index
    %15 = vector.load %arg5[%c0_9, %c0_10] : memref<128x32xbf16, #tpu.memory_space<vmem>>, vector<128x32xbf16>
    tpu.vector_store %arg5[%c0_9, %c0_10], %14 {strides = array<i32>} : memref<128x32xbf16, #tpu.memory_space<vmem>>, vector<128x32xbf16>,
    return
  }
  func.func @transform_0(%arg0: i32) -> (i32, i32) {
    %c0_i32 = arith.constant 0 : i32
    %c0_i32_0 = arith.constant 0 : i32
    return %arg0, %c0_i32 : i32, i32
  }
  func.func @transform_1(%arg0: i32) -> (i32, i32) {
    %c0_i32 = arith.constant 0 : i32
    %c0_i32_0 = arith.constant 0 : i32
    %c0_i32_1 = arith.constant 0 : i32
    return %c0_i32, %c0_i32_0 : i32, i32
  }
  func.func @transform_2(%arg0: i32) -> (i32, i32) {
    %c0_i32 = arith.constant 0 : i32
    %c0_i32_0 = arith.constant 0 : i32
    %c0_i32_1 = arith.constant 0 : i32
    return %c0_i32, %c0_i32_0 : i32, i32
  }
  func.func @transform_3(%arg0: i32) -> (i32, i32) {
    %c0_i32 = arith.constant 0 : i32
    %c0_i32_0 = arith.constant 0 : i32
    %c0_i32_1 = arith.constant 0 : i32
    return %c0_i32, %c0_i32_0 : i32, i32
  }
  func.func @transform_4(%arg0: i32) -> (i32, i32) {
    %c0_i32 = arith.constant 0 : i32
    %c0_i32_0 = arith.constant 0 : i32
    return %arg0, %c0_i32 : i32, i32
  }
}

module attributes {stable_mosaic.version = 11 : i64} {
  func.func @_mm_bn_act_kernel(%arg0: i32, %arg1: memref<128x144xbf16, #tpu.memory_space<vmem>>, %arg2: memref<144x16xbf16, #tpu.memory_space<vmem>>, %arg3: memref<1x16xf32, #tpu.memory_space<vmem>>, %arg4: memref<1x16xf32, #tpu.memory_space<vmem>>, %arg5: memref<128x16xbf16, #tpu.memory_space<vmem>>) attributes {dimension_semantics = [#tpu.dimension_semantics<parallel>], iteration_bounds = array<i64: 1>, scalar_prefetch = 0 : i64, scratch_operands = 0 : i64, tpu.core_type = #tpu.core_type<tc>, window_params = [{transform_indices = @transform_0, window_bounds = array<i64: 128, 144>}, {pipeline_mode = #tpu.pipeline_mode<synchronous>, transform_indices = @transform_1, window_bounds = array<i64: 144, 16>}, {pipeline_mode = #tpu.pipeline_mode<synchronous>, transform_indices = @transform_2, window_bounds = array<i64: 1, 16>}, {pipeline_mode = #tpu.pipeline_mode<synchronous>, transform_indices = @transform_3, window_bounds = array<i64: 1, 16>}, {transform_indices = @transform_4, window_bounds = array<i64: 128, 16>}]} {
    %c0 = arith.constant 0 : index
    %c0_0 = arith.constant 0 : index
    %0 = vector.load %arg1[%c0, %c0_0] : memref<128x144xbf16, #tpu.memory_space<vmem>>, vector<128x144xbf16>
    %c0_1 = arith.constant 0 : index
    %c0_2 = arith.constant 0 : index
    %1 = vector.load %arg2[%c0_1, %c0_2] : memref<144x16xbf16, #tpu.memory_space<vmem>>, vector<144x16xbf16>
    %cst = arith.constant dense<0.000000e+00> : vector<128x16xf32>
    %2 = tpu.matmul %0, %1, %cst {dimension_numbers = #tpu.dot_dimension_numbers<[1], [0], [0], [1], [0, 0, 1, 1], [], []>} : vector<128x144xbf16>, vector<144x16xbf16>, vector<128x16xf32> -> vector<128x16xf32>
    %c0_3 = arith.constant 0 : index
    %c0_4 = arith.constant 0 : index
    %3 = vector.load %arg3[%c0_3, %c0_4] : memref<1x16xf32, #tpu.memory_space<vmem>>, vector<1x16xf32>
    %4 = vector.broadcast %3 : vector<1x16xf32> to vector<128x16xf32>
    %5 = arith.mulf %2, %4 : vector<128x16xf32>
    %c0_5 = arith.constant 0 : index
    %c0_6 = arith.constant 0 : index
    %6 = vector.load %arg4[%c0_5, %c0_6] : memref<1x16xf32, #tpu.memory_space<vmem>>, vector<1x16xf32>
    %7 = vector.broadcast %6 : vector<1x16xf32> to vector<128x16xf32>
    %8 = arith.addf %5, %7 : vector<128x16xf32>
    %cst_7 = arith.constant 0.000000e+00 : f32
    %9 = vector.broadcast %cst_7 : f32 to vector<128x16xf32>
    %10 = arith.cmpf oge, %8, %9 : vector<128x16xf32>
    %cst_8 = arith.constant 2.500000e-01 : f32
    %11 = vector.broadcast %cst_8 : f32 to vector<128x16xf32>
    %12 = arith.mulf %11, %8 : vector<128x16xf32>
    %13 = arith.select %10, %8, %12 : vector<128x16xi1>, vector<128x16xf32>
    %14 = arith.truncf %13 : vector<128x16xf32> to vector<128x16xbf16>
    %c0_9 = arith.constant 0 : index
    %c0_10 = arith.constant 0 : index
    %15 = vector.load %arg5[%c0_9, %c0_10] : memref<128x16xbf16, #tpu.memory_space<vmem>>, vector<128x16xbf16>
    tpu.vector_store %arg5[%c0_9, %c0_10], %14 {strides = array<i32>} : memref<128x16xbf16, #tpu.memory_space<vmem>>, vector<128x16xbf16>,
    return
  }
  func.func @transform_0(%arg0: i32) -> (i32, i32) {
    %c0_i32 = arith.constant 0 : i32
    %c0_i32_0 = arith.constant 0 : i32
    return %arg0, %c0_i32 : i32, i32
  }
  func.func @transform_1(%arg0: i32) -> (i32, i32) {
    %c0_i32 = arith.constant 0 : i32
    %c0_i32_0 = arith.constant 0 : i32
    %c0_i32_1 = arith.constant 0 : i32
    return %c0_i32, %c0_i32_0 : i32, i32
  }
  func.func @transform_2(%arg0: i32) -> (i32, i32) {
    %c0_i32 = arith.constant 0 : i32
    %c0_i32_0 = arith.constant 0 : i32
    %c0_i32_1 = arith.constant 0 : i32
    return %c0_i32, %c0_i32_0 : i32, i32
  }
  func.func @transform_3(%arg0: i32) -> (i32, i32) {
    %c0_i32 = arith.constant 0 : i32
    %c0_i32_0 = arith.constant 0 : i32
    %c0_i32_1 = arith.constant 0 : i32
    return %c0_i32, %c0_i32_0 : i32, i32
  }
  func.func @transform_4(%arg0: i32) -> (i32, i32) {
    %c0_i32 = arith.constant 0 : i32
    %c0_i32_0 = arith.constant 0 : i32
    return %arg0, %c0_i32 : i32, i32
  }
}

module attributes {stable_mosaic.version = 11 : i64} {
  func.func @_mm_bn_act_kernel(%arg0: i32, %arg1: memref<32x32xbf16, #tpu.memory_space<vmem>>, %arg2: memref<32x128xbf16, #tpu.memory_space<vmem>>, %arg3: memref<1x128xf32, #tpu.memory_space<vmem>>, %arg4: memref<1x128xf32, #tpu.memory_space<vmem>>, %arg5: memref<32x128xbf16, #tpu.memory_space<vmem>>, %arg6: memref<32x128xbf16, #tpu.memory_space<vmem>>) attributes {dimension_semantics = [#tpu.dimension_semantics<parallel>], iteration_bounds = array<i64: 1>, scalar_prefetch = 0 : i64, scratch_operands = 0 : i64, tpu.core_type = #tpu.core_type<tc>, window_params = [{transform_indices = @transform_0, window_bounds = array<i64: 32, 32>}, {pipeline_mode = #tpu.pipeline_mode<synchronous>, transform_indices = @transform_1, window_bounds = array<i64: 32, 128>}, {pipeline_mode = #tpu.pipeline_mode<synchronous>, transform_indices = @transform_2, window_bounds = array<i64: 1, 128>}, {pipeline_mode = #tpu.pipeline_mode<synchronous>, transform_indices = @transform_3, window_bounds = array<i64: 1, 128>}, {transform_indices = @transform_4, window_bounds = array<i64: 32, 128>}, {transform_indices = @transform_5, window_bounds = array<i64: 32, 128>}]} {
    %c0 = arith.constant 0 : index
    %c0_0 = arith.constant 0 : index
    %0 = vector.load %arg1[%c0, %c0_0] : memref<32x32xbf16, #tpu.memory_space<vmem>>, vector<32x32xbf16>
    %c0_1 = arith.constant 0 : index
    %c0_2 = arith.constant 0 : index
    %1 = vector.load %arg2[%c0_1, %c0_2] : memref<32x128xbf16, #tpu.memory_space<vmem>>, vector<32x128xbf16>
    %cst = arith.constant dense<0.000000e+00> : vector<32x128xf32>
    %2 = tpu.matmul %0, %1, %cst {dimension_numbers = #tpu.dot_dimension_numbers<[1], [0], [0], [1], [0, 0, 1, 1], [], []>} : vector<32x32xbf16>, vector<32x128xbf16>, vector<32x128xf32> -> vector<32x128xf32>
    %c0_3 = arith.constant 0 : index
    %c0_4 = arith.constant 0 : index
    %3 = vector.load %arg3[%c0_3, %c0_4] : memref<1x128xf32, #tpu.memory_space<vmem>>, vector<1x128xf32>
    %4 = vector.broadcast %3 : vector<1x128xf32> to vector<32x128xf32>
    %5 = arith.mulf %2, %4 : vector<32x128xf32>
    %c0_5 = arith.constant 0 : index
    %c0_6 = arith.constant 0 : index
    %6 = vector.load %arg4[%c0_5, %c0_6] : memref<1x128xf32, #tpu.memory_space<vmem>>, vector<1x128xf32>
    %7 = vector.broadcast %6 : vector<1x128xf32> to vector<32x128xf32>
    %8 = arith.addf %5, %7 : vector<32x128xf32>
    %c0_7 = arith.constant 0 : index
    %c0_8 = arith.constant 0 : index
    %9 = vector.load %arg5[%c0_7, %c0_8] : memref<32x128xbf16, #tpu.memory_space<vmem>>, vector<32x128xbf16>
    %10 = arith.extf %9 : vector<32x128xbf16> to vector<32x128xf32>
    %11 = arith.addf %8, %10 : vector<32x128xf32>
    %cst_9 = arith.constant 0.000000e+00 : f32
    %12 = vector.broadcast %cst_9 : f32 to vector<32x128xf32>
    %13 = arith.cmpf oge, %11, %12 : vector<32x128xf32>
    %cst_10 = arith.constant 2.500000e-01 : f32
    %14 = vector.broadcast %cst_10 : f32 to vector<32x128xf32>
    %15 = arith.mulf %14, %11 : vector<32x128xf32>
    %16 = arith.select %13, %11, %15 : vector<32x128xi1>, vector<32x128xf32>
    %17 = arith.truncf %16 : vector<32x128xf32> to vector<32x128xbf16>
    %c0_11 = arith.constant 0 : index
    %c0_12 = arith.constant 0 : index
    %18 = vector.load %arg6[%c0_11, %c0_12] : memref<32x128xbf16, #tpu.memory_space<vmem>>, vector<32x128xbf16>
    tpu.vector_store %arg6[%c0_11, %c0_12], %17 {strides = array<i32>} : memref<32x128xbf16, #tpu.memory_space<vmem>>, vector<32x128xbf16>,
    return
  }
  func.func @transform_0(%arg0: i32) -> (i32, i32) {
    %c0_i32 = arith.constant 0 : i32
    %c0_i32_0 = arith.constant 0 : i32
    return %arg0, %c0_i32 : i32, i32
  }
  func.func @transform_1(%arg0: i32) -> (i32, i32) {
    %c0_i32 = arith.constant 0 : i32
    %c0_i32_0 = arith.constant 0 : i32
    %c0_i32_1 = arith.constant 0 : i32
    return %c0_i32, %c0_i32_0 : i32, i32
  }
  func.func @transform_2(%arg0: i32) -> (i32, i32) {
    %c0_i32 = arith.constant 0 : i32
    %c0_i32_0 = arith.constant 0 : i32
    %c0_i32_1 = arith.constant 0 : i32
    return %c0_i32, %c0_i32_0 : i32, i32
  }
  func.func @transform_3(%arg0: i32) -> (i32, i32) {
    %c0_i32 = arith.constant 0 : i32
    %c0_i32_0 = arith.constant 0 : i32
    %c0_i32_1 = arith.constant 0 : i32
    return %c0_i32, %c0_i32_0 : i32, i32
  }
  func.func @transform_4(%arg0: i32) -> (i32, i32) {
    %c0_i32 = arith.constant 0 : i32
    %c0_i32_0 = arith.constant 0 : i32
    return %arg0, %c0_i32 : i32, i32
  }
  func.func @transform_5(%arg0: i32) -> (i32, i32) {
    %c0_i32 = arith.constant 0 : i32
    %c0_i32_0 = arith.constant 0 : i32
    return %arg0, %c0_i32 : i32, i32
  }
}

module attributes {stable_mosaic.version = 11 : i64} {
  func.func @_mm_bn_act_kernel(%arg0: i32, %arg1: memref<32x128xbf16, #tpu.memory_space<vmem>>, %arg2: memref<128x32xbf16, #tpu.memory_space<vmem>>, %arg3: memref<1x32xf32, #tpu.memory_space<vmem>>, %arg4: memref<1x32xf32, #tpu.memory_space<vmem>>, %arg5: memref<32x32xbf16, #tpu.memory_space<vmem>>) attributes {dimension_semantics = [#tpu.dimension_semantics<parallel>], iteration_bounds = array<i64: 1>, scalar_prefetch = 0 : i64, scratch_operands = 0 : i64, tpu.core_type = #tpu.core_type<tc>, window_params = [{transform_indices = @transform_0, window_bounds = array<i64: 32, 128>}, {pipeline_mode = #tpu.pipeline_mode<synchronous>, transform_indices = @transform_1, window_bounds = array<i64: 128, 32>}, {pipeline_mode = #tpu.pipeline_mode<synchronous>, transform_indices = @transform_2, window_bounds = array<i64: 1, 32>}, {pipeline_mode = #tpu.pipeline_mode<synchronous>, transform_indices = @transform_3, window_bounds = array<i64: 1, 32>}, {transform_indices = @transform_4, window_bounds = array<i64: 32, 32>}]} {
    %c0 = arith.constant 0 : index
    %c0_0 = arith.constant 0 : index
    %0 = vector.load %arg1[%c0, %c0_0] : memref<32x128xbf16, #tpu.memory_space<vmem>>, vector<32x128xbf16>
    %c0_1 = arith.constant 0 : index
    %c0_2 = arith.constant 0 : index
    %1 = vector.load %arg2[%c0_1, %c0_2] : memref<128x32xbf16, #tpu.memory_space<vmem>>, vector<128x32xbf16>
    %cst = arith.constant dense<0.000000e+00> : vector<32x32xf32>
    %2 = tpu.matmul %0, %1, %cst {dimension_numbers = #tpu.dot_dimension_numbers<[1], [0], [0], [1], [0, 0, 1, 1], [], []>} : vector<32x128xbf16>, vector<128x32xbf16>, vector<32x32xf32> -> vector<32x32xf32>
    %c0_3 = arith.constant 0 : index
    %c0_4 = arith.constant 0 : index
    %3 = vector.load %arg3[%c0_3, %c0_4] : memref<1x32xf32, #tpu.memory_space<vmem>>, vector<1x32xf32>
    %4 = vector.broadcast %3 : vector<1x32xf32> to vector<32x32xf32>
    %5 = arith.mulf %2, %4 : vector<32x32xf32>
    %c0_5 = arith.constant 0 : index
    %c0_6 = arith.constant 0 : index
    %6 = vector.load %arg4[%c0_5, %c0_6] : memref<1x32xf32, #tpu.memory_space<vmem>>, vector<1x32xf32>
    %7 = vector.broadcast %6 : vector<1x32xf32> to vector<32x32xf32>
    %8 = arith.addf %5, %7 : vector<32x32xf32>
    %cst_7 = arith.constant 0.000000e+00 : f32
    %9 = vector.broadcast %cst_7 : f32 to vector<32x32xf32>
    %10 = arith.cmpf oge, %8, %9 : vector<32x32xf32>
    %cst_8 = arith.constant 2.500000e-01 : f32
    %11 = vector.broadcast %cst_8 : f32 to vector<32x32xf32>
    %12 = arith.mulf %11, %8 : vector<32x32xf32>
    %13 = arith.select %10, %8, %12 : vector<32x32xi1>, vector<32x32xf32>
    %14 = arith.truncf %13 : vector<32x32xf32> to vector<32x32xbf16>
    %c0_9 = arith.constant 0 : index
    %c0_10 = arith.constant 0 : index
    %15 = vector.load %arg5[%c0_9, %c0_10] : memref<32x32xbf16, #tpu.memory_space<vmem>>, vector<32x32xbf16>
    tpu.vector_store %arg5[%c0_9, %c0_10], %14 {strides = array<i32>} : memref<32x32xbf16, #tpu.memory_space<vmem>>, vector<32x32xbf16>,
    return
  }
  func.func @transform_0(%arg0: i32) -> (i32, i32) {
    %c0_i32 = arith.constant 0 : i32
    %c0_i32_0 = arith.constant 0 : i32
    return %arg0, %c0_i32 : i32, i32
  }
  func.func @transform_1(%arg0: i32) -> (i32, i32) {
    %c0_i32 = arith.constant 0 : i32
    %c0_i32_0 = arith.constant 0 : i32
    %c0_i32_1 = arith.constant 0 : i32
    return %c0_i32, %c0_i32_0 : i32, i32
  }
  func.func @transform_2(%arg0: i32) -> (i32, i32) {
    %c0_i32 = arith.constant 0 : i32
    %c0_i32_0 = arith.constant 0 : i32
    %c0_i32_1 = arith.constant 0 : i32
    return %c0_i32, %c0_i32_0 : i32, i32
  }
  func.func @transform_3(%arg0: i32) -> (i32, i32) {
    %c0_i32 = arith.constant 0 : i32
    %c0_i32_0 = arith.constant 0 : i32
    %c0_i32_1 = arith.constant 0 : i32
    return %c0_i32, %c0_i32_0 : i32, i32
  }
  func.func @transform_4(%arg0: i32) -> (i32, i32) {
    %c0_i32 = arith.constant 0 : i32
    %c0_i32_0 = arith.constant 0 : i32
    return %arg0, %c0_i32 : i32, i32
  }
}

module attributes {stable_mosaic.version = 11 : i64} {
  func.func @_mm_bn_act_kernel(%arg0: i32, %arg1: memref<32x64xbf16, #tpu.memory_space<vmem>>, %arg2: memref<64x128xbf16, #tpu.memory_space<vmem>>, %arg3: memref<1x128xf32, #tpu.memory_space<vmem>>, %arg4: memref<1x128xf32, #tpu.memory_space<vmem>>, %arg5: memref<32x128xbf16, #tpu.memory_space<vmem>>) attributes {dimension_semantics = [#tpu.dimension_semantics<parallel>], iteration_bounds = array<i64: 1>, scalar_prefetch = 0 : i64, scratch_operands = 0 : i64, tpu.core_type = #tpu.core_type<tc>, window_params = [{transform_indices = @transform_0, window_bounds = array<i64: 32, 64>}, {pipeline_mode = #tpu.pipeline_mode<synchronous>, transform_indices = @transform_1, window_bounds = array<i64: 64, 128>}, {pipeline_mode = #tpu.pipeline_mode<synchronous>, transform_indices = @transform_2, window_bounds = array<i64: 1, 128>}, {pipeline_mode = #tpu.pipeline_mode<synchronous>, transform_indices = @transform_3, window_bounds = array<i64: 1, 128>}, {transform_indices = @transform_4, window_bounds = array<i64: 32, 128>}]} {
    %c0 = arith.constant 0 : index
    %c0_0 = arith.constant 0 : index
    %0 = vector.load %arg1[%c0, %c0_0] : memref<32x64xbf16, #tpu.memory_space<vmem>>, vector<32x64xbf16>
    %c0_1 = arith.constant 0 : index
    %c0_2 = arith.constant 0 : index
    %1 = vector.load %arg2[%c0_1, %c0_2] : memref<64x128xbf16, #tpu.memory_space<vmem>>, vector<64x128xbf16>
    %cst = arith.constant dense<0.000000e+00> : vector<32x128xf32>
    %2 = tpu.matmul %0, %1, %cst {dimension_numbers = #tpu.dot_dimension_numbers<[1], [0], [0], [1], [0, 0, 1, 1], [], []>} : vector<32x64xbf16>, vector<64x128xbf16>, vector<32x128xf32> -> vector<32x128xf32>
    %c0_3 = arith.constant 0 : index
    %c0_4 = arith.constant 0 : index
    %3 = vector.load %arg3[%c0_3, %c0_4] : memref<1x128xf32, #tpu.memory_space<vmem>>, vector<1x128xf32>
    %4 = vector.broadcast %3 : vector<1x128xf32> to vector<32x128xf32>
    %5 = arith.mulf %2, %4 : vector<32x128xf32>
    %c0_5 = arith.constant 0 : index
    %c0_6 = arith.constant 0 : index
    %6 = vector.load %arg4[%c0_5, %c0_6] : memref<1x128xf32, #tpu.memory_space<vmem>>, vector<1x128xf32>
    %7 = vector.broadcast %6 : vector<1x128xf32> to vector<32x128xf32>
    %8 = arith.addf %5, %7 : vector<32x128xf32>
    %9 = arith.truncf %8 : vector<32x128xf32> to vector<32x128xbf16>
    %c0_7 = arith.constant 0 : index
    %c0_8 = arith.constant 0 : index
    %10 = vector.load %arg5[%c0_7, %c0_8] : memref<32x128xbf16, #tpu.memory_space<vmem>>, vector<32x128xbf16>
    tpu.vector_store %arg5[%c0_7, %c0_8], %9 {strides = array<i32>} : memref<32x128xbf16, #tpu.memory_space<vmem>>, vector<32x128xbf16>,
    return
  }
  func.func @transform_0(%arg0: i32) -> (i32, i32) {
    %c0_i32 = arith.constant 0 : i32
    %c0_i32_0 = arith.constant 0 : i32
    return %arg0, %c0_i32 : i32, i32
  }
  func.func @transform_1(%arg0: i32) -> (i32, i32) {
    %c0_i32 = arith.constant 0 : i32
    %c0_i32_0 = arith.constant 0 : i32
    %c0_i32_1 = arith.constant 0 : i32
    return %c0_i32, %c0_i32_0 : i32, i32
  }
  func.func @transform_2(%arg0: i32) -> (i32, i32) {
    %c0_i32 = arith.constant 0 : i32
    %c0_i32_0 = arith.constant 0 : i32
    %c0_i32_1 = arith.constant 0 : i32
    return %c0_i32, %c0_i32_0 : i32, i32
  }
  func.func @transform_3(%arg0: i32) -> (i32, i32) {
    %c0_i32 = arith.constant 0 : i32
    %c0_i32_0 = arith.constant 0 : i32
    %c0_i32_1 = arith.constant 0 : i32
    return %c0_i32, %c0_i32_0 : i32, i32
  }
  func.func @transform_4(%arg0: i32) -> (i32, i32) {
    %c0_i32 = arith.constant 0 : i32
    %c0_i32_0 = arith.constant 0 : i32
    return %arg0, %c0_i32 : i32, i32
  }
}

module attributes {stable_mosaic.version = 11 : i64} {
  func.func @_mm_bn_act_kernel(%arg0: i32, %arg1: memref<32x288xbf16, #tpu.memory_space<vmem>>, %arg2: memref<288x32xbf16, #tpu.memory_space<vmem>>, %arg3: memref<1x32xf32, #tpu.memory_space<vmem>>, %arg4: memref<1x32xf32, #tpu.memory_space<vmem>>, %arg5: memref<32x32xbf16, #tpu.memory_space<vmem>>) attributes {dimension_semantics = [#tpu.dimension_semantics<parallel>], iteration_bounds = array<i64: 1>, scalar_prefetch = 0 : i64, scratch_operands = 0 : i64, tpu.core_type = #tpu.core_type<tc>, window_params = [{transform_indices = @transform_0, window_bounds = array<i64: 32, 288>}, {pipeline_mode = #tpu.pipeline_mode<synchronous>, transform_indices = @transform_1, window_bounds = array<i64: 288, 32>}, {pipeline_mode = #tpu.pipeline_mode<synchronous>, transform_indices = @transform_2, window_bounds = array<i64: 1, 32>}, {pipeline_mode = #tpu.pipeline_mode<synchronous>, transform_indices = @transform_3, window_bounds = array<i64: 1, 32>}, {transform_indices = @transform_4, window_bounds = array<i64: 32, 32>}]} {
    %c0 = arith.constant 0 : index
    %c0_0 = arith.constant 0 : index
    %0 = vector.load %arg1[%c0, %c0_0] : memref<32x288xbf16, #tpu.memory_space<vmem>>, vector<32x288xbf16>
    %c0_1 = arith.constant 0 : index
    %c0_2 = arith.constant 0 : index
    %1 = vector.load %arg2[%c0_1, %c0_2] : memref<288x32xbf16, #tpu.memory_space<vmem>>, vector<288x32xbf16>
    %cst = arith.constant dense<0.000000e+00> : vector<32x32xf32>
    %2 = tpu.matmul %0, %1, %cst {dimension_numbers = #tpu.dot_dimension_numbers<[1], [0], [0], [1], [0, 0, 1, 1], [], []>} : vector<32x288xbf16>, vector<288x32xbf16>, vector<32x32xf32> -> vector<32x32xf32>
    %c0_3 = arith.constant 0 : index
    %c0_4 = arith.constant 0 : index
    %3 = vector.load %arg3[%c0_3, %c0_4] : memref<1x32xf32, #tpu.memory_space<vmem>>, vector<1x32xf32>
    %4 = vector.broadcast %3 : vector<1x32xf32> to vector<32x32xf32>
    %5 = arith.mulf %2, %4 : vector<32x32xf32>
    %c0_5 = arith.constant 0 : index
    %c0_6 = arith.constant 0 : index
    %6 = vector.load %arg4[%c0_5, %c0_6] : memref<1x32xf32, #tpu.memory_space<vmem>>, vector<1x32xf32>
    %7 = vector.broadcast %6 : vector<1x32xf32> to vector<32x32xf32>
    %8 = arith.addf %5, %7 : vector<32x32xf32>
    %cst_7 = arith.constant 0.000000e+00 : f32
    %9 = vector.broadcast %cst_7 : f32 to vector<32x32xf32>
    %10 = arith.cmpf oge, %8, %9 : vector<32x32xf32>
    %cst_8 = arith.constant 2.500000e-01 : f32
    %11 = vector.broadcast %cst_8 : f32 to vector<32x32xf32>
    %12 = arith.mulf %11, %8 : vector<32x32xf32>
    %13 = arith.select %10, %8, %12 : vector<32x32xi1>, vector<32x32xf32>
    %14 = arith.truncf %13 : vector<32x32xf32> to vector<32x32xbf16>
    %c0_9 = arith.constant 0 : index
    %c0_10 = arith.constant 0 : index
    %15 = vector.load %arg5[%c0_9, %c0_10] : memref<32x32xbf16, #tpu.memory_space<vmem>>, vector<32x32xbf16>
    tpu.vector_store %arg5[%c0_9, %c0_10], %14 {strides = array<i32>} : memref<32x32xbf16, #tpu.memory_space<vmem>>, vector<32x32xbf16>,
    return
  }
  func.func @transform_0(%arg0: i32) -> (i32, i32) {
    %c0_i32 = arith.constant 0 : i32
    %c0_i32_0 = arith.constant 0 : i32
    return %arg0, %c0_i32 : i32, i32
  }
  func.func @transform_1(%arg0: i32) -> (i32, i32) {
    %c0_i32 = arith.constant 0 : i32
    %c0_i32_0 = arith.constant 0 : i32
    %c0_i32_1 = arith.constant 0 : i32
    return %c0_i32, %c0_i32_0 : i32, i32
  }
  func.func @transform_2(%arg0: i32) -> (i32, i32) {
    %c0_i32 = arith.constant 0 : i32
    %c0_i32_0 = arith.constant 0 : i32
    %c0_i32_1 = arith.constant 0 : i32
    return %c0_i32, %c0_i32_0 : i32, i32
  }
  func.func @transform_3(%arg0: i32) -> (i32, i32) {
    %c0_i32 = arith.constant 0 : i32
    %c0_i32_0 = arith.constant 0 : i32
    %c0_i32_1 = arith.constant 0 : i32
    return %c0_i32, %c0_i32_0 : i32, i32
  }
  func.func @transform_4(%arg0: i32) -> (i32, i32) {
    %c0_i32 = arith.constant 0 : i32
    %c0_i32_0 = arith.constant 0 : i32
    return %arg0, %c0_i32 : i32, i32
  }
}

module attributes {stable_mosaic.version = 11 : i64} {
  func.func @_mm_bn_act_kernel(%arg0: i32, %arg1: memref<32x160xbf16, #tpu.memory_space<vmem>>, %arg2: memref<160x32xbf16, #tpu.memory_space<vmem>>, %arg3: memref<1x32xf32, #tpu.memory_space<vmem>>, %arg4: memref<1x32xf32, #tpu.memory_space<vmem>>, %arg5: memref<32x32xbf16, #tpu.memory_space<vmem>>) attributes {dimension_semantics = [#tpu.dimension_semantics<parallel>], iteration_bounds = array<i64: 1>, scalar_prefetch = 0 : i64, scratch_operands = 0 : i64, tpu.core_type = #tpu.core_type<tc>, window_params = [{transform_indices = @transform_0, window_bounds = array<i64: 32, 160>}, {pipeline_mode = #tpu.pipeline_mode<synchronous>, transform_indices = @transform_1, window_bounds = array<i64: 160, 32>}, {pipeline_mode = #tpu.pipeline_mode<synchronous>, transform_indices = @transform_2, window_bounds = array<i64: 1, 32>}, {pipeline_mode = #tpu.pipeline_mode<synchronous>, transform_indices = @transform_3, window_bounds = array<i64: 1, 32>}, {transform_indices = @transform_4, window_bounds = array<i64: 32, 32>}]} {
    %c0 = arith.constant 0 : index
    %c0_0 = arith.constant 0 : index
    %0 = vector.load %arg1[%c0, %c0_0] : memref<32x160xbf16, #tpu.memory_space<vmem>>, vector<32x160xbf16>
    %c0_1 = arith.constant 0 : index
    %c0_2 = arith.constant 0 : index
    %1 = vector.load %arg2[%c0_1, %c0_2] : memref<160x32xbf16, #tpu.memory_space<vmem>>, vector<160x32xbf16>
    %cst = arith.constant dense<0.000000e+00> : vector<32x32xf32>
    %2 = tpu.matmul %0, %1, %cst {dimension_numbers = #tpu.dot_dimension_numbers<[1], [0], [0], [1], [0, 0, 1, 1], [], []>} : vector<32x160xbf16>, vector<160x32xbf16>, vector<32x32xf32> -> vector<32x32xf32>
    %c0_3 = arith.constant 0 : index
    %c0_4 = arith.constant 0 : index
    %3 = vector.load %arg3[%c0_3, %c0_4] : memref<1x32xf32, #tpu.memory_space<vmem>>, vector<1x32xf32>
    %4 = vector.broadcast %3 : vector<1x32xf32> to vector<32x32xf32>
    %5 = arith.mulf %2, %4 : vector<32x32xf32>
    %c0_5 = arith.constant 0 : index
    %c0_6 = arith.constant 0 : index
    %6 = vector.load %arg4[%c0_5, %c0_6] : memref<1x32xf32, #tpu.memory_space<vmem>>, vector<1x32xf32>
    %7 = vector.broadcast %6 : vector<1x32xf32> to vector<32x32xf32>
    %8 = arith.addf %5, %7 : vector<32x32xf32>
    %cst_7 = arith.constant 0.000000e+00 : f32
    %9 = vector.broadcast %cst_7 : f32 to vector<32x32xf32>
    %10 = arith.cmpf oge, %8, %9 : vector<32x32xf32>
    %cst_8 = arith.constant 2.500000e-01 : f32
    %11 = vector.broadcast %cst_8 : f32 to vector<32x32xf32>
    %12 = arith.mulf %11, %8 : vector<32x32xf32>
    %13 = arith.select %10, %8, %12 : vector<32x32xi1>, vector<32x32xf32>
    %14 = arith.truncf %13 : vector<32x32xf32> to vector<32x32xbf16>
    %c0_9 = arith.constant 0 : index
    %c0_10 = arith.constant 0 : index
    %15 = vector.load %arg5[%c0_9, %c0_10] : memref<32x32xbf16, #tpu.memory_space<vmem>>, vector<32x32xbf16>
    tpu.vector_store %arg5[%c0_9, %c0_10], %14 {strides = array<i32>} : memref<32x32xbf16, #tpu.memory_space<vmem>>, vector<32x32xbf16>,
    return
  }
  func.func @transform_0(%arg0: i32) -> (i32, i32) {
    %c0_i32 = arith.constant 0 : i32
    %c0_i32_0 = arith.constant 0 : i32
    return %arg0, %c0_i32 : i32, i32
  }
  func.func @transform_1(%arg0: i32) -> (i32, i32) {
    %c0_i32 = arith.constant 0 : i32
    %c0_i32_0 = arith.constant 0 : i32
    %c0_i32_1 = arith.constant 0 : i32
    return %c0_i32, %c0_i32_0 : i32, i32
  }
  func.func @transform_2(%arg0: i32) -> (i32, i32) {
    %c0_i32 = arith.constant 0 : i32
    %c0_i32_0 = arith.constant 0 : i32
    %c0_i32_1 = arith.constant 0 : i32
    return %c0_i32, %c0_i32_0 : i32, i32
  }
  func.func @transform_3(%arg0: i32) -> (i32, i32) {
    %c0_i32 = arith.constant 0 : i32
    %c0_i32_0 = arith.constant 0 : i32
    %c0_i32_1 = arith.constant 0 : i32
    return %c0_i32, %c0_i32_0 : i32, i32
  }
  func.func @transform_4(%arg0: i32) -> (i32, i32) {
    %c0_i32 = arith.constant 0 : i32
    %c0_i32_0 = arith.constant 0 : i32
    return %arg0, %c0_i32 : i32, i32
  }
}

module attributes {stable_mosaic.version = 11 : i64} {
  func.func @_mm_bn_act_kernel(%arg0: i32, %arg1: memref<32x160xbf16, #tpu.memory_space<vmem>>, %arg2: memref<160x32xbf16, #tpu.memory_space<vmem>>, %arg3: memref<1x32xf32, #tpu.memory_space<vmem>>, %arg4: memref<1x32xf32, #tpu.memory_space<vmem>>, %arg5: memref<32x32xbf16, #tpu.memory_space<vmem>>) attributes {dimension_semantics = [#tpu.dimension_semantics<parallel>], iteration_bounds = array<i64: 1>, scalar_prefetch = 0 : i64, scratch_operands = 0 : i64, tpu.core_type = #tpu.core_type<tc>, window_params = [{transform_indices = @transform_0, window_bounds = array<i64: 32, 160>}, {pipeline_mode = #tpu.pipeline_mode<synchronous>, transform_indices = @transform_1, window_bounds = array<i64: 160, 32>}, {pipeline_mode = #tpu.pipeline_mode<synchronous>, transform_indices = @transform_2, window_bounds = array<i64: 1, 32>}, {pipeline_mode = #tpu.pipeline_mode<synchronous>, transform_indices = @transform_3, window_bounds = array<i64: 1, 32>}, {transform_indices = @transform_4, window_bounds = array<i64: 32, 32>}]} {
    %c0 = arith.constant 0 : index
    %c0_0 = arith.constant 0 : index
    %0 = vector.load %arg1[%c0, %c0_0] : memref<32x160xbf16, #tpu.memory_space<vmem>>, vector<32x160xbf16>
    %c0_1 = arith.constant 0 : index
    %c0_2 = arith.constant 0 : index
    %1 = vector.load %arg2[%c0_1, %c0_2] : memref<160x32xbf16, #tpu.memory_space<vmem>>, vector<160x32xbf16>
    %cst = arith.constant dense<0.000000e+00> : vector<32x32xf32>
    %2 = tpu.matmul %0, %1, %cst {dimension_numbers = #tpu.dot_dimension_numbers<[1], [0], [0], [1], [0, 0, 1, 1], [], []>} : vector<32x160xbf16>, vector<160x32xbf16>, vector<32x32xf32> -> vector<32x32xf32>
    %c0_3 = arith.constant 0 : index
    %c0_4 = arith.constant 0 : index
    %3 = vector.load %arg3[%c0_3, %c0_4] : memref<1x32xf32, #tpu.memory_space<vmem>>, vector<1x32xf32>
    %4 = vector.broadcast %3 : vector<1x32xf32> to vector<32x32xf32>
    %5 = arith.mulf %2, %4 : vector<32x32xf32>
    %c0_5 = arith.constant 0 : index
    %c0_6 = arith.constant 0 : index
    %6 = vector.load %arg4[%c0_5, %c0_6] : memref<1x32xf32, #tpu.memory_space<vmem>>, vector<1x32xf32>
    %7 = vector.broadcast %6 : vector<1x32xf32> to vector<32x32xf32>
    %8 = arith.addf %5, %7 : vector<32x32xf32>
    %9 = arith.truncf %8 : vector<32x32xf32> to vector<32x32xbf16>
    %c0_7 = arith.constant 0 : index
    %c0_8 = arith.constant 0 : index
    %10 = vector.load %arg5[%c0_7, %c0_8] : memref<32x32xbf16, #tpu.memory_space<vmem>>, vector<32x32xbf16>
    tpu.vector_store %arg5[%c0_7, %c0_8], %9 {strides = array<i32>} : memref<32x32xbf16, #tpu.memory_space<vmem>>, vector<32x32xbf16>,
    return
  }
  func.func @transform_0(%arg0: i32) -> (i32, i32) {
    %c0_i32 = arith.constant 0 : i32
    %c0_i32_0 = arith.constant 0 : i32
    return %arg0, %c0_i32 : i32, i32
  }
  func.func @transform_1(%arg0: i32) -> (i32, i32) {
    %c0_i32 = arith.constant 0 : i32
    %c0_i32_0 = arith.constant 0 : i32
    %c0_i32_1 = arith.constant 0 : i32
    return %c0_i32, %c0_i32_0 : i32, i32
  }
  func.func @transform_2(%arg0: i32) -> (i32, i32) {
    %c0_i32 = arith.constant 0 : i32
    %c0_i32_0 = arith.constant 0 : i32
    %c0_i32_1 = arith.constant 0 : i32
    return %c0_i32, %c0_i32_0 : i32, i32
  }
  func.func @transform_3(%arg0: i32) -> (i32, i32) {
    %c0_i32 = arith.constant 0 : i32
    %c0_i32_0 = arith.constant 0 : i32
    %c0_i32_1 = arith.constant 0 : i32
    return %c0_i32, %c0_i32_0 : i32, i32
  }
  func.func @transform_4(%arg0: i32) -> (i32, i32) {
    %c0_i32 = arith.constant 0 : i32
    %c0_i32_0 = arith.constant 0 : i32
    return %arg0, %c0_i32 : i32, i32
  }
}

module attributes {stable_mosaic.version = 11 : i64} {
  func.func @_mm_bn_act_kernel(%arg0: i32, %arg1: memref<32x128xbf16, #tpu.memory_space<vmem>>, %arg2: memref<128x64xbf16, #tpu.memory_space<vmem>>, %arg3: memref<1x64xf32, #tpu.memory_space<vmem>>, %arg4: memref<1x64xf32, #tpu.memory_space<vmem>>, %arg5: memref<32x64xbf16, #tpu.memory_space<vmem>>) attributes {dimension_semantics = [#tpu.dimension_semantics<parallel>], iteration_bounds = array<i64: 1>, scalar_prefetch = 0 : i64, scratch_operands = 0 : i64, tpu.core_type = #tpu.core_type<tc>, window_params = [{transform_indices = @transform_0, window_bounds = array<i64: 32, 128>}, {pipeline_mode = #tpu.pipeline_mode<synchronous>, transform_indices = @transform_1, window_bounds = array<i64: 128, 64>}, {pipeline_mode = #tpu.pipeline_mode<synchronous>, transform_indices = @transform_2, window_bounds = array<i64: 1, 64>}, {pipeline_mode = #tpu.pipeline_mode<synchronous>, transform_indices = @transform_3, window_bounds = array<i64: 1, 64>}, {transform_indices = @transform_4, window_bounds = array<i64: 32, 64>}]} {
    %c0 = arith.constant 0 : index
    %c0_0 = arith.constant 0 : index
    %0 = vector.load %arg1[%c0, %c0_0] : memref<32x128xbf16, #tpu.memory_space<vmem>>, vector<32x128xbf16>
    %c0_1 = arith.constant 0 : index
    %c0_2 = arith.constant 0 : index
    %1 = vector.load %arg2[%c0_1, %c0_2] : memref<128x64xbf16, #tpu.memory_space<vmem>>, vector<128x64xbf16>
    %cst = arith.constant dense<0.000000e+00> : vector<32x64xf32>
    %2 = tpu.matmul %0, %1, %cst {dimension_numbers = #tpu.dot_dimension_numbers<[1], [0], [0], [1], [0, 0, 1, 1], [], []>} : vector<32x128xbf16>, vector<128x64xbf16>, vector<32x64xf32> -> vector<32x64xf32>
    %c0_3 = arith.constant 0 : index
    %c0_4 = arith.constant 0 : index
    %3 = vector.load %arg3[%c0_3, %c0_4] : memref<1x64xf32, #tpu.memory_space<vmem>>, vector<1x64xf32>
    %4 = vector.broadcast %3 : vector<1x64xf32> to vector<32x64xf32>
    %5 = arith.mulf %2, %4 : vector<32x64xf32>
    %c0_5 = arith.constant 0 : index
    %c0_6 = arith.constant 0 : index
    %6 = vector.load %arg4[%c0_5, %c0_6] : memref<1x64xf32, #tpu.memory_space<vmem>>, vector<1x64xf32>
    %7 = vector.broadcast %6 : vector<1x64xf32> to vector<32x64xf32>
    %8 = arith.addf %5, %7 : vector<32x64xf32>
    %9 = arith.truncf %8 : vector<32x64xf32> to vector<32x64xbf16>
    %c0_7 = arith.constant 0 : index
    %c0_8 = arith.constant 0 : index
    %10 = vector.load %arg5[%c0_7, %c0_8] : memref<32x64xbf16, #tpu.memory_space<vmem>>, vector<32x64xbf16>
    tpu.vector_store %arg5[%c0_7, %c0_8], %9 {strides = array<i32>} : memref<32x64xbf16, #tpu.memory_space<vmem>>, vector<32x64xbf16>,
    return
  }
  func.func @transform_0(%arg0: i32) -> (i32, i32) {
    %c0_i32 = arith.constant 0 : i32
    %c0_i32_0 = arith.constant 0 : i32
    return %arg0, %c0_i32 : i32, i32
  }
  func.func @transform_1(%arg0: i32) -> (i32, i32) {
    %c0_i32 = arith.constant 0 : i32
    %c0_i32_0 = arith.constant 0 : i32
    %c0_i32_1 = arith.constant 0 : i32
    return %c0_i32, %c0_i32_0 : i32, i32
  }
  func.func @transform_2(%arg0: i32) -> (i32, i32) {
    %c0_i32 = arith.constant 0 : i32
    %c0_i32_0 = arith.constant 0 : i32
    %c0_i32_1 = arith.constant 0 : i32
    return %c0_i32, %c0_i32_0 : i32, i32
  }
  func.func @transform_3(%arg0: i32) -> (i32, i32) {
    %c0_i32 = arith.constant 0 : i32
    %c0_i32_0 = arith.constant 0 : i32
    %c0_i32_1 = arith.constant 0 : i32
    return %c0_i32, %c0_i32_0 : i32, i32
  }
  func.func @transform_4(%arg0: i32) -> (i32, i32) {
    %c0_i32 = arith.constant 0 : i32
    %c0_i32_0 = arith.constant 0 : i32
    return %arg0, %c0_i32 : i32, i32
  }
}

module attributes {stable_mosaic.version = 11 : i64} {
  func.func @_mm_bn_act_kernel(%arg0: i32, %arg1: memref<32x128xbf16, #tpu.memory_space<vmem>>, %arg2: memref<128x16xbf16, #tpu.memory_space<vmem>>, %arg3: memref<1x16xf32, #tpu.memory_space<vmem>>, %arg4: memref<1x16xf32, #tpu.memory_space<vmem>>, %arg5: memref<32x16xbf16, #tpu.memory_space<vmem>>) attributes {dimension_semantics = [#tpu.dimension_semantics<parallel>], iteration_bounds = array<i64: 1>, scalar_prefetch = 0 : i64, scratch_operands = 0 : i64, tpu.core_type = #tpu.core_type<tc>, window_params = [{transform_indices = @transform_0, window_bounds = array<i64: 32, 128>}, {pipeline_mode = #tpu.pipeline_mode<synchronous>, transform_indices = @transform_1, window_bounds = array<i64: 128, 16>}, {pipeline_mode = #tpu.pipeline_mode<synchronous>, transform_indices = @transform_2, window_bounds = array<i64: 1, 16>}, {pipeline_mode = #tpu.pipeline_mode<synchronous>, transform_indices = @transform_3, window_bounds = array<i64: 1, 16>}, {transform_indices = @transform_4, window_bounds = array<i64: 32, 16>}]} {
    %c0 = arith.constant 0 : index
    %c0_0 = arith.constant 0 : index
    %0 = vector.load %arg1[%c0, %c0_0] : memref<32x128xbf16, #tpu.memory_space<vmem>>, vector<32x128xbf16>
    %c0_1 = arith.constant 0 : index
    %c0_2 = arith.constant 0 : index
    %1 = vector.load %arg2[%c0_1, %c0_2] : memref<128x16xbf16, #tpu.memory_space<vmem>>, vector<128x16xbf16>
    %cst = arith.constant dense<0.000000e+00> : vector<32x16xf32>
    %2 = tpu.matmul %0, %1, %cst {dimension_numbers = #tpu.dot_dimension_numbers<[1], [0], [0], [1], [0, 0, 1, 1], [], []>} : vector<32x128xbf16>, vector<128x16xbf16>, vector<32x16xf32> -> vector<32x16xf32>
    %c0_3 = arith.constant 0 : index
    %c0_4 = arith.constant 0 : index
    %3 = vector.load %arg3[%c0_3, %c0_4] : memref<1x16xf32, #tpu.memory_space<vmem>>, vector<1x16xf32>
    %4 = vector.broadcast %3 : vector<1x16xf32> to vector<32x16xf32>
    %5 = arith.mulf %2, %4 : vector<32x16xf32>
    %c0_5 = arith.constant 0 : index
    %c0_6 = arith.constant 0 : index
    %6 = vector.load %arg4[%c0_5, %c0_6] : memref<1x16xf32, #tpu.memory_space<vmem>>, vector<1x16xf32>
    %7 = vector.broadcast %6 : vector<1x16xf32> to vector<32x16xf32>
    %8 = arith.addf %5, %7 : vector<32x16xf32>
    %cst_7 = arith.constant 0.000000e+00 : f32
    %9 = vector.broadcast %cst_7 : f32 to vector<32x16xf32>
    %10 = arith.cmpf oge, %8, %9 : vector<32x16xf32>
    %cst_8 = arith.constant 2.500000e-01 : f32
    %11 = vector.broadcast %cst_8 : f32 to vector<32x16xf32>
    %12 = arith.mulf %11, %8 : vector<32x16xf32>
    %13 = arith.select %10, %8, %12 : vector<32x16xi1>, vector<32x16xf32>
    %14 = arith.truncf %13 : vector<32x16xf32> to vector<32x16xbf16>
    %c0_9 = arith.constant 0 : index
    %c0_10 = arith.constant 0 : index
    %15 = vector.load %arg5[%c0_9, %c0_10] : memref<32x16xbf16, #tpu.memory_space<vmem>>, vector<32x16xbf16>
    tpu.vector_store %arg5[%c0_9, %c0_10], %14 {strides = array<i32>} : memref<32x16xbf16, #tpu.memory_space<vmem>>, vector<32x16xbf16>,
    return
  }
  func.func @transform_0(%arg0: i32) -> (i32, i32) {
    %c0_i32 = arith.constant 0 : i32
    %c0_i32_0 = arith.constant 0 : i32
    return %arg0, %c0_i32 : i32, i32
  }
  func.func @transform_1(%arg0: i32) -> (i32, i32) {
    %c0_i32 = arith.constant 0 : i32
    %c0_i32_0 = arith.constant 0 : i32
    %c0_i32_1 = arith.constant 0 : i32
    return %c0_i32, %c0_i32_0 : i32, i32
  }
  func.func @transform_2(%arg0: i32) -> (i32, i32) {
    %c0_i32 = arith.constant 0 : i32
    %c0_i32_0 = arith.constant 0 : i32
    %c0_i32_1 = arith.constant 0 : i32
    return %c0_i32, %c0_i32_0 : i32, i32
  }
  func.func @transform_3(%arg0: i32) -> (i32, i32) {
    %c0_i32 = arith.constant 0 : i32
    %c0_i32_0 = arith.constant 0 : i32
    %c0_i32_1 = arith.constant 0 : i32
    return %c0_i32, %c0_i32_0 : i32, i32
  }
  func.func @transform_4(%arg0: i32) -> (i32, i32) {
    %c0_i32 = arith.constant 0 : i32
    %c0_i32_0 = arith.constant 0 : i32
    return %arg0, %c0_i32 : i32, i32
  }
}

module attributes {stable_mosaic.version = 11 : i64} {
  func.func @_mm_bn_act_kernel(%arg0: i32, %arg1: memref<32x16xbf16, #tpu.memory_space<vmem>>, %arg2: memref<16x64xbf16, #tpu.memory_space<vmem>>, %arg3: memref<1x64xf32, #tpu.memory_space<vmem>>, %arg4: memref<1x64xf32, #tpu.memory_space<vmem>>, %arg5: memref<32x64xbf16, #tpu.memory_space<vmem>>) attributes {dimension_semantics = [#tpu.dimension_semantics<parallel>], iteration_bounds = array<i64: 1>, scalar_prefetch = 0 : i64, scratch_operands = 0 : i64, tpu.core_type = #tpu.core_type<tc>, window_params = [{transform_indices = @transform_0, window_bounds = array<i64: 32, 16>}, {pipeline_mode = #tpu.pipeline_mode<synchronous>, transform_indices = @transform_1, window_bounds = array<i64: 16, 64>}, {pipeline_mode = #tpu.pipeline_mode<synchronous>, transform_indices = @transform_2, window_bounds = array<i64: 1, 64>}, {pipeline_mode = #tpu.pipeline_mode<synchronous>, transform_indices = @transform_3, window_bounds = array<i64: 1, 64>}, {transform_indices = @transform_4, window_bounds = array<i64: 32, 64>}]} {
    %c0 = arith.constant 0 : index
    %c0_0 = arith.constant 0 : index
    %0 = vector.load %arg1[%c0, %c0_0] : memref<32x16xbf16, #tpu.memory_space<vmem>>, vector<32x16xbf16>
    %c0_1 = arith.constant 0 : index
    %c0_2 = arith.constant 0 : index
    %1 = vector.load %arg2[%c0_1, %c0_2] : memref<16x64xbf16, #tpu.memory_space<vmem>>, vector<16x64xbf16>
    %cst = arith.constant dense<0.000000e+00> : vector<32x64xf32>
    %2 = tpu.matmul %0, %1, %cst {dimension_numbers = #tpu.dot_dimension_numbers<[1], [0], [0], [1], [0, 0, 1, 1], [], []>} : vector<32x16xbf16>, vector<16x64xbf16>, vector<32x64xf32> -> vector<32x64xf32>
    %c0_3 = arith.constant 0 : index
    %c0_4 = arith.constant 0 : index
    %3 = vector.load %arg3[%c0_3, %c0_4] : memref<1x64xf32, #tpu.memory_space<vmem>>, vector<1x64xf32>
    %4 = vector.broadcast %3 : vector<1x64xf32> to vector<32x64xf32>
    %5 = arith.mulf %2, %4 : vector<32x64xf32>
    %c0_5 = arith.constant 0 : index
    %c0_6 = arith.constant 0 : index
    %6 = vector.load %arg4[%c0_5, %c0_6] : memref<1x64xf32, #tpu.memory_space<vmem>>, vector<1x64xf32>
    %7 = vector.broadcast %6 : vector<1x64xf32> to vector<32x64xf32>
    %8 = arith.addf %5, %7 : vector<32x64xf32>
    %cst_7 = arith.constant 0.000000e+00 : f32
    %9 = vector.broadcast %cst_7 : f32 to vector<32x64xf32>
    %10 = arith.cmpf oge, %8, %9 : vector<32x64xf32>
    %cst_8 = arith.constant 2.500000e-01 : f32
    %11 = vector.broadcast %cst_8 : f32 to vector<32x64xf32>
    %12 = arith.mulf %11, %8 : vector<32x64xf32>
    %13 = arith.select %10, %8, %12 : vector<32x64xi1>, vector<32x64xf32>
    %14 = arith.truncf %13 : vector<32x64xf32> to vector<32x64xbf16>
    %c0_9 = arith.constant 0 : index
    %c0_10 = arith.constant 0 : index
    %15 = vector.load %arg5[%c0_9, %c0_10] : memref<32x64xbf16, #tpu.memory_space<vmem>>, vector<32x64xbf16>
    tpu.vector_store %arg5[%c0_9, %c0_10], %14 {strides = array<i32>} : memref<32x64xbf16, #tpu.memory_space<vmem>>, vector<32x64xbf16>,
    return
  }
  func.func @transform_0(%arg0: i32) -> (i32, i32) {
    %c0_i32 = arith.constant 0 : i32
    %c0_i32_0 = arith.constant 0 : i32
    return %arg0, %c0_i32 : i32, i32
  }
  func.func @transform_1(%arg0: i32) -> (i32, i32) {
    %c0_i32 = arith.constant 0 : i32
    %c0_i32_0 = arith.constant 0 : i32
    %c0_i32_1 = arith.constant 0 : i32
    return %c0_i32, %c0_i32_0 : i32, i32
  }
  func.func @transform_2(%arg0: i32) -> (i32, i32) {
    %c0_i32 = arith.constant 0 : i32
    %c0_i32_0 = arith.constant 0 : i32
    %c0_i32_1 = arith.constant 0 : i32
    return %c0_i32, %c0_i32_0 : i32, i32
  }
  func.func @transform_3(%arg0: i32) -> (i32, i32) {
    %c0_i32 = arith.constant 0 : i32
    %c0_i32_0 = arith.constant 0 : i32
    %c0_i32_1 = arith.constant 0 : i32
    return %c0_i32, %c0_i32_0 : i32, i32
  }
  func.func @transform_4(%arg0: i32) -> (i32, i32) {
    %c0_i32 = arith.constant 0 : i32
    %c0_i32_0 = arith.constant 0 : i32
    return %arg0, %c0_i32 : i32, i32
  }
}

module attributes {stable_mosaic.version = 11 : i64} {
  func.func @_mm_bn_act_kernel(%arg0: i32, %arg1: memref<128x64xbf16, #tpu.memory_space<vmem>>, %arg2: memref<64x16xbf16, #tpu.memory_space<vmem>>, %arg3: memref<1x16xf32, #tpu.memory_space<vmem>>, %arg4: memref<1x16xf32, #tpu.memory_space<vmem>>, %arg5: memref<128x16xbf16, #tpu.memory_space<vmem>>) attributes {dimension_semantics = [#tpu.dimension_semantics<parallel>], iteration_bounds = array<i64: 1>, scalar_prefetch = 0 : i64, scratch_operands = 0 : i64, tpu.core_type = #tpu.core_type<tc>, window_params = [{transform_indices = @transform_0, window_bounds = array<i64: 128, 64>}, {pipeline_mode = #tpu.pipeline_mode<synchronous>, transform_indices = @transform_1, window_bounds = array<i64: 64, 16>}, {pipeline_mode = #tpu.pipeline_mode<synchronous>, transform_indices = @transform_2, window_bounds = array<i64: 1, 16>}, {pipeline_mode = #tpu.pipeline_mode<synchronous>, transform_indices = @transform_3, window_bounds = array<i64: 1, 16>}, {transform_indices = @transform_4, window_bounds = array<i64: 128, 16>}]} {
    %c0 = arith.constant 0 : index
    %c0_0 = arith.constant 0 : index
    %0 = vector.load %arg1[%c0, %c0_0] : memref<128x64xbf16, #tpu.memory_space<vmem>>, vector<128x64xbf16>
    %c0_1 = arith.constant 0 : index
    %c0_2 = arith.constant 0 : index
    %1 = vector.load %arg2[%c0_1, %c0_2] : memref<64x16xbf16, #tpu.memory_space<vmem>>, vector<64x16xbf16>
    %cst = arith.constant dense<0.000000e+00> : vector<128x16xf32>
    %2 = tpu.matmul %0, %1, %cst {dimension_numbers = #tpu.dot_dimension_numbers<[1], [0], [0], [1], [0, 0, 1, 1], [], []>} : vector<128x64xbf16>, vector<64x16xbf16>, vector<128x16xf32> -> vector<128x16xf32>
    %c0_3 = arith.constant 0 : index
    %c0_4 = arith.constant 0 : index
    %3 = vector.load %arg3[%c0_3, %c0_4] : memref<1x16xf32, #tpu.memory_space<vmem>>, vector<1x16xf32>
    %4 = vector.broadcast %3 : vector<1x16xf32> to vector<128x16xf32>
    %5 = arith.mulf %2, %4 : vector<128x16xf32>
    %c0_5 = arith.constant 0 : index
    %c0_6 = arith.constant 0 : index
    %6 = vector.load %arg4[%c0_5, %c0_6] : memref<1x16xf32, #tpu.memory_space<vmem>>, vector<1x16xf32>
    %7 = vector.broadcast %6 : vector<1x16xf32> to vector<128x16xf32>
    %8 = arith.addf %5, %7 : vector<128x16xf32>
    %9 = arith.truncf %8 : vector<128x16xf32> to vector<128x16xbf16>
    %c0_7 = arith.constant 0 : index
    %c0_8 = arith.constant 0 : index
    %10 = vector.load %arg5[%c0_7, %c0_8] : memref<128x16xbf16, #tpu.memory_space<vmem>>, vector<128x16xbf16>
    tpu.vector_store %arg5[%c0_7, %c0_8], %9 {strides = array<i32>} : memref<128x16xbf16, #tpu.memory_space<vmem>>, vector<128x16xbf16>,
    return
  }
  func.func @transform_0(%arg0: i32) -> (i32, i32) {
    %c0_i32 = arith.constant 0 : i32
    %c0_i32_0 = arith.constant 0 : i32
    return %arg0, %c0_i32 : i32, i32
  }
  func.func @transform_1(%arg0: i32) -> (i32, i32) {
    %c0_i32 = arith.constant 0 : i32
    %c0_i32_0 = arith.constant 0 : i32
    %c0_i32_1 = arith.constant 0 : i32
    return %c0_i32, %c0_i32_0 : i32, i32
  }
  func.func @transform_2(%arg0: i32) -> (i32, i32) {
    %c0_i32 = arith.constant 0 : i32
    %c0_i32_0 = arith.constant 0 : i32
    %c0_i32_1 = arith.constant 0 : i32
    return %c0_i32, %c0_i32_0 : i32, i32
  }
  func.func @transform_3(%arg0: i32) -> (i32, i32) {
    %c0_i32 = arith.constant 0 : i32
    %c0_i32_0 = arith.constant 0 : i32
    %c0_i32_1 = arith.constant 0 : i32
    return %c0_i32, %c0_i32_0 : i32, i32
  }
  func.func @transform_4(%arg0: i32) -> (i32, i32) {
    %c0_i32 = arith.constant 0 : i32
    %c0_i32_0 = arith.constant 0 : i32
    return %arg0, %c0_i32 : i32, i32
  }
}

module attributes {stable_mosaic.version = 11 : i64} {
  func.func @_mm_bn_act_kernel(%arg0: i32, %arg1: memref<128x64xbf16, #tpu.memory_space<vmem>>, %arg2: memref<64x4xbf16, #tpu.memory_space<vmem>>, %arg3: memref<1x4xf32, #tpu.memory_space<vmem>>, %arg4: memref<1x4xf32, #tpu.memory_space<vmem>>, %arg5: memref<128x4xbf16, #tpu.memory_space<vmem>>) attributes {dimension_semantics = [#tpu.dimension_semantics<parallel>], iteration_bounds = array<i64: 1>, scalar_prefetch = 0 : i64, scratch_operands = 0 : i64, tpu.core_type = #tpu.core_type<tc>, window_params = [{transform_indices = @transform_0, window_bounds = array<i64: 128, 64>}, {pipeline_mode = #tpu.pipeline_mode<synchronous>, transform_indices = @transform_1, window_bounds = array<i64: 64, 4>}, {pipeline_mode = #tpu.pipeline_mode<synchronous>, transform_indices = @transform_2, window_bounds = array<i64: 1, 4>}, {pipeline_mode = #tpu.pipeline_mode<synchronous>, transform_indices = @transform_3, window_bounds = array<i64: 1, 4>}, {transform_indices = @transform_4, window_bounds = array<i64: 128, 4>}]} {
    %c0 = arith.constant 0 : index
    %c0_0 = arith.constant 0 : index
    %0 = vector.load %arg1[%c0, %c0_0] : memref<128x64xbf16, #tpu.memory_space<vmem>>, vector<128x64xbf16>
    %c0_1 = arith.constant 0 : index
    %c0_2 = arith.constant 0 : index
    %1 = vector.load %arg2[%c0_1, %c0_2] : memref<64x4xbf16, #tpu.memory_space<vmem>>, vector<64x4xbf16>
    %cst = arith.constant dense<0.000000e+00> : vector<128x4xf32>
    %2 = tpu.matmul %0, %1, %cst {dimension_numbers = #tpu.dot_dimension_numbers<[1], [0], [0], [1], [0, 0, 1, 1], [], []>} : vector<128x64xbf16>, vector<64x4xbf16>, vector<128x4xf32> -> vector<128x4xf32>
    %c0_3 = arith.constant 0 : index
    %c0_4 = arith.constant 0 : index
    %3 = vector.load %arg3[%c0_3, %c0_4] : memref<1x4xf32, #tpu.memory_space<vmem>>, vector<1x4xf32>
    %4 = vector.broadcast %3 : vector<1x4xf32> to vector<128x4xf32>
    %5 = arith.mulf %2, %4 : vector<128x4xf32>
    %c0_5 = arith.constant 0 : index
    %c0_6 = arith.constant 0 : index
    %6 = vector.load %arg4[%c0_5, %c0_6] : memref<1x4xf32, #tpu.memory_space<vmem>>, vector<1x4xf32>
    %7 = vector.broadcast %6 : vector<1x4xf32> to vector<128x4xf32>
    %8 = arith.addf %5, %7 : vector<128x4xf32>
    %cst_7 = arith.constant 0.000000e+00 : f32
    %9 = vector.broadcast %cst_7 : f32 to vector<128x4xf32>
    %10 = arith.cmpf oge, %8, %9 : vector<128x4xf32>
    %cst_8 = arith.constant 2.500000e-01 : f32
    %11 = vector.broadcast %cst_8 : f32 to vector<128x4xf32>
    %12 = arith.mulf %11, %8 : vector<128x4xf32>
    %13 = arith.select %10, %8, %12 : vector<128x4xi1>, vector<128x4xf32>
    %14 = arith.truncf %13 : vector<128x4xf32> to vector<128x4xbf16>
    %c0_9 = arith.constant 0 : index
    %c0_10 = arith.constant 0 : index
    %15 = vector.load %arg5[%c0_9, %c0_10] : memref<128x4xbf16, #tpu.memory_space<vmem>>, vector<128x4xbf16>
    tpu.vector_store %arg5[%c0_9, %c0_10], %14 {strides = array<i32>} : memref<128x4xbf16, #tpu.memory_space<vmem>>, vector<128x4xbf16>,
    return
  }
  func.func @transform_0(%arg0: i32) -> (i32, i32) {
    %c0_i32 = arith.constant 0 : i32
    %c0_i32_0 = arith.constant 0 : i32
    return %arg0, %c0_i32 : i32, i32
  }
  func.func @transform_1(%arg0: i32) -> (i32, i32) {
    %c0_i32 = arith.constant 0 : i32
    %c0_i32_0 = arith.constant 0 : i32
    %c0_i32_1 = arith.constant 0 : i32
    return %c0_i32, %c0_i32_0 : i32, i32
  }
  func.func @transform_2(%arg0: i32) -> (i32, i32) {
    %c0_i32 = arith.constant 0 : i32
    %c0_i32_0 = arith.constant 0 : i32
    %c0_i32_1 = arith.constant 0 : i32
    return %c0_i32, %c0_i32_0 : i32, i32
  }
  func.func @transform_3(%arg0: i32) -> (i32, i32) {
    %c0_i32 = arith.constant 0 : i32
    %c0_i32_0 = arith.constant 0 : i32
    %c0_i32_1 = arith.constant 0 : i32
    return %c0_i32, %c0_i32_0 : i32, i32
  }
  func.func @transform_4(%arg0: i32) -> (i32, i32) {
    %c0_i32 = arith.constant 0 : i32
    %c0_i32_0 = arith.constant 0 : i32
    return %arg0, %c0_i32 : i32, i32
  }
}

module attributes {stable_mosaic.version = 11 : i64} {
  func.func @_mm_bn_act_kernel(%arg0: i32, %arg1: memref<128x4xbf16, #tpu.memory_space<vmem>>, %arg2: memref<4x16xbf16, #tpu.memory_space<vmem>>, %arg3: memref<1x16xf32, #tpu.memory_space<vmem>>, %arg4: memref<1x16xf32, #tpu.memory_space<vmem>>, %arg5: memref<128x16xbf16, #tpu.memory_space<vmem>>) attributes {dimension_semantics = [#tpu.dimension_semantics<parallel>], iteration_bounds = array<i64: 1>, scalar_prefetch = 0 : i64, scratch_operands = 0 : i64, tpu.core_type = #tpu.core_type<tc>, window_params = [{transform_indices = @transform_0, window_bounds = array<i64: 128, 4>}, {pipeline_mode = #tpu.pipeline_mode<synchronous>, transform_indices = @transform_1, window_bounds = array<i64: 4, 16>}, {pipeline_mode = #tpu.pipeline_mode<synchronous>, transform_indices = @transform_2, window_bounds = array<i64: 1, 16>}, {pipeline_mode = #tpu.pipeline_mode<synchronous>, transform_indices = @transform_3, window_bounds = array<i64: 1, 16>}, {transform_indices = @transform_4, window_bounds = array<i64: 128, 16>}]} {
    %c0 = arith.constant 0 : index
    %c0_0 = arith.constant 0 : index
    %0 = vector.load %arg1[%c0, %c0_0] : memref<128x4xbf16, #tpu.memory_space<vmem>>, vector<128x4xbf16>
    %c0_1 = arith.constant 0 : index
    %c0_2 = arith.constant 0 : index
    %1 = vector.load %arg2[%c0_1, %c0_2] : memref<4x16xbf16, #tpu.memory_space<vmem>>, vector<4x16xbf16>
    %cst = arith.constant dense<0.000000e+00> : vector<128x16xf32>
    %2 = tpu.matmul %0, %1, %cst {dimension_numbers = #tpu.dot_dimension_numbers<[1], [0], [0], [1], [0, 0, 1, 1], [], []>} : vector<128x4xbf16>, vector<4x16xbf16>, vector<128x16xf32> -> vector<128x16xf32>
    %c0_3 = arith.constant 0 : index
    %c0_4 = arith.constant 0 : index
    %3 = vector.load %arg3[%c0_3, %c0_4] : memref<1x16xf32, #tpu.memory_space<vmem>>, vector<1x16xf32>
    %4 = vector.broadcast %3 : vector<1x16xf32> to vector<128x16xf32>
    %5 = arith.mulf %2, %4 : vector<128x16xf32>
    %c0_5 = arith.constant 0 : index
    %c0_6 = arith.constant 0 : index
    %6 = vector.load %arg4[%c0_5, %c0_6] : memref<1x16xf32, #tpu.memory_space<vmem>>, vector<1x16xf32>
    %7 = vector.broadcast %6 : vector<1x16xf32> to vector<128x16xf32>
    %8 = arith.addf %5, %7 : vector<128x16xf32>
    %cst_7 = arith.constant 0.000000e+00 : f32
    %9 = vector.broadcast %cst_7 : f32 to vector<128x16xf32>
    %10 = arith.cmpf oge, %8, %9 : vector<128x16xf32>
    %cst_8 = arith.constant 2.500000e-01 : f32
    %11 = vector.broadcast %cst_8 : f32 to vector<128x16xf32>
    %12 = arith.mulf %11, %8 : vector<128x16xf32>
    %13 = arith.select %10, %8, %12 : vector<128x16xi1>, vector<128x16xf32>
    %14 = arith.truncf %13 : vector<128x16xf32> to vector<128x16xbf16>
    %c0_9 = arith.constant 0 : index
    %c0_10 = arith.constant 0 : index
    %15 = vector.load %arg5[%c0_9, %c0_10] : memref<128x16xbf16, #tpu.memory_space<vmem>>, vector<128x16xbf16>
    tpu.vector_store %arg5[%c0_9, %c0_10], %14 {strides = array<i32>} : memref<128x16xbf16, #tpu.memory_space<vmem>>, vector<128x16xbf16>,
    return
  }
  func.func @transform_0(%arg0: i32) -> (i32, i32) {
    %c0_i32 = arith.constant 0 : i32
    %c0_i32_0 = arith.constant 0 : i32
    return %arg0, %c0_i32 : i32, i32
  }
  func.func @transform_1(%arg0: i32) -> (i32, i32) {
    %c0_i32 = arith.constant 0 : i32
    %c0_i32_0 = arith.constant 0 : i32
    %c0_i32_1 = arith.constant 0 : i32
    return %c0_i32, %c0_i32_0 : i32, i32
  }
  func.func @transform_2(%arg0: i32) -> (i32, i32) {
    %c0_i32 = arith.constant 0 : i32
    %c0_i32_0 = arith.constant 0 : i32
    %c0_i32_1 = arith.constant 0 : i32
    return %c0_i32, %c0_i32_0 : i32, i32
  }
  func.func @transform_3(%arg0: i32) -> (i32, i32) {
    %c0_i32 = arith.constant 0 : i32
    %c0_i32_0 = arith.constant 0 : i32
    %c0_i32_1 = arith.constant 0 : i32
    return %c0_i32, %c0_i32_0 : i32, i32
  }
  func.func @transform_4(%arg0: i32) -> (i32, i32) {
    %c0_i32 = arith.constant 0 : i32
    %c0_i32_0 = arith.constant 0 : i32
    return %arg0, %c0_i32 : i32, i32
  }
}

module attributes {stable_mosaic.version = 11 : i64} {
  func.func @_mm_bn_act_kernel(%arg0: i32, %arg1: memref<256x4xbf16, #tpu.memory_space<vmem>>, %arg2: memref<4x16xbf16, #tpu.memory_space<vmem>>, %arg3: memref<1x16xf32, #tpu.memory_space<vmem>>, %arg4: memref<1x16xf32, #tpu.memory_space<vmem>>, %arg5: memref<256x16xbf16, #tpu.memory_space<vmem>>, %arg6: memref<256x16xbf16, #tpu.memory_space<vmem>>) attributes {dimension_semantics = [#tpu.dimension_semantics<parallel>], iteration_bounds = array<i64: 2>, scalar_prefetch = 0 : i64, scratch_operands = 0 : i64, tpu.core_type = #tpu.core_type<tc>, window_params = [{transform_indices = @transform_0, window_bounds = array<i64: 256, 4>}, {pipeline_mode = #tpu.pipeline_mode<synchronous>, transform_indices = @transform_1, window_bounds = array<i64: 4, 16>}, {pipeline_mode = #tpu.pipeline_mode<synchronous>, transform_indices = @transform_2, window_bounds = array<i64: 1, 16>}, {pipeline_mode = #tpu.pipeline_mode<synchronous>, transform_indices = @transform_3, window_bounds = array<i64: 1, 16>}, {transform_indices = @transform_4, window_bounds = array<i64: 256, 16>}, {transform_indices = @transform_5, window_bounds = array<i64: 256, 16>}]} {
    %c0 = arith.constant 0 : index
    %c0_0 = arith.constant 0 : index
    %0 = vector.load %arg1[%c0, %c0_0] : memref<256x4xbf16, #tpu.memory_space<vmem>>, vector<256x4xbf16>
    %c0_1 = arith.constant 0 : index
    %c0_2 = arith.constant 0 : index
    %1 = vector.load %arg2[%c0_1, %c0_2] : memref<4x16xbf16, #tpu.memory_space<vmem>>, vector<4x16xbf16>
    %cst = arith.constant dense<0.000000e+00> : vector<256x16xf32>
    %2 = tpu.matmul %0, %1, %cst {dimension_numbers = #tpu.dot_dimension_numbers<[1], [0], [0], [1], [0, 0, 1, 1], [], []>} : vector<256x4xbf16>, vector<4x16xbf16>, vector<256x16xf32> -> vector<256x16xf32>
    %c0_3 = arith.constant 0 : index
    %c0_4 = arith.constant 0 : index
    %3 = vector.load %arg3[%c0_3, %c0_4] : memref<1x16xf32, #tpu.memory_space<vmem>>, vector<1x16xf32>
    %4 = vector.broadcast %3 : vector<1x16xf32> to vector<256x16xf32>
    %5 = arith.mulf %2, %4 : vector<256x16xf32>
    %c0_5 = arith.constant 0 : index
    %c0_6 = arith.constant 0 : index
    %6 = vector.load %arg4[%c0_5, %c0_6] : memref<1x16xf32, #tpu.memory_space<vmem>>, vector<1x16xf32>
    %7 = vector.broadcast %6 : vector<1x16xf32> to vector<256x16xf32>
    %8 = arith.addf %5, %7 : vector<256x16xf32>
    %c0_7 = arith.constant 0 : index
    %c0_8 = arith.constant 0 : index
    %9 = vector.load %arg5[%c0_7, %c0_8] : memref<256x16xbf16, #tpu.memory_space<vmem>>, vector<256x16xbf16>
    %10 = arith.extf %9 : vector<256x16xbf16> to vector<256x16xf32>
    %11 = arith.addf %8, %10 : vector<256x16xf32>
    %cst_9 = arith.constant 0.000000e+00 : f32
    %12 = vector.broadcast %cst_9 : f32 to vector<256x16xf32>
    %13 = arith.cmpf oge, %11, %12 : vector<256x16xf32>
    %cst_10 = arith.constant 2.500000e-01 : f32
    %14 = vector.broadcast %cst_10 : f32 to vector<256x16xf32>
    %15 = arith.mulf %14, %11 : vector<256x16xf32>
    %16 = arith.select %13, %11, %15 : vector<256x16xi1>, vector<256x16xf32>
    %17 = arith.truncf %16 : vector<256x16xf32> to vector<256x16xbf16>
    %c0_11 = arith.constant 0 : index
    %c0_12 = arith.constant 0 : index
    %18 = vector.load %arg6[%c0_11, %c0_12] : memref<256x16xbf16, #tpu.memory_space<vmem>>, vector<256x16xbf16>
    tpu.vector_store %arg6[%c0_11, %c0_12], %17 {strides = array<i32>} : memref<256x16xbf16, #tpu.memory_space<vmem>>, vector<256x16xbf16>,
    return
  }
  func.func @transform_0(%arg0: i32) -> (i32, i32) {
    %c0_i32 = arith.constant 0 : i32
    %c0_i32_0 = arith.constant 0 : i32
    return %arg0, %c0_i32 : i32, i32
  }
  func.func @transform_1(%arg0: i32) -> (i32, i32) {
    %c0_i32 = arith.constant 0 : i32
    %c0_i32_0 = arith.constant 0 : i32
    %c0_i32_1 = arith.constant 0 : i32
    return %c0_i32, %c0_i32_0 : i32, i32
  }
  func.func @transform_2(%arg0: i32) -> (i32, i32) {
    %c0_i32 = arith.constant 0 : i32
    %c0_i32_0 = arith.constant 0 : i32
    %c0_i32_1 = arith.constant 0 : i32
    return %c0_i32, %c0_i32_0 : i32, i32
  }
  func.func @transform_3(%arg0: i32) -> (i32, i32) {
    %c0_i32 = arith.constant 0 : i32
    %c0_i32_0 = arith.constant 0 : i32
    %c0_i32_1 = arith.constant 0 : i32
    return %c0_i32, %c0_i32_0 : i32, i32
  }
  func.func @transform_4(%arg0: i32) -> (i32, i32) {
    %c0_i32 = arith.constant 0 : i32
    %c0_i32_0 = arith.constant 0 : i32
    return %arg0, %c0_i32 : i32, i32
  }
  func.func @transform_5(%arg0: i32) -> (i32, i32) {
    %c0_i32 = arith.constant 0 : i32
    %c0_i32_0 = arith.constant 0 : i32
    return %arg0, %c0_i32 : i32, i32
  }
}

module attributes {stable_mosaic.version = 11 : i64} {
  func.func @_mm_bn_act_kernel(%arg0: i32, %arg1: memref<256x16xbf16, #tpu.memory_space<vmem>>, %arg2: memref<16x4xbf16, #tpu.memory_space<vmem>>, %arg3: memref<1x4xf32, #tpu.memory_space<vmem>>, %arg4: memref<1x4xf32, #tpu.memory_space<vmem>>, %arg5: memref<256x4xbf16, #tpu.memory_space<vmem>>) attributes {dimension_semantics = [#tpu.dimension_semantics<parallel>], iteration_bounds = array<i64: 2>, scalar_prefetch = 0 : i64, scratch_operands = 0 : i64, tpu.core_type = #tpu.core_type<tc>, window_params = [{transform_indices = @transform_0, window_bounds = array<i64: 256, 16>}, {pipeline_mode = #tpu.pipeline_mode<synchronous>, transform_indices = @transform_1, window_bounds = array<i64: 16, 4>}, {pipeline_mode = #tpu.pipeline_mode<synchronous>, transform_indices = @transform_2, window_bounds = array<i64: 1, 4>}, {pipeline_mode = #tpu.pipeline_mode<synchronous>, transform_indices = @transform_3, window_bounds = array<i64: 1, 4>}, {transform_indices = @transform_4, window_bounds = array<i64: 256, 4>}]} {
    %c0 = arith.constant 0 : index
    %c0_0 = arith.constant 0 : index
    %0 = vector.load %arg1[%c0, %c0_0] : memref<256x16xbf16, #tpu.memory_space<vmem>>, vector<256x16xbf16>
    %c0_1 = arith.constant 0 : index
    %c0_2 = arith.constant 0 : index
    %1 = vector.load %arg2[%c0_1, %c0_2] : memref<16x4xbf16, #tpu.memory_space<vmem>>, vector<16x4xbf16>
    %cst = arith.constant dense<0.000000e+00> : vector<256x4xf32>
    %2 = tpu.matmul %0, %1, %cst {dimension_numbers = #tpu.dot_dimension_numbers<[1], [0], [0], [1], [0, 0, 1, 1], [], []>} : vector<256x16xbf16>, vector<16x4xbf16>, vector<256x4xf32> -> vector<256x4xf32>
    %c0_3 = arith.constant 0 : index
    %c0_4 = arith.constant 0 : index
    %3 = vector.load %arg3[%c0_3, %c0_4] : memref<1x4xf32, #tpu.memory_space<vmem>>, vector<1x4xf32>
    %4 = vector.broadcast %3 : vector<1x4xf32> to vector<256x4xf32>
    %5 = arith.mulf %2, %4 : vector<256x4xf32>
    %c0_5 = arith.constant 0 : index
    %c0_6 = arith.constant 0 : index
    %6 = vector.load %arg4[%c0_5, %c0_6] : memref<1x4xf32, #tpu.memory_space<vmem>>, vector<1x4xf32>
    %7 = vector.broadcast %6 : vector<1x4xf32> to vector<256x4xf32>
    %8 = arith.addf %5, %7 : vector<256x4xf32>
    %cst_7 = arith.constant 0.000000e+00 : f32
    %9 = vector.broadcast %cst_7 : f32 to vector<256x4xf32>
    %10 = arith.cmpf oge, %8, %9 : vector<256x4xf32>
    %cst_8 = arith.constant 2.500000e-01 : f32
    %11 = vector.broadcast %cst_8 : f32 to vector<256x4xf32>
    %12 = arith.mulf %11, %8 : vector<256x4xf32>
    %13 = arith.select %10, %8, %12 : vector<256x4xi1>, vector<256x4xf32>
    %14 = arith.truncf %13 : vector<256x4xf32> to vector<256x4xbf16>
    %c0_9 = arith.constant 0 : index
    %c0_10 = arith.constant 0 : index
    %15 = vector.load %arg5[%c0_9, %c0_10] : memref<256x4xbf16, #tpu.memory_space<vmem>>, vector<256x4xbf16>
    tpu.vector_store %arg5[%c0_9, %c0_10], %14 {strides = array<i32>} : memref<256x4xbf16, #tpu.memory_space<vmem>>, vector<256x4xbf16>,
    return
  }
  func.func @transform_0(%arg0: i32) -> (i32, i32) {
    %c0_i32 = arith.constant 0 : i32
    %c0_i32_0 = arith.constant 0 : i32
    return %arg0, %c0_i32 : i32, i32
  }
  func.func @transform_1(%arg0: i32) -> (i32, i32) {
    %c0_i32 = arith.constant 0 : i32
    %c0_i32_0 = arith.constant 0 : i32
    %c0_i32_1 = arith.constant 0 : i32
    return %c0_i32, %c0_i32_0 : i32, i32
  }
  func.func @transform_2(%arg0: i32) -> (i32, i32) {
    %c0_i32 = arith.constant 0 : i32
    %c0_i32_0 = arith.constant 0 : i32
    %c0_i32_1 = arith.constant 0 : i32
    return %c0_i32, %c0_i32_0 : i32, i32
  }
  func.func @transform_3(%arg0: i32) -> (i32, i32) {
    %c0_i32 = arith.constant 0 : i32
    %c0_i32_0 = arith.constant 0 : i32
    %c0_i32_1 = arith.constant 0 : i32
    return %c0_i32, %c0_i32_0 : i32, i32
  }
  func.func @transform_4(%arg0: i32) -> (i32, i32) {
    %c0_i32 = arith.constant 0 : i32
    %c0_i32_0 = arith.constant 0 : i32
    return %arg0, %c0_i32 : i32, i32
  }
}

module attributes {stable_mosaic.version = 11 : i64} {
  func.func @_mm_bn_act_kernel(%arg0: i32, %arg1: memref<256x36xbf16, #tpu.memory_space<vmem>>, %arg2: memref<36x4xbf16, #tpu.memory_space<vmem>>, %arg3: memref<1x4xf32, #tpu.memory_space<vmem>>, %arg4: memref<1x4xf32, #tpu.memory_space<vmem>>, %arg5: memref<256x4xbf16, #tpu.memory_space<vmem>>) attributes {dimension_semantics = [#tpu.dimension_semantics<parallel>], iteration_bounds = array<i64: 2>, scalar_prefetch = 0 : i64, scratch_operands = 0 : i64, tpu.core_type = #tpu.core_type<tc>, window_params = [{transform_indices = @transform_0, window_bounds = array<i64: 256, 36>}, {pipeline_mode = #tpu.pipeline_mode<synchronous>, transform_indices = @transform_1, window_bounds = array<i64: 36, 4>}, {pipeline_mode = #tpu.pipeline_mode<synchronous>, transform_indices = @transform_2, window_bounds = array<i64: 1, 4>}, {pipeline_mode = #tpu.pipeline_mode<synchronous>, transform_indices = @transform_3, window_bounds = array<i64: 1, 4>}, {transform_indices = @transform_4, window_bounds = array<i64: 256, 4>}]} {
    %c0 = arith.constant 0 : index
    %c0_0 = arith.constant 0 : index
    %0 = vector.load %arg1[%c0, %c0_0] : memref<256x36xbf16, #tpu.memory_space<vmem>>, vector<256x36xbf16>
    %c0_1 = arith.constant 0 : index
    %c0_2 = arith.constant 0 : index
    %1 = vector.load %arg2[%c0_1, %c0_2] : memref<36x4xbf16, #tpu.memory_space<vmem>>, vector<36x4xbf16>
    %cst = arith.constant dense<0.000000e+00> : vector<256x4xf32>
    %2 = tpu.matmul %0, %1, %cst {dimension_numbers = #tpu.dot_dimension_numbers<[1], [0], [0], [1], [0, 0, 1, 1], [], []>} : vector<256x36xbf16>, vector<36x4xbf16>, vector<256x4xf32> -> vector<256x4xf32>
    %c0_3 = arith.constant 0 : index
    %c0_4 = arith.constant 0 : index
    %3 = vector.load %arg3[%c0_3, %c0_4] : memref<1x4xf32, #tpu.memory_space<vmem>>, vector<1x4xf32>
    %4 = vector.broadcast %3 : vector<1x4xf32> to vector<256x4xf32>
    %5 = arith.mulf %2, %4 : vector<256x4xf32>
    %c0_5 = arith.constant 0 : index
    %c0_6 = arith.constant 0 : index
    %6 = vector.load %arg4[%c0_5, %c0_6] : memref<1x4xf32, #tpu.memory_space<vmem>>, vector<1x4xf32>
    %7 = vector.broadcast %6 : vector<1x4xf32> to vector<256x4xf32>
    %8 = arith.addf %5, %7 : vector<256x4xf32>
    %cst_7 = arith.constant 0.000000e+00 : f32
    %9 = vector.broadcast %cst_7 : f32 to vector<256x4xf32>
    %10 = arith.cmpf oge, %8, %9 : vector<256x4xf32>
    %cst_8 = arith.constant 2.500000e-01 : f32
    %11 = vector.broadcast %cst_8 : f32 to vector<256x4xf32>
    %12 = arith.mulf %11, %8 : vector<256x4xf32>
    %13 = arith.select %10, %8, %12 : vector<256x4xi1>, vector<256x4xf32>
    %14 = arith.truncf %13 : vector<256x4xf32> to vector<256x4xbf16>
    %c0_9 = arith.constant 0 : index
    %c0_10 = arith.constant 0 : index
    %15 = vector.load %arg5[%c0_9, %c0_10] : memref<256x4xbf16, #tpu.memory_space<vmem>>, vector<256x4xbf16>
    tpu.vector_store %arg5[%c0_9, %c0_10], %14 {strides = array<i32>} : memref<256x4xbf16, #tpu.memory_space<vmem>>, vector<256x4xbf16>,
    return
  }
  func.func @transform_0(%arg0: i32) -> (i32, i32) {
    %c0_i32 = arith.constant 0 : i32
    %c0_i32_0 = arith.constant 0 : i32
    return %arg0, %c0_i32 : i32, i32
  }
  func.func @transform_1(%arg0: i32) -> (i32, i32) {
    %c0_i32 = arith.constant 0 : i32
    %c0_i32_0 = arith.constant 0 : i32
    %c0_i32_1 = arith.constant 0 : i32
    return %c0_i32, %c0_i32_0 : i32, i32
  }
  func.func @transform_2(%arg0: i32) -> (i32, i32) {
    %c0_i32 = arith.constant 0 : i32
    %c0_i32_0 = arith.constant 0 : i32
    %c0_i32_1 = arith.constant 0 : i32
    return %c0_i32, %c0_i32_0 : i32, i32
  }
  func.func @transform_3(%arg0: i32) -> (i32, i32) {
    %c0_i32 = arith.constant 0 : i32
    %c0_i32_0 = arith.constant 0 : i32
    %c0_i32_1 = arith.constant 0 : i32
    return %c0_i32, %c0_i32_0 : i32, i32
  }
  func.func @transform_4(%arg0: i32) -> (i32, i32) {
    %c0_i32 = arith.constant 0 : i32
    %c0_i32_0 = arith.constant 0 : i32
    return %arg0, %c0_i32 : i32, i32
  }
}

module attributes {stable_mosaic.version = 11 : i64} {
  func.func @_mm_bn_act_kernel(%arg0: i32, %arg1: memref<256x16xbf16, #tpu.memory_space<vmem>>, %arg2: memref<16x16xbf16, #tpu.memory_space<vmem>>, %arg3: memref<1x16xf32, #tpu.memory_space<vmem>>, %arg4: memref<1x16xf32, #tpu.memory_space<vmem>>, %arg5: memref<256x16xf32, #tpu.memory_space<vmem>>) attributes {dimension_semantics = [#tpu.dimension_semantics<parallel>], iteration_bounds = array<i64: 2>, scalar_prefetch = 0 : i64, scratch_operands = 0 : i64, tpu.core_type = #tpu.core_type<tc>, window_params = [{transform_indices = @transform_0, window_bounds = array<i64: 256, 16>}, {pipeline_mode = #tpu.pipeline_mode<synchronous>, transform_indices = @transform_1, window_bounds = array<i64: 16, 16>}, {pipeline_mode = #tpu.pipeline_mode<synchronous>, transform_indices = @transform_2, window_bounds = array<i64: 1, 16>}, {pipeline_mode = #tpu.pipeline_mode<synchronous>, transform_indices = @transform_3, window_bounds = array<i64: 1, 16>}, {transform_indices = @transform_4, window_bounds = array<i64: 256, 16>}]} {
    %c0 = arith.constant 0 : index
    %c0_0 = arith.constant 0 : index
    %0 = vector.load %arg1[%c0, %c0_0] : memref<256x16xbf16, #tpu.memory_space<vmem>>, vector<256x16xbf16>
    %c0_1 = arith.constant 0 : index
    %c0_2 = arith.constant 0 : index
    %1 = vector.load %arg2[%c0_1, %c0_2] : memref<16x16xbf16, #tpu.memory_space<vmem>>, vector<16x16xbf16>
    %cst = arith.constant dense<0.000000e+00> : vector<256x16xf32>
    %2 = tpu.matmul %0, %1, %cst {dimension_numbers = #tpu.dot_dimension_numbers<[1], [0], [0], [1], [0, 0, 1, 1], [], []>} : vector<256x16xbf16>, vector<16x16xbf16>, vector<256x16xf32> -> vector<256x16xf32>
    %c0_3 = arith.constant 0 : index
    %c0_4 = arith.constant 0 : index
    %3 = vector.load %arg3[%c0_3, %c0_4] : memref<1x16xf32, #tpu.memory_space<vmem>>, vector<1x16xf32>
    %4 = vector.broadcast %3 : vector<1x16xf32> to vector<256x16xf32>
    %5 = arith.mulf %2, %4 : vector<256x16xf32>
    %c0_5 = arith.constant 0 : index
    %c0_6 = arith.constant 0 : index
    %6 = vector.load %arg4[%c0_5, %c0_6] : memref<1x16xf32, #tpu.memory_space<vmem>>, vector<1x16xf32>
    %7 = vector.broadcast %6 : vector<1x16xf32> to vector<256x16xf32>
    %8 = arith.addf %5, %7 : vector<256x16xf32>
    %c0_7 = arith.constant 0 : index
    %c0_8 = arith.constant 0 : index
    %9 = vector.load %arg5[%c0_7, %c0_8] : memref<256x16xf32, #tpu.memory_space<vmem>>, vector<256x16xf32>
    tpu.vector_store %arg5[%c0_7, %c0_8], %8 {strides = array<i32>} : memref<256x16xf32, #tpu.memory_space<vmem>>, vector<256x16xf32>,
    return
  }
  func.func @transform_0(%arg0: i32) -> (i32, i32) {
    %c0_i32 = arith.constant 0 : i32
    %c0_i32_0 = arith.constant 0 : i32
    return %arg0, %c0_i32 : i32, i32
  }
  func.func @transform_1(%arg0: i32) -> (i32, i32) {
    %c0_i32 = arith.constant 0 : i32
    %c0_i32_0 = arith.constant 0 : i32
    %c0_i32_1 = arith.constant 0 : i32
    return %c0_i32, %c0_i32_0 : i32, i32
  }
  func.func @transform_2(%arg0: i32) -> (i32, i32) {
    %c0_i32 = arith.constant 0 : i32
    %c0_i32_0 = arith.constant 0 : i32
    %c0_i32_1 = arith.constant 0 : i32
    return %c0_i32, %c0_i32_0 : i32, i32
  }
  func.func @transform_3(%arg0: i32) -> (i32, i32) {
    %c0_i32 = arith.constant 0 : i32
    %c0_i32_0 = arith.constant 0 : i32
    %c0_i32_1 = arith.constant 0 : i32
    return %c0_i32, %c0_i32_0 : i32, i32
  }
  func.func @transform_4(%arg0: i32) -> (i32, i32) {
    %c0_i32 = arith.constant 0 : i32
    %c0_i32_0 = arith.constant 0 : i32
    return %arg0, %c0_i32 : i32, i32
  }
}

</mosaic_0001>

<llo_original>
// kernel: enet_forward.88
$region0: #{enet_forward.88}
  #allocation0 [shape = 'u32[]', space=smem, size = 0x4, offset = 0x4, fixed_abs, tag = 'smem constant byte address 0x4 - core index']
  #allocation1 [shape = 'u32[144,128]{1,0:T(1,128)}', space=vmem, size = 0x12000, scoped, tag = 'internal scratch']
  %s0 = inlined_call_operand.vmem [shape: bf16[512,30], index: 0, kind: input, shape index: {}]
  %s1 = inlined_call_operand.vmem [shape: bf16[30,16], index: 1, kind: input, shape index: {}]
  %s2 = inlined_call_operand.vmem [shape: f32[1,16], index: 2, kind: input, shape index: {}]
  %s3 = inlined_call_operand.vmem [shape: f32[1,16], index: 3, kind: input, shape index: {}]
  %s4 = inlined_call_operand.vmem [shape: bf16[512,16], index: 4, kind: output, shape index: {}]
  %s5 = sld [smem:[#allocation0]]
  $region49: #{enet_forward.88} parent=0
    _
  %s7 = ssub.s32 1, %s5
  %s8 = scalar_select 0, %s7, %s5
  loop: start=0, step=1, limit=4
  $region2: #{enet_forward.88} parent=0 // loop_pre_header
    _
  $region3: #{enet_forward.88} parent=0 // loop_header
    %s10 = sphi 0, %s14
    %p11 = scmp.ge.s32.totalorder %s10, 4
    %s20 = sphi 0, %s22
    %s23 = sphi 0, %s20
    %s24 = sphi 0, %s23
    %s40 = sphi 0, %s24
    %s44 = sphi 0, %s44
    %s46 = sphi 0, %s44
    %s47 = sphi 0, %s46
    %s61 = sphi 0, %s47
    %s65 = sphi 0, %s65
    %s67 = sphi 0, %s65
    %s68 = sphi 0, %s67
    %s82 = sphi 0, %s68
    %s86 = sphi 0, %s86
    %s88 = sphi 0, %s86
    %s89 = sphi 0, %s88
    %s103 = sphi 0, %s89
    %s109 = sphi 0, %s111
    %s112 = sphi 0, %s109
    %s113 = sphi 0, %s112
    %s129 = sphi 0, %s113
  $region4: #{enet_forward.88} parent=0 // loop_header_branch
    %13 = sbr.rel (%p11) target = $region8
  $region5: #{enet_forward.88} parent=0 // loop_body
    %s15 = ssub.s32 %s10, 1
    %s16 = ssub.s32 %s10, 2
    %s17 = sadd.s32 %s10, 1
    %s18 = ssub.s32 %s10, %s17
    %p19 = scmp.eq.s32.totalorder %s18, 0
    %s21 = sadd.s32 %s20, 1
    %s22 = scalar_select %p19, %s20, %s21
    %p25 = pneg %p19
    %p26 = scmp.eq.s32.totalorder %s10, 1
    %p27 = por %p25, %p26
    %p28 = scmp.ne.s32.totalorder %s20, %s23
    %p29 = scmp.eq.s32.totalorder %s10, 0
    %p30 = por %p28, %p29
    %p31 = scmp.ne.s32.totalorder %s20, %s23
    %p32 = scmp.eq.s32.totalorder %s15, 1
    %p33 = por %p31, %p32
    %p34 = scmp.ne.s32.totalorder %s23, %s24
    %p35 = scmp.eq.s32.totalorder %s15, 0
    %p36 = por %p34, %p35
    %p37 = scmp.ne.s32.totalorder %s23, %s24
    %p38 = scmp.eq.s32.totalorder %s16, 1
    %p39 = por %p37, %p38
    %p41 = scmp.ne.s32.totalorder %s24, %s40
    %p42 = scmp.eq.s32.totalorder %s16, 0
    %p43 = por %p41, %p42
    %s45 = sadd.s32 %s44, 1
    %p48 = scmp.eq.s32.totalorder %s10, 1
    %p49 = scmp.ne.s32.totalorder %s44, %s46
    %p50 = scmp.eq.s32.totalorder %s10, 0
    %p51 = por %p49, %p50
    %p52 = scmp.ne.s32.totalorder %s44, %s46
    %p53 = scmp.eq.s32.totalorder %s15, 1
    %p54 = por %p52, %p53
    %p55 = scmp.ne.s32.totalorder %s46, %s47
    %p56 = scmp.eq.s32.totalorder %s15, 0
    %p57 = por %p55, %p56
    %p58 = scmp.ne.s32.totalorder %s46, %s47
    %p59 = scmp.eq.s32.totalorder %s16, 1
    %p60 = por %p58, %p59
    %p62 = scmp.ne.s32.totalorder %s47, %s61
    %p63 = scmp.eq.s32.totalorder %s16, 0
    %p64 = por %p62, %p63
    %s66 = sadd.s32 %s65, 1
    %p69 = scmp.eq.s32.totalorder %s10, 1
    %p70 = scmp.ne.s32.totalorder %s65, %s67
    %p71 = scmp.eq.s32.totalorder %s10, 0
    %p72 = por %p70, %p71
    %p73 = scmp.ne.s32.totalorder %s65, %s67
    %p74 = scmp.eq.s32.totalorder %s15, 1
    %p75 = por %p73, %p74
    %p76 = scmp.ne.s32.totalorder %s67, %s68
    %p77 = scmp.eq.s32.totalorder %s15, 0
    %p78 = por %p76, %p77
    %p79 = scmp.ne.s32.totalorder %s67, %s68
    %p80 = scmp.eq.s32.totalorder %s16, 1
    %p81 = por %p79, %p80
    %p83 = scmp.ne.s32.totalorder %s68, %s82
    %p84 = scmp.eq.s32.totalorder %s16, 0
    %p85 = por %p83, %p84
    %s87 = sadd.s32 %s86, 1
    %p90 = scmp.eq.s32.totalorder %s10, 1
    %p91 = scmp.ne.s32.totalorder %s86, %s88
    %p92 = scmp.eq.s32.totalorder %s10, 0
    %p93 = por %p91, %p92
    %p94 = scmp.ne.s32.totalorder %s86, %s88
    %p95 = scmp.eq.s32.totalorder %s15, 1
    %p96 = por %p94, %p95
    %p97 = scmp.ne.s32.totalorder %s88, %s89
    %p98 = scmp.eq.s32.totalorder %s15, 0
    %p99 = por %p97, %p98
    %p100 = scmp.ne.s32.totalorder %s88, %s89
    %p101 = scmp.eq.s32.totalorder %s16, 1
    %p102 = por %p100, %p101
    %p104 = scmp.ne.s32.totalorder %s89, %s103
    %p105 = scmp.eq.s32.totalorder %s16, 0
    %p106 = por %p104, %p105
    %s107 = ssub.s32 %s10, %s17
    %p108 = scmp.eq.s32.totalorder %s107, 0
    %s110 = sadd.s32 %s109, 1
    %s111 = scalar_select %p108, %s109, %s110
    %p114 = pneg %p108
    %p115 = scmp.eq.s32.totalorder %s10, 1
    %p116 = por %p114, %p115
    %p117 = scmp.ne.s32.totalorder %s109, %s112
    %p118 = scmp.eq.s32.totalorder %s10, 0
    %p119 = por %p117, %p118
    %p120 = scmp.ne.s32.totalorder %s109, %s112
    %p121 = scmp.eq.s32.totalorder %s15, 1
    %p122 = por %p120, %p121
    %p123 = scmp.ne.s32.totalorder %s112, %s113
    %p124 = scmp.eq.s32.totalorder %s15, 0
    %p125 = por %p123, %p124
    %p126 = scmp.ne.s32.totalorder %s112, %s113
    %p127 = scmp.eq.s32.totalorder %s16, 1
    %p128 = por %p126, %p127
    %p130 = scmp.ne.s32.totalorder %s113, %s129
    %p131 = scmp.eq.s32.totalorder %s16, 0
    %p132 = por %p130, %p131
    %p133 = scmp.le.s32.totalorder 1, %s10
    %p134 = scmp.lt.s32.totalorder %s10, 3
    %p135 = pnand %p133, %p134
    %p136 = pneg %p135
    // Predicated region
    $region9: #{enet_forward.88} parent=5 // pred_check
      _
    $region10: #{enet_forward.88} parent=5 // pred_check_branch
      %138 = sbr.rel (%p135) target = $region12
    $region11: #{enet_forward.88} parent=5 // pred_region
      %s139 = ssub.s32 %s10, 1
      // Predicated region
      $region13: #{enet_forward.88} parent=11 // pred_check
        %p140 = pneg %p57
      $region14: #{enet_forward.88} parent=11 // pred_check_branch
        %142 = sbr.rel (%p140) target = $region16
      $region15: #{enet_forward.88} parent=11 // pred_region
        _
      $region16: #{enet_forward.88} parent=11 // pred_fallthru
        _
      // Predicated region
      $region17: #{enet_forward.88} parent=11 // pred_check
        %p143 = pneg %p78
      $region18: #{enet_forward.88} parent=11 // pred_check_branch
        %145 = sbr.rel (%p143) target = $region20
      $region19: #{enet_forward.88} parent=11 // pred_region
        _
      $region20: #{enet_forward.88} parent=11 // pred_fallthru
        _
      // Predicated region
      $region21: #{enet_forward.88} parent=11 // pred_check
        %p146 = pneg %p99
      $region22: #{enet_forward.88} parent=11 // pred_check_branch
        %148 = sbr.rel (%p146) target = $region24
      $region23: #{enet_forward.88} parent=11 // pred_region
        _
      $region24: #{enet_forward.88} parent=11 // pred_fallthru
        _
    $region12: #{enet_forward.88} parent=5 // pred_fallthru
      _
    %p149 = scmp.lt.s32.totalorder %s10, 2
    // Predicated region
    $region25: #{enet_forward.88} parent=5 // pred_check
      %p150 = pneg %p149
    $region26: #{enet_forward.88} parent=5 // pred_check_branch
      %152 = sbr.rel (%p150) target = $region28
    $region27: #{enet_forward.88} parent=5 // pred_region
      // Predicated region
      $region29: #{enet_forward.88} parent=27 // pred_check
        %p153 = pneg %p30
      $region30: #{enet_forward.88} parent=27 // pred_check_branch
        %155 = sbr.rel (%p153) target = $region32
      $region31: #{enet_forward.88} parent=27 // pred_region
        %s156 = smul.u32 32, %s10
        %p157 = scmp.lt.s32.totalorder %s156, 63
        %s158 = scalar_select %p157, %s156, 63
        %s159 = smul.addr %s158, 4
        %s160 = scalar_lea.vmem %s0, %s159
        %s161 = smul.u32 32, %s10
      $region32: #{enet_forward.88} parent=27 // pred_fallthru
        _
    $region28: #{enet_forward.88} parent=5 // pred_fallthru
      _
    %p162 = scmp.le.s32.totalorder 1, %s10
    %p163 = scmp.lt.s32.totalorder %s10, 3
    %p164 = pnand %p162, %p163
    %p165 = pneg %p164
    // Predicated region
    $region33: #{enet_forward.88} parent=5 // pred_check
      _
    $region34: #{enet_forward.88} parent=5 // pred_check_branch
      %167 = sbr.rel (%p164) target = $region36
    $region35: #{enet_forward.88} parent=5 // pred_region
      %s168 = ssub.s32 %s10, 1
      %s169 = smul.u32 32, %s15
      %p170 = scmp.lt.s32.totalorder %s169, 63
      %s171 = scalar_select %p170, %s169, 63
      %s172 = smul.addr %s171, 4
      %s173 = scalar_lea.vmem %s0, %s172
      %p174 = pneg %p36
      %p175 = pneg %p33
      %p176 = pneg %p57
      %p177 = pneg %p54
      %p178 = pneg %p78
      %p179 = pneg %p75
      %p180 = pneg %p99
      %p181 = pneg %p96
      %p182 = pneg %p125
      %p183 = pneg %p122
      %s184 = smul.u32 32, %s15
      %p185 = scmp.lt.s32.totalorder %s184, 63
      %s186 = scalar_select %p185, %s184, 63
      %s187 = smul.addr %s186, 4
      %s188 = scalar_lea.vmem %s4, %s187
      %s189 = smul.u32 32, %s15
      %p190 = scmp.lt.s32.totalorder %s189, 63
      %s191 = scalar_select %p190, %s189, 63
      %s192 = smul.addr %s191, 4
      %s193 = scalar_lea.vmem %s0, %s192
      %s194 = smul.u32 32, %s15
      %s195 = smul.u32 32, %s15
      %p196 = scmp.lt.s32.totalorder %s195, 63
      %s197 = scalar_select %p196, %s195, 63
      %s198 = smul.addr %s197, 4
      %s199 = scalar_lea.vmem %s4, %s198
      %s200 = smul.u32 32, %s15
      %v202 = vld [vmem:[%s193] sm:$0xf]
      %v203 = vld [vmem:[%s193 + $0x4] sm:$0xf]
      %v204 = vld [vmem:[%s193 + $0x8] sm:$0xf]
      %v205 = vld [vmem:[%s193 + $0xc] sm:$0xf]
      %v206 = vld [vmem:[%s193 + $0x10] sm:$0xf]
      %v207 = vld [vmem:[%s193 + $0x14] sm:$0xf]
      %v208 = vld [vmem:[%s193 + $0x18] sm:$0xf]
      %v209 = vld [vmem:[%s193 + $0x1c] sm:$0xf]
      %v210 = vld [vmem:[%s193 + $0x20] sm:$0xf]
      %v211 = vld [vmem:[%s193 + $0x24] sm:$0xf]
      %v212 = vld [vmem:[%s193 + $0x28] sm:$0xf]
      %v213 = vld [vmem:[%s193 + $0x2c] sm:$0xf]
      %v214 = vld [vmem:[%s193 + $0x30] sm:$0xf]
      %v215 = vld [vmem:[%s193 + $0x34] sm:$0xf]
      %v216 = vld [vmem:[%s193 + $0x38] sm:$0xf]
      %v217 = vld [vmem:[%s193 + $0x3c] sm:$0xf]
      %v218 = vld [vmem:[%s193 + $0x40] sm:$0xf]
      %v219 = vld [vmem:[%s193 + $0x44] sm:$0xf]
      %v220 = vld [vmem:[%s193 + $0x48] sm:$0xf]
      %v221 = vld [vmem:[%s193 + $0x4c] sm:$0xf]
      %v222 = vld [vmem:[%s193 + $0x50] sm:$0xf]
      %v223 = vld [vmem:[%s193 + $0x54] sm:$0xf]
      %v224 = vld [vmem:[%s193 + $0x58] sm:$0xf]
      %v225 = vld [vmem:[%s193 + $0x5c] sm:$0xf]
      %v226 = vld [vmem:[%s193 + $0x60] sm:$0xf]
      %v227 = vld [vmem:[%s193 + $0x64] sm:$0xf]
      %v228 = vld [vmem:[%s193 + $0x68] sm:$0xf]
      %v229 = vld [vmem:[%s193 + $0x6c] sm:$0xf]
      %v230 = vld [vmem:[%s193 + $0x70] sm:$0xf]
      %v231 = vld [vmem:[%s193 + $0x74] sm:$0xf]
      %v232 = vld [vmem:[%s193 + $0x78] sm:$0xf]
      %v233 = vld [vmem:[%s193 + $0x7c] sm:$0xf]
      %v234 = vld [vmem:[%s1] sm:$0xf]
      %v235 = vld [vmem:[%s1 + $0x4] sm:$0xf]
      %v236 = vld [vmem:[%s1 + $0x8] sm:$0xf]
      %v237 = vld [vmem:[%s1 + $0xc] sm:$0x7]
      %v270 = vunpack.c.l.b16 %v202
      %v271 = vunpack.c.l.b16 %v203
      %v272 = vunpack.c.l.b16 %v204
      %v273 = vunpack.c.l.b16 %v205
      %v274 = vunpack.c.l.b16 %v206
      %v275 = vunpack.c.l.b16 %v207
      %v276 = vunpack.c.l.b16 %v208
      %v277 = vunpack.c.l.b16 %v209
      %v278 = vunpack.c.l.b16 %v210
      %v279 = vunpack.c.l.b16 %v211
      %v280 = vunpack.c.l.b16 %v212
      %v281 = vunpack.c.l.b16 %v213
      %v282 = vunpack.c.l.b16 %v214
      %v283 = vunpack.c.l.b16 %v215
      %v284 = vunpack.c.l.b16 %v216
      %v285 = vunpack.c.l.b16 %v217
      %v286 = vunpack.c.l.b16 %v218
      %v287 = vunpack.c.l.b16 %v219
      %v288 = vunpack.c.l.b16 %v220
      %v289 = vunpack.c.l.b16 %v221
      %v290 = vunpack.c.l.b16 %v222
      %v291 = vunpack.c.l.b16 %v223
      %v292 = vunpack.c.l.b16 %v224
      %v293 = vunpack.c.l.b16 %v225
      %v294 = vunpack.c.l.b16 %v226
      %v295 = vunpack.c.l.b16 %v227
      %v296 = vunpack.c.l.b16 %v228
      %v297 = vunpack.c.l.b16 %v229
      %v298 = vunpack.c.l.b16 %v230
      %v299 = vunpack.c.l.b16 %v231
      %v300 = vunpack.c.l.b16 %v232
      %v301 = vunpack.c.l.b16 %v233
      %v302 = vpack.c.b16 %v271, %v270
      %v303 = vpack.c.b16 %v273, %v272
      %v304 = vpack.c.b16 %v275, %v274
      %v305 = vpack.c.b16 %v277, %v276
      %v306 = vpack.c.b16 %v279, %v278
      %v307 = vpack.c.b16 %v281, %v280
      %v308 = vpack.c.b16 %v283, %v282
      %v309 = vpack.c.b16 %v285, %v284
      %v310 = vpack.c.b16 %v287, %v286
      %v311 = vpack.c.b16 %v289, %v288
      %v312 = vpack.c.b16 %v291, %v290
      %v313 = vpack.c.b16 %v293, %v292
      %v314 = vpack.c.b16 %v295, %v294
      %v315 = vpack.c.b16 %v297, %v296
      %v316 = vpack.c.b16 %v299, %v298
      %v317 = vpack.c.b16 %v301, %v300
      %v322 = vunpack.c.l.b16 %v234
      %v323 = vunpack.c.l.b16 %v235
      %v324 = vunpack.c.l.b16 %v236
      %v325 = vunpack.c.l.b16 %v237
      %v326 = vpack.c.b16 %v323, %v322
      %v327 = vpack.c.b16 %v325, %v324
      %vm329 = vcmask 244736
      %v331 = vsel %vm329, %v302, 0
      %v334 = vsel %vm329, %v303, 0
      %v337 = vsel %vm329, %v304, 0
      %v340 = vsel %vm329, %v305, 0
      %v343 = vsel %vm329, %v306, 0
      %v346 = vsel %vm329, %v307, 0
      %v349 = vsel %vm329, %v308, 0
      %v352 = vsel %vm329, %v309, 0
      %v355 = vsel %vm329, %v310, 0
      %v358 = vsel %vm329, %v311, 0
      %v361 = vsel %vm329, %v312, 0
      %v364 = vsel %vm329, %v313, 0
      %v367 = vsel %vm329, %v314, 0
      %v370 = vsel %vm329, %v315, 0
      %v373 = vsel %vm329, %v316, 0
      %v376 = vsel %vm329, %v317, 0
      %vm378 = vcmask 1046528
      %v380 = vsel %vm378, %v327, 0
      %382 = vmatprep.subr.bf16.mxu0 0
      %383 = vmatpush1.bf16.msra.mxu0 0
      %384 = vmatprep.subr.bf16.mxu0 0
      %385 = vmatpush1.bf16.msra.mxu0 0
      %386 = vmatprep.subr.bf16.mxu0 0
      %387 = vmatpush1.bf16.msra.mxu0 0
      %388 = vmatprep.subr.bf16.mxu0 0
      %389 = vmatpush1.bf16.msra.mxu0 0
      %390 = vmatprep.subr.bf16.mxu0 0
      %391 = vmatpush1.bf16.msra.mxu0 0
      %392 = vmatprep.subr.bf16.mxu0 0
      %393 = vmatpush1.bf16.msra.mxu0 0
      %394 = vmatprep.subr.bf16.mxu0 0
      %395 = vmatpush1.bf16.msra.mxu0 %v380
      %396 = vmatprep.subr.bf16.mxu0 0
      %397 = vmatpush1.bf16.msra.mxu0 %v326
      %398 = vmatprep.subr.bf16.mxu0 0
      %399 = vmatpush2.bf16.msra.mxu0 0
      %400 = vmatprep.subr.bf16.mxu0 0
      %401 = vmatpush2.bf16.msra.mxu0 0
      %402 = vmatprep.subr.bf16.mxu0 0
      %403 = vmatpush2.bf16.msra.mxu0 0
      %404 = vmatprep.subr.bf16.mxu0 0
      %405 = vmatpush2.bf16.msra.mxu0 0
      %406 = vmatprep.subr.bf16.mxu0 0
      %407 = vmatpush2.bf16.msra.mxu0 0
      %408 = vmatprep.subr.bf16.mxu0 0
      %409 = vmatpush2.bf16.msra.mxu0 0
      %410 = vmatprep.subr.bf16.mxu0 0
      %411 = vmatpush2.bf16.msra.mxu0 0
      %412 = vmatprep.subr.bf16.mxu0 0
      %413 = vmatpush2.bf16.msra.mxu0 0
      %414 = vmatprep.mubr.bf16.mxu0 0
      %415 = vmatmul.mubr.bf16.gmra.mxu0 %v331
      %v416 = vpop.f32.mrf.mxu0
      %v417 = vadd.f32 0.0, %v416
      %v418 = vpop.f32.mrf.mxu0
      %v419 = vpop.f32.mrf.mxu0
      %v420 = vadd.f32 0.0, %v419
      %v421 = vpop.f32.mrf.mxu0
      %422 = vmatprep.mubr.bf16.mxu0 0
      %423 = vmatmul.mubr.bf16.gmra.mxu0 %v334
      %v424 = vpop.f32.mrf.mxu0
      %v425 = vadd.f32 0.0, %v424
      %v426 = vpop.f32.mrf.mxu0
      %v427 = vpop.f32.mrf.mxu0
      %v428 = vadd.f32 0.0, %v427
      %v429 = vpop.f32.mrf.mxu0
      %430 = vmatprep.mubr.bf16.mxu0 0
      %431 = vmatmul.mubr.bf16.gmra.mxu0 %v337
      %v432 = vpop.f32.mrf.mxu0
      %v433 = vadd.f32 0.0, %v432
      %v434 = vpop.f32.mrf.mxu0
      %v435 = vpop.f32.mrf.mxu0
      %v436 = vadd.f32 0.0, %v435
      %v437 = vpop.f32.mrf.mxu0
      %438 = vmatprep.mubr.bf16.mxu0 0
      %439 = vmatmul.mubr.bf16.gmra.mxu0 %v340
      %v440 = vpop.f32.mrf.mxu0
      %v441 = vadd.f32 0.0, %v440
      %v442 = vpop.f32.mrf.mxu0
      %v443 = vpop.f32.mrf.mxu0
      %v444 = vadd.f32 0.0, %v443
      %v445 = vpop.f32.mrf.mxu0
      %446 = vmatprep.mubr.bf16.mxu0 0
      %447 = vmatmul.mubr.bf16.gmra.mxu0 %v343
      %v448 = vpop.f32.mrf.mxu0
      %v449 = vadd.f32 0.0, %v448
      %v450 = vpop.f32.mrf.mxu0
      %v451 = vpop.f32.mrf.mxu0
      %v452 = vadd.f32 0.0, %v451
      %v453 = vpop.f32.mrf.mxu0
      %454 = vmatprep.mubr.bf16.mxu0 0
      %455 = vmatmul.mubr.bf16.gmra.mxu0 %v346
      %v456 = vpop.f32.mrf.mxu0
      %v457 = vadd.f32 0.0, %v456
      %v458 = vpop.f32.mrf.mxu0
      %v459 = vpop.f32.mrf.mxu0
      %v460 = vadd.f32 0.0, %v459
      %v461 = vpop.f32.mrf.mxu0
      %462 = vmatprep.mubr.bf16.mxu0 0
      %463 = vmatmul.mubr.bf16.gmra.mxu0 %v349
      %v464 = vpop.f32.mrf.mxu0
      %v465 = vadd.f32 0.0, %v464
      %v466 = vpop.f32.mrf.mxu0
      %v467 = vpop.f32.mrf.mxu0
      %v468 = vadd.f32 0.0, %v467
      %v469 = vpop.f32.mrf.mxu0
      %470 = vmatprep.mubr.bf16.mxu0 0
      %471 = vmatmul.mubr.bf16.gmra.mxu0 %v352
      %v472 = vpop.f32.mrf.mxu0
      %v473 = vadd.f32 0.0, %v472
      %v474 = vpop.f32.mrf.mxu0
      %v475 = vpop.f32.mrf.mxu0
      %v476 = vadd.f32 0.0, %v475
      %v477 = vpop.f32.mrf.mxu0
      %478 = vmatprep.mubr.bf16.mxu0 0
      %479 = vmatmul.mubr.bf16.gmra.mxu0 %v355
      %v480 = vpop.f32.mrf.mxu0
      %v481 = vadd.f32 0.0, %v480
      %v482 = vpop.f32.mrf.mxu0
      %v483 = vpop.f32.mrf.mxu0
      %v484 = vadd.f32 0.0, %v483
      %v485 = vpop.f32.mrf.mxu0
      %486 = vmatprep.mubr.bf16.mxu0 0
      %487 = vmatmul.mubr.bf16.gmra.mxu0 %v358
      %v488 = vpop.f32.mrf.mxu0
      %v489 = vadd.f32 0.0, %v488
      %v490 = vpop.f32.mrf.mxu0
      %v491 = vpop.f32.mrf.mxu0
      %v492 = vadd.f32 0.0, %v491
      %v493 = vpop.f32.mrf.mxu0
      %494 = vmatprep.mubr.bf16.mxu0 0
      %495 = vmatmul.mubr.bf16.gmra.mxu0 %v361
      %v496 = vpop.f32.mrf.mxu0
      %v497 = vadd.f32 0.0, %v496
      %v498 = vpop.f32.mrf.mxu0
      %v499 = vpop.f32.mrf.mxu0
      %v500 = vadd.f32 0.0, %v499
      %v501 = vpop.f32.mrf.mxu0
      %502 = vmatprep.mubr.bf16.mxu0 0
      %503 = vmatmul.mubr.bf16.gmra.mxu0 %v364
      %v504 = vpop.f32.mrf.mxu0
      %v505 = vadd.f32 0.0, %v504
      %v506 = vpop.f32.mrf.mxu0
      %v507 = vpop.f32.mrf.mxu0
      %v508 = vadd.f32 0.0, %v507
      %v509 = vpop.f32.mrf.mxu0
      %510 = vmatprep.mubr.bf16.mxu0 0
      %511 = vmatmul.mubr.bf16.gmra.mxu0 %v367
      %v512 = vpop.f32.mrf.mxu0
      %v513 = vadd.f32 0.0, %v512
      %v514 = vpop.f32.mrf.mxu0
      %v515 = vpop.f32.mrf.mxu0
      %v516 = vadd.f32 0.0, %v515
      %v517 = vpop.f32.mrf.mxu0
      %518 = vmatprep.mubr.bf16.mxu0 0
      %519 = vmatmul.mubr.bf16.gmra.mxu0 %v370
      %v520 = vpop.f32.mrf.mxu0
      %v521 = vadd.f32 0.0, %v520
      %v522 = vpop.f32.mrf.mxu0
      %v523 = vpop.f32.mrf.mxu0
      %v524 = vadd.f32 0.0, %v523
      %v525 = vpop.f32.mrf.mxu0
      %526 = vmatprep.mubr.bf16.mxu0 0
      %527 = vmatmul.mubr.bf16.gmra.mxu0 %v373
      %v528 = vpop.f32.mrf.mxu0
      %v529 = vadd.f32 0.0, %v528
      %v530 = vpop.f32.mrf.mxu0
      %v531 = vpop.f32.mrf.mxu0
      %v532 = vadd.f32 0.0, %v531
      %v533 = vpop.f32.mrf.mxu0
      %534 = vmatprep.mubr.bf16.mxu0 0
      %535 = vmatmul.mubr.bf16.gmra.mxu0 %v376
      %v536 = vpop.f32.mrf.mxu0
      %v537 = vadd.f32 0.0, %v536
      %v538 = vpop.f32.mrf.mxu0
      %v539 = vpop.f32.mrf.mxu0
      %v540 = vadd.f32 0.0, %v539
      %v541 = vpop.f32.mrf.mxu0
      %542 = vdwg.mxu0
      %v543 = vld [vmem:[%s2] sm:$0x1]
      %v545 = vlaneseq
      %v546 = vshrl.u32 %v545, 7
      %v547 = vsub.s32 0, %v546
      %v548 = vrot.slane %v543, %v547
      %v550 = vmul.f32 %v417, %v548
      %v551 = vmul.f32 %v420, %v548
      %v552 = vmul.f32 %v425, %v548
      %v553 = vmul.f32 %v428, %v548
      %v554 = vmul.f32 %v433, %v548
      %v555 = vmul.f32 %v436, %v548
      %v556 = vmul.f32 %v441, %v548
      %v557 = vmul.f32 %v444, %v548
      %v558 = vmul.f32 %v449, %v548
      %v559 = vmul.f32 %v452, %v548
      %v560 = vmul.f32 %v457, %v548
      %v561 = vmul.f32 %v460, %v548
      %v562 = vmul.f32 %v465, %v548
      %v563 = vmul.f32 %v468, %v548
      %v564 = vmul.f32 %v473, %v548
      %v565 = vmul.f32 %v476, %v548
      %v566 = vmul.f32 %v481, %v548
      %v567 = vmul.f32 %v484, %v548
      %v568 = vmul.f32 %v489, %v548
      %v569 = vmul.f32 %v492, %v548
      %v570 = vmul.f32 %v497, %v548
      %v571 = vmul.f32 %v500, %v548
      %v572 = vmul.f32 %v505, %v548
      %v573 = vmul.f32 %v508, %v548
      %v574 = vmul.f32 %v513, %v548
      %v575 = vmul.f32 %v516, %v548
      %v576 = vmul.f32 %v521, %v548
      %v577 = vmul.f32 %v524, %v548
      %v578 = vmul.f32 %v529, %v548
      %v579 = vmul.f32 %v532, %v548
      %v580 = vmul.f32 %v537, %v548
      %v581 = vmul.f32 %v540, %v548
      %v582 = vld [vmem:[%s3] sm:$0x1]
      %v584 = vlaneseq
      %v585 = vshrl.u32 %v584, 7
      %v586 = vsub.s32 0, %v585
      %v587 = vrot.slane %v582, %v586
      %v589 = vadd.f32 %v550, %v587
      %v590 = vadd.f32 %v551, %v587
      %v591 = vadd.f32 %v552, %v587
      %v592 = vadd.f32 %v553, %v587
      %v593 = vadd.f32 %v554, %v587
      %v594 = vadd.f32 %v555, %v587
      %v595 = vadd.f32 %v556, %v587
      %v596 = vadd.f32 %v557, %v587
      %v597 = vadd.f32 %v558, %v587
      %v598 = vadd.f32 %v559, %v587
      %v599 = vadd.f32 %v560, %v587
      %v600 = vadd.f32 %v561, %v587
      %v601 = vadd.f32 %v562, %v587
      %v602 = vadd.f32 %v563, %v587
      %v603 = vadd.f32 %v564, %v587
      %v604 = vadd.f32 %v565, %v587
      %v605 = vadd.f32 %v566, %v587
      %v606 = vadd.f32 %v567, %v587
      %v607 = vadd.f32 %v568, %v587
      %v608 = vadd.f32 %v569, %v587
      %v609 = vadd.f32 %v570, %v587
      %v610 = vadd.f32 %v571, %v587
      %v611 = vadd.f32 %v572, %v587
      %v612 = vadd.f32 %v573, %v587
      %v613 = vadd.f32 %v574, %v587
      %v614 = vadd.f32 %v575, %v587
      %v615 = vadd.f32 %v576, %v587
      %v616 = vadd.f32 %v577, %v587
      %v617 = vadd.f32 %v578, %v587
      %v618 = vadd.f32 %v579, %v587
      %v619 = vadd.f32 %v580, %v587
      %v620 = vadd.f32 %v581, %v587
      %vm621 = vcmp.ge.f32.partialorder %v589, 0.0
      %vm622 = vcmp.ge.f32.partialorder %v590, 0.0
      %vm623 = vcmp.ge.f32.partialorder %v591, 0.0
      %vm624 = vcmp.ge.f32.partialorder %v592, 0.0
      %vm625 = vcmp.ge.f32.partialorder %v593, 0.0
      %vm626 = vcmp.ge.f32.partialorder %v594, 0.0
      %vm627 = vcmp.ge.f32.partialorder %v595, 0.0
      %vm628 = vcmp.ge.f32.partialorder %v596, 0.0
      %vm629 = vcmp.ge.f32.partialorder %v597, 0.0
      %vm630 = vcmp.ge.f32.partialorder %v598, 0.0
      %vm631 = vcmp.ge.f32.partialorder %v599, 0.0
      %vm632 = vcmp.ge.f32.partialorder %v600, 0.0
      %vm633 = vcmp.ge.f32.partialorder %v601, 0.0
      %vm634 = vcmp.ge.f32.partialorder %v602, 0.0
      %vm635 = vcmp.ge.f32.partialorder %v603, 0.0
      %vm636 = vcmp.ge.f32.partialorder %v604, 0.0
      %vm637 = vcmp.ge.f32.partialorder %v605, 0.0
      %vm638 = vcmp.ge.f32.partialorder %v606, 0.0
      %vm639 = vcmp.ge.f32.partialorder %v607, 0.0
      %vm640 = vcmp.ge.f32.partialorder %v608, 0.0
      %vm641 = vcmp.ge.f32.partialorder %v609, 0.0
      %vm642 = vcmp.ge.f32.partialorder %v610, 0.0
      %vm643 = vcmp.ge.f32.partialorder %v611, 0.0
      %vm644 = vcmp.ge.f32.partialorder %v612, 0.0
      %vm645 = vcmp.ge.f32.partialorder %v613, 0.0
      %vm646 = vcmp.ge.f32.partialorder %v614, 0.0
      %vm647 = vcmp.ge.f32.partialorder %v615, 0.0
      %vm648 = vcmp.ge.f32.partialorder %v616, 0.0
      %vm649 = vcmp.ge.f32.partialorder %v617, 0.0
      %vm650 = vcmp.ge.f32.partialorder %v618, 0.0
      %vm651 = vcmp.ge.f32.partialorder %v619, 0.0
      %vm652 = vcmp.ge.f32.partialorder %v620, 0.0
      %v653 = vmul.f32 %v589, 0.25
      %v654 = vmul.f32 %v590, 0.25
      %v655 = vmul.f32 %v591, 0.25
      %v656 = vmul.f32 %v592, 0.25
      %v657 = vmul.f32 %v593, 0.25
      %v658 = vmul.f32 %v594, 0.25
      %v659 = vmul.f32 %v595, 0.25
      %v660 = vmul.f32 %v596, 0.25
      %v661 = vmul.f32 %v597, 0.25
      %v662 = vmul.f32 %v598, 0.25
      %v663 = vmul.f32 %v599, 0.25
      %v664 = vmul.f32 %v600, 0.25
      %v665 = vmul.f32 %v601, 0.25
      %v666 = vmul.f32 %v602, 0.25
      %v667 = vmul.f32 %v603, 0.25
      %v668 = vmul.f32 %v604, 0.25
      %v669 = vmul.f32 %v605, 0.25
      %v670 = vmul.f32 %v606, 0.25
      %v671 = vmul.f32 %v607, 0.25
      %v672 = vmul.f32 %v608, 0.25
      %v673 = vmul.f32 %v609, 0.25
      %v674 = vmul.f32 %v610, 0.25
      %v675 = vmul.f32 %v611, 0.25
      %v676 = vmul.f32 %v612, 0.25
      %v677 = vmul.f32 %v613, 0.25
      %v678 = vmul.f32 %v614, 0.25
      %v679 = vmul.f32 %v615, 0.25
      %v680 = vmul.f32 %v616, 0.25
      %v681 = vmul.f32 %v617, 0.25
      %v682 = vmul.f32 %v618, 0.25
      %v683 = vmul.f32 %v619, 0.25
      %v684 = vmul.f32 %v620, 0.25
      %v685 = vsel %vm621, %v589, %v653
      %v686 = vsel %vm622, %v590, %v654
      %v687 = vsel %vm623, %v591, %v655
      %v688 = vsel %vm624, %v592, %v656
      %v689 = vsel %vm625, %v593, %v657
      %v690 = vsel %vm626, %v594, %v658
      %v691 = vsel %vm627, %v595, %v659
      %v692 = vsel %vm628, %v596, %v660
      %v693 = vsel %vm629, %v597, %v661
      %v694 = vsel %vm630, %v598, %v662
      %v695 = vsel %vm631, %v599, %v663
      %v696 = vsel %vm632, %v600, %v664
      %v697 = vsel %vm633, %v601, %v665
      %v698 = vsel %vm634, %v602, %v666
      %v699 = vsel %vm635, %v603, %v667
      %v700 = vsel %vm636, %v604, %v668
      %v701 = vsel %vm637, %v605, %v669
      %v702 = vsel %vm638, %v606, %v670
      %v703 = vsel %vm639, %v607, %v671
      %v704 = vsel %vm640, %v608, %v672
      %v705 = vsel %vm641, %v609, %v673
      %v706 = vsel %vm642, %v610, %v674
      %v707 = vsel %vm643, %v611, %v675
      %v708 = vsel %vm644, %v612, %v676
      %v709 = vsel %vm645, %v613, %v677
      %v710 = vsel %vm646, %v614, %v678
      %v711 = vsel %vm647, %v615, %v679
      %v712 = vsel %vm648, %v616, %v680
      %v713 = vsel %vm649, %v617, %v681
      %v714 = vsel %vm650, %v618, %v682
      %v715 = vsel %vm651, %v619, %v683
      %v716 = vsel %vm652, %v620, %v684
      %v717 = vpack.c.bf16 %v686, %v685
      %v718 = vpack.c.bf16 %v688, %v687
      %v719 = vpack.c.bf16 %v690, %v689
      %v720 = vpack.c.bf16 %v692, %v691
      %v721 = vpack.c.bf16 %v694, %v693
      %v722 = vpack.c.bf16 %v696, %v695
      %v723 = vpack.c.bf16 %v698, %v697
      %v724 = vpack.c.bf16 %v700, %v699
      %v725 = vpack.c.bf16 %v702, %v701
      %v726 = vpack.c.bf16 %v704, %v703
      %v727 = vpack.c.bf16 %v706, %v705
      %v728 = vpack.c.bf16 %v708, %v707
      %v729 = vpack.c.bf16 %v710, %v709
      %v730 = vpack.c.bf16 %v712, %v711
      %v731 = vpack.c.bf16 %v714, %v713
      %v732 = vpack.c.bf16 %v716, %v715
      %v749 = vunpack.c.l.b16 %v717
      %v750 = vunpack.c.h.b16 %v717
      %v751 = vunpack.c.l.b16 %v718
      %v752 = vunpack.c.h.b16 %v718
      %v753 = vunpack.c.l.b16 %v719
      %v754 = vunpack.c.h.b16 %v719
      %v755 = vunpack.c.l.b16 %v720
      %v756 = vunpack.c.h.b16 %v720
      %v757 = vunpack.c.l.b16 %v721
      %v758 = vunpack.c.h.b16 %v721
      %v759 = vunpack.c.l.b16 %v722
      %v760 = vunpack.c.h.b16 %v722
      %v761 = vunpack.c.l.b16 %v723
      %v762 = vunpack.c.h.b16 %v723
      %v763 = vunpack.c.l.b16 %v724
      %v764 = vunpack.c.h.b16 %v724
      %v765 = vunpack.c.l.b16 %v725
      %v766 = vunpack.c.h.b16 %v725
      %v767 = vunpack.c.l.b16 %v726
      %v768 = vunpack.c.h.b16 %v726
      %v769 = vunpack.c.l.b16 %v727
      %v770 = vunpack.c.h.b16 %v727
      %v771 = vunpack.c.l.b16 %v728
      %v772 = vunpack.c.h.b16 %v728
      %v773 = vunpack.c.l.b16 %v729
      %v774 = vunpack.c.h.b16 %v729
      %v775 = vunpack.c.l.b16 %v730
      %v776 = vunpack.c.h.b16 %v730
      %v777 = vunpack.c.l.b16 %v731
      %v778 = vunpack.c.h.b16 %v731
      %v779 = vunpack.c.l.b16 %v732
      %v780 = vunpack.c.h.b16 %v732
      %v781 = vpack.c.b16 %v749, %v749
      %v782 = vpack.c.b16 %v750, %v750
      %v783 = vpack.c.b16 %v751, %v751
      %v784 = vpack.c.b16 %v752, %v752
      %v785 = vpack.c.b16 %v753, %v753
      %v786 = vpack.c.b16 %v754, %v754
      %v787 = vpack.c.b16 %v755, %v755
      %v788 = vpack.c.b16 %v756, %v756
      %v789 = vpack.c.b16 %v757, %v757
      %v790 = vpack.c.b16 %v758, %v758
      %v791 = vpack.c.b16 %v759, %v759
      %v792 = vpack.c.b16 %v760, %v760
      %v793 = vpack.c.b16 %v761, %v761
      %v794 = vpack.c.b16 %v762, %v762
      %v795 = vpack.c.b16 %v763, %v763
      %v796 = vpack.c.b16 %v764, %v764
      %v797 = vpack.c.b16 %v765, %v765
      %v798 = vpack.c.b16 %v766, %v766
      %v799 = vpack.c.b16 %v767, %v767
      %v800 = vpack.c.b16 %v768, %v768
      %v801 = vpack.c.b16 %v769, %v769
      %v802 = vpack.c.b16 %v770, %v770
      %v803 = vpack.c.b16 %v771, %v771
      %v804 = vpack.c.b16 %v772, %v772
      %v805 = vpack.c.b16 %v773, %v773
      %v806 = vpack.c.b16 %v774, %v774
      %v807 = vpack.c.b16 %v775, %v775
      %v808 = vpack.c.b16 %v776, %v776
      %v809 = vpack.c.b16 %v777, %v777
      %v810 = vpack.c.b16 %v778, %v778
      %v811 = vpack.c.b16 %v779, %v779
      %v812 = vpack.c.b16 %v780, %v780
      %vm845 = vcmask 125952
      %846 = vst.msk [vmem:[%s199] sm:$0xf] %vm845, %v781
      %847 = vst.msk [vmem:[%s199 + $0x4] sm:$0xf] %vm845, %v782
      %848 = vst.msk [vmem:[%s199 + $0x8] sm:$0xf] %vm845, %v783
      %849 = vst.msk [vmem:[%s199 + $0xc] sm:$0xf] %vm845, %v784
      %850 = vst.msk [vmem:[%s199 + $0x10] sm:$0xf] %vm845, %v785
      %851 = vst.msk [vmem:[%s199 + $0x14] sm:$0xf] %vm845, %v786
      %852 = vst.msk [vmem:[%s199 + $0x18] sm:$0xf] %vm845, %v787
      %853 = vst.msk [vmem:[%s199 + $0x1c] sm:$0xf] %vm845, %v788
      %854 = vst.msk [vmem:[%s199 + $0x20] sm:$0xf] %vm845, %v789
      %855 = vst.msk [vmem:[%s199 + $0x24] sm:$0xf] %vm845, %v790
      %856 = vst.msk [vmem:[%s199 + $0x28] sm:$0xf] %vm845, %v791
      %857 = vst.msk [vmem:[%s199 + $0x2c] sm:$0xf] %vm845, %v792
      %858 = vst.msk [vmem:[%s199 + $0x30] sm:$0xf] %vm845, %v793
      %859 = vst.msk [vmem:[%s199 + $0x34] sm:$0xf] %vm845, %v794
      %860 = vst.msk [vmem:[%s199 + $0x38] sm:$0xf] %vm845, %v795
      %861 = vst.msk [vmem:[%s199 + $0x3c] sm:$0xf] %vm845, %v796
      %862 = vst.msk [vmem:[%s199 + $0x40] sm:$0xf] %vm845, %v797
      %863 = vst.msk [vmem:[%s199 + $0x44] sm:$0xf] %vm845, %v798
      %864 = vst.msk [vmem:[%s199 + $0x48] sm:$0xf] %vm845, %v799
      %865 = vst.msk [vmem:[%s199 + $0x4c] sm:$0xf] %vm845, %v800
      %866 = vst.msk [vmem:[%s199 + $0x50] sm:$0xf] %vm845, %v801
      %867 = vst.msk [vmem:[%s199 + $0x54] sm:$0xf] %vm845, %v802
      %868 = vst.msk [vmem:[%s199 + $0x58] sm:$0xf] %vm845, %v803
      %869 = vst.msk [vmem:[%s199 + $0x5c] sm:$0xf] %vm845, %v804
      %870 = vst.msk [vmem:[%s199 + $0x60] sm:$0xf] %vm845, %v805
      %871 = vst.msk [vmem:[%s199 + $0x64] sm:$0xf] %vm845, %v806
      %872 = vst.msk [vmem:[%s199 + $0x68] sm:$0xf] %vm845, %v807
      %873 = vst.msk [vmem:[%s199 + $0x6c] sm:$0xf] %vm845, %v808
      %874 = vst.msk [vmem:[%s199 + $0x70] sm:$0xf] %vm845, %v809
      %875 = vst.msk [vmem:[%s199 + $0x74] sm:$0xf] %vm845, %v810
      %876 = vst.msk [vmem:[%s199 + $0x78] sm:$0xf] %vm845, %v811
      %877 = vst.msk [vmem:[%s199 + $0x7c] sm:$0xf] %vm845, %v812
      %s878 = smul.u32 32, %s15
      %p879 = scmp.lt.s32.totalorder %s878, 63
      %s880 = scalar_select %p879, %s878, 63
      %s881 = smul.addr %s880, 4
      %s882 = scalar_lea.vmem %s4, %s881
      // Predicated region
      $region37: #{enet_forward.88} parent=35 // pred_check
        %p883 = pneg %p122
      $region38: #{enet_forward.88} parent=35 // pred_check_branch
        %885 = sbr.rel (%p883) target = $region40
      $region39: #{enet_forward.88} parent=35 // pred_region
        %s886 = smul.u32 32, %s15
      $region40: #{enet_forward.88} parent=35 // pred_fallthru
        _
    $region36: #{enet_forward.88} parent=5 // pred_fallthru
      _
    %p887 = scmp.le.s32.totalorder 2, %s10
    // Predicated region
    $region41: #{enet_forward.88} parent=5 // pred_check
      %p888 = pneg %p887
    $region42: #{enet_forward.88} parent=5 // pred_check_branch
      %890 = sbr.rel (%p888) target = $region44
    $region43: #{enet_forward.88} parent=5 // pred_region
      %s891 = ssub.s32 %s10, 2
      // Predicated region
      $region45: #{enet_forward.88} parent=43 // pred_check
        %p892 = pneg %p128
      $region46: #{enet_forward.88} parent=43 // pred_check_branch
        %894 = sbr.rel (%p892) target = $region48
      $region47: #{enet_forward.88} parent=43 // pred_region
        %s895 = smul.u32 32, %s16
        %p896 = scmp.lt.s32.totalorder %s895, 63
        %s897 = scalar_select %p896, %s895, 63
        %s898 = smul.addr %s897, 4
        %s899 = scalar_lea.vmem %s4, %s898
      $region48: #{enet_forward.88} parent=43 // pred_fallthru
        _
    $region44: #{enet_forward.88} parent=5 // pred_fallthru
      _
  $region6: #{enet_forward.88} parent=0 // loop_footer
    %s14 = sadd.s32 1, %s10
  $region7: #{enet_forward.88} parent=0 // loop_footer_branch
    %9 = sbr.rel target = $region3
  $region8: #{enet_forward.88} parent=0 // loop_exit
    _

// kernel: enet_forward.90
$region0: #{enet_forward.90}
  #allocation0 [shape = 'u32[]', space=smem, size = 0x4, offset = 0x4, fixed_abs, tag = 'smem constant byte address 0x4 - core index']
  #allocation1 [shape = 'u32[144,128]{1,0:T(1,128)}', space=vmem, size = 0x12000, scoped, tag = 'internal scratch']
  %s0 = inlined_call_operand.vmem [shape: bf16[512,16], index: 0, kind: input, shape index: {}]
  %s1 = inlined_call_operand.vmem [shape: bf16[16,16], index: 1, kind: input, shape index: {}]
  %s2 = inlined_call_operand.vmem [shape: f32[1,16], index: 2, kind: input, shape index: {}]
  %s3 = inlined_call_operand.vmem [shape: f32[1,16], index: 3, kind: input, shape index: {}]
  %s4 = inlined_call_operand.vmem [shape: bf16[512,16], index: 4, kind: output, shape index: {}]
  %s5 = sld [smem:[#allocation0]]
  $region49: #{enet_forward.90} parent=0
    _
  %s7 = ssub.s32 1, %s5
  %s8 = scalar_select 0, %s7, %s5
  loop: start=0, step=1, limit=4
  $region2: #{enet_forward.90} parent=0 // loop_pre_header
    _
  $region3: #{enet_forward.90} parent=0 // loop_header
    %s10 = sphi 0, %s14
    %p11 = scmp.ge.s32.totalorder %s10, 4
    %s20 = sphi 0, %s22
    %s23 = sphi 0, %s20
    %s24 = sphi 0, %s23
    %s40 = sphi 0, %s24
    %s44 = sphi 0, %s44
    %s46 = sphi 0, %s44
    %s47 = sphi 0, %s46
    %s61 = sphi 0, %s47
    %s65 = sphi 0, %s65
    %s67 = sphi 0, %s65
    %s68 = sphi 0, %s67
    %s82 = sphi 0, %s68
    %s86 = sphi 0, %s86
    %s88 = sphi 0, %s86
    %s89 = sphi 0, %s88
    %s103 = sphi 0, %s89
    %s109 = sphi 0, %s111
    %s112 = sphi 0, %s109
    %s113 = sphi 0, %s112
    %s129 = sphi 0, %s113
  $region4: #{enet_forward.90} parent=0 // loop_header_branch
    %13 = sbr.rel (%p11) target = $region8
  $region5: #{enet_forward.90} parent=0 // loop_body
    %s15 = ssub.s32 %s10, 1
    %s16 = ssub.s32 %s10, 2
    %s17 = sadd.s32 %s10, 1
    %s18 = ssub.s32 %s10, %s17
    %p19 = scmp.eq.s32.totalorder %s18, 0
    %s21 = sadd.s32 %s20, 1
    %s22 = scalar_select %p19, %s20, %s21
    %p25 = pneg %p19
    %p26 = scmp.eq.s32.totalorder %s10, 1
    %p27 = por %p25, %p26
    %p28 = scmp.ne.s32.totalorder %s20, %s23
    %p29 = scmp.eq.s32.totalorder %s10, 0
    %p30 = por %p28, %p29
    %p31 = scmp.ne.s32.totalorder %s20, %s23
    %p32 = scmp.eq.s32.totalorder %s15, 1
    %p33 = por %p31, %p32
    %p34 = scmp.ne.s32.totalorder %s23, %s24
    %p35 = scmp.eq.s32.totalorder %s15, 0
    %p36 = por %p34, %p35
    %p37 = scmp.ne.s32.totalorder %s23, %s24
    %p38 = scmp.eq.s32.totalorder %s16, 1
    %p39 = por %p37, %p38
    %p41 = scmp.ne.s32.totalorder %s24, %s40
    %p42 = scmp.eq.s32.totalorder %s16, 0
    %p43 = por %p41, %p42
    %s45 = sadd.s32 %s44, 1
    %p48 = scmp.eq.s32.totalorder %s10, 1
    %p49 = scmp.ne.s32.totalorder %s44, %s46
    %p50 = scmp.eq.s32.totalorder %s10, 0
    %p51 = por %p49, %p50
    %p52 = scmp.ne.s32.totalorder %s44, %s46
    %p53 = scmp.eq.s32.totalorder %s15, 1
    %p54 = por %p52, %p53
    %p55 = scmp.ne.s32.totalorder %s46, %s47
    %p56 = scmp.eq.s32.totalorder %s15, 0
    %p57 = por %p55, %p56
    %p58 = scmp.ne.s32.totalorder %s46, %s47
    %p59 = scmp.eq.s32.totalorder %s16, 1
    %p60 = por %p58, %p59
    %p62 = scmp.ne.s32.totalorder %s47, %s61
    %p63 = scmp.eq.s32.totalorder %s16, 0
    %p64 = por %p62, %p63
    %s66 = sadd.s32 %s65, 1
    %p69 = scmp.eq.s32.totalorder %s10, 1
    %p70 = scmp.ne.s32.totalorder %s65, %s67
    %p71 = scmp.eq.s32.totalorder %s10, 0
    %p72 = por %p70, %p71
    %p73 = scmp.ne.s32.totalorder %s65, %s67
    %p74 = scmp.eq.s32.totalorder %s15, 1
    %p75 = por %p73, %p74
    %p76 = scmp.ne.s32.totalorder %s67, %s68
    %p77 = scmp.eq.s32.totalorder %s15, 0
    %p78 = por %p76, %p77
    %p79 = scmp.ne.s32.totalorder %s67, %s68
    %p80 = scmp.eq.s32.totalorder %s16, 1
    %p81 = por %p79, %p80
    %p83 = scmp.ne.s32.totalorder %s68, %s82
    %p84 = scmp.eq.s32.totalorder %s16, 0
    %p85 = por %p83, %p84
    %s87 = sadd.s32 %s86, 1
    %p90 = scmp.eq.s32.totalorder %s10, 1
    %p91 = scmp.ne.s32.totalorder %s86, %s88
    %p92 = scmp.eq.s32.totalorder %s10, 0
    %p93 = por %p91, %p92
    %p94 = scmp.ne.s32.totalorder %s86, %s88
    %p95 = scmp.eq.s32.totalorder %s15, 1
    %p96 = por %p94, %p95
    %p97 = scmp.ne.s32.totalorder %s88, %s89
    %p98 = scmp.eq.s32.totalorder %s15, 0
    %p99 = por %p97, %p98
    %p100 = scmp.ne.s32.totalorder %s88, %s89
    %p101 = scmp.eq.s32.totalorder %s16, 1
    %p102 = por %p100, %p101
    %p104 = scmp.ne.s32.totalorder %s89, %s103
    %p105 = scmp.eq.s32.totalorder %s16, 0
    %p106 = por %p104, %p105
    %s107 = ssub.s32 %s10, %s17
    %p108 = scmp.eq.s32.totalorder %s107, 0
    %s110 = sadd.s32 %s109, 1
    %s111 = scalar_select %p108, %s109, %s110
    %p114 = pneg %p108
    %p115 = scmp.eq.s32.totalorder %s10, 1
    %p116 = por %p114, %p115
    %p117 = scmp.ne.s32.totalorder %s109, %s112
    %p118 = scmp.eq.s32.totalorder %s10, 0
    %p119 = por %p117, %p118
    %p120 = scmp.ne.s32.totalorder %s109, %s112
    %p121 = scmp.eq.s32.totalorder %s15, 1
    %p122 = por %p120, %p121
    %p123 = scmp.ne.s32.totalorder %s112, %s113
    %p124 = scmp.eq.s32.totalorder %s15, 0
    %p125 = por %p123, %p124
    %p126 = scmp.ne.s32.totalorder %s112, %s113
    %p127 = scmp.eq.s32.totalorder %s16, 1
    %p128 = por %p126, %p127
    %p130 = scmp.ne.s32.totalorder %s113, %s129
    %p131 = scmp.eq.s32.totalorder %s16, 0
    %p132 = por %p130, %p131
    %p133 = scmp.le.s32.totalorder 1, %s10
    %p134 = scmp.lt.s32.totalorder %s10, 3
    %p135 = pnand %p133, %p134
    %p136 = pneg %p135
    // Predicated region
    $region9: #{enet_forward.90} parent=5 // pred_check
      _
    $region10: #{enet_forward.90} parent=5 // pred_check_branch
      %138 = sbr.rel (%p135) target = $region12
    $region11: #{enet_forward.90} parent=5 // pred_region
      %s139 = ssub.s32 %s10, 1
      // Predicated region
      $region13: #{enet_forward.90} parent=11 // pred_check
        %p140 = pneg %p57
      $region14: #{enet_forward.90} parent=11 // pred_check_branch
        %142 = sbr.rel (%p140) target = $region16
      $region15: #{enet_forward.90} parent=11 // pred_region
        _
      $region16: #{enet_forward.90} parent=11 // pred_fallthru
        _
      // Predicated region
      $region17: #{enet_forward.90} parent=11 // pred_check
        %p143 = pneg %p78
      $region18: #{enet_forward.90} parent=11 // pred_check_branch
        %145 = sbr.rel (%p143) target = $region20
      $region19: #{enet_forward.90} parent=11 // pred_region
        _
      $region20: #{enet_forward.90} parent=11 // pred_fallthru
        _
      // Predicated region
      $region21: #{enet_forward.90} parent=11 // pred_check
        %p146 = pneg %p99
      $region22: #{enet_forward.90} parent=11 // pred_check_branch
        %148 = sbr.rel (%p146) target = $region24
      $region23: #{enet_forward.90} parent=11 // pred_region
        _
      $region24: #{enet_forward.90} parent=11 // pred_fallthru
        _
    $region12: #{enet_forward.90} parent=5 // pred_fallthru
      _
    %p149 = scmp.lt.s32.totalorder %s10, 2
    // Predicated region
    $region25: #{enet_forward.90} parent=5 // pred_check
      %p150 = pneg %p149
    $region26: #{enet_forward.90} parent=5 // pred_check_branch
      %152 = sbr.rel (%p150) target = $region28
    $region27: #{enet_forward.90} parent=5 // pred_region
      // Predicated region
      $region29: #{enet_forward.90} parent=27 // pred_check
        %p153 = pneg %p30
      $region30: #{enet_forward.90} parent=27 // pred_check_branch
        %155 = sbr.rel (%p153) target = $region32
      $region31: #{enet_forward.90} parent=27 // pred_region
        %s156 = smul.u32 32, %s10
        %p157 = scmp.lt.s32.totalorder %s156, 63
        %s158 = scalar_select %p157, %s156, 63
        %s159 = smul.addr %s158, 4
        %s160 = scalar_lea.vmem %s0, %s159
        %s161 = smul.u32 32, %s10
      $region32: #{enet_forward.90} parent=27 // pred_fallthru
        _
    $region28: #{enet_forward.90} parent=5 // pred_fallthru
      _
    %p162 = scmp.le.s32.totalorder 1, %s10
    %p163 = scmp.lt.s32.totalorder %s10, 3
    %p164 = pnand %p162, %p163
    %p165 = pneg %p164
    // Predicated region
    $region33: #{enet_forward.90} parent=5 // pred_check
      _
    $region34: #{enet_forward.90} parent=5 // pred_check_branch
      %167 = sbr.rel (%p164) target = $region36
    $region35: #{enet_forward.90} parent=5 // pred_region
      %s168 = ssub.s32 %s10, 1
      %s169 = smul.u32 32, %s15
      %p170 = scmp.lt.s32.totalorder %s169, 63
      %s171 = scalar_select %p170, %s169, 63
      %s172 = smul.addr %s171, 4
      %s173 = scalar_lea.vmem %s0, %s172
      %p174 = pneg %p36
      %p175 = pneg %p33
      %p176 = pneg %p57
      %p177 = pneg %p54
      %p178 = pneg %p78
      %p179 = pneg %p75
      %p180 = pneg %p99
      %p181 = pneg %p96
      %p182 = pneg %p125
      %p183 = pneg %p122
      %s184 = smul.u32 32, %s15
      %p185 = scmp.lt.s32.totalorder %s184, 63
      %s186 = scalar_select %p185, %s184, 63
      %s187 = smul.addr %s186, 4
      %s188 = scalar_lea.vmem %s4, %s187
      %s189 = smul.u32 32, %s15
      %p190 = scmp.lt.s32.totalorder %s189, 63
      %s191 = scalar_select %p190, %s189, 63
      %s192 = smul.addr %s191, 4
      %s193 = scalar_lea.vmem %s0, %s192
      %s194 = smul.u32 32, %s15
      %s195 = smul.u32 32, %s15
      %p196 = scmp.lt.s32.totalorder %s195, 63
      %s197 = scalar_select %p196, %s195, 63
      %s198 = smul.addr %s197, 4
      %s199 = scalar_lea.vmem %s4, %s198
      %s200 = smul.u32 32, %s15
      %v202 = vld [vmem:[%s193] sm:$0xf]
      %v203 = vld [vmem:[%s193 + $0x4] sm:$0xf]
      %v204 = vld [vmem:[%s193 + $0x8] sm:$0xf]
      %v205 = vld [vmem:[%s193 + $0xc] sm:$0xf]
      %v206 = vld [vmem:[%s193 + $0x10] sm:$0xf]
      %v207 = vld [vmem:[%s193 + $0x14] sm:$0xf]
      %v208 = vld [vmem:[%s193 + $0x18] sm:$0xf]
      %v209 = vld [vmem:[%s193 + $0x1c] sm:$0xf]
      %v210 = vld [vmem:[%s193 + $0x20] sm:$0xf]
      %v211 = vld [vmem:[%s193 + $0x24] sm:$0xf]
      %v212 = vld [vmem:[%s193 + $0x28] sm:$0xf]
      %v213 = vld [vmem:[%s193 + $0x2c] sm:$0xf]
      %v214 = vld [vmem:[%s193 + $0x30] sm:$0xf]
      %v215 = vld [vmem:[%s193 + $0x34] sm:$0xf]
      %v216 = vld [vmem:[%s193 + $0x38] sm:$0xf]
      %v217 = vld [vmem:[%s193 + $0x3c] sm:$0xf]
      %v218 = vld [vmem:[%s193 + $0x40] sm:$0xf]
      %v219 = vld [vmem:[%s193 + $0x44] sm:$0xf]
      %v220 = vld [vmem:[%s193 + $0x48] sm:$0xf]
      %v221 = vld [vmem:[%s193 + $0x4c] sm:$0xf]
      %v222 = vld [vmem:[%s193 + $0x50] sm:$0xf]
      %v223 = vld [vmem:[%s193 + $0x54] sm:$0xf]
      %v224 = vld [vmem:[%s193 + $0x58] sm:$0xf]
      %v225 = vld [vmem:[%s193 + $0x5c] sm:$0xf]
      %v226 = vld [vmem:[%s193 + $0x60] sm:$0xf]
      %v227 = vld [vmem:[%s193 + $0x64] sm:$0xf]
      %v228 = vld [vmem:[%s193 + $0x68] sm:$0xf]
      %v229 = vld [vmem:[%s193 + $0x6c] sm:$0xf]
      %v230 = vld [vmem:[%s193 + $0x70] sm:$0xf]
      %v231 = vld [vmem:[%s193 + $0x74] sm:$0xf]
      %v232 = vld [vmem:[%s193 + $0x78] sm:$0xf]
      %v233 = vld [vmem:[%s193 + $0x7c] sm:$0xf]
      %v234 = vld [vmem:[%s1] sm:$0xf]
      %v235 = vld [vmem:[%s1 + $0x4] sm:$0xf]
      %v268 = vunpack.c.l.b16 %v202
      %v269 = vunpack.c.l.b16 %v203
      %v270 = vunpack.c.l.b16 %v204
      %v271 = vunpack.c.l.b16 %v205
      %v272 = vunpack.c.l.b16 %v206
      %v273 = vunpack.c.l.b16 %v207
      %v274 = vunpack.c.l.b16 %v208
      %v275 = vunpack.c.l.b16 %v209
      %v276 = vunpack.c.l.b16 %v210
      %v277 = vunpack.c.l.b16 %v211
      %v278 = vunpack.c.l.b16 %v212
      %v279 = vunpack.c.l.b16 %v213
      %v280 = vunpack.c.l.b16 %v214
      %v281 = vunpack.c.l.b16 %v215
      %v282 = vunpack.c.l.b16 %v216
      %v283 = vunpack.c.l.b16 %v217
      %v284 = vunpack.c.l.b16 %v218
      %v285 = vunpack.c.l.b16 %v219
      %v286 = vunpack.c.l.b16 %v220
      %v287 = vunpack.c.l.b16 %v221
      %v288 = vunpack.c.l.b16 %v222
      %v289 = vunpack.c.l.b16 %v223
      %v290 = vunpack.c.l.b16 %v224
      %v291 = vunpack.c.l.b16 %v225
      %v292 = vunpack.c.l.b16 %v226
      %v293 = vunpack.c.l.b16 %v227
      %v294 = vunpack.c.l.b16 %v228
      %v295 = vunpack.c.l.b16 %v229
      %v296 = vunpack.c.l.b16 %v230
      %v297 = vunpack.c.l.b16 %v231
      %v298 = vunpack.c.l.b16 %v232
      %v299 = vunpack.c.l.b16 %v233
      %v300 = vpack.c.b16 %v269, %v268
      %v301 = vpack.c.b16 %v271, %v270
      %v302 = vpack.c.b16 %v273, %v272
      %v303 = vpack.c.b16 %v275, %v274
      %v304 = vpack.c.b16 %v277, %v276
      %v305 = vpack.c.b16 %v279, %v278
      %v306 = vpack.c.b16 %v281, %v280
      %v307 = vpack.c.b16 %v283, %v282
      %v308 = vpack.c.b16 %v285, %v284
      %v309 = vpack.c.b16 %v287, %v286
      %v310 = vpack.c.b16 %v289, %v288
      %v311 = vpack.c.b16 %v291, %v290
      %v312 = vpack.c.b16 %v293, %v292
      %v313 = vpack.c.b16 %v295, %v294
      %v314 = vpack.c.b16 %v297, %v296
      %v315 = vpack.c.b16 %v299, %v298
      %v318 = vunpack.c.l.b16 %v234
      %v319 = vunpack.c.l.b16 %v235
      %v320 = vpack.c.b16 %v319, %v318
      %vm322 = vcmask 130048
      %v324 = vsel %vm322, %v300, 0
      %v327 = vsel %vm322, %v301, 0
      %v330 = vsel %vm322, %v302, 0
      %v333 = vsel %vm322, %v303, 0
      %v336 = vsel %vm322, %v304, 0
      %v339 = vsel %vm322, %v305, 0
      %v342 = vsel %vm322, %v306, 0
      %v345 = vsel %vm322, %v307, 0
      %v348 = vsel %vm322, %v308, 0
      %v351 = vsel %vm322, %v309, 0
      %v354 = vsel %vm322, %v310, 0
      %v357 = vsel %vm322, %v311, 0
      %v360 = vsel %vm322, %v312, 0
      %v363 = vsel %vm322, %v313, 0
      %v366 = vsel %vm322, %v314, 0
      %v369 = vsel %vm322, %v315, 0
      %371 = vmatprep.subr.bf16.mxu0 0
      %372 = vmatpush1.bf16.msra.mxu0 0
      %373 = vmatprep.subr.bf16.mxu0 0
      %374 = vmatpush1.bf16.msra.mxu0 0
      %375 = vmatprep.subr.bf16.mxu0 0
      %376 = vmatpush1.bf16.msra.mxu0 0
      %377 = vmatprep.subr.bf16.mxu0 0
      %378 = vmatpush1.bf16.msra.mxu0 0
      %379 = vmatprep.subr.bf16.mxu0 0
      %380 = vmatpush1.bf16.msra.mxu0 0
      %381 = vmatprep.subr.bf16.mxu0 0
      %382 = vmatpush1.bf16.msra.mxu0 0
      %383 = vmatprep.subr.bf16.mxu0 0
      %384 = vmatpush1.bf16.msra.mxu0 0
      %385 = vmatprep.subr.bf16.mxu0 0
      %386 = vmatpush1.bf16.msra.mxu0 %v320
      %387 = vmatprep.subr.bf16.mxu0 0
      %388 = vmatpush2.bf16.msra.mxu0 0
      %389 = vmatprep.subr.bf16.mxu0 0
      %390 = vmatpush2.bf16.msra.mxu0 0
      %391 = vmatprep.subr.bf16.mxu0 0
      %392 = vmatpush2.bf16.msra.mxu0 0
      %393 = vmatprep.subr.bf16.mxu0 0
      %394 = vmatpush2.bf16.msra.mxu0 0
      %395 = vmatprep.subr.bf16.mxu0 0
      %396 = vmatpush2.bf16.msra.mxu0 0
      %397 = vmatprep.subr.bf16.mxu0 0
      %398 = vmatpush2.bf16.msra.mxu0 0
      %399 = vmatprep.subr.bf16.mxu0 0
      %400 = vmatpush2.bf16.msra.mxu0 0
      %401 = vmatprep.subr.bf16.mxu0 0
      %402 = vmatpush2.bf16.msra.mxu0 0
      %403 = vmatprep.mubr.bf16.mxu0 0
      %404 = vmatmul.mubr.bf16.gmra.mxu0 %v324
      %v405 = vpop.f32.mrf.mxu0
      %v406 = vadd.f32 0.0, %v405
      %v407 = vpop.f32.mrf.mxu0
      %v408 = vpop.f32.mrf.mxu0
      %v409 = vadd.f32 0.0, %v408
      %v410 = vpop.f32.mrf.mxu0
      %411 = vmatprep.mubr.bf16.mxu0 0
      %412 = vmatmul.mubr.bf16.gmra.mxu0 %v327
      %v413 = vpop.f32.mrf.mxu0
      %v414 = vadd.f32 0.0, %v413
      %v415 = vpop.f32.mrf.mxu0
      %v416 = vpop.f32.mrf.mxu0
      %v417 = vadd.f32 0.0, %v416
      %v418 = vpop.f32.mrf.mxu0
      %419 = vmatprep.mubr.bf16.mxu0 0
      %420 = vmatmul.mubr.bf16.gmra.mxu0 %v330
      %v421 = vpop.f32.mrf.mxu0
      %v422 = vadd.f32 0.0, %v421
      %v423 = vpop.f32.mrf.mxu0
      %v424 = vpop.f32.mrf.mxu0
      %v425 = vadd.f32 0.0, %v424
      %v426 = vpop.f32.mrf.mxu0
      %427 = vmatprep.mubr.bf16.mxu0 0
      %428 = vmatmul.mubr.bf16.gmra.mxu0 %v333
      %v429 = vpop.f32.mrf.mxu0
      %v430 = vadd.f32 0.0, %v429
      %v431 = vpop.f32.mrf.mxu0
      %v432 = vpop.f32.mrf.mxu0
      %v433 = vadd.f32 0.0, %v432
      %v434 = vpop.f32.mrf.mxu0
      %435 = vmatprep.mubr.bf16.mxu0 0
      %436 = vmatmul.mubr.bf16.gmra.mxu0 %v336
      %v437 = vpop.f32.mrf.mxu0
      %v438 = vadd.f32 0.0, %v437
      %v439 = vpop.f32.mrf.mxu0
      %v440 = vpop.f32.mrf.mxu0
      %v441 = vadd.f32 0.0, %v440
      %v442 = vpop.f32.mrf.mxu0
      %443 = vmatprep.mubr.bf16.mxu0 0
      %444 = vmatmul.mubr.bf16.gmra.mxu0 %v339
      %v445 = vpop.f32.mrf.mxu0
      %v446 = vadd.f32 0.0, %v445
      %v447 = vpop.f32.mrf.mxu0
      %v448 = vpop.f32.mrf.mxu0
      %v449 = vadd.f32 0.0, %v448
      %v450 = vpop.f32.mrf.mxu0
      %451 = vmatprep.mubr.bf16.mxu0 0
      %452 = vmatmul.mubr.bf16.gmra.mxu0 %v342
      %v453 = vpop.f32.mrf.mxu0
      %v454 = vadd.f32 0.0, %v453
      %v455 = vpop.f32.mrf.mxu0
      %v456 = vpop.f32.mrf.mxu0
      %v457 = vadd.f32 0.0, %v456
      %v458 = vpop.f32.mrf.mxu0
      %459 = vmatprep.mubr.bf16.mxu0 0
      %460 = vmatmul.mubr.bf16.gmra.mxu0 %v345
      %v461 = vpop.f32.mrf.mxu0
      %v462 = vadd.f32 0.0, %v461
      %v463 = vpop.f32.mrf.mxu0
      %v464 = vpop.f32.mrf.mxu0
      %v465 = vadd.f32 0.0, %v464
      %v466 = vpop.f32.mrf.mxu0
      %467 = vmatprep.mubr.bf16.mxu0 0
      %468 = vmatmul.mubr.bf16.gmra.mxu0 %v348
      %v469 = vpop.f32.mrf.mxu0
      %v470 = vadd.f32 0.0, %v469
      %v471 = vpop.f32.mrf.mxu0
      %v472 = vpop.f32.mrf.mxu0
      %v473 = vadd.f32 0.0, %v472
      %v474 = vpop.f32.mrf.mxu0
      %475 = vmatprep.mubr.bf16.mxu0 0
      %476 = vmatmul.mubr.bf16.gmra.mxu0 %v351
      %v477 = vpop.f32.mrf.mxu0
      %v478 = vadd.f32 0.0, %v477
      %v479 = vpop.f32.mrf.mxu0
      %v480 = vpop.f32.mrf.mxu0
      %v481 = vadd.f32 0.0, %v480
      %v482 = vpop.f32.mrf.mxu0
      %483 = vmatprep.mubr.bf16.mxu0 0
      %484 = vmatmul.mubr.bf16.gmra.mxu0 %v354
      %v485 = vpop.f32.mrf.mxu0
      %v486 = vadd.f32 0.0, %v485
      %v487 = vpop.f32.mrf.mxu0
      %v488 = vpop.f32.mrf.mxu0
      %v489 = vadd.f32 0.0, %v488
      %v490 = vpop.f32.mrf.mxu0
      %491 = vmatprep.mubr.bf16.mxu0 0
      %492 = vmatmul.mubr.bf16.gmra.mxu0 %v357
      %v493 = vpop.f32.mrf.mxu0
      %v494 = vadd.f32 0.0, %v493
      %v495 = vpop.f32.mrf.mxu0
      %v496 = vpop.f32.mrf.mxu0
      %v497 = vadd.f32 0.0, %v496
      %v498 = vpop.f32.mrf.mxu0
      %499 = vmatprep.mubr.bf16.mxu0 0
      %500 = vmatmul.mubr.bf16.gmra.mxu0 %v360
      %v501 = vpop.f32.mrf.mxu0
      %v502 = vadd.f32 0.0, %v501
      %v503 = vpop.f32.mrf.mxu0
      %v504 = vpop.f32.mrf.mxu0
      %v505 = vadd.f32 0.0, %v504
      %v506 = vpop.f32.mrf.mxu0
      %507 = vmatprep.mubr.bf16.mxu0 0
      %508 = vmatmul.mubr.bf16.gmra.mxu0 %v363
      %v509 = vpop.f32.mrf.mxu0
      %v510 = vadd.f32 0.0, %v509
      %v511 = vpop.f32.mrf.mxu0
      %v512 = vpop.f32.mrf.mxu0
      %v513 = vadd.f32 0.0, %v512
      %v514 = vpop.f32.mrf.mxu0
      %515 = vmatprep.mubr.bf16.mxu0 0
      %516 = vmatmul.mubr.bf16.gmra.mxu0 %v366
      %v517 = vpop.f32.mrf.mxu0
      %v518 = vadd.f32 0.0, %v517
      %v519 = vpop.f32.mrf.mxu0
      %v520 = vpop.f32.mrf.mxu0
      %v521 = vadd.f32 0.0, %v520
      %v522 = vpop.f32.mrf.mxu0
      %523 = vmatprep.mubr.bf16.mxu0 0
      %524 = vmatmul.mubr.bf16.gmra.mxu0 %v369
      %v525 = vpop.f32.mrf.mxu0
      %v526 = vadd.f32 0.0, %v525
      %v527 = vpop.f32.mrf.mxu0
      %v528 = vpop.f32.mrf.mxu0
      %v529 = vadd.f32 0.0, %v528
      %v530 = vpop.f32.mrf.mxu0
      %531 = vdwg.mxu0
      %v532 = vld [vmem:[%s2] sm:$0x1]
      %v534 = vlaneseq
      %v535 = vshrl.u32 %v534, 7
      %v536 = vsub.s32 0, %v535
      %v537 = vrot.slane %v532, %v536
      %v539 = vmul.f32 %v406, %v537
      %v540 = vmul.f32 %v409, %v537
      %v541 = vmul.f32 %v414, %v537
      %v542 = vmul.f32 %v417, %v537
      %v543 = vmul.f32 %v422, %v537
      %v544 = vmul.f32 %v425, %v537
      %v545 = vmul.f32 %v430, %v537
      %v546 = vmul.f32 %v433, %v537
      %v547 = vmul.f32 %v438, %v537
      %v548 = vmul.f32 %v441, %v537
      %v549 = vmul.f32 %v446, %v537
      %v550 = vmul.f32 %v449, %v537
      %v551 = vmul.f32 %v454, %v537
      %v552 = vmul.f32 %v457, %v537
      %v553 = vmul.f32 %v462, %v537
      %v554 = vmul.f32 %v465, %v537
      %v555 = vmul.f32 %v470, %v537
      %v556 = vmul.f32 %v473, %v537
      %v557 = vmul.f32 %v478, %v537
      %v558 = vmul.f32 %v481, %v537
      %v559 = vmul.f32 %v486, %v537
      %v560 = vmul.f32 %v489, %v537
      %v561 = vmul.f32 %v494, %v537
      %v562 = vmul.f32 %v497, %v537
      %v563 = vmul.f32 %v502, %v537
      %v564 = vmul.f32 %v505, %v537
      %v565 = vmul.f32 %v510, %v537
      %v566 = vmul.f32 %v513, %v537
      %v567 = vmul.f32 %v518, %v537
      %v568 = vmul.f32 %v521, %v537
      %v569 = vmul.f32 %v526, %v537
      %v570 = vmul.f32 %v529, %v537
      %v571 = vld [vmem:[%s3] sm:$0x1]
      %v573 = vlaneseq
      %v574 = vshrl.u32 %v573, 7
      %v575 = vsub.s32 0, %v574
      %v576 = vrot.slane %v571, %v575
      %v578 = vadd.f32 %v539, %v576
      %v579 = vadd.f32 %v540, %v576
      %v580 = vadd.f32 %v541, %v576
      %v581 = vadd.f32 %v542, %v576
      %v582 = vadd.f32 %v543, %v576
      %v583 = vadd.f32 %v544, %v576
      %v584 = vadd.f32 %v545, %v576
      %v585 = vadd.f32 %v546, %v576
      %v586 = vadd.f32 %v547, %v576
      %v587 = vadd.f32 %v548, %v576
      %v588 = vadd.f32 %v549, %v576
      %v589 = vadd.f32 %v550, %v576
      %v590 = vadd.f32 %v551, %v576
      %v591 = vadd.f32 %v552, %v576
      %v592 = vadd.f32 %v553, %v576
      %v593 = vadd.f32 %v554, %v576
      %v594 = vadd.f32 %v555, %v576
      %v595 = vadd.f32 %v556, %v576
      %v596 = vadd.f32 %v557, %v576
      %v597 = vadd.f32 %v558, %v576
      %v598 = vadd.f32 %v559, %v576
      %v599 = vadd.f32 %v560, %v576
      %v600 = vadd.f32 %v561, %v576
      %v601 = vadd.f32 %v562, %v576
      %v602 = vadd.f32 %v563, %v576
      %v603 = vadd.f32 %v564, %v576
      %v604 = vadd.f32 %v565, %v576
      %v605 = vadd.f32 %v566, %v576
      %v606 = vadd.f32 %v567, %v576
      %v607 = vadd.f32 %v568, %v576
      %v608 = vadd.f32 %v569, %v576
      %v609 = vadd.f32 %v570, %v576
      %vm610 = vcmp.ge.f32.partialorder %v578, 0.0
      %vm611 = vcmp.ge.f32.partialorder %v579, 0.0
      %vm612 = vcmp.ge.f32.partialorder %v580, 0.0
      %vm613 = vcmp.ge.f32.partialorder %v581, 0.0
      %vm614 = vcmp.ge.f32.partialorder %v582, 0.0
      %vm615 = vcmp.ge.f32.partialorder %v583, 0.0
      %vm616 = vcmp.ge.f32.partialorder %v584, 0.0
      %vm617 = vcmp.ge.f32.partialorder %v585, 0.0
      %vm618 = vcmp.ge.f32.partialorder %v586, 0.0
      %vm619 = vcmp.ge.f32.partialorder %v587, 0.0
      %vm620 = vcmp.ge.f32.partialorder %v588, 0.0
      %vm621 = vcmp.ge.f32.partialorder %v589, 0.0
      %vm622 = vcmp.ge.f32.partialorder %v590, 0.0
      %vm623 = vcmp.ge.f32.partialorder %v591, 0.0
      %vm624 = vcmp.ge.f32.partialorder %v592, 0.0
      %vm625 = vcmp.ge.f32.partialorder %v593, 0.0
      %vm626 = vcmp.ge.f32.partialorder %v594, 0.0
      %vm627 = vcmp.ge.f32.partialorder %v595, 0.0
      %vm628 = vcmp.ge.f32.partialorder %v596, 0.0
      %vm629 = vcmp.ge.f32.partialorder %v597, 0.0
      %vm630 = vcmp.ge.f32.partialorder %v598, 0.0
      %vm631 = vcmp.ge.f32.partialorder %v599, 0.0
      %vm632 = vcmp.ge.f32.partialorder %v600, 0.0
      %vm633 = vcmp.ge.f32.partialorder %v601, 0.0
      %vm634 = vcmp.ge.f32.partialorder %v602, 0.0
      %vm635 = vcmp.ge.f32.partialorder %v603, 0.0
      %vm636 = vcmp.ge.f32.partialorder %v604, 0.0
      %vm637 = vcmp.ge.f32.partialorder %v605, 0.0
      %vm638 = vcmp.ge.f32.partialorder %v606, 0.0
      %vm639 = vcmp.ge.f32.partialorder %v607, 0.0
      %vm640 = vcmp.ge.f32.partialorder %v608, 0.0
      %vm641 = vcmp.ge.f32.partialorder %v609, 0.0
      %v642 = vmul.f32 %v578, 0.25
      %v643 = vmul.f32 %v579, 0.25
      %v644 = vmul.f32 %v580, 0.25
      %v645 = vmul.f32 %v581, 0.25
      %v646 = vmul.f32 %v582, 0.25
      %v647 = vmul.f32 %v583, 0.25
      %v648 = vmul.f32 %v584, 0.25
      %v649 = vmul.f32 %v585, 0.25
      %v650 = vmul.f32 %v586, 0.25
      %v651 = vmul.f32 %v587, 0.25
      %v652 = vmul.f32 %v588, 0.25
      %v653 = vmul.f32 %v589, 0.25
      %v654 = vmul.f32 %v590, 0.25
      %v655 = vmul.f32 %v591, 0.25
      %v656 = vmul.f32 %v592, 0.25
      %v657 = vmul.f32 %v593, 0.25
      %v658 = vmul.f32 %v594, 0.25
      %v659 = vmul.f32 %v595, 0.25
      %v660 = vmul.f32 %v596, 0.25
      %v661 = vmul.f32 %v597, 0.25
      %v662 = vmul.f32 %v598, 0.25
      %v663 = vmul.f32 %v599, 0.25
      %v664 = vmul.f32 %v600, 0.25
      %v665 = vmul.f32 %v601, 0.25
      %v666 = vmul.f32 %v602, 0.25
      %v667 = vmul.f32 %v603, 0.25
      %v668 = vmul.f32 %v604, 0.25
      %v669 = vmul.f32 %v605, 0.25
      %v670 = vmul.f32 %v606, 0.25
      %v671 = vmul.f32 %v607, 0.25
      %v672 = vmul.f32 %v608, 0.25
      %v673 = vmul.f32 %v609, 0.25
      %v674 = vsel %vm610, %v578, %v642
      %v675 = vsel %vm611, %v579, %v643
      %v676 = vsel %vm612, %v580, %v644
      %v677 = vsel %vm613, %v581, %v645
      %v678 = vsel %vm614, %v582, %v646
      %v679 = vsel %vm615, %v583, %v647
      %v680 = vsel %vm616, %v584, %v648
      %v681 = vsel %vm617, %v585, %v649
      %v682 = vsel %vm618, %v586, %v650
      %v683 = vsel %vm619, %v587, %v651
      %v684 = vsel %vm620, %v588, %v652
      %v685 = vsel %vm621, %v589, %v653
      %v686 = vsel %vm622, %v590, %v654
      %v687 = vsel %vm623, %v591, %v655
      %v688 = vsel %vm624, %v592, %v656
      %v689 = vsel %vm625, %v593, %v657
      %v690 = vsel %vm626, %v594, %v658
      %v691 = vsel %vm627, %v595, %v659
      %v692 = vsel %vm628, %v596, %v660
      %v693 = vsel %vm629, %v597, %v661
      %v694 = vsel %vm630, %v598, %v662
      %v695 = vsel %vm631, %v599, %v663
      %v696 = vsel %vm632, %v600, %v664
      %v697 = vsel %vm633, %v601, %v665
      %v698 = vsel %vm634, %v602, %v666
      %v699 = vsel %vm635, %v603, %v667
      %v700 = vsel %vm636, %v604, %v668
      %v701 = vsel %vm637, %v605, %v669
      %v702 = vsel %vm638, %v606, %v670
      %v703 = vsel %vm639, %v607, %v671
      %v704 = vsel %vm640, %v608, %v672
      %v705 = vsel %vm641, %v609, %v673
      %v706 = vpack.c.bf16 %v675, %v674
      %v707 = vpack.c.bf16 %v677, %v676
      %v708 = vpack.c.bf16 %v679, %v678
      %v709 = vpack.c.bf16 %v681, %v680
      %v710 = vpack.c.bf16 %v683, %v682
      %v711 = vpack.c.bf16 %v685, %v684
      %v712 = vpack.c.bf16 %v687, %v686
      %v713 = vpack.c.bf16 %v689, %v688
      %v714 = vpack.c.bf16 %v691, %v690
      %v715 = vpack.c.bf16 %v693, %v692
      %v716 = vpack.c.bf16 %v695, %v694
      %v717 = vpack.c.bf16 %v697, %v696
      %v718 = vpack.c.bf16 %v699, %v698
      %v719 = vpack.c.bf16 %v701, %v700
      %v720 = vpack.c.bf16 %v703, %v702
      %v721 = vpack.c.bf16 %v705, %v704
      %v738 = vunpack.c.l.b16 %v706
      %v739 = vunpack.c.h.b16 %v706
      %v740 = vunpack.c.l.b16 %v707
      %v741 = vunpack.c.h.b16 %v707
      %v742 = vunpack.c.l.b16 %v708
      %v743 = vunpack.c.h.b16 %v708
      %v744 = vunpack.c.l.b16 %v709
      %v745 = vunpack.c.h.b16 %v709
      %v746 = vunpack.c.l.b16 %v710
      %v747 = vunpack.c.h.b16 %v710
      %v748 = vunpack.c.l.b16 %v711
      %v749 = vunpack.c.h.b16 %v711
      %v750 = vunpack.c.l.b16 %v712
      %v751 = vunpack.c.h.b16 %v712
      %v752 = vunpack.c.l.b16 %v713
      %v753 = vunpack.c.h.b16 %v713
      %v754 = vunpack.c.l.b16 %v714
      %v755 = vunpack.c.h.b16 %v714
      %v756 = vunpack.c.l.b16 %v715
      %v757 = vunpack.c.h.b16 %v715
      %v758 = vunpack.c.l.b16 %v716
      %v759 = vunpack.c.h.b16 %v716
      %v760 = vunpack.c.l.b16 %v717
      %v761 = vunpack.c.h.b16 %v717
      %v762 = vunpack.c.l.b16 %v718
      %v763 = vunpack.c.h.b16 %v718
      %v764 = vunpack.c.l.b16 %v719
      %v765 = vunpack.c.h.b16 %v719
      %v766 = vunpack.c.l.b16 %v720
      %v767 = vunpack.c.h.b16 %v720
      %v768 = vunpack.c.l.b16 %v721
      %v769 = vunpack.c.h.b16 %v721
      %v770 = vpack.c.b16 %v738, %v738
      %v771 = vpack.c.b16 %v739, %v739
      %v772 = vpack.c.b16 %v740, %v740
      %v773 = vpack.c.b16 %v741, %v741
      %v774 = vpack.c.b16 %v742, %v742
      %v775 = vpack.c.b16 %v743, %v743
      %v776 = vpack.c.b16 %v744, %v744
      %v777 = vpack.c.b16 %v745, %v745
      %v778 = vpack.c.b16 %v746, %v746
      %v779 = vpack.c.b16 %v747, %v747
      %v780 = vpack.c.b16 %v748, %v748
      %v781 = vpack.c.b16 %v749, %v749
      %v782 = vpack.c.b16 %v750, %v750
      %v783 = vpack.c.b16 %v751, %v751
      %v784 = vpack.c.b16 %v752, %v752
      %v785 = vpack.c.b16 %v753, %v753
      %v786 = vpack.c.b16 %v754, %v754
      %v787 = vpack.c.b16 %v755, %v755
      %v788 = vpack.c.b16 %v756, %v756
      %v789 = vpack.c.b16 %v757, %v757
      %v790 = vpack.c.b16 %v758, %v758
      %v791 = vpack.c.b16 %v759, %v759
      %v792 = vpack.c.b16 %v760, %v760
      %v793 = vpack.c.b16 %v761, %v761
      %v794 = vpack.c.b16 %v762, %v762
      %v795 = vpack.c.b16 %v763, %v763
      %v796 = vpack.c.b16 %v764, %v764
      %v797 = vpack.c.b16 %v765, %v765
      %v798 = vpack.c.b16 %v766, %v766
      %v799 = vpack.c.b16 %v767, %v767
      %v800 = vpack.c.b16 %v768, %v768
      %v801 = vpack.c.b16 %v769, %v769
      %vm834 = vcmask 125952
      %835 = vst.msk [vmem:[%s199] sm:$0xf] %vm834, %v770
      %836 = vst.msk [vmem:[%s199 + $0x4] sm:$0xf] %vm834, %v771
      %837 = vst.msk [vmem:[%s199 + $0x8] sm:$0xf] %vm834, %v772
      %838 = vst.msk [vmem:[%s199 + $0xc] sm:$0xf] %vm834, %v773
      %839 = vst.msk [vmem:[%s199 + $0x10] sm:$0xf] %vm834, %v774
      %840 = vst.msk [vmem:[%s199 + $0x14] sm:$0xf] %vm834, %v775
      %841 = vst.msk [vmem:[%s199 + $0x18] sm:$0xf] %vm834, %v776
      %842 = vst.msk [vmem:[%s199 + $0x1c] sm:$0xf] %vm834, %v777
      %843 = vst.msk [vmem:[%s199 + $0x20] sm:$0xf] %vm834, %v778
      %844 = vst.msk [vmem:[%s199 + $0x24] sm:$0xf] %vm834, %v779
      %845 = vst.msk [vmem:[%s199 + $0x28] sm:$0xf] %vm834, %v780
      %846 = vst.msk [vmem:[%s199 + $0x2c] sm:$0xf] %vm834, %v781
      %847 = vst.msk [vmem:[%s199 + $0x30] sm:$0xf] %vm834, %v782
      %848 = vst.msk [vmem:[%s199 + $0x34] sm:$0xf] %vm834, %v783
      %849 = vst.msk [vmem:[%s199 + $0x38] sm:$0xf] %vm834, %v784
      %850 = vst.msk [vmem:[%s199 + $0x3c] sm:$0xf] %vm834, %v785
      %851 = vst.msk [vmem:[%s199 + $0x40] sm:$0xf] %vm834, %v786
      %852 = vst.msk [vmem:[%s199 + $0x44] sm:$0xf] %vm834, %v787
      %853 = vst.msk [vmem:[%s199 + $0x48] sm:$0xf] %vm834, %v788
      %854 = vst.msk [vmem:[%s199 + $0x4c] sm:$0xf] %vm834, %v789
      %855 = vst.msk [vmem:[%s199 + $0x50] sm:$0xf] %vm834, %v790
      %856 = vst.msk [vmem:[%s199 + $0x54] sm:$0xf] %vm834, %v791
      %857 = vst.msk [vmem:[%s199 + $0x58] sm:$0xf] %vm834, %v792
      %858 = vst.msk [vmem:[%s199 + $0x5c] sm:$0xf] %vm834, %v793
      %859 = vst.msk [vmem:[%s199 + $0x60] sm:$0xf] %vm834, %v794
      %860 = vst.msk [vmem:[%s199 + $0x64] sm:$0xf] %vm834, %v795
      %861 = vst.msk [vmem:[%s199 + $0x68] sm:$0xf] %vm834, %v796
      %862 = vst.msk [vmem:[%s199 + $0x6c] sm:$0xf] %vm834, %v797
      %863 = vst.msk [vmem:[%s199 + $0x70] sm:$0xf] %vm834, %v798
      %864 = vst.msk [vmem:[%s199 + $0x74] sm:$0xf] %vm834, %v799
      %865 = vst.msk [vmem:[%s199 + $0x78] sm:$0xf] %vm834, %v800
      %866 = vst.msk [vmem:[%s199 + $0x7c] sm:$0xf] %vm834, %v801
      %s867 = smul.u32 32, %s15
      %p868 = scmp.lt.s32.totalorder %s867, 63
      %s869 = scalar_select %p868, %s867, 63
      %s870 = smul.addr %s869, 4
      %s871 = scalar_lea.vmem %s4, %s870
      // Predicated region
      $region37: #{enet_forward.90} parent=35 // pred_check
        %p872 = pneg %p122
      $region38: #{enet_forward.90} parent=35 // pred_check_branch
        %874 = sbr.rel (%p872) target = $region40
      $region39: #{enet_forward.90} parent=35 // pred_region
        %s875 = smul.u32 32, %s15
      $region40: #{enet_forward.90} parent=35 // pred_fallthru
        _
    $region36: #{enet_forward.90} parent=5 // pred_fallthru
      _
    %p876 = scmp.le.s32.totalorder 2, %s10
    // Predicated region
    $region41: #{enet_forward.90} parent=5 // pred_check
      %p877 = pneg %p876
    $region42: #{enet_forward.90} parent=5 // pred_check_branch
      %879 = sbr.rel (%p877) target = $region44
    $region43: #{enet_forward.90} parent=5 // pred_region
      %s880 = ssub.s32 %s10, 2
      // Predicated region
      $region45: #{enet_forward.90} parent=43 // pred_check
        %p881 = pneg %p128
      $region46: #{enet_forward.90} parent=43 // pred_check_branch
        %883 = sbr.rel (%p881) target = $region48
      $region47: #{enet_forward.90} parent=43 // pred_region
        %s884 = smul.u32 32, %s16
        %p885 = scmp.lt.s32.totalorder %s884, 63
        %s886 = scalar_select %p885, %s884, 63
        %s887 = smul.addr %s886, 4
        %s888 = scalar_lea.vmem %s4, %s887
      $region48: #{enet_forward.90} parent=43 // pred_fallthru
        _
    $region44: #{enet_forward.90} parent=5 // pred_fallthru
      _
  $region6: #{enet_forward.90} parent=0 // loop_footer
    %s14 = sadd.s32 1, %s10
  $region7: #{enet_forward.90} parent=0 // loop_footer_branch
    %9 = sbr.rel target = $region3
  $region8: #{enet_forward.90} parent=0 // loop_exit
    _

// kernel: enet_forward.91
$region0: #{enet_forward.91}
  #allocation0 [shape = 'u32[]', space=smem, size = 0x4, offset = 0x4, fixed_abs, tag = 'smem constant byte address 0x4 - core index']
  #allocation1 [shape = 'u32[144,128]{1,0:T(1,128)}', space=vmem, size = 0x12000, scoped, tag = 'internal scratch']
  %s0 = inlined_call_operand.vmem [shape: bf16[128,64], index: 0, kind: input, shape index: {}]
  %s1 = inlined_call_operand.vmem [shape: bf16[64,16], index: 1, kind: input, shape index: {}]
  %s2 = inlined_call_operand.vmem [shape: f32[1,16], index: 2, kind: input, shape index: {}]
  %s3 = inlined_call_operand.vmem [shape: f32[1,16], index: 3, kind: input, shape index: {}]
  %s4 = inlined_call_operand.vmem [shape: bf16[128,16], index: 4, kind: output, shape index: {}]
  %s5 = sld [smem:[#allocation0]]
  $region26: #{enet_forward.91} parent=0
    _
  %s7 = ssub.s32 1, %s5
  %s8 = scalar_select 0, %s7, %s5
  // Predicated region
  $region2: #{enet_forward.91} parent=0 // pred_check
    _
  $region3: #{enet_forward.91} parent=0 // pred_check_branch
    %10 = sbr.rel (0) target = $region5
  $region4: #{enet_forward.91} parent=0 // pred_region
    _
  $region5: #{enet_forward.91} parent=0 // pred_fallthru
    _
  // Predicated region
  $region6: #{enet_forward.91} parent=0 // pred_check
    _
  $region7: #{enet_forward.91} parent=0 // pred_check_branch
    %12 = sbr.rel (0) target = $region9
  $region8: #{enet_forward.91} parent=0 // pred_region
    _
  $region9: #{enet_forward.91} parent=0 // pred_fallthru
    _
  // Predicated region
  $region10: #{enet_forward.91} parent=0 // pred_check
    _
  $region11: #{enet_forward.91} parent=0 // pred_check_branch
    %14 = sbr.rel (0) target = $region13
  $region12: #{enet_forward.91} parent=0 // pred_region
    _
  $region13: #{enet_forward.91} parent=0 // pred_fallthru
    _
  // Predicated region
  $region14: #{enet_forward.91} parent=0 // pred_check
    _
  $region15: #{enet_forward.91} parent=0 // pred_check_branch
    %16 = sbr.rel (0) target = $region17
  $region16: #{enet_forward.91} parent=0 // pred_region
    _
  $region17: #{enet_forward.91} parent=0 // pred_fallthru
    _
  %v18 = vld [vmem:[%s0] sm:$0xf]
  %v19 = vld [vmem:[%s0 + $0x4] sm:$0xf]
  %v20 = vld [vmem:[%s0 + $0x8] sm:$0xf]
  %v21 = vld [vmem:[%s0 + $0xc] sm:$0xf]
  %v22 = vld [vmem:[%s0 + $0x10] sm:$0xf]
  %v23 = vld [vmem:[%s0 + $0x14] sm:$0xf]
  %v24 = vld [vmem:[%s0 + $0x18] sm:$0xf]
  %v25 = vld [vmem:[%s0 + $0x1c] sm:$0xf]
  %v26 = vld [vmem:[%s0 + $0x20] sm:$0xf]
  %v27 = vld [vmem:[%s0 + $0x24] sm:$0xf]
  %v28 = vld [vmem:[%s0 + $0x28] sm:$0xf]
  %v29 = vld [vmem:[%s0 + $0x2c] sm:$0xf]
  %v30 = vld [vmem:[%s0 + $0x30] sm:$0xf]
  %v31 = vld [vmem:[%s0 + $0x34] sm:$0xf]
  %v32 = vld [vmem:[%s0 + $0x38] sm:$0xf]
  %v33 = vld [vmem:[%s0 + $0x3c] sm:$0xf]
  %v34 = vld [vmem:[%s1] sm:$0xf]
  %v35 = vld [vmem:[%s1 + $0x4] sm:$0xf]
  %v36 = vld [vmem:[%s1 + $0x8] sm:$0xf]
  %v37 = vld [vmem:[%s1 + $0xc] sm:$0xf]
  %v38 = vld [vmem:[%s1 + $0x10] sm:$0xf]
  %v39 = vld [vmem:[%s1 + $0x14] sm:$0xf]
  %v40 = vld [vmem:[%s1 + $0x18] sm:$0xf]
  %v41 = vld [vmem:[%s1 + $0x1c] sm:$0xf]
  %v58 = vunpack.c.l.b16 %v18
  %v59 = vunpack.c.l.b16 %v19
  %v60 = vunpack.c.l.b16 %v20
  %v61 = vunpack.c.l.b16 %v21
  %v62 = vunpack.c.l.b16 %v22
  %v63 = vunpack.c.l.b16 %v23
  %v64 = vunpack.c.l.b16 %v24
  %v65 = vunpack.c.l.b16 %v25
  %v66 = vunpack.c.l.b16 %v26
  %v67 = vunpack.c.l.b16 %v27
  %v68 = vunpack.c.l.b16 %v28
  %v69 = vunpack.c.l.b16 %v29
  %v70 = vunpack.c.l.b16 %v30
  %v71 = vunpack.c.l.b16 %v31
  %v72 = vunpack.c.l.b16 %v32
  %v73 = vunpack.c.l.b16 %v33
  %v74 = vpack.c.b16 %v59, %v58
  %v75 = vpack.c.b16 %v61, %v60
  %v76 = vpack.c.b16 %v63, %v62
  %v77 = vpack.c.b16 %v65, %v64
  %v78 = vpack.c.b16 %v67, %v66
  %v79 = vpack.c.b16 %v69, %v68
  %v80 = vpack.c.b16 %v71, %v70
  %v81 = vpack.c.b16 %v73, %v72
  %v90 = vunpack.c.l.b16 %v34
  %v91 = vunpack.c.l.b16 %v35
  %v92 = vunpack.c.l.b16 %v36
  %v93 = vunpack.c.l.b16 %v37
  %v94 = vunpack.c.l.b16 %v38
  %v95 = vunpack.c.l.b16 %v39
  %v96 = vunpack.c.l.b16 %v40
  %v97 = vunpack.c.l.b16 %v41
  %v98 = vpack.c.b16 %v91, %v90
  %v99 = vpack.c.b16 %v93, %v92
  %v100 = vpack.c.b16 %v95, %v94
  %v101 = vpack.c.b16 %v97, %v96
  %vm106 = vcmask 523264
  %v108 = vsel %vm106, %v74, 0
  %v111 = vsel %vm106, %v75, 0
  %v114 = vsel %vm106, %v76, 0
  %v117 = vsel %vm106, %v77, 0
  %v120 = vsel %vm106, %v78, 0
  %v123 = vsel %vm106, %v79, 0
  %v126 = vsel %vm106, %v80, 0
  %v129 = vsel %vm106, %v81, 0
  %131 = vmatprep.subr.bf16.mxu0 0
  %132 = vmatpush1.bf16.msra.mxu0 0
  %133 = vmatprep.subr.bf16.mxu0 0
  %134 = vmatpush1.bf16.msra.mxu0 0
  %135 = vmatprep.subr.bf16.mxu0 0
  %136 = vmatpush1.bf16.msra.mxu0 0
  %137 = vmatprep.subr.bf16.mxu0 0
  %138 = vmatpush1.bf16.msra.mxu0 0
  %139 = vmatprep.subr.bf16.mxu0 0
  %140 = vmatpush1.bf16.msra.mxu0 %v101
  %141 = vmatprep.subr.bf16.mxu0 0
  %142 = vmatpush1.bf16.msra.mxu0 %v100
  %143 = vmatprep.subr.bf16.mxu0 0
  %144 = vmatpush1.bf16.msra.mxu0 %v99
  %145 = vmatprep.subr.bf16.mxu0 0
  %146 = vmatpush1.bf16.msra.mxu0 %v98
  %147 = vmatprep.subr.bf16.mxu0 0
  %148 = vmatpush2.bf16.msra.mxu0 0
  %149 = vmatprep.subr.bf16.mxu0 0
  %150 = vmatpush2.bf16.msra.mxu0 0
  %151 = vmatprep.subr.bf16.mxu0 0
  %152 = vmatpush2.bf16.msra.mxu0 0
  %153 = vmatprep.subr.bf16.mxu0 0
  %154 = vmatpush2.bf16.msra.mxu0 0
  %155 = vmatprep.subr.bf16.mxu0 0
  %156 = vmatpush2.bf16.msra.mxu0 0
  %157 = vmatprep.subr.bf16.mxu0 0
  %158 = vmatpush2.bf16.msra.mxu0 0
  %159 = vmatprep.subr.bf16.mxu0 0
  %160 = vmatpush2.bf16.msra.mxu0 0
  %161 = vmatprep.subr.bf16.mxu0 0
  %162 = vmatpush2.bf16.msra.mxu0 0
  %163 = vmatprep.mubr.bf16.mxu0 0
  %164 = vmatmul.mubr.bf16.gmra.mxu0 %v108
  %v165 = vpop.f32.mrf.mxu0
  %v166 = vadd.f32 0.0, %v165
  %v167 = vpop.f32.mrf.mxu0
  %v168 = vpop.f32.mrf.mxu0
  %v169 = vadd.f32 0.0, %v168
  %v170 = vpop.f32.mrf.mxu0
  %171 = vmatprep.mubr.bf16.mxu0 0
  %172 = vmatmul.mubr.bf16.gmra.mxu0 %v111
  %v173 = vpop.f32.mrf.mxu0
  %v174 = vadd.f32 0.0, %v173
  %v175 = vpop.f32.mrf.mxu0
  %v176 = vpop.f32.mrf.mxu0
  %v177 = vadd.f32 0.0, %v176
  %v178 = vpop.f32.mrf.mxu0
  %179 = vmatprep.mubr.bf16.mxu0 0
  %180 = vmatmul.mubr.bf16.gmra.mxu0 %v114
  %v181 = vpop.f32.mrf.mxu0
  %v182 = vadd.f32 0.0, %v181
  %v183 = vpop.f32.mrf.mxu0
  %v184 = vpop.f32.mrf.mxu0
  %v185 = vadd.f32 0.0, %v184
  %v186 = vpop.f32.mrf.mxu0
  %187 = vmatprep.mubr.bf16.mxu0 0
  %188 = vmatmul.mubr.bf16.gmra.mxu0 %v117
  %v189 = vpop.f32.mrf.mxu0
  %v190 = vadd.f32 0.0, %v189
  %v191 = vpop.f32.mrf.mxu0
  %v192 = vpop.f32.mrf.mxu0
  %v193 = vadd.f32 0.0, %v192
  %v194 = vpop.f32.mrf.mxu0
  %195 = vmatprep.mubr.bf16.mxu0 0
  %196 = vmatmul.mubr.bf16.gmra.mxu0 %v120
  %v197 = vpop.f32.mrf.mxu0
  %v198 = vadd.f32 0.0, %v197
  %v199 = vpop.f32.mrf.mxu0
  %v200 = vpop.f32.mrf.mxu0
  %v201 = vadd.f32 0.0, %v200
  %v202 = vpop.f32.mrf.mxu0
  %203 = vmatprep.mubr.bf16.mxu0 0
  %204 = vmatmul.mubr.bf16.gmra.mxu0 %v123
  %v205 = vpop.f32.mrf.mxu0
  %v206 = vadd.f32 0.0, %v205
  %v207 = vpop.f32.mrf.mxu0
  %v208 = vpop.f32.mrf.mxu0
  %v209 = vadd.f32 0.0, %v208
  %v210 = vpop.f32.mrf.mxu0
  %211 = vmatprep.mubr.bf16.mxu0 0
  %212 = vmatmul.mubr.bf16.gmra.mxu0 %v126
  %v213 = vpop.f32.mrf.mxu0
  %v214 = vadd.f32 0.0, %v213
  %v215 = vpop.f32.mrf.mxu0
  %v216 = vpop.f32.mrf.mxu0
  %v217 = vadd.f32 0.0, %v216
  %v218 = vpop.f32.mrf.mxu0
  %219 = vmatprep.mubr.bf16.mxu0 0
  %220 = vmatmul.mubr.bf16.gmra.mxu0 %v129
  %v221 = vpop.f32.mrf.mxu0
  %v222 = vadd.f32 0.0, %v221
  %v223 = vpop.f32.mrf.mxu0
  %v224 = vpop.f32.mrf.mxu0
  %v225 = vadd.f32 0.0, %v224
  %v226 = vpop.f32.mrf.mxu0
  %227 = vdwg.mxu0
  %v228 = vld [vmem:[%s2] sm:$0x1]
  %v230 = vlaneseq
  %v231 = vshrl.u32 %v230, 7
  %v232 = vsub.s32 0, %v231
  %v233 = vrot.slane %v228, %v232
  %v235 = vmul.f32 %v166, %v233
  %v236 = vmul.f32 %v169, %v233
  %v237 = vmul.f32 %v174, %v233
  %v238 = vmul.f32 %v177, %v233
  %v239 = vmul.f32 %v182, %v233
  %v240 = vmul.f32 %v185, %v233
  %v241 = vmul.f32 %v190, %v233
  %v242 = vmul.f32 %v193, %v233
  %v243 = vmul.f32 %v198, %v233
  %v244 = vmul.f32 %v201, %v233
  %v245 = vmul.f32 %v206, %v233
  %v246 = vmul.f32 %v209, %v233
  %v247 = vmul.f32 %v214, %v233
  %v248 = vmul.f32 %v217, %v233
  %v249 = vmul.f32 %v222, %v233
  %v250 = vmul.f32 %v225, %v233
  %v251 = vld [vmem:[%s3] sm:$0x1]
  %v253 = vlaneseq
  %v254 = vshrl.u32 %v253, 7
  %v255 = vsub.s32 0, %v254
  %v256 = vrot.slane %v251, %v255
  %v258 = vadd.f32 %v235, %v256
  %v259 = vadd.f32 %v236, %v256
  %v260 = vadd.f32 %v237, %v256
  %v261 = vadd.f32 %v238, %v256
  %v262 = vadd.f32 %v239, %v256
  %v263 = vadd.f32 %v240, %v256
  %v264 = vadd.f32 %v241, %v256
  %v265 = vadd.f32 %v242, %v256
  %v266 = vadd.f32 %v243, %v256
  %v267 = vadd.f32 %v244, %v256
  %v268 = vadd.f32 %v245, %v256
  %v269 = vadd.f32 %v246, %v256
  %v270 = vadd.f32 %v247, %v256
  %v271 = vadd.f32 %v248, %v256
  %v272 = vadd.f32 %v249, %v256
  %v273 = vadd.f32 %v250, %v256
  %vm274 = vcmp.ge.f32.partialorder %v258, 0.0
  %vm275 = vcmp.ge.f32.partialorder %v259, 0.0
  %vm276 = vcmp.ge.f32.partialorder %v260, 0.0
  %vm277 = vcmp.ge.f32.partialorder %v261, 0.0
  %vm278 = vcmp.ge.f32.partialorder %v262, 0.0
  %vm279 = vcmp.ge.f32.partialorder %v263, 0.0
  %vm280 = vcmp.ge.f32.partialorder %v264, 0.0
  %vm281 = vcmp.ge.f32.partialorder %v265, 0.0
  %vm282 = vcmp.ge.f32.partialorder %v266, 0.0
  %vm283 = vcmp.ge.f32.partialorder %v267, 0.0
  %vm284 = vcmp.ge.f32.partialorder %v268, 0.0
  %vm285 = vcmp.ge.f32.partialorder %v269, 0.0
  %vm286 = vcmp.ge.f32.partialorder %v270, 0.0
  %vm287 = vcmp.ge.f32.partialorder %v271, 0.0
  %vm288 = vcmp.ge.f32.partialorder %v272, 0.0
  %vm289 = vcmp.ge.f32.partialorder %v273, 0.0
  %v290 = vmul.f32 %v258, 0.25
  %v291 = vmul.f32 %v259, 0.25
  %v292 = vmul.f32 %v260, 0.25
  %v293 = vmul.f32 %v261, 0.25
  %v294 = vmul.f32 %v262, 0.25
  %v295 = vmul.f32 %v263, 0.25
  %v296 = vmul.f32 %v264, 0.25
  %v297 = vmul.f32 %v265, 0.25
  %v298 = vmul.f32 %v266, 0.25
  %v299 = vmul.f32 %v267, 0.25
  %v300 = vmul.f32 %v268, 0.25
  %v301 = vmul.f32 %v269, 0.25
  %v302 = vmul.f32 %v270, 0.25
  %v303 = vmul.f32 %v271, 0.25
  %v304 = vmul.f32 %v272, 0.25
  %v305 = vmul.f32 %v273, 0.25
  %v306 = vsel %vm274, %v258, %v290
  %v307 = vsel %vm275, %v259, %v291
  %v308 = vsel %vm276, %v260, %v292
  %v309 = vsel %vm277, %v261, %v293
  %v310 = vsel %vm278, %v262, %v294
  %v311 = vsel %vm279, %v263, %v295
  %v312 = vsel %vm280, %v264, %v296
  %v313 = vsel %vm281, %v265, %v297
  %v314 = vsel %vm282, %v266, %v298
  %v315 = vsel %vm283, %v267, %v299
  %v316 = vsel %vm284, %v268, %v300
  %v317 = vsel %vm285, %v269, %v301
  %v318 = vsel %vm286, %v270, %v302
  %v319 = vsel %vm287, %v271, %v303
  %v320 = vsel %vm288, %v272, %v304
  %v321 = vsel %vm289, %v273, %v305
  %v322 = vpack.c.bf16 %v307, %v306
  %v323 = vpack.c.bf16 %v309, %v308
  %v324 = vpack.c.bf16 %v311, %v310
  %v325 = vpack.c.bf16 %v313, %v312
  %v326 = vpack.c.bf16 %v315, %v314
  %v327 = vpack.c.bf16 %v317, %v316
  %v328 = vpack.c.bf16 %v319, %v318
  %v329 = vpack.c.bf16 %v321, %v320
  %v338 = vunpack.c.l.b16 %v322
  %v339 = vunpack.c.h.b16 %v322
  %v340 = vunpack.c.l.b16 %v323
  %v341 = vunpack.c.h.b16 %v323
  %v342 = vunpack.c.l.b16 %v324
  %v343 = vunpack.c.h.b16 %v324
  %v344 = vunpack.c.l.b16 %v325
  %v345 = vunpack.c.h.b16 %v325
  %v346 = vunpack.c.l.b16 %v326
  %v347 = vunpack.c.h.b16 %v326
  %v348 = vunpack.c.l.b16 %v327
  %v349 = vunpack.c.h.b16 %v327
  %v350 = vunpack.c.l.b16 %v328
  %v351 = vunpack.c.h.b16 %v328
  %v352 = vunpack.c.l.b16 %v329
  %v353 = vunpack.c.h.b16 %v329
  %v354 = vpack.c.b16 %v338, %v338
  %v355 = vpack.c.b16 %v339, %v339
  %v356 = vpack.c.b16 %v340, %v340
  %v357 = vpack.c.b16 %v341, %v341
  %v358 = vpack.c.b16 %v342, %v342
  %v359 = vpack.c.b16 %v343, %v343
  %v360 = vpack.c.b16 %v344, %v344
  %v361 = vpack.c.b16 %v345, %v345
  %v362 = vpack.c.b16 %v346, %v346
  %v363 = vpack.c.b16 %v347, %v347
  %v364 = vpack.c.b16 %v348, %v348
  %v365 = vpack.c.b16 %v349, %v349
  %v366 = vpack.c.b16 %v350, %v350
  %v367 = vpack.c.b16 %v351, %v351
  %v368 = vpack.c.b16 %v352, %v352
  %v369 = vpack.c.b16 %v353, %v353
  %vm386 = vcmask 125952
  %387 = vst.msk [vmem:[%s4] sm:$0xf] %vm386, %v354
  %388 = vst.msk [vmem:[%s4 + $0x4] sm:$0xf] %vm386, %v355
  %389 = vst.msk [vmem:[%s4 + $0x8] sm:$0xf] %vm386, %v356
  %390 = vst.msk [vmem:[%s4 + $0xc] sm:$0xf] %vm386, %v357
  %391 = vst.msk [vmem:[%s4 + $0x10] sm:$0xf] %vm386, %v358
  %392 = vst.msk [vmem:[%s4 + $0x14] sm:$0xf] %vm386, %v359
  %393 = vst.msk [vmem:[%s4 + $0x18] sm:$0xf] %vm386, %v360
  %394 = vst.msk [vmem:[%s4 + $0x1c] sm:$0xf] %vm386, %v361
  %395 = vst.msk [vmem:[%s4 + $0x20] sm:$0xf] %vm386, %v362
  %396 = vst.msk [vmem:[%s4 + $0x24] sm:$0xf] %vm386, %v363
  %397 = vst.msk [vmem:[%s4 + $0x28] sm:$0xf] %vm386, %v364
  %398 = vst.msk [vmem:[%s4 + $0x2c] sm:$0xf] %vm386, %v365
  %399 = vst.msk [vmem:[%s4 + $0x30] sm:$0xf] %vm386, %v366
  %400 = vst.msk [vmem:[%s4 + $0x34] sm:$0xf] %vm386, %v367
  %401 = vst.msk [vmem:[%s4 + $0x38] sm:$0xf] %vm386, %v368
  %402 = vst.msk [vmem:[%s4 + $0x3c] sm:$0xf] %vm386, %v369
  // Predicated region
  $region18: #{enet_forward.91} parent=0 // pred_check
    _
  $region19: #{enet_forward.91} parent=0 // pred_check_branch
    %404 = sbr.rel (0) target = $region21
  $region20: #{enet_forward.91} parent=0 // pred_region
    _
  $region21: #{enet_forward.91} parent=0 // pred_fallthru
    _
  // Predicated region
  $region22: #{enet_forward.91} parent=0 // pred_check
    _
  $region23: #{enet_forward.91} parent=0 // pred_check_branch
    %406 = sbr.rel (0) target = $region25
  $region24: #{enet_forward.91} parent=0 // pred_region
    _
  $region25: #{enet_forward.91} parent=0 // pred_fallthru
    _

// kernel: enet_forward.89
$region0: #{enet_forward.89}
  #allocation0 [shape = 'u32[]', space=smem, size = 0x4, offset = 0x4, fixed_abs, tag = 'smem constant byte address 0x4 - core index']
  #allocation1 [shape = 'u32[144,128]{1,0:T(1,128)}', space=vmem, size = 0x12000, scoped, tag = 'internal scratch']
  %s0 = inlined_call_operand.vmem [shape: bf16[128,16], index: 0, kind: input, shape index: {}]
  %s1 = inlined_call_operand.vmem [shape: bf16[16,64], index: 1, kind: input, shape index: {}]
  %s2 = inlined_call_operand.vmem [shape: f32[1,64], index: 2, kind: input, shape index: {}]
  %s3 = inlined_call_operand.vmem [shape: f32[1,64], index: 3, kind: input, shape index: {}]
  %s4 = inlined_call_operand.vmem [shape: bf16[128,64], index: 4, kind: output, shape index: {}]
  %s5 = sld [smem:[#allocation0]]
  $region26: #{enet_forward.89} parent=0
    _
  %s7 = ssub.s32 1, %s5
  %s8 = scalar_select 0, %s7, %s5
  // Predicated region
  $region2: #{enet_forward.89} parent=0 // pred_check
    _
  $region3: #{enet_forward.89} parent=0 // pred_check_branch
    %10 = sbr.rel (0) target = $region5
  $region4: #{enet_forward.89} parent=0 // pred_region
    _
  $region5: #{enet_forward.89} parent=0 // pred_fallthru
    _
  // Predicated region
  $region6: #{enet_forward.89} parent=0 // pred_check
    _
  $region7: #{enet_forward.89} parent=0 // pred_check_branch
    %12 = sbr.rel (0) target = $region9
  $region8: #{enet_forward.89} parent=0 // pred_region
    _
  $region9: #{enet_forward.89} parent=0 // pred_fallthru
    _
  // Predicated region
  $region10: #{enet_forward.89} parent=0 // pred_check
    _
  $region11: #{enet_forward.89} parent=0 // pred_check_branch
    %14 = sbr.rel (0) target = $region13
  $region12: #{enet_forward.89} parent=0 // pred_region
    _
  $region13: #{enet_forward.89} parent=0 // pred_fallthru
    _
  // Predicated region
  $region14: #{enet_forward.89} parent=0 // pred_check
    _
  $region15: #{enet_forward.89} parent=0 // pred_check_branch
    %16 = sbr.rel (0) target = $region17
  $region16: #{enet_forward.89} parent=0 // pred_region
    _
  $region17: #{enet_forward.89} parent=0 // pred_fallthru
    _
  %v18 = vld [vmem:[%s0] sm:$0xf]
  %v19 = vld [vmem:[%s0 + $0x4] sm:$0xf]
  %v20 = vld [vmem:[%s0 + $0x8] sm:$0xf]
  %v21 = vld [vmem:[%s0 + $0xc] sm:$0xf]
  %v22 = vld [vmem:[%s0 + $0x10] sm:$0xf]
  %v23 = vld [vmem:[%s0 + $0x14] sm:$0xf]
  %v24 = vld [vmem:[%s0 + $0x18] sm:$0xf]
  %v25 = vld [vmem:[%s0 + $0x1c] sm:$0xf]
  %v26 = vld [vmem:[%s0 + $0x20] sm:$0xf]
  %v27 = vld [vmem:[%s0 + $0x24] sm:$0xf]
  %v28 = vld [vmem:[%s0 + $0x28] sm:$0xf]
  %v29 = vld [vmem:[%s0 + $0x2c] sm:$0xf]
  %v30 = vld [vmem:[%s0 + $0x30] sm:$0xf]
  %v31 = vld [vmem:[%s0 + $0x34] sm:$0xf]
  %v32 = vld [vmem:[%s0 + $0x38] sm:$0xf]
  %v33 = vld [vmem:[%s0 + $0x3c] sm:$0xf]
  %v34 = vld [vmem:[%s1] sm:$0xf]
  %v35 = vld [vmem:[%s1 + $0x4] sm:$0xf]
  %v52 = vunpack.c.l.b16 %v18
  %v53 = vunpack.c.l.b16 %v19
  %v54 = vunpack.c.l.b16 %v20
  %v55 = vunpack.c.l.b16 %v21
  %v56 = vunpack.c.l.b16 %v22
  %v57 = vunpack.c.l.b16 %v23
  %v58 = vunpack.c.l.b16 %v24
  %v59 = vunpack.c.l.b16 %v25
  %v60 = vunpack.c.l.b16 %v26
  %v61 = vunpack.c.l.b16 %v27
  %v62 = vunpack.c.l.b16 %v28
  %v63 = vunpack.c.l.b16 %v29
  %v64 = vunpack.c.l.b16 %v30
  %v65 = vunpack.c.l.b16 %v31
  %v66 = vunpack.c.l.b16 %v32
  %v67 = vunpack.c.l.b16 %v33
  %v68 = vpack.c.b16 %v53, %v52
  %v69 = vpack.c.b16 %v55, %v54
  %v70 = vpack.c.b16 %v57, %v56
  %v71 = vpack.c.b16 %v59, %v58
  %v72 = vpack.c.b16 %v61, %v60
  %v73 = vpack.c.b16 %v63, %v62
  %v74 = vpack.c.b16 %v65, %v64
  %v75 = vpack.c.b16 %v67, %v66
  %v78 = vunpack.c.l.b16 %v34
  %v79 = vunpack.c.l.b16 %v35
  %v80 = vpack.c.b16 %v79, %v78
  %vm82 = vcmask 130048
  %v84 = vsel %vm82, %v68, 0
  %v87 = vsel %vm82, %v69, 0
  %v90 = vsel %vm82, %v70, 0
  %v93 = vsel %vm82, %v71, 0
  %v96 = vsel %vm82, %v72, 0
  %v99 = vsel %vm82, %v73, 0
  %v102 = vsel %vm82, %v74, 0
  %v105 = vsel %vm82, %v75, 0
  %107 = vmatprep.subr.bf16.mxu0 0
  %108 = vmatpush1.bf16.msra.mxu0 0
  %109 = vmatprep.subr.bf16.mxu0 0
  %110 = vmatpush1.bf16.msra.mxu0 0
  %111 = vmatprep.subr.bf16.mxu0 0
  %112 = vmatpush1.bf16.msra.mxu0 0
  %113 = vmatprep.subr.bf16.mxu0 0
  %114 = vmatpush1.bf16.msra.mxu0 0
  %115 = vmatprep.subr.bf16.mxu0 0
  %116 = vmatpush1.bf16.msra.mxu0 0
  %117 = vmatprep.subr.bf16.mxu0 0
  %118 = vmatpush1.bf16.msra.mxu0 0
  %119 = vmatprep.subr.bf16.mxu0 0
  %120 = vmatpush1.bf16.msra.mxu0 0
  %121 = vmatprep.subr.bf16.mxu0 0
  %122 = vmatpush1.bf16.msra.mxu0 %v80
  %123 = vmatprep.subr.bf16.mxu0 0
  %124 = vmatpush2.bf16.msra.mxu0 0
  %125 = vmatprep.subr.bf16.mxu0 0
  %126 = vmatpush2.bf16.msra.mxu0 0
  %127 = vmatprep.subr.bf16.mxu0 0
  %128 = vmatpush2.bf16.msra.mxu0 0
  %129 = vmatprep.subr.bf16.mxu0 0
  %130 = vmatpush2.bf16.msra.mxu0 0
  %131 = vmatprep.subr.bf16.mxu0 0
  %132 = vmatpush2.bf16.msra.mxu0 0
  %133 = vmatprep.subr.bf16.mxu0 0
  %134 = vmatpush2.bf16.msra.mxu0 0
  %135 = vmatprep.subr.bf16.mxu0 0
  %136 = vmatpush2.bf16.msra.mxu0 0
  %137 = vmatprep.subr.bf16.mxu0 0
  %138 = vmatpush2.bf16.msra.mxu0 0
  %139 = vmatprep.mubr.bf16.mxu0 0
  %140 = vmatmul.mubr.bf16.gmra.mxu0 %v84
  %v141 = vpop.f32.mrf.mxu0
  %v142 = vadd.f32 0.0, %v141
  %v143 = vpop.f32.mrf.mxu0
  %v144 = vpop.f32.mrf.mxu0
  %v145 = vadd.f32 0.0, %v144
  %v146 = vpop.f32.mrf.mxu0
  %147 = vmatprep.mubr.bf16.mxu0 0
  %148 = vmatmul.mubr.bf16.gmra.mxu0 %v87
  %v149 = vpop.f32.mrf.mxu0
  %v150 = vadd.f32 0.0, %v149
  %v151 = vpop.f32.mrf.mxu0
  %v152 = vpop.f32.mrf.mxu0
  %v153 = vadd.f32 0.0, %v152
  %v154 = vpop.f32.mrf.mxu0
  %155 = vmatprep.mubr.bf16.mxu0 0
  %156 = vmatmul.mubr.bf16.gmra.mxu0 %v90
  %v157 = vpop.f32.mrf.mxu0
  %v158 = vadd.f32 0.0, %v157
  %v159 = vpop.f32.mrf.mxu0
  %v160 = vpop.f32.mrf.mxu0
  %v161 = vadd.f32 0.0, %v160
  %v162 = vpop.f32.mrf.mxu0
  %163 = vmatprep.mubr.bf16.mxu0 0
  %164 = vmatmul.mubr.bf16.gmra.mxu0 %v93
  %v165 = vpop.f32.mrf.mxu0
  %v166 = vadd.f32 0.0, %v165
  %v167 = vpop.f32.mrf.mxu0
  %v168 = vpop.f32.mrf.mxu0
  %v169 = vadd.f32 0.0, %v168
  %v170 = vpop.f32.mrf.mxu0
  %171 = vmatprep.mubr.bf16.mxu0 0
  %172 = vmatmul.mubr.bf16.gmra.mxu0 %v96
  %v173 = vpop.f32.mrf.mxu0
  %v174 = vadd.f32 0.0, %v173
  %v175 = vpop.f32.mrf.mxu0
  %v176 = vpop.f32.mrf.mxu0
  %v177 = vadd.f32 0.0, %v176
  %v178 = vpop.f32.mrf.mxu0
  %179 = vmatprep.mubr.bf16.mxu0 0
  %180 = vmatmul.mubr.bf16.gmra.mxu0 %v99
  %v181 = vpop.f32.mrf.mxu0
  %v182 = vadd.f32 0.0, %v181
  %v183 = vpop.f32.mrf.mxu0
  %v184 = vpop.f32.mrf.mxu0
  %v185 = vadd.f32 0.0, %v184
  %v186 = vpop.f32.mrf.mxu0
  %187 = vmatprep.mubr.bf16.mxu0 0
  %188 = vmatmul.mubr.bf16.gmra.mxu0 %v102
  %v189 = vpop.f32.mrf.mxu0
  %v190 = vadd.f32 0.0, %v189
  %v191 = vpop.f32.mrf.mxu0
  %v192 = vpop.f32.mrf.mxu0
  %v193 = vadd.f32 0.0, %v192
  %v194 = vpop.f32.mrf.mxu0
  %195 = vmatprep.mubr.bf16.mxu0 0
  %196 = vmatmul.mubr.bf16.gmra.mxu0 %v105
  %v197 = vpop.f32.mrf.mxu0
  %v198 = vadd.f32 0.0, %v197
  %v199 = vpop.f32.mrf.mxu0
  %v200 = vpop.f32.mrf.mxu0
  %v201 = vadd.f32 0.0, %v200
  %v202 = vpop.f32.mrf.mxu0
  %203 = vdwg.mxu0
  %v204 = vld [vmem:[%s2] sm:$0x1]
  %v206 = vlaneseq
  %v207 = vshrl.u32 %v206, 7
  %v208 = vsub.s32 0, %v207
  %v209 = vrot.slane %v204, %v208
  %v211 = vmul.f32 %v142, %v209
  %v212 = vmul.f32 %v145, %v209
  %v213 = vmul.f32 %v150, %v209
  %v214 = vmul.f32 %v153, %v209
  %v215 = vmul.f32 %v158, %v209
  %v216 = vmul.f32 %v161, %v209
  %v217 = vmul.f32 %v166, %v209
  %v218 = vmul.f32 %v169, %v209
  %v219 = vmul.f32 %v174, %v209
  %v220 = vmul.f32 %v177, %v209
  %v221 = vmul.f32 %v182, %v209
  %v222 = vmul.f32 %v185, %v209
  %v223 = vmul.f32 %v190, %v209
  %v224 = vmul.f32 %v193, %v209
  %v225 = vmul.f32 %v198, %v209
  %v226 = vmul.f32 %v201, %v209
  %v227 = vld [vmem:[%s3] sm:$0x1]
  %v229 = vlaneseq
  %v230 = vshrl.u32 %v229, 7
  %v231 = vsub.s32 0, %v230
  %v232 = vrot.slane %v227, %v231
  %v234 = vadd.f32 %v211, %v232
  %v235 = vadd.f32 %v212, %v232
  %v236 = vadd.f32 %v213, %v232
  %v237 = vadd.f32 %v214, %v232
  %v238 = vadd.f32 %v215, %v232
  %v239 = vadd.f32 %v216, %v232
  %v240 = vadd.f32 %v217, %v232
  %v241 = vadd.f32 %v218, %v232
  %v242 = vadd.f32 %v219, %v232
  %v243 = vadd.f32 %v220, %v232
  %v244 = vadd.f32 %v221, %v232
  %v245 = vadd.f32 %v222, %v232
  %v246 = vadd.f32 %v223, %v232
  %v247 = vadd.f32 %v224, %v232
  %v248 = vadd.f32 %v225, %v232
  %v249 = vadd.f32 %v226, %v232
  %v250 = vpack.c.bf16 %v235, %v234
  %v251 = vpack.c.bf16 %v237, %v236
  %v252 = vpack.c.bf16 %v239, %v238
  %v253 = vpack.c.bf16 %v241, %v240
  %v254 = vpack.c.bf16 %v243, %v242
  %v255 = vpack.c.bf16 %v245, %v244
  %v256 = vpack.c.bf16 %v247, %v246
  %v257 = vpack.c.bf16 %v249, %v248
  %v266 = vunpack.c.l.b16 %v250
  %v267 = vunpack.c.h.b16 %v250
  %v268 = vunpack.c.l.b16 %v251
  %v269 = vunpack.c.h.b16 %v251
  %v270 = vunpack.c.l.b16 %v252
  %v271 = vunpack.c.h.b16 %v252
  %v272 = vunpack.c.l.b16 %v253
  %v273 = vunpack.c.h.b16 %v253
  %v274 = vunpack.c.l.b16 %v254
  %v275 = vunpack.c.h.b16 %v254
  %v276 = vunpack.c.l.b16 %v255
  %v277 = vunpack.c.h.b16 %v255
  %v278 = vunpack.c.l.b16 %v256
  %v279 = vunpack.c.h.b16 %v256
  %v280 = vunpack.c.l.b16 %v257
  %v281 = vunpack.c.h.b16 %v257
  %v282 = vpack.c.b16 %v266, %v266
  %v283 = vpack.c.b16 %v267, %v267
  %v284 = vpack.c.b16 %v268, %v268
  %v285 = vpack.c.b16 %v269, %v269
  %v286 = vpack.c.b16 %v270, %v270
  %v287 = vpack.c.b16 %v271, %v271
  %v288 = vpack.c.b16 %v272, %v272
  %v289 = vpack.c.b16 %v273, %v273
  %v290 = vpack.c.b16 %v274, %v274
  %v291 = vpack.c.b16 %v275, %v275
  %v292 = vpack.c.b16 %v276, %v276
  %v293 = vpack.c.b16 %v277, %v277
  %v294 = vpack.c.b16 %v278, %v278
  %v295 = vpack.c.b16 %v279, %v279
  %v296 = vpack.c.b16 %v280, %v280
  %v297 = vpack.c.b16 %v281, %v281
  %vm314 = vcmask 519168
  %315 = vst.msk [vmem:[%s4] sm:$0xf] %vm314, %v282
  %316 = vst.msk [vmem:[%s4 + $0x4] sm:$0xf] %vm314, %v283
  %317 = vst.msk [vmem:[%s4 + $0x8] sm:$0xf] %vm314, %v284
  %318 = vst.msk [vmem:[%s4 + $0xc] sm:$0xf] %vm314, %v285
  %319 = vst.msk [vmem:[%s4 + $0x10] sm:$0xf] %vm314, %v286
  %320 = vst.msk [vmem:[%s4 + $0x14] sm:$0xf] %vm314, %v287
  %321 = vst.msk [vmem:[%s4 + $0x18] sm:$0xf] %vm314, %v288
  %322 = vst.msk [vmem:[%s4 + $0x1c] sm:$0xf] %vm314, %v289
  %323 = vst.msk [vmem:[%s4 + $0x20] sm:$0xf] %vm314, %v290
  %324 = vst.msk [vmem:[%s4 + $0x24] sm:$0xf] %vm314, %v291
  %325 = vst.msk [vmem:[%s4 + $0x28] sm:$0xf] %vm314, %v292
  %326 = vst.msk [vmem:[%s4 + $0x2c] sm:$0xf] %vm314, %v293
  %327 = vst.msk [vmem:[%s4 + $0x30] sm:$0xf] %vm314, %v294
  %328 = vst.msk [vmem:[%s4 + $0x34] sm:$0xf] %vm314, %v295
  %329 = vst.msk [vmem:[%s4 + $0x38] sm:$0xf] %vm314, %v296
  %330 = vst.msk [vmem:[%s4 + $0x3c] sm:$0xf] %vm314, %v297
  // Predicated region
  $region18: #{enet_forward.89} parent=0 // pred_check
    _
  $region19: #{enet_forward.89} parent=0 // pred_check_branch
    %332 = sbr.rel (0) target = $region21
  $region20: #{enet_forward.89} parent=0 // pred_region
    _
  $region21: #{enet_forward.89} parent=0 // pred_fallthru
    _
  // Predicated region
  $region22: #{enet_forward.89} parent=0 // pred_check
    _
  $region23: #{enet_forward.89} parent=0 // pred_check_branch
    %334 = sbr.rel (0) target = $region25
  $region24: #{enet_forward.89} parent=0 // pred_region
    _
  $region25: #{enet_forward.89} parent=0 // pred_fallthru
    _

// kernel: enet_forward.92
$region0: #{enet_forward.92}
  #allocation0 [shape = 'u32[]', space=smem, size = 0x4, offset = 0x4, fixed_abs, tag = 'smem constant byte address 0x4 - core index']
  #allocation1 [shape = 'u32[144,128]{1,0:T(1,128)}', space=vmem, size = 0x12000, scoped, tag = 'internal scratch']
  %s0 = inlined_call_operand.vmem [shape: bf16[128,16], index: 0, kind: input, shape index: {}]
  %s1 = inlined_call_operand.vmem [shape: bf16[16,64], index: 1, kind: input, shape index: {}]
  %s2 = inlined_call_operand.vmem [shape: f32[1,64], index: 2, kind: input, shape index: {}]
  %s3 = inlined_call_operand.vmem [shape: f32[1,64], index: 3, kind: input, shape index: {}]
  %s4 = inlined_call_operand.vmem [shape: bf16[128,64], index: 4, kind: input, shape index: {}]
  %s5 = inlined_call_operand.vmem [shape: bf16[128,64], index: 5, kind: output, shape index: {}]
  %s6 = sld [smem:[#allocation0]]
  $region30: #{enet_forward.92} parent=0
    _
  %s8 = ssub.s32 1, %s6
  %s9 = scalar_select 0, %s8, %s6
  // Predicated region
  $region2: #{enet_forward.92} parent=0 // pred_check
    _
  $region3: #{enet_forward.92} parent=0 // pred_check_branch
    %11 = sbr.rel (0) target = $region5
  $region4: #{enet_forward.92} parent=0 // pred_region
    _
  $region5: #{enet_forward.92} parent=0 // pred_fallthru
    _
  // Predicated region
  $region6: #{enet_forward.92} parent=0 // pred_check
    _
  $region7: #{enet_forward.92} parent=0 // pred_check_branch
    %13 = sbr.rel (0) target = $region9
  $region8: #{enet_forward.92} parent=0 // pred_region
    _
  $region9: #{enet_forward.92} parent=0 // pred_fallthru
    _
  // Predicated region
  $region10: #{enet_forward.92} parent=0 // pred_check
    _
  $region11: #{enet_forward.92} parent=0 // pred_check_branch
    %15 = sbr.rel (0) target = $region13
  $region12: #{enet_forward.92} parent=0 // pred_region
    _
  $region13: #{enet_forward.92} parent=0 // pred_fallthru
    _
  // Predicated region
  $region14: #{enet_forward.92} parent=0 // pred_check
    _
  $region15: #{enet_forward.92} parent=0 // pred_check_branch
    %17 = sbr.rel (0) target = $region17
  $region16: #{enet_forward.92} parent=0 // pred_region
    _
  $region17: #{enet_forward.92} parent=0 // pred_fallthru
    _
  // Predicated region
  $region18: #{enet_forward.92} parent=0 // pred_check
    _
  $region19: #{enet_forward.92} parent=0 // pred_check_branch
    %19 = sbr.rel (0) target = $region21
  $region20: #{enet_forward.92} parent=0 // pred_region
    _
  $region21: #{enet_forward.92} parent=0 // pred_fallthru
    _
  %v21 = vld [vmem:[%s0] sm:$0xf]
  %v22 = vld [vmem:[%s0 + $0x4] sm:$0xf]
  %v23 = vld [vmem:[%s0 + $0x8] sm:$0xf]
  %v24 = vld [vmem:[%s0 + $0xc] sm:$0xf]
  %v25 = vld [vmem:[%s0 + $0x10] sm:$0xf]
  %v26 = vld [vmem:[%s0 + $0x14] sm:$0xf]
  %v27 = vld [vmem:[%s0 + $0x18] sm:$0xf]
  %v28 = vld [vmem:[%s0 + $0x1c] sm:$0xf]
  %v29 = vld [vmem:[%s0 + $0x20] sm:$0xf]
  %v30 = vld [vmem:[%s0 + $0x24] sm:$0xf]
  %v31 = vld [vmem:[%s0 + $0x28] sm:$0xf]
  %v32 = vld [vmem:[%s0 + $0x2c] sm:$0xf]
  %v33 = vld [vmem:[%s0 + $0x30] sm:$0xf]
  %v34 = vld [vmem:[%s0 + $0x34] sm:$0xf]
  %v35 = vld [vmem:[%s0 + $0x38] sm:$0xf]
  %v36 = vld [vmem:[%s0 + $0x3c] sm:$0xf]
  %v37 = vld [vmem:[%s1] sm:$0xf]
  %v38 = vld [vmem:[%s1 + $0x4] sm:$0xf]
  %v55 = vunpack.c.l.b16 %v21
  %v56 = vunpack.c.l.b16 %v22
  %v57 = vunpack.c.l.b16 %v23
  %v58 = vunpack.c.l.b16 %v24
  %v59 = vunpack.c.l.b16 %v25
  %v60 = vunpack.c.l.b16 %v26
  %v61 = vunpack.c.l.b16 %v27
  %v62 = vunpack.c.l.b16 %v28
  %v63 = vunpack.c.l.b16 %v29
  %v64 = vunpack.c.l.b16 %v30
  %v65 = vunpack.c.l.b16 %v31
  %v66 = vunpack.c.l.b16 %v32
  %v67 = vunpack.c.l.b16 %v33
  %v68 = vunpack.c.l.b16 %v34
  %v69 = vunpack.c.l.b16 %v35
  %v70 = vunpack.c.l.b16 %v36
  %v71 = vpack.c.b16 %v56, %v55
  %v72 = vpack.c.b16 %v58, %v57
  %v73 = vpack.c.b16 %v60, %v59
  %v74 = vpack.c.b16 %v62, %v61
  %v75 = vpack.c.b16 %v64, %v63
  %v76 = vpack.c.b16 %v66, %v65
  %v77 = vpack.c.b16 %v68, %v67
  %v78 = vpack.c.b16 %v70, %v69
  %v81 = vunpack.c.l.b16 %v37
  %v82 = vunpack.c.l.b16 %v38
  %v83 = vpack.c.b16 %v82, %v81
  %vm85 = vcmask 130048
  %v87 = vsel %vm85, %v71, 0
  %v90 = vsel %vm85, %v72, 0
  %v93 = vsel %vm85, %v73, 0
  %v96 = vsel %vm85, %v74, 0
  %v99 = vsel %vm85, %v75, 0
  %v102 = vsel %vm85, %v76, 0
  %v105 = vsel %vm85, %v77, 0
  %v108 = vsel %vm85, %v78, 0
  %110 = vmatprep.subr.bf16.mxu0 0
  %111 = vmatpush1.bf16.msra.mxu0 0
  %112 = vmatprep.subr.bf16.mxu0 0
  %113 = vmatpush1.bf16.msra.mxu0 0
  %114 = vmatprep.subr.bf16.mxu0 0
  %115 = vmatpush1.bf16.msra.mxu0 0
  %116 = vmatprep.subr.bf16.mxu0 0
  %117 = vmatpush1.bf16.msra.mxu0 0
  %118 = vmatprep.subr.bf16.mxu0 0
  %119 = vmatpush1.bf16.msra.mxu0 0
  %120 = vmatprep.subr.bf16.mxu0 0
  %121 = vmatpush1.bf16.msra.mxu0 0
  %122 = vmatprep.subr.bf16.mxu0 0
  %123 = vmatpush1.bf16.msra.mxu0 0
  %124 = vmatprep.subr.bf16.mxu0 0
  %125 = vmatpush1.bf16.msra.mxu0 %v83
  %126 = vmatprep.subr.bf16.mxu0 0
  %127 = vmatpush2.bf16.msra.mxu0 0
  %128 = vmatprep.subr.bf16.mxu0 0
  %129 = vmatpush2.bf16.msra.mxu0 0
  %130 = vmatprep.subr.bf16.mxu0 0
  %131 = vmatpush2.bf16.msra.mxu0 0
  %132 = vmatprep.subr.bf16.mxu0 0
  %133 = vmatpush2.bf16.msra.mxu0 0
  %134 = vmatprep.subr.bf16.mxu0 0
  %135 = vmatpush2.bf16.msra.mxu0 0
  %136 = vmatprep.subr.bf16.mxu0 0
  %137 = vmatpush2.bf16.msra.mxu0 0
  %138 = vmatprep.subr.bf16.mxu0 0
  %139 = vmatpush2.bf16.msra.mxu0 0
  %140 = vmatprep.subr.bf16.mxu0 0
  %141 = vmatpush2.bf16.msra.mxu0 0
  %142 = vmatprep.mubr.bf16.mxu0 0
  %143 = vmatmul.mubr.bf16.gmra.mxu0 %v87
  %v144 = vpop.f32.mrf.mxu0
  %v145 = vadd.f32 0.0, %v144
  %v146 = vpop.f32.mrf.mxu0
  %v147 = vpop.f32.mrf.mxu0
  %v148 = vadd.f32 0.0, %v147
  %v149 = vpop.f32.mrf.mxu0
  %150 = vmatprep.mubr.bf16.mxu0 0
  %151 = vmatmul.mubr.bf16.gmra.mxu0 %v90
  %v152 = vpop.f32.mrf.mxu0
  %v153 = vadd.f32 0.0, %v152
  %v154 = vpop.f32.mrf.mxu0
  %v155 = vpop.f32.mrf.mxu0
  %v156 = vadd.f32 0.0, %v155
  %v157 = vpop.f32.mrf.mxu0
  %158 = vmatprep.mubr.bf16.mxu0 0
  %159 = vmatmul.mubr.bf16.gmra.mxu0 %v93
  %v160 = vpop.f32.mrf.mxu0
  %v161 = vadd.f32 0.0, %v160
  %v162 = vpop.f32.mrf.mxu0
  %v163 = vpop.f32.mrf.mxu0
  %v164 = vadd.f32 0.0, %v163
  %v165 = vpop.f32.mrf.mxu0
  %166 = vmatprep.mubr.bf16.mxu0 0
  %167 = vmatmul.mubr.bf16.gmra.mxu0 %v96
  %v168 = vpop.f32.mrf.mxu0
  %v169 = vadd.f32 0.0, %v168
  %v170 = vpop.f32.mrf.mxu0
  %v171 = vpop.f32.mrf.mxu0
  %v172 = vadd.f32 0.0, %v171
  %v173 = vpop.f32.mrf.mxu0
  %174 = vmatprep.mubr.bf16.mxu0 0
  %175 = vmatmul.mubr.bf16.gmra.mxu0 %v99
  %v176 = vpop.f32.mrf.mxu0
  %v177 = vadd.f32 0.0, %v176
  %v178 = vpop.f32.mrf.mxu0
  %v179 = vpop.f32.mrf.mxu0
  %v180 = vadd.f32 0.0, %v179
  %v181 = vpop.f32.mrf.mxu0
  %182 = vmatprep.mubr.bf16.mxu0 0
  %183 = vmatmul.mubr.bf16.gmra.mxu0 %v102
  %v184 = vpop.f32.mrf.mxu0
  %v185 = vadd.f32 0.0, %v184
  %v186 = vpop.f32.mrf.mxu0
  %v187 = vpop.f32.mrf.mxu0
  %v188 = vadd.f32 0.0, %v187
  %v189 = vpop.f32.mrf.mxu0
  %190 = vmatprep.mubr.bf16.mxu0 0
  %191 = vmatmul.mubr.bf16.gmra.mxu0 %v105
  %v192 = vpop.f32.mrf.mxu0
  %v193 = vadd.f32 0.0, %v192
  %v194 = vpop.f32.mrf.mxu0
  %v195 = vpop.f32.mrf.mxu0
  %v196 = vadd.f32 0.0, %v195
  %v197 = vpop.f32.mrf.mxu0
  %198 = vmatprep.mubr.bf16.mxu0 0
  %199 = vmatmul.mubr.bf16.gmra.mxu0 %v108
  %v200 = vpop.f32.mrf.mxu0
  %v201 = vadd.f32 0.0, %v200
  %v202 = vpop.f32.mrf.mxu0
  %v203 = vpop.f32.mrf.mxu0
  %v204 = vadd.f32 0.0, %v203
  %v205 = vpop.f32.mrf.mxu0
  %206 = vdwg.mxu0
  %v207 = vld [vmem:[%s2] sm:$0x1]
  %v209 = vlaneseq
  %v210 = vshrl.u32 %v209, 7
  %v211 = vsub.s32 0, %v210
  %v212 = vrot.slane %v207, %v211
  %v214 = vmul.f32 %v145, %v212
  %v215 = vmul.f32 %v148, %v212
  %v216 = vmul.f32 %v153, %v212
  %v217 = vmul.f32 %v156, %v212
  %v218 = vmul.f32 %v161, %v212
  %v219 = vmul.f32 %v164, %v212
  %v220 = vmul.f32 %v169, %v212
  %v221 = vmul.f32 %v172, %v212
  %v222 = vmul.f32 %v177, %v212
  %v223 = vmul.f32 %v180, %v212
  %v224 = vmul.f32 %v185, %v212
  %v225 = vmul.f32 %v188, %v212
  %v226 = vmul.f32 %v193, %v212
  %v227 = vmul.f32 %v196, %v212
  %v228 = vmul.f32 %v201, %v212
  %v229 = vmul.f32 %v204, %v212
  %v230 = vld [vmem:[%s3] sm:$0x1]
  %v232 = vlaneseq
  %v233 = vshrl.u32 %v232, 7
  %v234 = vsub.s32 0, %v233
  %v235 = vrot.slane %v230, %v234
  %v237 = vadd.f32 %v214, %v235
  %v238 = vadd.f32 %v215, %v235
  %v239 = vadd.f32 %v216, %v235
  %v240 = vadd.f32 %v217, %v235
  %v241 = vadd.f32 %v218, %v235
  %v242 = vadd.f32 %v219, %v235
  %v243 = vadd.f32 %v220, %v235
  %v244 = vadd.f32 %v221, %v235
  %v245 = vadd.f32 %v222, %v235
  %v246 = vadd.f32 %v223, %v235
  %v247 = vadd.f32 %v224, %v235
  %v248 = vadd.f32 %v225, %v235
  %v249 = vadd.f32 %v226, %v235
  %v250 = vadd.f32 %v227, %v235
  %v251 = vadd.f32 %v228, %v235
  %v252 = vadd.f32 %v229, %v235
  %v253 = vld [vmem:[%s4] sm:$0xf]
  %v254 = vld [vmem:[%s4 + $0x4] sm:$0xf]
  %v255 = vld [vmem:[%s4 + $0x8] sm:$0xf]
  %v256 = vld [vmem:[%s4 + $0xc] sm:$0xf]
  %v257 = vld [vmem:[%s4 + $0x10] sm:$0xf]
  %v258 = vld [vmem:[%s4 + $0x14] sm:$0xf]
  %v259 = vld [vmem:[%s4 + $0x18] sm:$0xf]
  %v260 = vld [vmem:[%s4 + $0x1c] sm:$0xf]
  %v261 = vld [vmem:[%s4 + $0x20] sm:$0xf]
  %v262 = vld [vmem:[%s4 + $0x24] sm:$0xf]
  %v263 = vld [vmem:[%s4 + $0x28] sm:$0xf]
  %v264 = vld [vmem:[%s4 + $0x2c] sm:$0xf]
  %v265 = vld [vmem:[%s4 + $0x30] sm:$0xf]
  %v266 = vld [vmem:[%s4 + $0x34] sm:$0xf]
  %v267 = vld [vmem:[%s4 + $0x38] sm:$0xf]
  %v268 = vld [vmem:[%s4 + $0x3c] sm:$0xf]
  %v269 = vunpack.c.l.bf16 %v253
  %v270 = vunpack.c.l.bf16 %v254
  %v271 = vunpack.c.l.bf16 %v255
  %v272 = vunpack.c.l.bf16 %v256
  %v273 = vunpack.c.l.bf16 %v257
  %v274 = vunpack.c.l.bf16 %v258
  %v275 = vunpack.c.l.bf16 %v259
  %v276 = vunpack.c.l.bf16 %v260
  %v277 = vunpack.c.l.bf16 %v261
  %v278 = vunpack.c.l.bf16 %v262
  %v279 = vunpack.c.l.bf16 %v263
  %v280 = vunpack.c.l.bf16 %v264
  %v281 = vunpack.c.l.bf16 %v265
  %v282 = vunpack.c.l.bf16 %v266
  %v283 = vunpack.c.l.bf16 %v267
  %v284 = vunpack.c.l.bf16 %v268
  %v285 = vadd.f32 %v237, %v269
  %v286 = vadd.f32 %v238, %v270
  %v287 = vadd.f32 %v239, %v271
  %v288 = vadd.f32 %v240, %v272
  %v289 = vadd.f32 %v241, %v273
  %v290 = vadd.f32 %v242, %v274
  %v291 = vadd.f32 %v243, %v275
  %v292 = vadd.f32 %v244, %v276
  %v293 = vadd.f32 %v245, %v277
  %v294 = vadd.f32 %v246, %v278
  %v295 = vadd.f32 %v247, %v279
  %v296 = vadd.f32 %v248, %v280
  %v297 = vadd.f32 %v249, %v281
  %v298 = vadd.f32 %v250, %v282
  %v299 = vadd.f32 %v251, %v283
  %v300 = vadd.f32 %v252, %v284
  %vm301 = vcmp.ge.f32.partialorder %v285, 0.0
  %vm302 = vcmp.ge.f32.partialorder %v286, 0.0
  %vm303 = vcmp.ge.f32.partialorder %v287, 0.0
  %vm304 = vcmp.ge.f32.partialorder %v288, 0.0
  %vm305 = vcmp.ge.f32.partialorder %v289, 0.0
  %vm306 = vcmp.ge.f32.partialorder %v290, 0.0
  %vm307 = vcmp.ge.f32.partialorder %v291, 0.0
  %vm308 = vcmp.ge.f32.partialorder %v292, 0.0
  %vm309 = vcmp.ge.f32.partialorder %v293, 0.0
  %vm310 = vcmp.ge.f32.partialorder %v294, 0.0
  %vm311 = vcmp.ge.f32.partialorder %v295, 0.0
  %vm312 = vcmp.ge.f32.partialorder %v296, 0.0
  %vm313 = vcmp.ge.f32.partialorder %v297, 0.0
  %vm314 = vcmp.ge.f32.partialorder %v298, 0.0
  %vm315 = vcmp.ge.f32.partialorder %v299, 0.0
  %vm316 = vcmp.ge.f32.partialorder %v300, 0.0
  %v317 = vmul.f32 %v285, 0.25
  %v318 = vmul.f32 %v286, 0.25
  %v319 = vmul.f32 %v287, 0.25
  %v320 = vmul.f32 %v288, 0.25
  %v321 = vmul.f32 %v289, 0.25
  %v322 = vmul.f32 %v290, 0.25
  %v323 = vmul.f32 %v291, 0.25
  %v324 = vmul.f32 %v292, 0.25
  %v325 = vmul.f32 %v293, 0.25
  %v326 = vmul.f32 %v294, 0.25
  %v327 = vmul.f32 %v295, 0.25
  %v328 = vmul.f32 %v296, 0.25
  %v329 = vmul.f32 %v297, 0.25
  %v330 = vmul.f32 %v298, 0.25
  %v331 = vmul.f32 %v299, 0.25
  %v332 = vmul.f32 %v300, 0.25
  %v333 = vsel %vm301, %v285, %v317
  %v334 = vsel %vm302, %v286, %v318
  %v335 = vsel %vm303, %v287, %v319
  %v336 = vsel %vm304, %v288, %v320
  %v337 = vsel %vm305, %v289, %v321
  %v338 = vsel %vm306, %v290, %v322
  %v339 = vsel %vm307, %v291, %v323
  %v340 = vsel %vm308, %v292, %v324
  %v341 = vsel %vm309, %v293, %v325
  %v342 = vsel %vm310, %v294, %v326
  %v343 = vsel %vm311, %v295, %v327
  %v344 = vsel %vm312, %v296, %v328
  %v345 = vsel %vm313, %v297, %v329
  %v346 = vsel %vm314, %v298, %v330
  %v347 = vsel %vm315, %v299, %v331
  %v348 = vsel %vm316, %v300, %v332
  %v349 = vpack.c.bf16 %v334, %v333
  %v350 = vpack.c.bf16 %v336, %v335
  %v351 = vpack.c.bf16 %v338, %v337
  %v352 = vpack.c.bf16 %v340, %v339
  %v353 = vpack.c.bf16 %v342, %v341
  %v354 = vpack.c.bf16 %v344, %v343
  %v355 = vpack.c.bf16 %v346, %v345
  %v356 = vpack.c.bf16 %v348, %v347
  %v365 = vunpack.c.l.b16 %v349
  %v366 = vunpack.c.h.b16 %v349
  %v367 = vunpack.c.l.b16 %v350
  %v368 = vunpack.c.h.b16 %v350
  %v369 = vunpack.c.l.b16 %v351
  %v370 = vunpack.c.h.b16 %v351
  %v371 = vunpack.c.l.b16 %v352
  %v372 = vunpack.c.h.b16 %v352
  %v373 = vunpack.c.l.b16 %v353
  %v374 = vunpack.c.h.b16 %v353
  %v375 = vunpack.c.l.b16 %v354
  %v376 = vunpack.c.h.b16 %v354
  %v377 = vunpack.c.l.b16 %v355
  %v378 = vunpack.c.h.b16 %v355
  %v379 = vunpack.c.l.b16 %v356
  %v380 = vunpack.c.h.b16 %v356
  %v381 = vpack.c.b16 %v365, %v365
  %v382 = vpack.c.b16 %v366, %v366
  %v383 = vpack.c.b16 %v367, %v367
  %v384 = vpack.c.b16 %v368, %v368
  %v385 = vpack.c.b16 %v369, %v369
  %v386 = vpack.c.b16 %v370, %v370
  %v387 = vpack.c.b16 %v371, %v371
  %v388 = vpack.c.b16 %v372, %v372
  %v389 = vpack.c.b16 %v373, %v373
  %v390 = vpack.c.b16 %v374, %v374
  %v391 = vpack.c.b16 %v375, %v375
  %v392 = vpack.c.b16 %v376, %v376
  %v393 = vpack.c.b16 %v377, %v377
  %v394 = vpack.c.b16 %v378, %v378
  %v395 = vpack.c.b16 %v379, %v379
  %v396 = vpack.c.b16 %v380, %v380
  %vm413 = vcmask 519168
  %414 = vst.msk [vmem:[%s5] sm:$0xf] %vm413, %v381
  %415 = vst.msk [vmem:[%s5 + $0x4] sm:$0xf] %vm413, %v382
  %416 = vst.msk [vmem:[%s5 + $0x8] sm:$0xf] %vm413, %v383
  %417 = vst.msk [vmem:[%s5 + $0xc] sm:$0xf] %vm413, %v384
  %418 = vst.msk [vmem:[%s5 + $0x10] sm:$0xf] %vm413, %v385
  %419 = vst.msk [vmem:[%s5 + $0x14] sm:$0xf] %vm413, %v386
  %420 = vst.msk [vmem:[%s5 + $0x18] sm:$0xf] %vm413, %v387
  %421 = vst.msk [vmem:[%s5 + $0x1c] sm:$0xf] %vm413, %v388
  %422 = vst.msk [vmem:[%s5 + $0x20] sm:$0xf] %vm413, %v389
  %423 = vst.msk [vmem:[%s5 + $0x24] sm:$0xf] %vm413, %v390
  %424 = vst.msk [vmem:[%s5 + $0x28] sm:$0xf] %vm413, %v391
  %425 = vst.msk [vmem:[%s5 + $0x2c] sm:$0xf] %vm413, %v392
  %426 = vst.msk [vmem:[%s5 + $0x30] sm:$0xf] %vm413, %v393
  %427 = vst.msk [vmem:[%s5 + $0x34] sm:$0xf] %vm413, %v394
  %428 = vst.msk [vmem:[%s5 + $0x38] sm:$0xf] %vm413, %v395
  %429 = vst.msk [vmem:[%s5 + $0x3c] sm:$0xf] %vm413, %v396
  // Predicated region
  $region22: #{enet_forward.92} parent=0 // pred_check
    _
  $region23: #{enet_forward.92} parent=0 // pred_check_branch
    %431 = sbr.rel (0) target = $region25
  $region24: #{enet_forward.92} parent=0 // pred_region
    _
  $region25: #{enet_forward.92} parent=0 // pred_fallthru
    _
  // Predicated region
  $region26: #{enet_forward.92} parent=0 // pred_check
    _
  $region27: #{enet_forward.92} parent=0 // pred_check_branch
    %433 = sbr.rel (0) target = $region29
  $region28: #{enet_forward.92} parent=0 // pred_region
    _
  $region29: #{enet_forward.92} parent=0 // pred_fallthru
    _

// kernel: enet_forward.106
$region0: #{enet_forward.106}
  #allocation0 [shape = 'u32[]', space=smem, size = 0x4, offset = 0x4, fixed_abs, tag = 'smem constant byte address 0x4 - core index']
  #allocation1 [shape = 'u32[144,128]{1,0:T(1,128)}', space=vmem, size = 0x12000, scoped, tag = 'internal scratch']
  %s0 = inlined_call_operand.vmem [shape: bf16[128,64], index: 0, kind: input, shape index: {}]
  %s1 = inlined_call_operand.vmem [shape: bf16[64,32], index: 1, kind: input, shape index: {}]
  %s2 = inlined_call_operand.vmem [shape: f32[1,32], index: 2, kind: input, shape index: {}]
  %s3 = inlined_call_operand.vmem [shape: f32[1,32], index: 3, kind: input, shape index: {}]
  %s4 = inlined_call_operand.vmem [shape: bf16[128,32], index: 4, kind: output, shape index: {}]
  %s5 = sld [smem:[#allocation0]]
  $region26: #{enet_forward.106} parent=0
    _
  %s7 = ssub.s32 1, %s5
  %s8 = scalar_select 0, %s7, %s5
  // Predicated region
  $region2: #{enet_forward.106} parent=0 // pred_check
    _
  $region3: #{enet_forward.106} parent=0 // pred_check_branch
    %10 = sbr.rel (0) target = $region5
  $region4: #{enet_forward.106} parent=0 // pred_region
    _
  $region5: #{enet_forward.106} parent=0 // pred_fallthru
    _
  // Predicated region
  $region6: #{enet_forward.106} parent=0 // pred_check
    _
  $region7: #{enet_forward.106} parent=0 // pred_check_branch
    %12 = sbr.rel (0) target = $region9
  $region8: #{enet_forward.106} parent=0 // pred_region
    _
  $region9: #{enet_forward.106} parent=0 // pred_fallthru
    _
  // Predicated region
  $region10: #{enet_forward.106} parent=0 // pred_check
    _
  $region11: #{enet_forward.106} parent=0 // pred_check_branch
    %14 = sbr.rel (0) target = $region13
  $region12: #{enet_forward.106} parent=0 // pred_region
    _
  $region13: #{enet_forward.106} parent=0 // pred_fallthru
    _
  // Predicated region
  $region14: #{enet_forward.106} parent=0 // pred_check
    _
  $region15: #{enet_forward.106} parent=0 // pred_check_branch
    %16 = sbr.rel (0) target = $region17
  $region16: #{enet_forward.106} parent=0 // pred_region
    _
  $region17: #{enet_forward.106} parent=0 // pred_fallthru
    _
  %v18 = vld [vmem:[%s0] sm:$0xf]
  %v19 = vld [vmem:[%s0 + $0x4] sm:$0xf]
  %v20 = vld [vmem:[%s0 + $0x8] sm:$0xf]
  %v21 = vld [vmem:[%s0 + $0xc] sm:$0xf]
  %v22 = vld [vmem:[%s0 + $0x10] sm:$0xf]
  %v23 = vld [vmem:[%s0 + $0x14] sm:$0xf]
  %v24 = vld [vmem:[%s0 + $0x18] sm:$0xf]
  %v25 = vld [vmem:[%s0 + $0x1c] sm:$0xf]
  %v26 = vld [vmem:[%s0 + $0x20] sm:$0xf]
  %v27 = vld [vmem:[%s0 + $0x24] sm:$0xf]
  %v28 = vld [vmem:[%s0 + $0x28] sm:$0xf]
  %v29 = vld [vmem:[%s0 + $0x2c] sm:$0xf]
  %v30 = vld [vmem:[%s0 + $0x30] sm:$0xf]
  %v31 = vld [vmem:[%s0 + $0x34] sm:$0xf]
  %v32 = vld [vmem:[%s0 + $0x38] sm:$0xf]
  %v33 = vld [vmem:[%s0 + $0x3c] sm:$0xf]
  %v34 = vld [vmem:[%s1] sm:$0xf]
  %v35 = vld [vmem:[%s1 + $0x4] sm:$0xf]
  %v36 = vld [vmem:[%s1 + $0x8] sm:$0xf]
  %v37 = vld [vmem:[%s1 + $0xc] sm:$0xf]
  %v38 = vld [vmem:[%s1 + $0x10] sm:$0xf]
  %v39 = vld [vmem:[%s1 + $0x14] sm:$0xf]
  %v40 = vld [vmem:[%s1 + $0x18] sm:$0xf]
  %v41 = vld [vmem:[%s1 + $0x1c] sm:$0xf]
  %v58 = vunpack.c.l.b16 %v18
  %v59 = vunpack.c.l.b16 %v19
  %v60 = vunpack.c.l.b16 %v20
  %v61 = vunpack.c.l.b16 %v21
  %v62 = vunpack.c.l.b16 %v22
  %v63 = vunpack.c.l.b16 %v23
  %v64 = vunpack.c.l.b16 %v24
  %v65 = vunpack.c.l.b16 %v25
  %v66 = vunpack.c.l.b16 %v26
  %v67 = vunpack.c.l.b16 %v27
  %v68 = vunpack.c.l.b16 %v28
  %v69 = vunpack.c.l.b16 %v29
  %v70 = vunpack.c.l.b16 %v30
  %v71 = vunpack.c.l.b16 %v31
  %v72 = vunpack.c.l.b16 %v32
  %v73 = vunpack.c.l.b16 %v33
  %v74 = vpack.c.b16 %v59, %v58
  %v75 = vpack.c.b16 %v61, %v60
  %v76 = vpack.c.b16 %v63, %v62
  %v77 = vpack.c.b16 %v65, %v64
  %v78 = vpack.c.b16 %v67, %v66
  %v79 = vpack.c.b16 %v69, %v68
  %v80 = vpack.c.b16 %v71, %v70
  %v81 = vpack.c.b16 %v73, %v72
  %v90 = vunpack.c.l.b16 %v34
  %v91 = vunpack.c.l.b16 %v35
  %v92 = vunpack.c.l.b16 %v36
  %v93 = vunpack.c.l.b16 %v37
  %v94 = vunpack.c.l.b16 %v38
  %v95 = vunpack.c.l.b16 %v39
  %v96 = vunpack.c.l.b16 %v40
  %v97 = vunpack.c.l.b16 %v41
  %v98 = vpack.c.b16 %v91, %v90
  %v99 = vpack.c.b16 %v93, %v92
  %v100 = vpack.c.b16 %v95, %v94
  %v101 = vpack.c.b16 %v97, %v96
  %vm106 = vcmask 523264
  %v108 = vsel %vm106, %v74, 0
  %v111 = vsel %vm106, %v75, 0
  %v114 = vsel %vm106, %v76, 0
  %v117 = vsel %vm106, %v77, 0
  %v120 = vsel %vm106, %v78, 0
  %v123 = vsel %vm106, %v79, 0
  %v126 = vsel %vm106, %v80, 0
  %v129 = vsel %vm106, %v81, 0
  %131 = vmatprep.subr.bf16.mxu0 0
  %132 = vmatpush1.bf16.msra.mxu0 0
  %133 = vmatprep.subr.bf16.mxu0 0
  %134 = vmatpush1.bf16.msra.mxu0 0
  %135 = vmatprep.subr.bf16.mxu0 0
  %136 = vmatpush1.bf16.msra.mxu0 0
  %137 = vmatprep.subr.bf16.mxu0 0
  %138 = vmatpush1.bf16.msra.mxu0 0
  %139 = vmatprep.subr.bf16.mxu0 0
  %140 = vmatpush1.bf16.msra.mxu0 %v101
  %141 = vmatprep.subr.bf16.mxu0 0
  %142 = vmatpush1.bf16.msra.mxu0 %v100
  %143 = vmatprep.subr.bf16.mxu0 0
  %144 = vmatpush1.bf16.msra.mxu0 %v99
  %145 = vmatprep.subr.bf16.mxu0 0
  %146 = vmatpush1.bf16.msra.mxu0 %v98
  %147 = vmatprep.subr.bf16.mxu0 0
  %148 = vmatpush2.bf16.msra.mxu0 0
  %149 = vmatprep.subr.bf16.mxu0 0
  %150 = vmatpush2.bf16.msra.mxu0 0
  %151 = vmatprep.subr.bf16.mxu0 0
  %152 = vmatpush2.bf16.msra.mxu0 0
  %153 = vmatprep.subr.bf16.mxu0 0
  %154 = vmatpush2.bf16.msra.mxu0 0
  %155 = vmatprep.subr.bf16.mxu0 0
  %156 = vmatpush2.bf16.msra.mxu0 0
  %157 = vmatprep.subr.bf16.mxu0 0
  %158 = vmatpush2.bf16.msra.mxu0 0
  %159 = vmatprep.subr.bf16.mxu0 0
  %160 = vmatpush2.bf16.msra.mxu0 0
  %161 = vmatprep.subr.bf16.mxu0 0
  %162 = vmatpush2.bf16.msra.mxu0 0
  %163 = vmatprep.mubr.bf16.mxu0 0
  %164 = vmatmul.mubr.bf16.gmra.mxu0 %v108
  %v165 = vpop.f32.mrf.mxu0
  %v166 = vadd.f32 0.0, %v165
  %v167 = vpop.f32.mrf.mxu0
  %v168 = vpop.f32.mrf.mxu0
  %v169 = vadd.f32 0.0, %v168
  %v170 = vpop.f32.mrf.mxu0
  %171 = vmatprep.mubr.bf16.mxu0 0
  %172 = vmatmul.mubr.bf16.gmra.mxu0 %v111
  %v173 = vpop.f32.mrf.mxu0
  %v174 = vadd.f32 0.0, %v173
  %v175 = vpop.f32.mrf.mxu0
  %v176 = vpop.f32.mrf.mxu0
  %v177 = vadd.f32 0.0, %v176
  %v178 = vpop.f32.mrf.mxu0
  %179 = vmatprep.mubr.bf16.mxu0 0
  %180 = vmatmul.mubr.bf16.gmra.mxu0 %v114
  %v181 = vpop.f32.mrf.mxu0
  %v182 = vadd.f32 0.0, %v181
  %v183 = vpop.f32.mrf.mxu0
  %v184 = vpop.f32.mrf.mxu0
  %v185 = vadd.f32 0.0, %v184
  %v186 = vpop.f32.mrf.mxu0
  %187 = vmatprep.mubr.bf16.mxu0 0
  %188 = vmatmul.mubr.bf16.gmra.mxu0 %v117
  %v189 = vpop.f32.mrf.mxu0
  %v190 = vadd.f32 0.0, %v189
  %v191 = vpop.f32.mrf.mxu0
  %v192 = vpop.f32.mrf.mxu0
  %v193 = vadd.f32 0.0, %v192
  %v194 = vpop.f32.mrf.mxu0
  %195 = vmatprep.mubr.bf16.mxu0 0
  %196 = vmatmul.mubr.bf16.gmra.mxu0 %v120
  %v197 = vpop.f32.mrf.mxu0
  %v198 = vadd.f32 0.0, %v197
  %v199 = vpop.f32.mrf.mxu0
  %v200 = vpop.f32.mrf.mxu0
  %v201 = vadd.f32 0.0, %v200
  %v202 = vpop.f32.mrf.mxu0
  %203 = vmatprep.mubr.bf16.mxu0 0
  %204 = vmatmul.mubr.bf16.gmra.mxu0 %v123
  %v205 = vpop.f32.mrf.mxu0
  %v206 = vadd.f32 0.0, %v205
  %v207 = vpop.f32.mrf.mxu0
  %v208 = vpop.f32.mrf.mxu0
  %v209 = vadd.f32 0.0, %v208
  %v210 = vpop.f32.mrf.mxu0
  %211 = vmatprep.mubr.bf16.mxu0 0
  %212 = vmatmul.mubr.bf16.gmra.mxu0 %v126
  %v213 = vpop.f32.mrf.mxu0
  %v214 = vadd.f32 0.0, %v213
  %v215 = vpop.f32.mrf.mxu0
  %v216 = vpop.f32.mrf.mxu0
  %v217 = vadd.f32 0.0, %v216
  %v218 = vpop.f32.mrf.mxu0
  %219 = vmatprep.mubr.bf16.mxu0 0
  %220 = vmatmul.mubr.bf16.gmra.mxu0 %v129
  %v221 = vpop.f32.mrf.mxu0
  %v222 = vadd.f32 0.0, %v221
  %v223 = vpop.f32.mrf.mxu0
  %v224 = vpop.f32.mrf.mxu0
  %v225 = vadd.f32 0.0, %v224
  %v226 = vpop.f32.mrf.mxu0
  %227 = vdwg.mxu0
  %v228 = vld [vmem:[%s2] sm:$0x1]
  %v230 = vlaneseq
  %v231 = vshrl.u32 %v230, 7
  %v232 = vsub.s32 0, %v231
  %v233 = vrot.slane %v228, %v232
  %v235 = vmul.f32 %v166, %v233
  %v236 = vmul.f32 %v169, %v233
  %v237 = vmul.f32 %v174, %v233
  %v238 = vmul.f32 %v177, %v233
  %v239 = vmul.f32 %v182, %v233
  %v240 = vmul.f32 %v185, %v233
  %v241 = vmul.f32 %v190, %v233
  %v242 = vmul.f32 %v193, %v233
  %v243 = vmul.f32 %v198, %v233
  %v244 = vmul.f32 %v201, %v233
  %v245 = vmul.f32 %v206, %v233
  %v246 = vmul.f32 %v209, %v233
  %v247 = vmul.f32 %v214, %v233
  %v248 = vmul.f32 %v217, %v233
  %v249 = vmul.f32 %v222, %v233
  %v250 = vmul.f32 %v225, %v233
  %v251 = vld [vmem:[%s3] sm:$0x1]
  %v253 = vlaneseq
  %v254 = vshrl.u32 %v253, 7
  %v255 = vsub.s32 0, %v254
  %v256 = vrot.slane %v251, %v255
  %v258 = vadd.f32 %v235, %v256
  %v259 = vadd.f32 %v236, %v256
  %v260 = vadd.f32 %v237, %v256
  %v261 = vadd.f32 %v238, %v256
  %v262 = vadd.f32 %v239, %v256
  %v263 = vadd.f32 %v240, %v256
  %v264 = vadd.f32 %v241, %v256
  %v265 = vadd.f32 %v242, %v256
  %v266 = vadd.f32 %v243, %v256
  %v267 = vadd.f32 %v244, %v256
  %v268 = vadd.f32 %v245, %v256
  %v269 = vadd.f32 %v246, %v256
  %v270 = vadd.f32 %v247, %v256
  %v271 = vadd.f32 %v248, %v256
  %v272 = vadd.f32 %v249, %v256
  %v273 = vadd.f32 %v250, %v256
  %vm274 = vcmp.ge.f32.partialorder %v258, 0.0
  %vm275 = vcmp.ge.f32.partialorder %v259, 0.0
  %vm276 = vcmp.ge.f32.partialorder %v260, 0.0
  %vm277 = vcmp.ge.f32.partialorder %v261, 0.0
  %vm278 = vcmp.ge.f32.partialorder %v262, 0.0
  %vm279 = vcmp.ge.f32.partialorder %v263, 0.0
  %vm280 = vcmp.ge.f32.partialorder %v264, 0.0
  %vm281 = vcmp.ge.f32.partialorder %v265, 0.0
  %vm282 = vcmp.ge.f32.partialorder %v266, 0.0
  %vm283 = vcmp.ge.f32.partialorder %v267, 0.0
  %vm284 = vcmp.ge.f32.partialorder %v268, 0.0
  %vm285 = vcmp.ge.f32.partialorder %v269, 0.0
  %vm286 = vcmp.ge.f32.partialorder %v270, 0.0
  %vm287 = vcmp.ge.f32.partialorder %v271, 0.0
  %vm288 = vcmp.ge.f32.partialorder %v272, 0.0
  %vm289 = vcmp.ge.f32.partialorder %v273, 0.0
  %v290 = vmul.f32 %v258, 0.25
  %v291 = vmul.f32 %v259, 0.25
  %v292 = vmul.f32 %v260, 0.25
  %v293 = vmul.f32 %v261, 0.25
  %v294 = vmul.f32 %v262, 0.25
  %v295 = vmul.f32 %v263, 0.25
  %v296 = vmul.f32 %v264, 0.25
  %v297 = vmul.f32 %v265, 0.25
  %v298 = vmul.f32 %v266, 0.25
  %v299 = vmul.f32 %v267, 0.25
  %v300 = vmul.f32 %v268, 0.25
  %v301 = vmul.f32 %v269, 0.25
  %v302 = vmul.f32 %v270, 0.25
  %v303 = vmul.f32 %v271, 0.25
  %v304 = vmul.f32 %v272, 0.25
  %v305 = vmul.f32 %v273, 0.25
  %v306 = vsel %vm274, %v258, %v290
  %v307 = vsel %vm275, %v259, %v291
  %v308 = vsel %vm276, %v260, %v292
  %v309 = vsel %vm277, %v261, %v293
  %v310 = vsel %vm278, %v262, %v294
  %v311 = vsel %vm279, %v263, %v295
  %v312 = vsel %vm280, %v264, %v296
  %v313 = vsel %vm281, %v265, %v297
  %v314 = vsel %vm282, %v266, %v298
  %v315 = vsel %vm283, %v267, %v299
  %v316 = vsel %vm284, %v268, %v300
  %v317 = vsel %vm285, %v269, %v301
  %v318 = vsel %vm286, %v270, %v302
  %v319 = vsel %vm287, %v271, %v303
  %v320 = vsel %vm288, %v272, %v304
  %v321 = vsel %vm289, %v273, %v305
  %v322 = vpack.c.bf16 %v307, %v306
  %v323 = vpack.c.bf16 %v309, %v308
  %v324 = vpack.c.bf16 %v311, %v310
  %v325 = vpack.c.bf16 %v313, %v312
  %v326 = vpack.c.bf16 %v315, %v314
  %v327 = vpack.c.bf16 %v317, %v316
  %v328 = vpack.c.bf16 %v319, %v318
  %v329 = vpack.c.bf16 %v321, %v320
  %v338 = vunpack.c.l.b16 %v322
  %v339 = vunpack.c.h.b16 %v322
  %v340 = vunpack.c.l.b16 %v323
  %v341 = vunpack.c.h.b16 %v323
  %v342 = vunpack.c.l.b16 %v324
  %v343 = vunpack.c.h.b16 %v324
  %v344 = vunpack.c.l.b16 %v325
  %v345 = vunpack.c.h.b16 %v325
  %v346 = vunpack.c.l.b16 %v326
  %v347 = vunpack.c.h.b16 %v326
  %v348 = vunpack.c.l.b16 %v327
  %v349 = vunpack.c.h.b16 %v327
  %v350 = vunpack.c.l.b16 %v328
  %v351 = vunpack.c.h.b16 %v328
  %v352 = vunpack.c.l.b16 %v329
  %v353 = vunpack.c.h.b16 %v329
  %v354 = vpack.c.b16 %v338, %v338
  %v355 = vpack.c.b16 %v339, %v339
  %v356 = vpack.c.b16 %v340, %v340
  %v357 = vpack.c.b16 %v341, %v341
  %v358 = vpack.c.b16 %v342, %v342
  %v359 = vpack.c.b16 %v343, %v343
  %v360 = vpack.c.b16 %v344, %v344
  %v361 = vpack.c.b16 %v345, %v345
  %v362 = vpack.c.b16 %v346, %v346
  %v363 = vpack.c.b16 %v347, %v347
  %v364 = vpack.c.b16 %v348, %v348
  %v365 = vpack.c.b16 %v349, %v349
  %v366 = vpack.c.b16 %v350, %v350
  %v367 = vpack.c.b16 %v351, %v351
  %v368 = vpack.c.b16 %v352, %v352
  %v369 = vpack.c.b16 %v353, %v353
  %vm386 = vcmask 257024
  %387 = vst.msk [vmem:[%s4] sm:$0xf] %vm386, %v354
  %388 = vst.msk [vmem:[%s4 + $0x4] sm:$0xf] %vm386, %v355
  %389 = vst.msk [vmem:[%s4 + $0x8] sm:$0xf] %vm386, %v356
  %390 = vst.msk [vmem:[%s4 + $0xc] sm:$0xf] %vm386, %v357
  %391 = vst.msk [vmem:[%s4 + $0x10] sm:$0xf] %vm386, %v358
  %392 = vst.msk [vmem:[%s4 + $0x14] sm:$0xf] %vm386, %v359
  %393 = vst.msk [vmem:[%s4 + $0x18] sm:$0xf] %vm386, %v360
  %394 = vst.msk [vmem:[%s4 + $0x1c] sm:$0xf] %vm386, %v361
  %395 = vst.msk [vmem:[%s4 + $0x20] sm:$0xf] %vm386, %v362
  %396 = vst.msk [vmem:[%s4 + $0x24] sm:$0xf] %vm386, %v363
  %397 = vst.msk [vmem:[%s4 + $0x28] sm:$0xf] %vm386, %v364
  %398 = vst.msk [vmem:[%s4 + $0x2c] sm:$0xf] %vm386, %v365
  %399 = vst.msk [vmem:[%s4 + $0x30] sm:$0xf] %vm386, %v366
  %400 = vst.msk [vmem:[%s4 + $0x34] sm:$0xf] %vm386, %v367
  %401 = vst.msk [vmem:[%s4 + $0x38] sm:$0xf] %vm386, %v368
  %402 = vst.msk [vmem:[%s4 + $0x3c] sm:$0xf] %vm386, %v369
  // Predicated region
  $region18: #{enet_forward.106} parent=0 // pred_check
    _
  $region19: #{enet_forward.106} parent=0 // pred_check_branch
    %404 = sbr.rel (0) target = $region21
  $region20: #{enet_forward.106} parent=0 // pred_region
    _
  $region21: #{enet_forward.106} parent=0 // pred_fallthru
    _
  // Predicated region
  $region22: #{enet_forward.106} parent=0 // pred_check
    _
  $region23: #{enet_forward.106} parent=0 // pred_check_branch
    %406 = sbr.rel (0) target = $region25
  $region24: #{enet_forward.106} parent=0 // pred_region
    _
  $region25: #{enet_forward.106} parent=0 // pred_fallthru
    _

// kernel: enet_forward.94
$region0: #{enet_forward.94}
  #allocation0 [shape = 'u32[]', space=smem, size = 0x4, offset = 0x4, fixed_abs, tag = 'smem constant byte address 0x4 - core index']
  #allocation1 [shape = 'u32[144,128]{1,0:T(1,128)}', space=vmem, size = 0x12000, scoped, tag = 'internal scratch']
  %s0 = inlined_call_operand.vmem [shape: bf16[128,144], index: 0, kind: input, shape index: {}]
  %s1 = inlined_call_operand.vmem [shape: bf16[144,16], index: 1, kind: input, shape index: {}]
  %s2 = inlined_call_operand.vmem [shape: f32[1,16], index: 2, kind: input, shape index: {}]
  %s3 = inlined_call_operand.vmem [shape: f32[1,16], index: 3, kind: input, shape index: {}]
  %s4 = inlined_call_operand.vmem [shape: bf16[128,16], index: 4, kind: output, shape index: {}]
  %s5 = sld [smem:[#allocation0]]
  $region26: #{enet_forward.94} parent=0
    _
  %s7 = ssub.s32 1, %s5
  %s8 = scalar_select 0, %s7, %s5
  // Predicated region
  $region2: #{enet_forward.94} parent=0 // pred_check
    _
  $region3: #{enet_forward.94} parent=0 // pred_check_branch
    %10 = sbr.rel (0) target = $region5
  $region4: #{enet_forward.94} parent=0 // pred_region
    _
  $region5: #{enet_forward.94} parent=0 // pred_fallthru
    _
  // Predicated region
  $region6: #{enet_forward.94} parent=0 // pred_check
    _
  $region7: #{enet_forward.94} parent=0 // pred_check_branch
    %12 = sbr.rel (0) target = $region9
  $region8: #{enet_forward.94} parent=0 // pred_region
    _
  $region9: #{enet_forward.94} parent=0 // pred_fallthru
    _
  // Predicated region
  $region10: #{enet_forward.94} parent=0 // pred_check
    _
  $region11: #{enet_forward.94} parent=0 // pred_check_branch
    %14 = sbr.rel (0) target = $region13
  $region12: #{enet_forward.94} parent=0 // pred_region
    _
  $region13: #{enet_forward.94} parent=0 // pred_fallthru
    _
  // Predicated region
  $region14: #{enet_forward.94} parent=0 // pred_check
    _
  $region15: #{enet_forward.94} parent=0 // pred_check_branch
    %16 = sbr.rel (0) target = $region17
  $region16: #{enet_forward.94} parent=0 // pred_region
    _
  $region17: #{enet_forward.94} parent=0 // pred_fallthru
    _
  %v18 = vld [vmem:[%s0] sm:$0xff]
  %v19 = vld [vmem:[%s0 + $0x8] sm:$0xff]
  %v20 = vld [vmem:[%s0 + $0x10] sm:$0xff]
  %v21 = vld [vmem:[%s0 + $0x18] sm:$0xff]
  %v22 = vld [vmem:[%s0 + $0x20] sm:$0xff]
  %v23 = vld [vmem:[%s0 + $0x28] sm:$0xff]
  %v24 = vld [vmem:[%s0 + $0x30] sm:$0xff]
  %v25 = vld [vmem:[%s0 + $0x38] sm:$0xff]
  %v26 = vld [vmem:[%s0 + $0x40] sm:$0xff]
  %v27 = vld [vmem:[%s0 + $0x48] sm:$0xff]
  %v28 = vld [vmem:[%s0 + $0x50] sm:$0xff]
  %v29 = vld [vmem:[%s0 + $0x58] sm:$0xff]
  %v30 = vld [vmem:[%s0 + $0x60] sm:$0xff]
  %v31 = vld [vmem:[%s0 + $0x68] sm:$0xff]
  %v32 = vld [vmem:[%s0 + $0x70] sm:$0xff]
  %v33 = vld [vmem:[%s0 + $0x78] sm:$0xff]
  %v34 = vld [vmem:[%s1] sm:$0xf]
  %v35 = vld [vmem:[%s1 + $0x4] sm:$0xf]
  %v36 = vld [vmem:[%s1 + $0x8] sm:$0xf]
  %v37 = vld [vmem:[%s1 + $0xc] sm:$0xf]
  %v38 = vld [vmem:[%s1 + $0x10] sm:$0xf]
  %v39 = vld [vmem:[%s1 + $0x14] sm:$0xf]
  %v40 = vld [vmem:[%s1 + $0x18] sm:$0xf]
  %v41 = vld [vmem:[%s1 + $0x1c] sm:$0xf]
  %v42 = vld [vmem:[%s1 + $0x20] sm:$0xf]
  %v43 = vld [vmem:[%s1 + $0x24] sm:$0xf]
  %v44 = vld [vmem:[%s1 + $0x28] sm:$0xf]
  %v45 = vld [vmem:[%s1 + $0x2c] sm:$0xf]
  %v46 = vld [vmem:[%s1 + $0x30] sm:$0xf]
  %v47 = vld [vmem:[%s1 + $0x34] sm:$0xf]
  %v48 = vld [vmem:[%s1 + $0x38] sm:$0xf]
  %v49 = vld [vmem:[%s1 + $0x3c] sm:$0xf]
  %v50 = vld [vmem:[%s1 + $0x40] sm:$0xf]
  %v51 = vld [vmem:[%s1 + $0x44] sm:$0xf]
  %v68 = vunpack.c.l.b16 %v18
  %v69 = vunpack.c.h.b16 %v18
  %v70 = vunpack.c.l.b16 %v19
  %v71 = vunpack.c.h.b16 %v19
  %v72 = vunpack.c.l.b16 %v20
  %v73 = vunpack.c.h.b16 %v20
  %v74 = vunpack.c.l.b16 %v21
  %v75 = vunpack.c.h.b16 %v21
  %v76 = vunpack.c.l.b16 %v22
  %v77 = vunpack.c.h.b16 %v22
  %v78 = vunpack.c.l.b16 %v23
  %v79 = vunpack.c.h.b16 %v23
  %v80 = vunpack.c.l.b16 %v24
  %v81 = vunpack.c.h.b16 %v24
  %v82 = vunpack.c.l.b16 %v25
  %v83 = vunpack.c.h.b16 %v25
  %v84 = vunpack.c.l.b16 %v26
  %v85 = vunpack.c.h.b16 %v26
  %v86 = vunpack.c.l.b16 %v27
  %v87 = vunpack.c.h.b16 %v27
  %v88 = vunpack.c.l.b16 %v28
  %v89 = vunpack.c.h.b16 %v28
  %v90 = vunpack.c.l.b16 %v29
  %v91 = vunpack.c.h.b16 %v29
  %v92 = vunpack.c.l.b16 %v30
  %v93 = vunpack.c.h.b16 %v30
  %v94 = vunpack.c.l.b16 %v31
  %v95 = vunpack.c.h.b16 %v31
  %v96 = vunpack.c.l.b16 %v32
  %v97 = vunpack.c.h.b16 %v32
  %v98 = vunpack.c.l.b16 %v33
  %v99 = vunpack.c.h.b16 %v33
  %v100 = vpack.c.b16 %v70, %v68
  %v101 = vpack.c.b16 %v71, %v69
  %v102 = vpack.c.b16 %v74, %v72
  %v103 = vpack.c.b16 %v75, %v73
  %v104 = vpack.c.b16 %v78, %v76
  %v105 = vpack.c.b16 %v79, %v77
  %v106 = vpack.c.b16 %v82, %v80
  %v107 = vpack.c.b16 %v83, %v81
  %v108 = vpack.c.b16 %v86, %v84
  %v109 = vpack.c.b16 %v87, %v85
  %v110 = vpack.c.b16 %v90, %v88
  %v111 = vpack.c.b16 %v91, %v89
  %v112 = vpack.c.b16 %v94, %v92
  %v113 = vpack.c.b16 %v95, %v93
  %v114 = vpack.c.b16 %v98, %v96
  %v115 = vpack.c.b16 %v99, %v97
  %v142 = vunpack.c.l.b16 %v34
  %v143 = vunpack.c.l.b16 %v35
  %v144 = vunpack.c.l.b16 %v36
  %v145 = vunpack.c.l.b16 %v37
  %v146 = vunpack.c.l.b16 %v38
  %v147 = vunpack.c.l.b16 %v39
  %v148 = vunpack.c.l.b16 %v40
  %v149 = vunpack.c.l.b16 %v41
  %v150 = vunpack.c.l.b16 %v42
  %v151 = vunpack.c.l.b16 %v43
  %v152 = vunpack.c.l.b16 %v44
  %v153 = vunpack.c.l.b16 %v45
  %v154 = vunpack.c.l.b16 %v46
  %v155 = vunpack.c.l.b16 %v47
  %v156 = vunpack.c.l.b16 %v48
  %v157 = vunpack.c.l.b16 %v49
  %v158 = vunpack.c.l.b16 %v50
  %v159 = vunpack.c.l.b16 %v51
  %v160 = vpack.c.b16 %v143, %v142
  %v161 = vpack.c.b16 %v145, %v144
  %v162 = vpack.c.b16 %v147, %v146
  %v163 = vpack.c.b16 %v149, %v148
  %v164 = vpack.c.b16 %v151, %v150
  %v165 = vpack.c.b16 %v153, %v152
  %v166 = vpack.c.b16 %v155, %v154
  %v167 = vpack.c.b16 %v157, %v156
  %v168 = vpack.c.b16 %v159, %v158
  %vm178 = vcmask 130048
  %v180 = vsel %vm178, %v101, 0
  %v183 = vsel %vm178, %v103, 0
  %v186 = vsel %vm178, %v105, 0
  %v189 = vsel %vm178, %v107, 0
  %v192 = vsel %vm178, %v109, 0
  %v195 = vsel %vm178, %v111, 0
  %v198 = vsel %vm178, %v113, 0
  %v201 = vsel %vm178, %v115, 0
  %203 = vmatprep.subr.bf16.mxu0 0
  %204 = vmatpush1.bf16.msra.mxu0 %v167
  %205 = vmatprep.subr.bf16.mxu0 0
  %206 = vmatpush1.bf16.msra.mxu0 %v166
  %207 = vmatprep.subr.bf16.mxu0 0
  %208 = vmatpush1.bf16.msra.mxu0 %v165
  %209 = vmatprep.subr.bf16.mxu0 0
  %210 = vmatpush1.bf16.msra.mxu0 %v164
  %211 = vmatprep.subr.bf16.mxu0 0
  %212 = vmatpush1.bf16.msra.mxu0 %v163
  %213 = vmatprep.subr.bf16.mxu0 0
  %214 = vmatpush1.bf16.msra.mxu0 %v162
  %215 = vmatprep.subr.bf16.mxu0 0
  %216 = vmatpush1.bf16.msra.mxu0 %v161
  %217 = vmatprep.subr.bf16.mxu0 0
  %218 = vmatpush1.bf16.msra.mxu0 %v160
  %219 = vmatprep.subr.bf16.mxu0 0
  %220 = vmatpush2.bf16.msra.mxu0 0
  %221 = vmatprep.subr.bf16.mxu0 0
  %222 = vmatpush2.bf16.msra.mxu0 0
  %223 = vmatprep.subr.bf16.mxu0 0
  %224 = vmatpush2.bf16.msra.mxu0 0
  %225 = vmatprep.subr.bf16.mxu0 0
  %226 = vmatpush2.bf16.msra.mxu0 0
  %227 = vmatprep.subr.bf16.mxu0 0
  %228 = vmatpush2.bf16.msra.mxu0 0
  %229 = vmatprep.subr.bf16.mxu0 0
  %230 = vmatpush2.bf16.msra.mxu0 0
  %231 = vmatprep.subr.bf16.mxu0 0
  %232 = vmatpush2.bf16.msra.mxu0 0
  %233 = vmatprep.subr.bf16.mxu0 0
  %234 = vmatpush2.bf16.msra.mxu0 %v168
  %235 = vmatprep.mubr.bf16.mxu0 %v180
  %236 = vmatmul.mubr.bf16.gmra.mxu0 %v100
  %v237 = vpop.f32.mrf.mxu0
  %v238 = vadd.f32 0.0, %v237
  %v239 = vpop.f32.mrf.mxu0
  %v240 = vpop.f32.mrf.mxu0
  %v241 = vadd.f32 0.0, %v240
  %v242 = vpop.f32.mrf.mxu0
  %243 = vmatprep.mubr.bf16.mxu0 %v183
  %244 = vmatmul.mubr.bf16.gmra.mxu0 %v102
  %v245 = vpop.f32.mrf.mxu0
  %v246 = vadd.f32 0.0, %v245
  %v247 = vpop.f32.mrf.mxu0
  %v248 = vpop.f32.mrf.mxu0
  %v249 = vadd.f32 0.0, %v248
  %v250 = vpop.f32.mrf.mxu0
  %251 = vmatprep.mubr.bf16.mxu0 %v186
  %252 = vmatmul.mubr.bf16.gmra.mxu0 %v104
  %v253 = vpop.f32.mrf.mxu0
  %v254 = vadd.f32 0.0, %v253
  %v255 = vpop.f32.mrf.mxu0
  %v256 = vpop.f32.mrf.mxu0
  %v257 = vadd.f32 0.0, %v256
  %v258 = vpop.f32.mrf.mxu0
  %259 = vmatprep.mubr.bf16.mxu0 %v189
  %260 = vmatmul.mubr.bf16.gmra.mxu0 %v106
  %v261 = vpop.f32.mrf.mxu0
  %v262 = vadd.f32 0.0, %v261
  %v263 = vpop.f32.mrf.mxu0
  %v264 = vpop.f32.mrf.mxu0
  %v265 = vadd.f32 0.0, %v264
  %v266 = vpop.f32.mrf.mxu0
  %267 = vmatprep.mubr.bf16.mxu0 %v192
  %268 = vmatmul.mubr.bf16.gmra.mxu0 %v108
  %v269 = vpop.f32.mrf.mxu0
  %v270 = vadd.f32 0.0, %v269
  %v271 = vpop.f32.mrf.mxu0
  %v272 = vpop.f32.mrf.mxu0
  %v273 = vadd.f32 0.0, %v272
  %v274 = vpop.f32.mrf.mxu0
  %275 = vmatprep.mubr.bf16.mxu0 %v195
  %276 = vmatmul.mubr.bf16.gmra.mxu0 %v110
  %v277 = vpop.f32.mrf.mxu0
  %v278 = vadd.f32 0.0, %v277
  %v279 = vpop.f32.mrf.mxu0
  %v280 = vpop.f32.mrf.mxu0
  %v281 = vadd.f32 0.0, %v280
  %v282 = vpop.f32.mrf.mxu0
  %283 = vmatprep.mubr.bf16.mxu0 %v198
  %284 = vmatmul.mubr.bf16.gmra.mxu0 %v112
  %v285 = vpop.f32.mrf.mxu0
  %v286 = vadd.f32 0.0, %v285
  %v287 = vpop.f32.mrf.mxu0
  %v288 = vpop.f32.mrf.mxu0
  %v289 = vadd.f32 0.0, %v288
  %v290 = vpop.f32.mrf.mxu0
  %291 = vmatprep.mubr.bf16.mxu0 %v201
  %292 = vmatmul.mubr.bf16.gmra.mxu0 %v114
  %v293 = vpop.f32.mrf.mxu0
  %v294 = vadd.f32 0.0, %v293
  %v295 = vpop.f32.mrf.mxu0
  %v296 = vpop.f32.mrf.mxu0
  %v297 = vadd.f32 0.0, %v296
  %v298 = vpop.f32.mrf.mxu0
  %299 = vdwg.mxu0
  %v300 = vld [vmem:[%s2] sm:$0x1]
  %v302 = vlaneseq
  %v303 = vshrl.u32 %v302, 7
  %v304 = vsub.s32 0, %v303
  %v305 = vrot.slane %v300, %v304
  %v307 = vmul.f32 %v238, %v305
  %v308 = vmul.f32 %v241, %v305
  %v309 = vmul.f32 %v246, %v305
  %v310 = vmul.f32 %v249, %v305
  %v311 = vmul.f32 %v254, %v305
  %v312 = vmul.f32 %v257, %v305
  %v313 = vmul.f32 %v262, %v305
  %v314 = vmul.f32 %v265, %v305
  %v315 = vmul.f32 %v270, %v305
  %v316 = vmul.f32 %v273, %v305
  %v317 = vmul.f32 %v278, %v305
  %v318 = vmul.f32 %v281, %v305
  %v319 = vmul.f32 %v286, %v305
  %v320 = vmul.f32 %v289, %v305
  %v321 = vmul.f32 %v294, %v305
  %v322 = vmul.f32 %v297, %v305
  %v323 = vld [vmem:[%s3] sm:$0x1]
  %v325 = vlaneseq
  %v326 = vshrl.u32 %v325, 7
  %v327 = vsub.s32 0, %v326
  %v328 = vrot.slane %v323, %v327
  %v330 = vadd.f32 %v307, %v328
  %v331 = vadd.f32 %v308, %v328
  %v332 = vadd.f32 %v309, %v328
  %v333 = vadd.f32 %v310, %v328
  %v334 = vadd.f32 %v311, %v328
  %v335 = vadd.f32 %v312, %v328
  %v336 = vadd.f32 %v313, %v328
  %v337 = vadd.f32 %v314, %v328
  %v338 = vadd.f32 %v315, %v328
  %v339 = vadd.f32 %v316, %v328
  %v340 = vadd.f32 %v317, %v328
  %v341 = vadd.f32 %v318, %v328
  %v342 = vadd.f32 %v319, %v328
  %v343 = vadd.f32 %v320, %v328
  %v344 = vadd.f32 %v321, %v328
  %v345 = vadd.f32 %v322, %v328
  %vm346 = vcmp.ge.f32.partialorder %v330, 0.0
  %vm347 = vcmp.ge.f32.partialorder %v331, 0.0
  %vm348 = vcmp.ge.f32.partialorder %v332, 0.0
  %vm349 = vcmp.ge.f32.partialorder %v333, 0.0
  %vm350 = vcmp.ge.f32.partialorder %v334, 0.0
  %vm351 = vcmp.ge.f32.partialorder %v335, 0.0
  %vm352 = vcmp.ge.f32.partialorder %v336, 0.0
  %vm353 = vcmp.ge.f32.partialorder %v337, 0.0
  %vm354 = vcmp.ge.f32.partialorder %v338, 0.0
  %vm355 = vcmp.ge.f32.partialorder %v339, 0.0
  %vm356 = vcmp.ge.f32.partialorder %v340, 0.0
  %vm357 = vcmp.ge.f32.partialorder %v341, 0.0
  %vm358 = vcmp.ge.f32.partialorder %v342, 0.0
  %vm359 = vcmp.ge.f32.partialorder %v343, 0.0
  %vm360 = vcmp.ge.f32.partialorder %v344, 0.0
  %vm361 = vcmp.ge.f32.partialorder %v345, 0.0
  %v362 = vmul.f32 %v330, 0.25
  %v363 = vmul.f32 %v331, 0.25
  %v364 = vmul.f32 %v332, 0.25
  %v365 = vmul.f32 %v333, 0.25
  %v366 = vmul.f32 %v334, 0.25
  %v367 = vmul.f32 %v335, 0.25
  %v368 = vmul.f32 %v336, 0.25
  %v369 = vmul.f32 %v337, 0.25
  %v370 = vmul.f32 %v338, 0.25
  %v371 = vmul.f32 %v339, 0.25
  %v372 = vmul.f32 %v340, 0.25
  %v373 = vmul.f32 %v341, 0.25
  %v374 = vmul.f32 %v342, 0.25
  %v375 = vmul.f32 %v343, 0.25
  %v376 = vmul.f32 %v344, 0.25
  %v377 = vmul.f32 %v345, 0.25
  %v378 = vsel %vm346, %v330, %v362
  %v379 = vsel %vm347, %v331, %v363
  %v380 = vsel %vm348, %v332, %v364
  %v381 = vsel %vm349, %v333, %v365
  %v382 = vsel %vm350, %v334, %v366
  %v383 = vsel %vm351, %v335, %v367
  %v384 = vsel %vm352, %v336, %v368
  %v385 = vsel %vm353, %v337, %v369
  %v386 = vsel %vm354, %v338, %v370
  %v387 = vsel %vm355, %v339, %v371
  %v388 = vsel %vm356, %v340, %v372
  %v389 = vsel %vm357, %v341, %v373
  %v390 = vsel %vm358, %v342, %v374
  %v391 = vsel %vm359, %v343, %v375
  %v392 = vsel %vm360, %v344, %v376
  %v393 = vsel %vm361, %v345, %v377
  %v394 = vpack.c.bf16 %v379, %v378
  %v395 = vpack.c.bf16 %v381, %v380
  %v396 = vpack.c.bf16 %v383, %v382
  %v397 = vpack.c.bf16 %v385, %v384
  %v398 = vpack.c.bf16 %v387, %v386
  %v399 = vpack.c.bf16 %v389, %v388
  %v400 = vpack.c.bf16 %v391, %v390
  %v401 = vpack.c.bf16 %v393, %v392
  %v410 = vunpack.c.l.b16 %v394
  %v411 = vunpack.c.h.b16 %v394
  %v412 = vunpack.c.l.b16 %v395
  %v413 = vunpack.c.h.b16 %v395
  %v414 = vunpack.c.l.b16 %v396
  %v415 = vunpack.c.h.b16 %v396
  %v416 = vunpack.c.l.b16 %v397
  %v417 = vunpack.c.h.b16 %v397
  %v418 = vunpack.c.l.b16 %v398
  %v419 = vunpack.c.h.b16 %v398
  %v420 = vunpack.c.l.b16 %v399
  %v421 = vunpack.c.h.b16 %v399
  %v422 = vunpack.c.l.b16 %v400
  %v423 = vunpack.c.h.b16 %v400
  %v424 = vunpack.c.l.b16 %v401
  %v425 = vunpack.c.h.b16 %v401
  %v426 = vpack.c.b16 %v410, %v410
  %v427 = vpack.c.b16 %v411, %v411
  %v428 = vpack.c.b16 %v412, %v412
  %v429 = vpack.c.b16 %v413, %v413
  %v430 = vpack.c.b16 %v414, %v414
  %v431 = vpack.c.b16 %v415, %v415
  %v432 = vpack.c.b16 %v416, %v416
  %v433 = vpack.c.b16 %v417, %v417
  %v434 = vpack.c.b16 %v418, %v418
  %v435 = vpack.c.b16 %v419, %v419
  %v436 = vpack.c.b16 %v420, %v420
  %v437 = vpack.c.b16 %v421, %v421
  %v438 = vpack.c.b16 %v422, %v422
  %v439 = vpack.c.b16 %v423, %v423
  %v440 = vpack.c.b16 %v424, %v424
  %v441 = vpack.c.b16 %v425, %v425
  %vm458 = vcmask 125952
  %459 = vst.msk [vmem:[%s4] sm:$0xf] %vm458, %v426
  %460 = vst.msk [vmem:[%s4 + $0x4] sm:$0xf] %vm458, %v427
  %461 = vst.msk [vmem:[%s4 + $0x8] sm:$0xf] %vm458, %v428
  %462 = vst.msk [vmem:[%s4 + $0xc] sm:$0xf] %vm458, %v429
  %463 = vst.msk [vmem:[%s4 + $0x10] sm:$0xf] %vm458, %v430
  %464 = vst.msk [vmem:[%s4 + $0x14] sm:$0xf] %vm458, %v431
  %465 = vst.msk [vmem:[%s4 + $0x18] sm:$0xf] %vm458, %v432
  %466 = vst.msk [vmem:[%s4 + $0x1c] sm:$0xf] %vm458, %v433
  %467 = vst.msk [vmem:[%s4 + $0x20] sm:$0xf] %vm458, %v434
  %468 = vst.msk [vmem:[%s4 + $0x24] sm:$0xf] %vm458, %v435
  %469 = vst.msk [vmem:[%s4 + $0x28] sm:$0xf] %vm458, %v436
  %470 = vst.msk [vmem:[%s4 + $0x2c] sm:$0xf] %vm458, %v437
  %471 = vst.msk [vmem:[%s4 + $0x30] sm:$0xf] %vm458, %v438
  %472 = vst.msk [vmem:[%s4 + $0x34] sm:$0xf] %vm458, %v439
  %473 = vst.msk [vmem:[%s4 + $0x38] sm:$0xf] %vm458, %v440
  %474 = vst.msk [vmem:[%s4 + $0x3c] sm:$0xf] %vm458, %v441
  // Predicated region
  $region18: #{enet_forward.94} parent=0 // pred_check
    _
  $region19: #{enet_forward.94} parent=0 // pred_check_branch
    %476 = sbr.rel (0) target = $region21
  $region20: #{enet_forward.94} parent=0 // pred_region
    _
  $region21: #{enet_forward.94} parent=0 // pred_fallthru
    _
  // Predicated region
  $region22: #{enet_forward.94} parent=0 // pred_check
    _
  $region23: #{enet_forward.94} parent=0 // pred_check_branch
    %478 = sbr.rel (0) target = $region25
  $region24: #{enet_forward.94} parent=0 // pred_region
    _
  $region25: #{enet_forward.94} parent=0 // pred_fallthru
    _

// kernel: enet_forward.107
$region0: #{enet_forward.107}
  #allocation0 [shape = 'u32[]', space=smem, size = 0x4, offset = 0x4, fixed_abs, tag = 'smem constant byte address 0x4 - core index']
  #allocation1 [shape = 'u32[144,128]{1,0:T(1,128)}', space=vmem, size = 0x12000, scoped, tag = 'internal scratch']
  %s0 = inlined_call_operand.vmem [shape: bf16[32,128], index: 0, kind: input, shape index: {}]
  %s1 = inlined_call_operand.vmem [shape: bf16[128,32], index: 1, kind: input, shape index: {}]
  %s2 = inlined_call_operand.vmem [shape: f32[1,32], index: 2, kind: input, shape index: {}]
  %s3 = inlined_call_operand.vmem [shape: f32[1,32], index: 3, kind: input, shape index: {}]
  %s4 = inlined_call_operand.vmem [shape: bf16[32,32], index: 4, kind: output, shape index: {}]
  %s5 = sld [smem:[#allocation0]]
  $region26: #{enet_forward.107} parent=0
    _
  %s7 = ssub.s32 1, %s5
  %s8 = scalar_select 0, %s7, %s5
  // Predicated region
  $region2: #{enet_forward.107} parent=0 // pred_check
    _
  $region3: #{enet_forward.107} parent=0 // pred_check_branch
    %10 = sbr.rel (0) target = $region5
  $region4: #{enet_forward.107} parent=0 // pred_region
    _
  $region5: #{enet_forward.107} parent=0 // pred_fallthru
    _
  // Predicated region
  $region6: #{enet_forward.107} parent=0 // pred_check
    _
  $region7: #{enet_forward.107} parent=0 // pred_check_branch
    %12 = sbr.rel (0) target = $region9
  $region8: #{enet_forward.107} parent=0 // pred_region
    _
  $region9: #{enet_forward.107} parent=0 // pred_fallthru
    _
  // Predicated region
  $region10: #{enet_forward.107} parent=0 // pred_check
    _
  $region11: #{enet_forward.107} parent=0 // pred_check_branch
    %14 = sbr.rel (0) target = $region13
  $region12: #{enet_forward.107} parent=0 // pred_region
    _
  $region13: #{enet_forward.107} parent=0 // pred_fallthru
    _
  // Predicated region
  $region14: #{enet_forward.107} parent=0 // pred_check
    _
  $region15: #{enet_forward.107} parent=0 // pred_check_branch
    %16 = sbr.rel (0) target = $region17
  $region16: #{enet_forward.107} parent=0 // pred_region
    _
  $region17: #{enet_forward.107} parent=0 // pred_fallthru
    _
  %v18 = vld [vmem:[%s0] sm:$0xf]
  %v19 = vld [vmem:[%s0 + $0x4] sm:$0xf]
  %v20 = vld [vmem:[%s0 + $0x8] sm:$0xf]
  %v21 = vld [vmem:[%s0 + $0xc] sm:$0xf]
  %v22 = vld [vmem:[%s1] sm:$0xf]
  %v23 = vld [vmem:[%s1 + $0x4] sm:$0xf]
  %v24 = vld [vmem:[%s1 + $0x8] sm:$0xf]
  %v25 = vld [vmem:[%s1 + $0xc] sm:$0xf]
  %v26 = vld [vmem:[%s1 + $0x10] sm:$0xf]
  %v27 = vld [vmem:[%s1 + $0x14] sm:$0xf]
  %v28 = vld [vmem:[%s1 + $0x18] sm:$0xf]
  %v29 = vld [vmem:[%s1 + $0x1c] sm:$0xf]
  %v30 = vld [vmem:[%s1 + $0x20] sm:$0xf]
  %v31 = vld [vmem:[%s1 + $0x24] sm:$0xf]
  %v32 = vld [vmem:[%s1 + $0x28] sm:$0xf]
  %v33 = vld [vmem:[%s1 + $0x2c] sm:$0xf]
  %v34 = vld [vmem:[%s1 + $0x30] sm:$0xf]
  %v35 = vld [vmem:[%s1 + $0x34] sm:$0xf]
  %v36 = vld [vmem:[%s1 + $0x38] sm:$0xf]
  %v37 = vld [vmem:[%s1 + $0x3c] sm:$0xf]
  %v42 = vunpack.c.l.b16 %v18
  %v43 = vunpack.c.l.b16 %v19
  %v44 = vunpack.c.l.b16 %v20
  %v45 = vunpack.c.l.b16 %v21
  %v46 = vpack.c.b16 %v43, %v42
  %v47 = vpack.c.b16 %v45, %v44
  %v66 = vunpack.c.l.b16 %v22
  %v67 = vunpack.c.l.b16 %v23
  %v68 = vunpack.c.l.b16 %v24
  %v69 = vunpack.c.l.b16 %v25
  %v70 = vunpack.c.l.b16 %v26
  %v71 = vunpack.c.l.b16 %v27
  %v72 = vunpack.c.l.b16 %v28
  %v73 = vunpack.c.l.b16 %v29
  %v74 = vunpack.c.l.b16 %v30
  %v75 = vunpack.c.l.b16 %v31
  %v76 = vunpack.c.l.b16 %v32
  %v77 = vunpack.c.l.b16 %v33
  %v78 = vunpack.c.l.b16 %v34
  %v79 = vunpack.c.l.b16 %v35
  %v80 = vunpack.c.l.b16 %v36
  %v81 = vunpack.c.l.b16 %v37
  %v82 = vpack.c.b16 %v67, %v66
  %v83 = vpack.c.b16 %v69, %v68
  %v84 = vpack.c.b16 %v71, %v70
  %v85 = vpack.c.b16 %v73, %v72
  %v86 = vpack.c.b16 %v75, %v74
  %v87 = vpack.c.b16 %v77, %v76
  %v88 = vpack.c.b16 %v79, %v78
  %v89 = vpack.c.b16 %v81, %v80
  %98 = vmatprep.subr.bf16.mxu0 0
  %99 = vmatpush1.bf16.msra.mxu0 %v89
  %100 = vmatprep.subr.bf16.mxu0 0
  %101 = vmatpush1.bf16.msra.mxu0 %v88
  %102 = vmatprep.subr.bf16.mxu0 0
  %103 = vmatpush1.bf16.msra.mxu0 %v87
  %104 = vmatprep.subr.bf16.mxu0 0
  %105 = vmatpush1.bf16.msra.mxu0 %v86
  %106 = vmatprep.subr.bf16.mxu0 0
  %107 = vmatpush1.bf16.msra.mxu0 %v85
  %108 = vmatprep.subr.bf16.mxu0 0
  %109 = vmatpush1.bf16.msra.mxu0 %v84
  %110 = vmatprep.subr.bf16.mxu0 0
  %111 = vmatpush1.bf16.msra.mxu0 %v83
  %112 = vmatprep.subr.bf16.mxu0 0
  %113 = vmatpush1.bf16.msra.mxu0 %v82
  %114 = vmatprep.subr.bf16.mxu0 0
  %115 = vmatpush2.bf16.msra.mxu0 0
  %116 = vmatprep.subr.bf16.mxu0 0
  %117 = vmatpush2.bf16.msra.mxu0 0
  %118 = vmatprep.subr.bf16.mxu0 0
  %119 = vmatpush2.bf16.msra.mxu0 0
  %120 = vmatprep.subr.bf16.mxu0 0
  %121 = vmatpush2.bf16.msra.mxu0 0
  %122 = vmatprep.subr.bf16.mxu0 0
  %123 = vmatpush2.bf16.msra.mxu0 0
  %124 = vmatprep.subr.bf16.mxu0 0
  %125 = vmatpush2.bf16.msra.mxu0 0
  %126 = vmatprep.subr.bf16.mxu0 0
  %127 = vmatpush2.bf16.msra.mxu0 0
  %128 = vmatprep.subr.bf16.mxu0 0
  %129 = vmatpush2.bf16.msra.mxu0 0
  %130 = vmatprep.mubr.bf16.mxu0 0
  %131 = vmatmul.mubr.bf16.gmra.mxu0 %v46
  %v132 = vpop.f32.mrf.mxu0
  %v133 = vadd.f32 0.0, %v132
  %v134 = vpop.f32.mrf.mxu0
  %v135 = vpop.f32.mrf.mxu0
  %v136 = vadd.f32 0.0, %v135
  %v137 = vpop.f32.mrf.mxu0
  %138 = vmatprep.mubr.bf16.mxu0 0
  %139 = vmatmul.mubr.bf16.gmra.mxu0 %v47
  %v140 = vpop.f32.mrf.mxu0
  %v141 = vadd.f32 0.0, %v140
  %v142 = vpop.f32.mrf.mxu0
  %v143 = vpop.f32.mrf.mxu0
  %v144 = vadd.f32 0.0, %v143
  %v145 = vpop.f32.mrf.mxu0
  %146 = vdwg.mxu0
  %v147 = vld [vmem:[%s2] sm:$0x1]
  %v149 = vlaneseq
  %v150 = vshrl.u32 %v149, 7
  %v151 = vsub.s32 0, %v150
  %v152 = vrot.slane %v147, %v151
  %v154 = vmul.f32 %v133, %v152
  %v155 = vmul.f32 %v136, %v152
  %v156 = vmul.f32 %v141, %v152
  %v157 = vmul.f32 %v144, %v152
  %v158 = vld [vmem:[%s3] sm:$0x1]
  %v160 = vlaneseq
  %v161 = vshrl.u32 %v160, 7
  %v162 = vsub.s32 0, %v161
  %v163 = vrot.slane %v158, %v162
  %v165 = vadd.f32 %v154, %v163
  %v166 = vadd.f32 %v155, %v163
  %v167 = vadd.f32 %v156, %v163
  %v168 = vadd.f32 %v157, %v163
  %vm169 = vcmp.ge.f32.partialorder %v165, 0.0
  %vm170 = vcmp.ge.f32.partialorder %v166, 0.0
  %vm171 = vcmp.ge.f32.partialorder %v167, 0.0
  %vm172 = vcmp.ge.f32.partialorder %v168, 0.0
  %v173 = vmul.f32 %v165, 0.25
  %v174 = vmul.f32 %v166, 0.25
  %v175 = vmul.f32 %v167, 0.25
  %v176 = vmul.f32 %v168, 0.25
  %v177 = vsel %vm169, %v165, %v173
  %v178 = vsel %vm170, %v166, %v174
  %v179 = vsel %vm171, %v167, %v175
  %v180 = vsel %vm172, %v168, %v176
  %v181 = vpack.c.bf16 %v178, %v177
  %v182 = vpack.c.bf16 %v180, %v179
  %v185 = vunpack.c.l.b16 %v181
  %v186 = vunpack.c.h.b16 %v181
  %v187 = vunpack.c.l.b16 %v182
  %v188 = vunpack.c.h.b16 %v182
  %v189 = vpack.c.b16 %v185, %v185
  %v190 = vpack.c.b16 %v186, %v186
  %v191 = vpack.c.b16 %v187, %v187
  %v192 = vpack.c.b16 %v188, %v188
  %vm197 = vcmask 257024
  %198 = vst.msk [vmem:[%s4] sm:$0xf] %vm197, %v189
  %199 = vst.msk [vmem:[%s4 + $0x4] sm:$0xf] %vm197, %v190
  %200 = vst.msk [vmem:[%s4 + $0x8] sm:$0xf] %vm197, %v191
  %201 = vst.msk [vmem:[%s4 + $0xc] sm:$0xf] %vm197, %v192
  // Predicated region
  $region18: #{enet_forward.107} parent=0 // pred_check
    _
  $region19: #{enet_forward.107} parent=0 // pred_check_branch
    %203 = sbr.rel (0) target = $region21
  $region20: #{enet_forward.107} parent=0 // pred_region
    _
  $region21: #{enet_forward.107} parent=0 // pred_fallthru
    _
  // Predicated region
  $region22: #{enet_forward.107} parent=0 // pred_check
    _
  $region23: #{enet_forward.107} parent=0 // pred_check_branch
    %205 = sbr.rel (0) target = $region25
  $region24: #{enet_forward.107} parent=0 // pred_region
    _
  $region25: #{enet_forward.107} parent=0 // pred_fallthru
    _

// kernel: enet_forward.105
$region0: #{enet_forward.105}
  #allocation0 [shape = 'u32[]', space=smem, size = 0x4, offset = 0x4, fixed_abs, tag = 'smem constant byte address 0x4 - core index']
  #allocation1 [shape = 'u32[144,128]{1,0:T(1,128)}', space=vmem, size = 0x12000, scoped, tag = 'internal scratch']
  %s0 = inlined_call_operand.vmem [shape: bf16[32,64], index: 0, kind: input, shape index: {}]
  %s1 = inlined_call_operand.vmem [shape: bf16[64,128], index: 1, kind: input, shape index: {}]
  %s2 = inlined_call_operand.vmem [shape: f32[1,128], index: 2, kind: input, shape index: {}]
  %s3 = inlined_call_operand.vmem [shape: f32[1,128], index: 3, kind: input, shape index: {}]
  %s4 = inlined_call_operand.vmem [shape: bf16[32,128], index: 4, kind: output, shape index: {}]
  %s5 = sld [smem:[#allocation0]]
  $region26: #{enet_forward.105} parent=0
    _
  %s7 = ssub.s32 1, %s5
  %s8 = scalar_select 0, %s7, %s5
  // Predicated region
  $region2: #{enet_forward.105} parent=0 // pred_check
    _
  $region3: #{enet_forward.105} parent=0 // pred_check_branch
    %10 = sbr.rel (0) target = $region5
  $region4: #{enet_forward.105} parent=0 // pred_region
    _
  $region5: #{enet_forward.105} parent=0 // pred_fallthru
    _
  // Predicated region
  $region6: #{enet_forward.105} parent=0 // pred_check
    _
  $region7: #{enet_forward.105} parent=0 // pred_check_branch
    %12 = sbr.rel (0) target = $region9
  $region8: #{enet_forward.105} parent=0 // pred_region
    _
  $region9: #{enet_forward.105} parent=0 // pred_fallthru
    _
  // Predicated region
  $region10: #{enet_forward.105} parent=0 // pred_check
    _
  $region11: #{enet_forward.105} parent=0 // pred_check_branch
    %14 = sbr.rel (0) target = $region13
  $region12: #{enet_forward.105} parent=0 // pred_region
    _
  $region13: #{enet_forward.105} parent=0 // pred_fallthru
    _
  // Predicated region
  $region14: #{enet_forward.105} parent=0 // pred_check
    _
  $region15: #{enet_forward.105} parent=0 // pred_check_branch
    %16 = sbr.rel (0) target = $region17
  $region16: #{enet_forward.105} parent=0 // pred_region
    _
  $region17: #{enet_forward.105} parent=0 // pred_fallthru
    _
  %v18 = vld [vmem:[%s0] sm:$0xf]
  %v19 = vld [vmem:[%s0 + $0x4] sm:$0xf]
  %v20 = vld [vmem:[%s0 + $0x8] sm:$0xf]
  %v21 = vld [vmem:[%s0 + $0xc] sm:$0xf]
  %v22 = vld [vmem:[%s1] sm:$0xf]
  %v23 = vld [vmem:[%s1 + $0x4] sm:$0xf]
  %v24 = vld [vmem:[%s1 + $0x8] sm:$0xf]
  %v25 = vld [vmem:[%s1 + $0xc] sm:$0xf]
  %v26 = vld [vmem:[%s1 + $0x10] sm:$0xf]
  %v27 = vld [vmem:[%s1 + $0x14] sm:$0xf]
  %v28 = vld [vmem:[%s1 + $0x18] sm:$0xf]
  %v29 = vld [vmem:[%s1 + $0x1c] sm:$0xf]
  %v34 = vunpack.c.l.b16 %v18
  %v35 = vunpack.c.l.b16 %v19
  %v36 = vunpack.c.l.b16 %v20
  %v37 = vunpack.c.l.b16 %v21
  %v38 = vpack.c.b16 %v35, %v34
  %v39 = vpack.c.b16 %v37, %v36
  %v48 = vunpack.c.l.b16 %v22
  %v49 = vunpack.c.l.b16 %v23
  %v50 = vunpack.c.l.b16 %v24
  %v51 = vunpack.c.l.b16 %v25
  %v52 = vunpack.c.l.b16 %v26
  %v53 = vunpack.c.l.b16 %v27
  %v54 = vunpack.c.l.b16 %v28
  %v55 = vunpack.c.l.b16 %v29
  %v56 = vpack.c.b16 %v49, %v48
  %v57 = vpack.c.b16 %v51, %v50
  %v58 = vpack.c.b16 %v53, %v52
  %v59 = vpack.c.b16 %v55, %v54
  %vm64 = vcmask 523264
  %v66 = vsel %vm64, %v38, 0
  %v69 = vsel %vm64, %v39, 0
  %71 = vmatprep.subr.bf16.mxu0 0
  %72 = vmatpush1.bf16.msra.mxu0 0
  %73 = vmatprep.subr.bf16.mxu0 0
  %74 = vmatpush1.bf16.msra.mxu0 0
  %75 = vmatprep.subr.bf16.mxu0 0
  %76 = vmatpush1.bf16.msra.mxu0 0
  %77 = vmatprep.subr.bf16.mxu0 0
  %78 = vmatpush1.bf16.msra.mxu0 0
  %79 = vmatprep.subr.bf16.mxu0 0
  %80 = vmatpush1.bf16.msra.mxu0 %v59
  %81 = vmatprep.subr.bf16.mxu0 0
  %82 = vmatpush1.bf16.msra.mxu0 %v58
  %83 = vmatprep.subr.bf16.mxu0 0
  %84 = vmatpush1.bf16.msra.mxu0 %v57
  %85 = vmatprep.subr.bf16.mxu0 0
  %86 = vmatpush1.bf16.msra.mxu0 %v56
  %87 = vmatprep.subr.bf16.mxu0 0
  %88 = vmatpush2.bf16.msra.mxu0 0
  %89 = vmatprep.subr.bf16.mxu0 0
  %90 = vmatpush2.bf16.msra.mxu0 0
  %91 = vmatprep.subr.bf16.mxu0 0
  %92 = vmatpush2.bf16.msra.mxu0 0
  %93 = vmatprep.subr.bf16.mxu0 0
  %94 = vmatpush2.bf16.msra.mxu0 0
  %95 = vmatprep.subr.bf16.mxu0 0
  %96 = vmatpush2.bf16.msra.mxu0 0
  %97 = vmatprep.subr.bf16.mxu0 0
  %98 = vmatpush2.bf16.msra.mxu0 0
  %99 = vmatprep.subr.bf16.mxu0 0
  %100 = vmatpush2.bf16.msra.mxu0 0
  %101 = vmatprep.subr.bf16.mxu0 0
  %102 = vmatpush2.bf16.msra.mxu0 0
  %103 = vmatprep.mubr.bf16.mxu0 0
  %104 = vmatmul.mubr.bf16.gmra.mxu0 %v66
  %v105 = vpop.f32.mrf.mxu0
  %v106 = vadd.f32 0.0, %v105
  %v107 = vpop.f32.mrf.mxu0
  %v108 = vpop.f32.mrf.mxu0
  %v109 = vadd.f32 0.0, %v108
  %v110 = vpop.f32.mrf.mxu0
  %111 = vmatprep.mubr.bf16.mxu0 0
  %112 = vmatmul.mubr.bf16.gmra.mxu0 %v69
  %v113 = vpop.f32.mrf.mxu0
  %v114 = vadd.f32 0.0, %v113
  %v115 = vpop.f32.mrf.mxu0
  %v116 = vpop.f32.mrf.mxu0
  %v117 = vadd.f32 0.0, %v116
  %v118 = vpop.f32.mrf.mxu0
  %119 = vdwg.mxu0
  %v120 = vld [vmem:[%s2] sm:$0x1]
  %v122 = vlaneseq
  %v123 = vshrl.u32 %v122, 7
  %v124 = vsub.s32 0, %v123
  %v125 = vrot.slane %v120, %v124
  %v127 = vmul.f32 %v106, %v125
  %v128 = vmul.f32 %v109, %v125
  %v129 = vmul.f32 %v114, %v125
  %v130 = vmul.f32 %v117, %v125
  %v131 = vld [vmem:[%s3] sm:$0x1]
  %v133 = vlaneseq
  %v134 = vshrl.u32 %v133, 7
  %v135 = vsub.s32 0, %v134
  %v136 = vrot.slane %v131, %v135
  %v138 = vadd.f32 %v127, %v136
  %v139 = vadd.f32 %v128, %v136
  %v140 = vadd.f32 %v129, %v136
  %v141 = vadd.f32 %v130, %v136
  %v142 = vpack.c.bf16 %v139, %v138
  %v143 = vpack.c.bf16 %v141, %v140
  %v146 = vunpack.c.l.b16 %v142
  %v147 = vunpack.c.h.b16 %v142
  %v148 = vunpack.c.l.b16 %v143
  %v149 = vunpack.c.h.b16 %v143
  %v150 = vpack.c.b16 %v146, %v146
  %v151 = vpack.c.b16 %v147, %v147
  %v152 = vpack.c.b16 %v148, %v148
  %v153 = vpack.c.b16 %v149, %v149
  %158 = vst [vmem:[%s4] sm:$0xf] %v150
  %159 = vst [vmem:[%s4 + $0x4] sm:$0xf] %v151
  %160 = vst [vmem:[%s4 + $0x8] sm:$0xf] %v152
  %161 = vst [vmem:[%s4 + $0xc] sm:$0xf] %v153
  // Predicated region
  $region18: #{enet_forward.105} parent=0 // pred_check
    _
  $region19: #{enet_forward.105} parent=0 // pred_check_branch
    %163 = sbr.rel (0) target = $region21
  $region20: #{enet_forward.105} parent=0 // pred_region
    _
  $region21: #{enet_forward.105} parent=0 // pred_fallthru
    _
  // Predicated region
  $region22: #{enet_forward.105} parent=0 // pred_check
    _
  $region23: #{enet_forward.105} parent=0 // pred_check_branch
    %165 = sbr.rel (0) target = $region25
  $region24: #{enet_forward.105} parent=0 // pred_region
    _
  $region25: #{enet_forward.105} parent=0 // pred_fallthru
    _

// kernel: enet_forward.108
$region0: #{enet_forward.108}
  #allocation0 [shape = 'u32[]', space=smem, size = 0x4, offset = 0x4, fixed_abs, tag = 'smem constant byte address 0x4 - core index']
  #allocation1 [shape = 'u32[144,128]{1,0:T(1,128)}', space=vmem, size = 0x12000, scoped, tag = 'internal scratch']
  %s0 = inlined_call_operand.vmem [shape: bf16[32,32], index: 0, kind: input, shape index: {}]
  %s1 = inlined_call_operand.vmem [shape: bf16[32,128], index: 1, kind: input, shape index: {}]
  %s2 = inlined_call_operand.vmem [shape: f32[1,128], index: 2, kind: input, shape index: {}]
  %s3 = inlined_call_operand.vmem [shape: f32[1,128], index: 3, kind: input, shape index: {}]
  %s4 = inlined_call_operand.vmem [shape: bf16[32,128], index: 4, kind: input, shape index: {}]
  %s5 = inlined_call_operand.vmem [shape: bf16[32,128], index: 5, kind: output, shape index: {}]
  %s6 = sld [smem:[#allocation0]]
  $region30: #{enet_forward.108} parent=0
    _
  %s8 = ssub.s32 1, %s6
  %s9 = scalar_select 0, %s8, %s6
  // Predicated region
  $region2: #{enet_forward.108} parent=0 // pred_check
    _
  $region3: #{enet_forward.108} parent=0 // pred_check_branch
    %11 = sbr.rel (0) target = $region5
  $region4: #{enet_forward.108} parent=0 // pred_region
    _
  $region5: #{enet_forward.108} parent=0 // pred_fallthru
    _
  // Predicated region
  $region6: #{enet_forward.108} parent=0 // pred_check
    _
  $region7: #{enet_forward.108} parent=0 // pred_check_branch
    %13 = sbr.rel (0) target = $region9
  $region8: #{enet_forward.108} parent=0 // pred_region
    _
  $region9: #{enet_forward.108} parent=0 // pred_fallthru
    _
  // Predicated region
  $region10: #{enet_forward.108} parent=0 // pred_check
    _
  $region11: #{enet_forward.108} parent=0 // pred_check_branch
    %15 = sbr.rel (0) target = $region13
  $region12: #{enet_forward.108} parent=0 // pred_region
    _
  $region13: #{enet_forward.108} parent=0 // pred_fallthru
    _
  // Predicated region
  $region14: #{enet_forward.108} parent=0 // pred_check
    _
  $region15: #{enet_forward.108} parent=0 // pred_check_branch
    %17 = sbr.rel (0) target = $region17
  $region16: #{enet_forward.108} parent=0 // pred_region
    _
  $region17: #{enet_forward.108} parent=0 // pred_fallthru
    _
  // Predicated region
  $region18: #{enet_forward.108} parent=0 // pred_check
    _
  $region19: #{enet_forward.108} parent=0 // pred_check_branch
    %19 = sbr.rel (0) target = $region21
  $region20: #{enet_forward.108} parent=0 // pred_region
    _
  $region21: #{enet_forward.108} parent=0 // pred_fallthru
    _
  %v21 = vld [vmem:[%s0] sm:$0xf]
  %v22 = vld [vmem:[%s0 + $0x4] sm:$0xf]
  %v23 = vld [vmem:[%s0 + $0x8] sm:$0xf]
  %v24 = vld [vmem:[%s0 + $0xc] sm:$0xf]
  %v25 = vld [vmem:[%s1] sm:$0xf]
  %v26 = vld [vmem:[%s1 + $0x4] sm:$0xf]
  %v27 = vld [vmem:[%s1 + $0x8] sm:$0xf]
  %v28 = vld [vmem:[%s1 + $0xc] sm:$0xf]
  %v33 = vunpack.c.l.b16 %v21
  %v34 = vunpack.c.l.b16 %v22
  %v35 = vunpack.c.l.b16 %v23
  %v36 = vunpack.c.l.b16 %v24
  %v37 = vpack.c.b16 %v34, %v33
  %v38 = vpack.c.b16 %v36, %v35
  %v43 = vunpack.c.l.b16 %v25
  %v44 = vunpack.c.l.b16 %v26
  %v45 = vunpack.c.l.b16 %v27
  %v46 = vunpack.c.l.b16 %v28
  %v47 = vpack.c.b16 %v44, %v43
  %v48 = vpack.c.b16 %v46, %v45
  %vm51 = vcmask 261120
  %v53 = vsel %vm51, %v37, 0
  %v56 = vsel %vm51, %v38, 0
  %58 = vmatprep.subr.bf16.mxu0 0
  %59 = vmatpush1.bf16.msra.mxu0 0
  %60 = vmatprep.subr.bf16.mxu0 0
  %61 = vmatpush1.bf16.msra.mxu0 0
  %62 = vmatprep.subr.bf16.mxu0 0
  %63 = vmatpush1.bf16.msra.mxu0 0
  %64 = vmatprep.subr.bf16.mxu0 0
  %65 = vmatpush1.bf16.msra.mxu0 0
  %66 = vmatprep.subr.bf16.mxu0 0
  %67 = vmatpush1.bf16.msra.mxu0 0
  %68 = vmatprep.subr.bf16.mxu0 0
  %69 = vmatpush1.bf16.msra.mxu0 0
  %70 = vmatprep.subr.bf16.mxu0 0
  %71 = vmatpush1.bf16.msra.mxu0 %v48
  %72 = vmatprep.subr.bf16.mxu0 0
  %73 = vmatpush1.bf16.msra.mxu0 %v47
  %74 = vmatprep.subr.bf16.mxu0 0
  %75 = vmatpush2.bf16.msra.mxu0 0
  %76 = vmatprep.subr.bf16.mxu0 0
  %77 = vmatpush2.bf16.msra.mxu0 0
  %78 = vmatprep.subr.bf16.mxu0 0
  %79 = vmatpush2.bf16.msra.mxu0 0
  %80 = vmatprep.subr.bf16.mxu0 0
  %81 = vmatpush2.bf16.msra.mxu0 0
  %82 = vmatprep.subr.bf16.mxu0 0
  %83 = vmatpush2.bf16.msra.mxu0 0
  %84 = vmatprep.subr.bf16.mxu0 0
  %85 = vmatpush2.bf16.msra.mxu0 0
  %86 = vmatprep.subr.bf16.mxu0 0
  %87 = vmatpush2.bf16.msra.mxu0 0
  %88 = vmatprep.subr.bf16.mxu0 0
  %89 = vmatpush2.bf16.msra.mxu0 0
  %90 = vmatprep.mubr.bf16.mxu0 0
  %91 = vmatmul.mubr.bf16.gmra.mxu0 %v53
  %v92 = vpop.f32.mrf.mxu0
  %v93 = vadd.f32 0.0, %v92
  %v94 = vpop.f32.mrf.mxu0
  %v95 = vpop.f32.mrf.mxu0
  %v96 = vadd.f32 0.0, %v95
  %v97 = vpop.f32.mrf.mxu0
  %98 = vmatprep.mubr.bf16.mxu0 0
  %99 = vmatmul.mubr.bf16.gmra.mxu0 %v56
  %v100 = vpop.f32.mrf.mxu0
  %v101 = vadd.f32 0.0, %v100
  %v102 = vpop.f32.mrf.mxu0
  %v103 = vpop.f32.mrf.mxu0
  %v104 = vadd.f32 0.0, %v103
  %v105 = vpop.f32.mrf.mxu0
  %106 = vdwg.mxu0
  %v107 = vld [vmem:[%s2] sm:$0x1]
  %v109 = vlaneseq
  %v110 = vshrl.u32 %v109, 7
  %v111 = vsub.s32 0, %v110
  %v112 = vrot.slane %v107, %v111
  %v114 = vmul.f32 %v93, %v112
  %v115 = vmul.f32 %v96, %v112
  %v116 = vmul.f32 %v101, %v112
  %v117 = vmul.f32 %v104, %v112
  %v118 = vld [vmem:[%s3] sm:$0x1]
  %v120 = vlaneseq
  %v121 = vshrl.u32 %v120, 7
  %v122 = vsub.s32 0, %v121
  %v123 = vrot.slane %v118, %v122
  %v125 = vadd.f32 %v114, %v123
  %v126 = vadd.f32 %v115, %v123
  %v127 = vadd.f32 %v116, %v123
  %v128 = vadd.f32 %v117, %v123
  %v129 = vld [vmem:[%s4] sm:$0xf]
  %v130 = vld [vmem:[%s4 + $0x4] sm:$0xf]
  %v131 = vld [vmem:[%s4 + $0x8] sm:$0xf]
  %v132 = vld [vmem:[%s4 + $0xc] sm:$0xf]
  %v133 = vunpack.c.l.bf16 %v129
  %v134 = vunpack.c.l.bf16 %v130
  %v135 = vunpack.c.l.bf16 %v131
  %v136 = vunpack.c.l.bf16 %v132
  %v137 = vadd.f32 %v125, %v133
  %v138 = vadd.f32 %v126, %v134
  %v139 = vadd.f32 %v127, %v135
  %v140 = vadd.f32 %v128, %v136
  %vm141 = vcmp.ge.f32.partialorder %v137, 0.0
  %vm142 = vcmp.ge.f32.partialorder %v138, 0.0
  %vm143 = vcmp.ge.f32.partialorder %v139, 0.0
  %vm144 = vcmp.ge.f32.partialorder %v140, 0.0
  %v145 = vmul.f32 %v137, 0.25
  %v146 = vmul.f32 %v138, 0.25
  %v147 = vmul.f32 %v139, 0.25
  %v148 = vmul.f32 %v140, 0.25
  %v149 = vsel %vm141, %v137, %v145
  %v150 = vsel %vm142, %v138, %v146
  %v151 = vsel %vm143, %v139, %v147
  %v152 = vsel %vm144, %v140, %v148
  %v153 = vpack.c.bf16 %v150, %v149
  %v154 = vpack.c.bf16 %v152, %v151
  %v157 = vunpack.c.l.b16 %v153
  %v158 = vunpack.c.h.b16 %v153
  %v159 = vunpack.c.l.b16 %v154
  %v160 = vunpack.c.h.b16 %v154
  %v161 = vpack.c.b16 %v157, %v157
  %v162 = vpack.c.b16 %v158, %v158
  %v163 = vpack.c.b16 %v159, %v159
  %v164 = vpack.c.b16 %v160, %v160
  %169 = vst [vmem:[%s5] sm:$0xf] %v161
  %170 = vst [vmem:[%s5 + $0x4] sm:$0xf] %v162
  %171 = vst [vmem:[%s5 + $0x8] sm:$0xf] %v163
  %172 = vst [vmem:[%s5 + $0xc] sm:$0xf] %v164
  // Predicated region
  $region22: #{enet_forward.108} parent=0 // pred_check
    _
  $region23: #{enet_forward.108} parent=0 // pred_check_branch
    %174 = sbr.rel (0) target = $region25
  $region24: #{enet_forward.108} parent=0 // pred_region
    _
  $region25: #{enet_forward.108} parent=0 // pred_fallthru
    _
  // Predicated region
  $region26: #{enet_forward.108} parent=0 // pred_check
    _
  $region27: #{enet_forward.108} parent=0 // pred_check_branch
    %176 = sbr.rel (0) target = $region29
  $region28: #{enet_forward.108} parent=0 // pred_region
    _
  $region29: #{enet_forward.108} parent=0 // pred_fallthru
    _

// kernel: enet_forward.110
$region0: #{enet_forward.110}
  #allocation0 [shape = 'u32[]', space=smem, size = 0x4, offset = 0x4, fixed_abs, tag = 'smem constant byte address 0x4 - core index']
  #allocation1 [shape = 'u32[144,128]{1,0:T(1,128)}', space=vmem, size = 0x12000, scoped, tag = 'internal scratch']
  %s0 = inlined_call_operand.vmem [shape: bf16[32,288], index: 0, kind: input, shape index: {}]
  %s1 = inlined_call_operand.vmem [shape: bf16[288,32], index: 1, kind: input, shape index: {}]
  %s2 = inlined_call_operand.vmem [shape: f32[1,32], index: 2, kind: input, shape index: {}]
  %s3 = inlined_call_operand.vmem [shape: f32[1,32], index: 3, kind: input, shape index: {}]
  %s4 = inlined_call_operand.vmem [shape: bf16[32,32], index: 4, kind: output, shape index: {}]
  %s5 = sld [smem:[#allocation0]]
  $region26: #{enet_forward.110} parent=0
    _
  %s7 = ssub.s32 1, %s5
  %s8 = scalar_select 0, %s7, %s5
  // Predicated region
  $region2: #{enet_forward.110} parent=0 // pred_check
    _
  $region3: #{enet_forward.110} parent=0 // pred_check_branch
    %10 = sbr.rel (0) target = $region5
  $region4: #{enet_forward.110} parent=0 // pred_region
    _
  $region5: #{enet_forward.110} parent=0 // pred_fallthru
    _
  // Predicated region
  $region6: #{enet_forward.110} parent=0 // pred_check
    _
  $region7: #{enet_forward.110} parent=0 // pred_check_branch
    %12 = sbr.rel (0) target = $region9
  $region8: #{enet_forward.110} parent=0 // pred_region
    _
  $region9: #{enet_forward.110} parent=0 // pred_fallthru
    _
  // Predicated region
  $region10: #{enet_forward.110} parent=0 // pred_check
    _
  $region11: #{enet_forward.110} parent=0 // pred_check_branch
    %14 = sbr.rel (0) target = $region13
  $region12: #{enet_forward.110} parent=0 // pred_region
    _
  $region13: #{enet_forward.110} parent=0 // pred_fallthru
    _
  // Predicated region
  $region14: #{enet_forward.110} parent=0 // pred_check
    _
  $region15: #{enet_forward.110} parent=0 // pred_check_branch
    %16 = sbr.rel (0) target = $region17
  $region16: #{enet_forward.110} parent=0 // pred_region
    _
  $region17: #{enet_forward.110} parent=0 // pred_fallthru
    _
  %v18 = vld [vmem:[%s0] sm:$0xff]
  %v19 = vld [vmem:[%s0 + $0x8] sm:$0xf]
  %v20 = vld [vmem:[%s0 + $0xc] sm:$0xff]
  %v21 = vld [vmem:[%s0 + $0x14] sm:$0xf]
  %v22 = vld [vmem:[%s0 + $0x18] sm:$0xff]
  %v23 = vld [vmem:[%s0 + $0x20] sm:$0xf]
  %v24 = vld [vmem:[%s0 + $0x24] sm:$0xff]
  %v25 = vld [vmem:[%s0 + $0x2c] sm:$0xf]
  %v26 = vld [vmem:[%s1] sm:$0xf]
  %v27 = vld [vmem:[%s1 + $0x4] sm:$0xf]
  %v28 = vld [vmem:[%s1 + $0x8] sm:$0xf]
  %v29 = vld [vmem:[%s1 + $0xc] sm:$0xf]
  %v30 = vld [vmem:[%s1 + $0x10] sm:$0xf]
  %v31 = vld [vmem:[%s1 + $0x14] sm:$0xf]
  %v32 = vld [vmem:[%s1 + $0x18] sm:$0xf]
  %v33 = vld [vmem:[%s1 + $0x1c] sm:$0xf]
  %v34 = vld [vmem:[%s1 + $0x20] sm:$0xf]
  %v35 = vld [vmem:[%s1 + $0x24] sm:$0xf]
  %v36 = vld [vmem:[%s1 + $0x28] sm:$0xf]
  %v37 = vld [vmem:[%s1 + $0x2c] sm:$0xf]
  %v38 = vld [vmem:[%s1 + $0x30] sm:$0xf]
  %v39 = vld [vmem:[%s1 + $0x34] sm:$0xf]
  %v40 = vld [vmem:[%s1 + $0x38] sm:$0xf]
  %v41 = vld [vmem:[%s1 + $0x3c] sm:$0xf]
  %v42 = vld [vmem:[%s1 + $0x40] sm:$0xf]
  %v43 = vld [vmem:[%s1 + $0x44] sm:$0xf]
  %v44 = vld [vmem:[%s1 + $0x48] sm:$0xf]
  %v45 = vld [vmem:[%s1 + $0x4c] sm:$0xf]
  %v46 = vld [vmem:[%s1 + $0x50] sm:$0xf]
  %v47 = vld [vmem:[%s1 + $0x54] sm:$0xf]
  %v48 = vld [vmem:[%s1 + $0x58] sm:$0xf]
  %v49 = vld [vmem:[%s1 + $0x5c] sm:$0xf]
  %v50 = vld [vmem:[%s1 + $0x60] sm:$0xf]
  %v51 = vld [vmem:[%s1 + $0x64] sm:$0xf]
  %v52 = vld [vmem:[%s1 + $0x68] sm:$0xf]
  %v53 = vld [vmem:[%s1 + $0x6c] sm:$0xf]
  %v54 = vld [vmem:[%s1 + $0x70] sm:$0xf]
  %v55 = vld [vmem:[%s1 + $0x74] sm:$0xf]
  %v56 = vld [vmem:[%s1 + $0x78] sm:$0xf]
  %v57 = vld [vmem:[%s1 + $0x7c] sm:$0xf]
  %v58 = vld [vmem:[%s1 + $0x80] sm:$0xf]
  %v59 = vld [vmem:[%s1 + $0x84] sm:$0xf]
  %v60 = vld [vmem:[%s1 + $0x88] sm:$0xf]
  %v61 = vld [vmem:[%s1 + $0x8c] sm:$0xf]
  %v70 = vunpack.c.l.b16 %v18
  %v71 = vunpack.c.h.b16 %v18
  %v72 = vunpack.c.l.b16 %v19
  %v73 = vunpack.c.l.b16 %v20
  %v74 = vunpack.c.h.b16 %v20
  %v75 = vunpack.c.l.b16 %v21
  %v76 = vunpack.c.l.b16 %v22
  %v77 = vunpack.c.h.b16 %v22
  %v78 = vunpack.c.l.b16 %v23
  %v79 = vunpack.c.l.b16 %v24
  %v80 = vunpack.c.h.b16 %v24
  %v81 = vunpack.c.l.b16 %v25
  %v82 = vpack.c.b16 %v73, %v70
  %v83 = vpack.c.b16 %v74, %v71
  %v84 = vpack.c.b16 %v75, %v72
  %v85 = vpack.c.b16 %v79, %v76
  %v86 = vpack.c.b16 %v80, %v77
  %v87 = vpack.c.b16 %v81, %v78
  %v128 = vunpack.c.l.b16 %v26
  %v129 = vunpack.c.l.b16 %v27
  %v130 = vunpack.c.l.b16 %v28
  %v131 = vunpack.c.l.b16 %v29
  %v132 = vunpack.c.l.b16 %v30
  %v133 = vunpack.c.l.b16 %v31
  %v134 = vunpack.c.l.b16 %v32
  %v135 = vunpack.c.l.b16 %v33
  %v136 = vunpack.c.l.b16 %v34
  %v137 = vunpack.c.l.b16 %v35
  %v138 = vunpack.c.l.b16 %v36
  %v139 = vunpack.c.l.b16 %v37
  %v140 = vunpack.c.l.b16 %v38
  %v141 = vunpack.c.l.b16 %v39
  %v142 = vunpack.c.l.b16 %v40
  %v143 = vunpack.c.l.b16 %v41
  %v144 = vunpack.c.l.b16 %v42
  %v145 = vunpack.c.l.b16 %v43
  %v146 = vunpack.c.l.b16 %v44
  %v147 = vunpack.c.l.b16 %v45
  %v148 = vunpack.c.l.b16 %v46
  %v149 = vunpack.c.l.b16 %v47
  %v150 = vunpack.c.l.b16 %v48
  %v151 = vunpack.c.l.b16 %v49
  %v152 = vunpack.c.l.b16 %v50
  %v153 = vunpack.c.l.b16 %v51
  %v154 = vunpack.c.l.b16 %v52
  %v155 = vunpack.c.l.b16 %v53
  %v156 = vunpack.c.l.b16 %v54
  %v157 = vunpack.c.l.b16 %v55
  %v158 = vunpack.c.l.b16 %v56
  %v159 = vunpack.c.l.b16 %v57
  %v160 = vunpack.c.l.b16 %v58
  %v161 = vunpack.c.l.b16 %v59
  %v162 = vunpack.c.l.b16 %v60
  %v163 = vunpack.c.l.b16 %v61
  %v164 = vpack.c.b16 %v129, %v128
  %v165 = vpack.c.b16 %v131, %v130
  %v166 = vpack.c.b16 %v133, %v132
  %v167 = vpack.c.b16 %v135, %v134
  %v168 = vpack.c.b16 %v137, %v136
  %v169 = vpack.c.b16 %v139, %v138
  %v170 = vpack.c.b16 %v141, %v140
  %v171 = vpack.c.b16 %v143, %v142
  %v172 = vpack.c.b16 %v145, %v144
  %v173 = vpack.c.b16 %v147, %v146
  %v174 = vpack.c.b16 %v149, %v148
  %v175 = vpack.c.b16 %v151, %v150
  %v176 = vpack.c.b16 %v153, %v152
  %v177 = vpack.c.b16 %v155, %v154
  %v178 = vpack.c.b16 %v157, %v156
  %v179 = vpack.c.b16 %v159, %v158
  %v180 = vpack.c.b16 %v161, %v160
  %v181 = vpack.c.b16 %v163, %v162
  %vm200 = vcmask 261120
  %v202 = vsel %vm200, %v84, 0
  %v205 = vsel %vm200, %v87, 0
  %207 = vmatprep.subr.bf16.mxu0 0
  %208 = vmatpush1.bf16.msra.mxu0 %v171
  %209 = vmatprep.subr.bf16.mxu0 0
  %210 = vmatpush1.bf16.msra.mxu0 %v170
  %211 = vmatprep.subr.bf16.mxu0 0
  %212 = vmatpush1.bf16.msra.mxu0 %v169
  %213 = vmatprep.subr.bf16.mxu0 0
  %214 = vmatpush1.bf16.msra.mxu0 %v168
  %215 = vmatprep.subr.bf16.mxu0 0
  %216 = vmatpush1.bf16.msra.mxu0 %v167
  %217 = vmatprep.subr.bf16.mxu0 0
  %218 = vmatpush1.bf16.msra.mxu0 %v166
  %219 = vmatprep.subr.bf16.mxu0 0
  %220 = vmatpush1.bf16.msra.mxu0 %v165
  %221 = vmatprep.subr.bf16.mxu0 0
  %222 = vmatpush1.bf16.msra.mxu0 %v164
  %223 = vmatprep.subr.bf16.mxu0 0
  %224 = vmatpush2.bf16.msra.mxu0 %v179
  %225 = vmatprep.subr.bf16.mxu0 0
  %226 = vmatpush2.bf16.msra.mxu0 %v178
  %227 = vmatprep.subr.bf16.mxu0 0
  %228 = vmatpush2.bf16.msra.mxu0 %v177
  %229 = vmatprep.subr.bf16.mxu0 0
  %230 = vmatpush2.bf16.msra.mxu0 %v176
  %231 = vmatprep.subr.bf16.mxu0 0
  %232 = vmatpush2.bf16.msra.mxu0 %v175
  %233 = vmatprep.subr.bf16.mxu0 0
  %234 = vmatpush2.bf16.msra.mxu0 %v174
  %235 = vmatprep.subr.bf16.mxu0 0
  %236 = vmatpush2.bf16.msra.mxu0 %v173
  %237 = vmatprep.subr.bf16.mxu0 0
  %238 = vmatpush2.bf16.msra.mxu0 %v172
  %239 = vmatprep.mubr.bf16.mxu0 %v83
  %240 = vmatmul.mubr.bf16.gmra.mxu0 %v82
  %v241 = vpop.f32.mrf.mxu0
  %v242 = vadd.f32 0.0, %v241
  %v243 = vpop.f32.mrf.mxu0
  %v244 = vpop.f32.mrf.mxu0
  %v245 = vadd.f32 0.0, %v244
  %v246 = vpop.f32.mrf.mxu0
  %247 = vmatprep.mubr.bf16.mxu0 %v86
  %248 = vmatmul.mubr.bf16.gmra.mxu0 %v85
  %v249 = vpop.f32.mrf.mxu0
  %v250 = vadd.f32 0.0, %v249
  %v251 = vpop.f32.mrf.mxu0
  %v252 = vpop.f32.mrf.mxu0
  %v253 = vadd.f32 0.0, %v252
  %v254 = vpop.f32.mrf.mxu0
  %255 = vdwg.mxu0
  %256 = vmatprep.subr.bf16.mxu0 0
  %257 = vmatpush1.bf16.msra.mxu0 0
  %258 = vmatprep.subr.bf16.mxu0 0
  %259 = vmatpush1.bf16.msra.mxu0 0
  %260 = vmatprep.subr.bf16.mxu0 0
  %261 = vmatpush1.bf16.msra.mxu0 0
  %262 = vmatprep.subr.bf16.mxu0 0
  %263 = vmatpush1.bf16.msra.mxu0 0
  %264 = vmatprep.subr.bf16.mxu0 0
  %265 = vmatpush1.bf16.msra.mxu0 0
  %266 = vmatprep.subr.bf16.mxu0 0
  %267 = vmatpush1.bf16.msra.mxu0 0
  %268 = vmatprep.subr.bf16.mxu0 0
  %269 = vmatpush1.bf16.msra.mxu0 %v181
  %270 = vmatprep.subr.bf16.mxu0 0
  %271 = vmatpush1.bf16.msra.mxu0 %v180
  %272 = vmatprep.subr.bf16.mxu0 0
  %273 = vmatpush2.bf16.msra.mxu0 0
  %274 = vmatprep.subr.bf16.mxu0 0
  %275 = vmatpush2.bf16.msra.mxu0 0
  %276 = vmatprep.subr.bf16.mxu0 0
  %277 = vmatpush2.bf16.msra.mxu0 0
  %278 = vmatprep.subr.bf16.mxu0 0
  %279 = vmatpush2.bf16.msra.mxu0 0
  %280 = vmatprep.subr.bf16.mxu0 0
  %281 = vmatpush2.bf16.msra.mxu0 0
  %282 = vmatprep.subr.bf16.mxu0 0
  %283 = vmatpush2.bf16.msra.mxu0 0
  %284 = vmatprep.subr.bf16.mxu0 0
  %285 = vmatpush2.bf16.msra.mxu0 0
  %286 = vmatprep.subr.bf16.mxu0 0
  %287 = vmatpush2.bf16.msra.mxu0 0
  %288 = vmatprep.mubr.bf16.mxu0 0
  %289 = vmatmul.mubr.bf16.gmra.mxu0 %v202
  %v290 = vpop.f32.mrf.mxu0
  %v291 = vadd.f32 %v242, %v290
  %v292 = vpop.f32.mrf.mxu0
  %v293 = vpop.f32.mrf.mxu0
  %v294 = vadd.f32 %v245, %v293
  %v295 = vpop.f32.mrf.mxu0
  %296 = vmatprep.mubr.bf16.mxu0 0
  %297 = vmatmul.mubr.bf16.gmra.mxu0 %v205
  %v298 = vpop.f32.mrf.mxu0
  %v299 = vadd.f32 %v250, %v298
  %v300 = vpop.f32.mrf.mxu0
  %v301 = vpop.f32.mrf.mxu0
  %v302 = vadd.f32 %v253, %v301
  %v303 = vpop.f32.mrf.mxu0
  %304 = vdwg.mxu0
  %v305 = vld [vmem:[%s2] sm:$0x1]
  %v307 = vlaneseq
  %v308 = vshrl.u32 %v307, 7
  %v309 = vsub.s32 0, %v308
  %v310 = vrot.slane %v305, %v309
  %v312 = vmul.f32 %v291, %v310
  %v313 = vmul.f32 %v294, %v310
  %v314 = vmul.f32 %v299, %v310
  %v315 = vmul.f32 %v302, %v310
  %v316 = vld [vmem:[%s3] sm:$0x1]
  %v318 = vlaneseq
  %v319 = vshrl.u32 %v318, 7
  %v320 = vsub.s32 0, %v319
  %v321 = vrot.slane %v316, %v320
  %v323 = vadd.f32 %v312, %v321
  %v324 = vadd.f32 %v313, %v321
  %v325 = vadd.f32 %v314, %v321
  %v326 = vadd.f32 %v315, %v321
  %vm327 = vcmp.ge.f32.partialorder %v323, 0.0
  %vm328 = vcmp.ge.f32.partialorder %v324, 0.0
  %vm329 = vcmp.ge.f32.partialorder %v325, 0.0
  %vm330 = vcmp.ge.f32.partialorder %v326, 0.0
  %v331 = vmul.f32 %v323, 0.25
  %v332 = vmul.f32 %v324, 0.25
  %v333 = vmul.f32 %v325, 0.25
  %v334 = vmul.f32 %v326, 0.25
  %v335 = vsel %vm327, %v323, %v331
  %v336 = vsel %vm328, %v324, %v332
  %v337 = vsel %vm329, %v325, %v333
  %v338 = vsel %vm330, %v326, %v334
  %v339 = vpack.c.bf16 %v336, %v335
  %v340 = vpack.c.bf16 %v338, %v337
  %v343 = vunpack.c.l.b16 %v339
  %v344 = vunpack.c.h.b16 %v339
  %v345 = vunpack.c.l.b16 %v340
  %v346 = vunpack.c.h.b16 %v340
  %v347 = vpack.c.b16 %v343, %v343
  %v348 = vpack.c.b16 %v344, %v344
  %v349 = vpack.c.b16 %v345, %v345
  %v350 = vpack.c.b16 %v346, %v346
  %vm355 = vcmask 257024
  %356 = vst.msk [vmem:[%s4] sm:$0xf] %vm355, %v347
  %357 = vst.msk [vmem:[%s4 + $0x4] sm:$0xf] %vm355, %v348
  %358 = vst.msk [vmem:[%s4 + $0x8] sm:$0xf] %vm355, %v349
  %359 = vst.msk [vmem:[%s4 + $0xc] sm:$0xf] %vm355, %v350
  // Predicated region
  $region18: #{enet_forward.110} parent=0 // pred_check
    _
  $region19: #{enet_forward.110} parent=0 // pred_check_branch
    %361 = sbr.rel (0) target = $region21
  $region20: #{enet_forward.110} parent=0 // pred_region
    _
  $region21: #{enet_forward.110} parent=0 // pred_fallthru
    _
  // Predicated region
  $region22: #{enet_forward.110} parent=0 // pred_check
    _
  $region23: #{enet_forward.110} parent=0 // pred_check_branch
    %363 = sbr.rel (0) target = $region25
  $region24: #{enet_forward.110} parent=0 // pred_region
    _
  $region25: #{enet_forward.110} parent=0 // pred_fallthru
    _

// kernel: enet_forward.117
$region0: #{enet_forward.117}
  #allocation0 [shape = 'u32[]', space=smem, size = 0x4, offset = 0x4, fixed_abs, tag = 'smem constant byte address 0x4 - core index']
  #allocation1 [shape = 'u32[144,128]{1,0:T(1,128)}', space=vmem, size = 0x12000, scoped, tag = 'internal scratch']
  %s0 = inlined_call_operand.vmem [shape: bf16[32,160], index: 0, kind: input, shape index: {}]
  %s1 = inlined_call_operand.vmem [shape: bf16[160,32], index: 1, kind: input, shape index: {}]
  %s2 = inlined_call_operand.vmem [shape: f32[1,32], index: 2, kind: input, shape index: {}]
  %s3 = inlined_call_operand.vmem [shape: f32[1,32], index: 3, kind: input, shape index: {}]
  %s4 = inlined_call_operand.vmem [shape: bf16[32,32], index: 4, kind: output, shape index: {}]
  %s5 = sld [smem:[#allocation0]]
  $region26: #{enet_forward.117} parent=0
    _
  %s7 = ssub.s32 1, %s5
  %s8 = scalar_select 0, %s7, %s5
  // Predicated region
  $region2: #{enet_forward.117} parent=0 // pred_check
    _
  $region3: #{enet_forward.117} parent=0 // pred_check_branch
    %10 = sbr.rel (0) target = $region5
  $region4: #{enet_forward.117} parent=0 // pred_region
    _
  $region5: #{enet_forward.117} parent=0 // pred_fallthru
    _
  // Predicated region
  $region6: #{enet_forward.117} parent=0 // pred_check
    _
  $region7: #{enet_forward.117} parent=0 // pred_check_branch
    %12 = sbr.rel (0) target = $region9
  $region8: #{enet_forward.117} parent=0 // pred_region
    _
  $region9: #{enet_forward.117} parent=0 // pred_fallthru
    _
  // Predicated region
  $region10: #{enet_forward.117} parent=0 // pred_check
    _
  $region11: #{enet_forward.117} parent=0 // pred_check_branch
    %14 = sbr.rel (0) target = $region13
  $region12: #{enet_forward.117} parent=0 // pred_region
    _
  $region13: #{enet_forward.117} parent=0 // pred_fallthru
    _
  // Predicated region
  $region14: #{enet_forward.117} parent=0 // pred_check
    _
  $region15: #{enet_forward.117} parent=0 // pred_check_branch
    %16 = sbr.rel (0) target = $region17
  $region16: #{enet_forward.117} parent=0 // pred_region
    _
  $region17: #{enet_forward.117} parent=0 // pred_fallthru
    _
  %v18 = vld [vmem:[%s0] sm:$0xff]
  %v19 = vld [vmem:[%s0 + $0x8] sm:$0xff]
  %v20 = vld [vmem:[%s0 + $0x10] sm:$0xff]
  %v21 = vld [vmem:[%s0 + $0x18] sm:$0xff]
  %v22 = vld [vmem:[%s1] sm:$0xf]
  %v23 = vld [vmem:[%s1 + $0x4] sm:$0xf]
  %v24 = vld [vmem:[%s1 + $0x8] sm:$0xf]
  %v25 = vld [vmem:[%s1 + $0xc] sm:$0xf]
  %v26 = vld [vmem:[%s1 + $0x10] sm:$0xf]
  %v27 = vld [vmem:[%s1 + $0x14] sm:$0xf]
  %v28 = vld [vmem:[%s1 + $0x18] sm:$0xf]
  %v29 = vld [vmem:[%s1 + $0x1c] sm:$0xf]
  %v30 = vld [vmem:[%s1 + $0x20] sm:$0xf]
  %v31 = vld [vmem:[%s1 + $0x24] sm:$0xf]
  %v32 = vld [vmem:[%s1 + $0x28] sm:$0xf]
  %v33 = vld [vmem:[%s1 + $0x2c] sm:$0xf]
  %v34 = vld [vmem:[%s1 + $0x30] sm:$0xf]
  %v35 = vld [vmem:[%s1 + $0x34] sm:$0xf]
  %v36 = vld [vmem:[%s1 + $0x38] sm:$0xf]
  %v37 = vld [vmem:[%s1 + $0x3c] sm:$0xf]
  %v38 = vld [vmem:[%s1 + $0x40] sm:$0xf]
  %v39 = vld [vmem:[%s1 + $0x44] sm:$0xf]
  %v40 = vld [vmem:[%s1 + $0x48] sm:$0xf]
  %v41 = vld [vmem:[%s1 + $0x4c] sm:$0xf]
  %v46 = vunpack.c.l.b16 %v18
  %v47 = vunpack.c.h.b16 %v18
  %v48 = vunpack.c.l.b16 %v19
  %v49 = vunpack.c.h.b16 %v19
  %v50 = vunpack.c.l.b16 %v20
  %v51 = vunpack.c.h.b16 %v20
  %v52 = vunpack.c.l.b16 %v21
  %v53 = vunpack.c.h.b16 %v21
  %v54 = vpack.c.b16 %v48, %v46
  %v55 = vpack.c.b16 %v49, %v47
  %v56 = vpack.c.b16 %v52, %v50
  %v57 = vpack.c.b16 %v53, %v51
  %v80 = vunpack.c.l.b16 %v22
  %v81 = vunpack.c.l.b16 %v23
  %v82 = vunpack.c.l.b16 %v24
  %v83 = vunpack.c.l.b16 %v25
  %v84 = vunpack.c.l.b16 %v26
  %v85 = vunpack.c.l.b16 %v27
  %v86 = vunpack.c.l.b16 %v28
  %v87 = vunpack.c.l.b16 %v29
  %v88 = vunpack.c.l.b16 %v30
  %v89 = vunpack.c.l.b16 %v31
  %v90 = vunpack.c.l.b16 %v32
  %v91 = vunpack.c.l.b16 %v33
  %v92 = vunpack.c.l.b16 %v34
  %v93 = vunpack.c.l.b16 %v35
  %v94 = vunpack.c.l.b16 %v36
  %v95 = vunpack.c.l.b16 %v37
  %v96 = vunpack.c.l.b16 %v38
  %v97 = vunpack.c.l.b16 %v39
  %v98 = vunpack.c.l.b16 %v40
  %v99 = vunpack.c.l.b16 %v41
  %v100 = vpack.c.b16 %v81, %v80
  %v101 = vpack.c.b16 %v83, %v82
  %v102 = vpack.c.b16 %v85, %v84
  %v103 = vpack.c.b16 %v87, %v86
  %v104 = vpack.c.b16 %v89, %v88
  %v105 = vpack.c.b16 %v91, %v90
  %v106 = vpack.c.b16 %v93, %v92
  %v107 = vpack.c.b16 %v95, %v94
  %v108 = vpack.c.b16 %v97, %v96
  %v109 = vpack.c.b16 %v99, %v98
  %vm120 = vcmask 261120
  %v122 = vsel %vm120, %v55, 0
  %v125 = vsel %vm120, %v57, 0
  %127 = vmatprep.subr.bf16.mxu0 0
  %128 = vmatpush1.bf16.msra.mxu0 %v107
  %129 = vmatprep.subr.bf16.mxu0 0
  %130 = vmatpush1.bf16.msra.mxu0 %v106
  %131 = vmatprep.subr.bf16.mxu0 0
  %132 = vmatpush1.bf16.msra.mxu0 %v105
  %133 = vmatprep.subr.bf16.mxu0 0
  %134 = vmatpush1.bf16.msra.mxu0 %v104
  %135 = vmatprep.subr.bf16.mxu0 0
  %136 = vmatpush1.bf16.msra.mxu0 %v103
  %137 = vmatprep.subr.bf16.mxu0 0
  %138 = vmatpush1.bf16.msra.mxu0 %v102
  %139 = vmatprep.subr.bf16.mxu0 0
  %140 = vmatpush1.bf16.msra.mxu0 %v101
  %141 = vmatprep.subr.bf16.mxu0 0
  %142 = vmatpush1.bf16.msra.mxu0 %v100
  %143 = vmatprep.subr.bf16.mxu0 0
  %144 = vmatpush2.bf16.msra.mxu0 0
  %145 = vmatprep.subr.bf16.mxu0 0
  %146 = vmatpush2.bf16.msra.mxu0 0
  %147 = vmatprep.subr.bf16.mxu0 0
  %148 = vmatpush2.bf16.msra.mxu0 0
  %149 = vmatprep.subr.bf16.mxu0 0
  %150 = vmatpush2.bf16.msra.mxu0 0
  %151 = vmatprep.subr.bf16.mxu0 0
  %152 = vmatpush2.bf16.msra.mxu0 0
  %153 = vmatprep.subr.bf16.mxu0 0
  %154 = vmatpush2.bf16.msra.mxu0 0
  %155 = vmatprep.subr.bf16.mxu0 0
  %156 = vmatpush2.bf16.msra.mxu0 %v109
  %157 = vmatprep.subr.bf16.mxu0 0
  %158 = vmatpush2.bf16.msra.mxu0 %v108
  %159 = vmatprep.mubr.bf16.mxu0 %v122
  %160 = vmatmul.mubr.bf16.gmra.mxu0 %v54
  %v161 = vpop.f32.mrf.mxu0
  %v162 = vadd.f32 0.0, %v161
  %v163 = vpop.f32.mrf.mxu0
  %v164 = vpop.f32.mrf.mxu0
  %v165 = vadd.f32 0.0, %v164
  %v166 = vpop.f32.mrf.mxu0
  %167 = vmatprep.mubr.bf16.mxu0 %v125
  %168 = vmatmul.mubr.bf16.gmra.mxu0 %v56
  %v169 = vpop.f32.mrf.mxu0
  %v170 = vadd.f32 0.0, %v169
  %v171 = vpop.f32.mrf.mxu0
  %v172 = vpop.f32.mrf.mxu0
  %v173 = vadd.f32 0.0, %v172
  %v174 = vpop.f32.mrf.mxu0
  %175 = vdwg.mxu0
  %v176 = vld [vmem:[%s2] sm:$0x1]
  %v178 = vlaneseq
  %v179 = vshrl.u32 %v178, 7
  %v180 = vsub.s32 0, %v179
  %v181 = vrot.slane %v176, %v180
  %v183 = vmul.f32 %v162, %v181
  %v184 = vmul.f32 %v165, %v181
  %v185 = vmul.f32 %v170, %v181
  %v186 = vmul.f32 %v173, %v181
  %v187 = vld [vmem:[%s3] sm:$0x1]
  %v189 = vlaneseq
  %v190 = vshrl.u32 %v189, 7
  %v191 = vsub.s32 0, %v190
  %v192 = vrot.slane %v187, %v191
  %v194 = vadd.f32 %v183, %v192
  %v195 = vadd.f32 %v184, %v192
  %v196 = vadd.f32 %v185, %v192
  %v197 = vadd.f32 %v186, %v192
  %vm198 = vcmp.ge.f32.partialorder %v194, 0.0
  %vm199 = vcmp.ge.f32.partialorder %v195, 0.0
  %vm200 = vcmp.ge.f32.partialorder %v196, 0.0
  %vm201 = vcmp.ge.f32.partialorder %v197, 0.0
  %v202 = vmul.f32 %v194, 0.25
  %v203 = vmul.f32 %v195, 0.25
  %v204 = vmul.f32 %v196, 0.25
  %v205 = vmul.f32 %v197, 0.25
  %v206 = vsel %vm198, %v194, %v202
  %v207 = vsel %vm199, %v195, %v203
  %v208 = vsel %vm200, %v196, %v204
  %v209 = vsel %vm201, %v197, %v205
  %v210 = vpack.c.bf16 %v207, %v206
  %v211 = vpack.c.bf16 %v209, %v208
  %v214 = vunpack.c.l.b16 %v210
  %v215 = vunpack.c.h.b16 %v210
  %v216 = vunpack.c.l.b16 %v211
  %v217 = vunpack.c.h.b16 %v211
  %v218 = vpack.c.b16 %v214, %v214
  %v219 = vpack.c.b16 %v215, %v215
  %v220 = vpack.c.b16 %v216, %v216
  %v221 = vpack.c.b16 %v217, %v217
  %vm226 = vcmask 257024
  %227 = vst.msk [vmem:[%s4] sm:$0xf] %vm226, %v218
  %228 = vst.msk [vmem:[%s4 + $0x4] sm:$0xf] %vm226, %v219
  %229 = vst.msk [vmem:[%s4 + $0x8] sm:$0xf] %vm226, %v220
  %230 = vst.msk [vmem:[%s4 + $0xc] sm:$0xf] %vm226, %v221
  // Predicated region
  $region18: #{enet_forward.117} parent=0 // pred_check
    _
  $region19: #{enet_forward.117} parent=0 // pred_check_branch
    %232 = sbr.rel (0) target = $region21
  $region20: #{enet_forward.117} parent=0 // pred_region
    _
  $region21: #{enet_forward.117} parent=0 // pred_fallthru
    _
  // Predicated region
  $region22: #{enet_forward.117} parent=0 // pred_check
    _
  $region23: #{enet_forward.117} parent=0 // pred_check_branch
    %234 = sbr.rel (0) target = $region25
  $region24: #{enet_forward.117} parent=0 // pred_region
    _
  $region25: #{enet_forward.117} parent=0 // pred_fallthru
    _

// kernel: enet_forward.116
$region0: #{enet_forward.116}
  #allocation0 [shape = 'u32[]', space=smem, size = 0x4, offset = 0x4, fixed_abs, tag = 'smem constant byte address 0x4 - core index']
  #allocation1 [shape = 'u32[144,128]{1,0:T(1,128)}', space=vmem, size = 0x12000, scoped, tag = 'internal scratch']
  %s0 = inlined_call_operand.vmem [shape: bf16[32,160], index: 0, kind: input, shape index: {}]
  %s1 = inlined_call_operand.vmem [shape: bf16[160,32], index: 1, kind: input, shape index: {}]
  %s2 = inlined_call_operand.vmem [shape: f32[1,32], index: 2, kind: input, shape index: {}]
  %s3 = inlined_call_operand.vmem [shape: f32[1,32], index: 3, kind: input, shape index: {}]
  %s4 = inlined_call_operand.vmem [shape: bf16[32,32], index: 4, kind: output, shape index: {}]
  %s5 = sld [smem:[#allocation0]]
  $region26: #{enet_forward.116} parent=0
    _
  %s7 = ssub.s32 1, %s5
  %s8 = scalar_select 0, %s7, %s5
  // Predicated region
  $region2: #{enet_forward.116} parent=0 // pred_check
    _
  $region3: #{enet_forward.116} parent=0 // pred_check_branch
    %10 = sbr.rel (0) target = $region5
  $region4: #{enet_forward.116} parent=0 // pred_region
    _
  $region5: #{enet_forward.116} parent=0 // pred_fallthru
    _
  // Predicated region
  $region6: #{enet_forward.116} parent=0 // pred_check
    _
  $region7: #{enet_forward.116} parent=0 // pred_check_branch
    %12 = sbr.rel (0) target = $region9
  $region8: #{enet_forward.116} parent=0 // pred_region
    _
  $region9: #{enet_forward.116} parent=0 // pred_fallthru
    _
  // Predicated region
  $region10: #{enet_forward.116} parent=0 // pred_check
    _
  $region11: #{enet_forward.116} parent=0 // pred_check_branch
    %14 = sbr.rel (0) target = $region13
  $region12: #{enet_forward.116} parent=0 // pred_region
    _
  $region13: #{enet_forward.116} parent=0 // pred_fallthru
    _
  // Predicated region
  $region14: #{enet_forward.116} parent=0 // pred_check
    _
  $region15: #{enet_forward.116} parent=0 // pred_check_branch
    %16 = sbr.rel (0) target = $region17
  $region16: #{enet_forward.116} parent=0 // pred_region
    _
  $region17: #{enet_forward.116} parent=0 // pred_fallthru
    _
  %v18 = vld [vmem:[%s0] sm:$0xff]
  %v19 = vld [vmem:[%s0 + $0x8] sm:$0xff]
  %v20 = vld [vmem:[%s0 + $0x10] sm:$0xff]
  %v21 = vld [vmem:[%s0 + $0x18] sm:$0xff]
  %v22 = vld [vmem:[%s1] sm:$0xf]
  %v23 = vld [vmem:[%s1 + $0x4] sm:$0xf]
  %v24 = vld [vmem:[%s1 + $0x8] sm:$0xf]
  %v25 = vld [vmem:[%s1 + $0xc] sm:$0xf]
  %v26 = vld [vmem:[%s1 + $0x10] sm:$0xf]
  %v27 = vld [vmem:[%s1 + $0x14] sm:$0xf]
  %v28 = vld [vmem:[%s1 + $0x18] sm:$0xf]
  %v29 = vld [vmem:[%s1 + $0x1c] sm:$0xf]
  %v30 = vld [vmem:[%s1 + $0x20] sm:$0xf]
  %v31 = vld [vmem:[%s1 + $0x24] sm:$0xf]
  %v32 = vld [vmem:[%s1 + $0x28] sm:$0xf]
  %v33 = vld [vmem:[%s1 + $0x2c] sm:$0xf]
  %v34 = vld [vmem:[%s1 + $0x30] sm:$0xf]
  %v35 = vld [vmem:[%s1 + $0x34] sm:$0xf]
  %v36 = vld [vmem:[%s1 + $0x38] sm:$0xf]
  %v37 = vld [vmem:[%s1 + $0x3c] sm:$0xf]
  %v38 = vld [vmem:[%s1 + $0x40] sm:$0xf]
  %v39 = vld [vmem:[%s1 + $0x44] sm:$0xf]
  %v40 = vld [vmem:[%s1 + $0x48] sm:$0xf]
  %v41 = vld [vmem:[%s1 + $0x4c] sm:$0xf]
  %v46 = vunpack.c.l.b16 %v18
  %v47 = vunpack.c.h.b16 %v18
  %v48 = vunpack.c.l.b16 %v19
  %v49 = vunpack.c.h.b16 %v19
  %v50 = vunpack.c.l.b16 %v20
  %v51 = vunpack.c.h.b16 %v20
  %v52 = vunpack.c.l.b16 %v21
  %v53 = vunpack.c.h.b16 %v21
  %v54 = vpack.c.b16 %v48, %v46
  %v55 = vpack.c.b16 %v49, %v47
  %v56 = vpack.c.b16 %v52, %v50
  %v57 = vpack.c.b16 %v53, %v51
  %v80 = vunpack.c.l.b16 %v22
  %v81 = vunpack.c.l.b16 %v23
  %v82 = vunpack.c.l.b16 %v24
  %v83 = vunpack.c.l.b16 %v25
  %v84 = vunpack.c.l.b16 %v26
  %v85 = vunpack.c.l.b16 %v27
  %v86 = vunpack.c.l.b16 %v28
  %v87 = vunpack.c.l.b16 %v29
  %v88 = vunpack.c.l.b16 %v30
  %v89 = vunpack.c.l.b16 %v31
  %v90 = vunpack.c.l.b16 %v32
  %v91 = vunpack.c.l.b16 %v33
  %v92 = vunpack.c.l.b16 %v34
  %v93 = vunpack.c.l.b16 %v35
  %v94 = vunpack.c.l.b16 %v36
  %v95 = vunpack.c.l.b16 %v37
  %v96 = vunpack.c.l.b16 %v38
  %v97 = vunpack.c.l.b16 %v39
  %v98 = vunpack.c.l.b16 %v40
  %v99 = vunpack.c.l.b16 %v41
  %v100 = vpack.c.b16 %v81, %v80
  %v101 = vpack.c.b16 %v83, %v82
  %v102 = vpack.c.b16 %v85, %v84
  %v103 = vpack.c.b16 %v87, %v86
  %v104 = vpack.c.b16 %v89, %v88
  %v105 = vpack.c.b16 %v91, %v90
  %v106 = vpack.c.b16 %v93, %v92
  %v107 = vpack.c.b16 %v95, %v94
  %v108 = vpack.c.b16 %v97, %v96
  %v109 = vpack.c.b16 %v99, %v98
  %vm120 = vcmask 261120
  %v122 = vsel %vm120, %v55, 0
  %v125 = vsel %vm120, %v57, 0
  %127 = vmatprep.subr.bf16.mxu0 0
  %128 = vmatpush1.bf16.msra.mxu0 %v107
  %129 = vmatprep.subr.bf16.mxu0 0
  %130 = vmatpush1.bf16.msra.mxu0 %v106
  %131 = vmatprep.subr.bf16.mxu0 0
  %132 = vmatpush1.bf16.msra.mxu0 %v105
  %133 = vmatprep.subr.bf16.mxu0 0
  %134 = vmatpush1.bf16.msra.mxu0 %v104
  %135 = vmatprep.subr.bf16.mxu0 0
  %136 = vmatpush1.bf16.msra.mxu0 %v103
  %137 = vmatprep.subr.bf16.mxu0 0
  %138 = vmatpush1.bf16.msra.mxu0 %v102
  %139 = vmatprep.subr.bf16.mxu0 0
  %140 = vmatpush1.bf16.msra.mxu0 %v101
  %141 = vmatprep.subr.bf16.mxu0 0
  %142 = vmatpush1.bf16.msra.mxu0 %v100
  %143 = vmatprep.subr.bf16.mxu0 0
  %144 = vmatpush2.bf16.msra.mxu0 0
  %145 = vmatprep.subr.bf16.mxu0 0
  %146 = vmatpush2.bf16.msra.mxu0 0
  %147 = vmatprep.subr.bf16.mxu0 0
  %148 = vmatpush2.bf16.msra.mxu0 0
  %149 = vmatprep.subr.bf16.mxu0 0
  %150 = vmatpush2.bf16.msra.mxu0 0
  %151 = vmatprep.subr.bf16.mxu0 0
  %152 = vmatpush2.bf16.msra.mxu0 0
  %153 = vmatprep.subr.bf16.mxu0 0
  %154 = vmatpush2.bf16.msra.mxu0 0
  %155 = vmatprep.subr.bf16.mxu0 0
  %156 = vmatpush2.bf16.msra.mxu0 %v109
  %157 = vmatprep.subr.bf16.mxu0 0
  %158 = vmatpush2.bf16.msra.mxu0 %v108
  %159 = vmatprep.mubr.bf16.mxu0 %v122
  %160 = vmatmul.mubr.bf16.gmra.mxu0 %v54
  %v161 = vpop.f32.mrf.mxu0
  %v162 = vadd.f32 0.0, %v161
  %v163 = vpop.f32.mrf.mxu0
  %v164 = vpop.f32.mrf.mxu0
  %v165 = vadd.f32 0.0, %v164
  %v166 = vpop.f32.mrf.mxu0
  %167 = vmatprep.mubr.bf16.mxu0 %v125
  %168 = vmatmul.mubr.bf16.gmra.mxu0 %v56
  %v169 = vpop.f32.mrf.mxu0
  %v170 = vadd.f32 0.0, %v169
  %v171 = vpop.f32.mrf.mxu0
  %v172 = vpop.f32.mrf.mxu0
  %v173 = vadd.f32 0.0, %v172
  %v174 = vpop.f32.mrf.mxu0
  %175 = vdwg.mxu0
  %v176 = vld [vmem:[%s2] sm:$0x1]
  %v178 = vlaneseq
  %v179 = vshrl.u32 %v178, 7
  %v180 = vsub.s32 0, %v179
  %v181 = vrot.slane %v176, %v180
  %v183 = vmul.f32 %v162, %v181
  %v184 = vmul.f32 %v165, %v181
  %v185 = vmul.f32 %v170, %v181
  %v186 = vmul.f32 %v173, %v181
  %v187 = vld [vmem:[%s3] sm:$0x1]
  %v189 = vlaneseq
  %v190 = vshrl.u32 %v189, 7
  %v191 = vsub.s32 0, %v190
  %v192 = vrot.slane %v187, %v191
  %v194 = vadd.f32 %v183, %v192
  %v195 = vadd.f32 %v184, %v192
  %v196 = vadd.f32 %v185, %v192
  %v197 = vadd.f32 %v186, %v192
  %v198 = vpack.c.bf16 %v195, %v194
  %v199 = vpack.c.bf16 %v197, %v196
  %v202 = vunpack.c.l.b16 %v198
  %v203 = vunpack.c.h.b16 %v198
  %v204 = vunpack.c.l.b16 %v199
  %v205 = vunpack.c.h.b16 %v199
  %v206 = vpack.c.b16 %v202, %v202
  %v207 = vpack.c.b16 %v203, %v203
  %v208 = vpack.c.b16 %v204, %v204
  %v209 = vpack.c.b16 %v205, %v205
  %vm214 = vcmask 257024
  %215 = vst.msk [vmem:[%s4] sm:$0xf] %vm214, %v206
  %216 = vst.msk [vmem:[%s4 + $0x4] sm:$0xf] %vm214, %v207
  %217 = vst.msk [vmem:[%s4 + $0x8] sm:$0xf] %vm214, %v208
  %218 = vst.msk [vmem:[%s4 + $0xc] sm:$0xf] %vm214, %v209
  // Predicated region
  $region18: #{enet_forward.116} parent=0 // pred_check
    _
  $region19: #{enet_forward.116} parent=0 // pred_check_branch
    %220 = sbr.rel (0) target = $region21
  $region20: #{enet_forward.116} parent=0 // pred_region
    _
  $region21: #{enet_forward.116} parent=0 // pred_fallthru
    _
  // Predicated region
  $region22: #{enet_forward.116} parent=0 // pred_check
    _
  $region23: #{enet_forward.116} parent=0 // pred_check_branch
    %222 = sbr.rel (0) target = $region25
  $region24: #{enet_forward.116} parent=0 // pred_region
    _
  $region25: #{enet_forward.116} parent=0 // pred_fallthru
    _

// kernel: enet_forward.158
$region0: #{enet_forward.158}
  #allocation0 [shape = 'u32[]', space=smem, size = 0x4, offset = 0x4, fixed_abs, tag = 'smem constant byte address 0x4 - core index']
  #allocation1 [shape = 'u32[144,128]{1,0:T(1,128)}', space=vmem, size = 0x12000, scoped, tag = 'internal scratch']
  %s0 = inlined_call_operand.vmem [shape: bf16[32,128], index: 0, kind: input, shape index: {}]
  %s1 = inlined_call_operand.vmem [shape: bf16[128,64], index: 1, kind: input, shape index: {}]
  %s2 = inlined_call_operand.vmem [shape: f32[1,64], index: 2, kind: input, shape index: {}]
  %s3 = inlined_call_operand.vmem [shape: f32[1,64], index: 3, kind: input, shape index: {}]
  %s4 = inlined_call_operand.vmem [shape: bf16[32,64], index: 4, kind: output, shape index: {}]
  %s5 = sld [smem:[#allocation0]]
  $region26: #{enet_forward.158} parent=0
    _
  %s7 = ssub.s32 1, %s5
  %s8 = scalar_select 0, %s7, %s5
  // Predicated region
  $region2: #{enet_forward.158} parent=0 // pred_check
    _
  $region3: #{enet_forward.158} parent=0 // pred_check_branch
    %10 = sbr.rel (0) target = $region5
  $region4: #{enet_forward.158} parent=0 // pred_region
    _
  $region5: #{enet_forward.158} parent=0 // pred_fallthru
    _
  // Predicated region
  $region6: #{enet_forward.158} parent=0 // pred_check
    _
  $region7: #{enet_forward.158} parent=0 // pred_check_branch
    %12 = sbr.rel (0) target = $region9
  $region8: #{enet_forward.158} parent=0 // pred_region
    _
  $region9: #{enet_forward.158} parent=0 // pred_fallthru
    _
  // Predicated region
  $region10: #{enet_forward.158} parent=0 // pred_check
    _
  $region11: #{enet_forward.158} parent=0 // pred_check_branch
    %14 = sbr.rel (0) target = $region13
  $region12: #{enet_forward.158} parent=0 // pred_region
    _
  $region13: #{enet_forward.158} parent=0 // pred_fallthru
    _
  // Predicated region
  $region14: #{enet_forward.158} parent=0 // pred_check
    _
  $region15: #{enet_forward.158} parent=0 // pred_check_branch
    %16 = sbr.rel (0) target = $region17
  $region16: #{enet_forward.158} parent=0 // pred_region
    _
  $region17: #{enet_forward.158} parent=0 // pred_fallthru
    _
  %v18 = vld [vmem:[%s0] sm:$0xf]
  %v19 = vld [vmem:[%s0 + $0x4] sm:$0xf]
  %v20 = vld [vmem:[%s0 + $0x8] sm:$0xf]
  %v21 = vld [vmem:[%s0 + $0xc] sm:$0xf]
  %v22 = vld [vmem:[%s1] sm:$0xf]
  %v23 = vld [vmem:[%s1 + $0x4] sm:$0xf]
  %v24 = vld [vmem:[%s1 + $0x8] sm:$0xf]
  %v25 = vld [vmem:[%s1 + $0xc] sm:$0xf]
  %v26 = vld [vmem:[%s1 + $0x10] sm:$0xf]
  %v27 = vld [vmem:[%s1 + $0x14] sm:$0xf]
  %v28 = vld [vmem:[%s1 + $0x18] sm:$0xf]
  %v29 = vld [vmem:[%s1 + $0x1c] sm:$0xf]
  %v30 = vld [vmem:[%s1 + $0x20] sm:$0xf]
  %v31 = vld [vmem:[%s1 + $0x24] sm:$0xf]
  %v32 = vld [vmem:[%s1 + $0x28] sm:$0xf]
  %v33 = vld [vmem:[%s1 + $0x2c] sm:$0xf]
  %v34 = vld [vmem:[%s1 + $0x30] sm:$0xf]
  %v35 = vld [vmem:[%s1 + $0x34] sm:$0xf]
  %v36 = vld [vmem:[%s1 + $0x38] sm:$0xf]
  %v37 = vld [vmem:[%s1 + $0x3c] sm:$0xf]
  %v42 = vunpack.c.l.b16 %v18
  %v43 = vunpack.c.l.b16 %v19
  %v44 = vunpack.c.l.b16 %v20
  %v45 = vunpack.c.l.b16 %v21
  %v46 = vpack.c.b16 %v43, %v42
  %v47 = vpack.c.b16 %v45, %v44
  %v66 = vunpack.c.l.b16 %v22
  %v67 = vunpack.c.l.b16 %v23
  %v68 = vunpack.c.l.b16 %v24
  %v69 = vunpack.c.l.b16 %v25
  %v70 = vunpack.c.l.b16 %v26
  %v71 = vunpack.c.l.b16 %v27
  %v72 = vunpack.c.l.b16 %v28
  %v73 = vunpack.c.l.b16 %v29
  %v74 = vunpack.c.l.b16 %v30
  %v75 = vunpack.c.l.b16 %v31
  %v76 = vunpack.c.l.b16 %v32
  %v77 = vunpack.c.l.b16 %v33
  %v78 = vunpack.c.l.b16 %v34
  %v79 = vunpack.c.l.b16 %v35
  %v80 = vunpack.c.l.b16 %v36
  %v81 = vunpack.c.l.b16 %v37
  %v82 = vpack.c.b16 %v67, %v66
  %v83 = vpack.c.b16 %v69, %v68
  %v84 = vpack.c.b16 %v71, %v70
  %v85 = vpack.c.b16 %v73, %v72
  %v86 = vpack.c.b16 %v75, %v74
  %v87 = vpack.c.b16 %v77, %v76
  %v88 = vpack.c.b16 %v79, %v78
  %v89 = vpack.c.b16 %v81, %v80
  %98 = vmatprep.subr.bf16.mxu0 0
  %99 = vmatpush1.bf16.msra.mxu0 %v89
  %100 = vmatprep.subr.bf16.mxu0 0
  %101 = vmatpush1.bf16.msra.mxu0 %v88
  %102 = vmatprep.subr.bf16.mxu0 0
  %103 = vmatpush1.bf16.msra.mxu0 %v87
  %104 = vmatprep.subr.bf16.mxu0 0
  %105 = vmatpush1.bf16.msra.mxu0 %v86
  %106 = vmatprep.subr.bf16.mxu0 0
  %107 = vmatpush1.bf16.msra.mxu0 %v85
  %108 = vmatprep.subr.bf16.mxu0 0
  %109 = vmatpush1.bf16.msra.mxu0 %v84
  %110 = vmatprep.subr.bf16.mxu0 0
  %111 = vmatpush1.bf16.msra.mxu0 %v83
  %112 = vmatprep.subr.bf16.mxu0 0
  %113 = vmatpush1.bf16.msra.mxu0 %v82
  %114 = vmatprep.subr.bf16.mxu0 0
  %115 = vmatpush2.bf16.msra.mxu0 0
  %116 = vmatprep.subr.bf16.mxu0 0
  %117 = vmatpush2.bf16.msra.mxu0 0
  %118 = vmatprep.subr.bf16.mxu0 0
  %119 = vmatpush2.bf16.msra.mxu0 0
  %120 = vmatprep.subr.bf16.mxu0 0
  %121 = vmatpush2.bf16.msra.mxu0 0
  %122 = vmatprep.subr.bf16.mxu0 0
  %123 = vmatpush2.bf16.msra.mxu0 0
  %124 = vmatprep.subr.bf16.mxu0 0
  %125 = vmatpush2.bf16.msra.mxu0 0
  %126 = vmatprep.subr.bf16.mxu0 0
  %127 = vmatpush2.bf16.msra.mxu0 0
  %128 = vmatprep.subr.bf16.mxu0 0
  %129 = vmatpush2.bf16.msra.mxu0 0
  %130 = vmatprep.mubr.bf16.mxu0 0
  %131 = vmatmul.mubr.bf16.gmra.mxu0 %v46
  %v132 = vpop.f32.mrf.mxu0
  %v133 = vadd.f32 0.0, %v132
  %v134 = vpop.f32.mrf.mxu0
  %v135 = vpop.f32.mrf.mxu0
  %v136 = vadd.f32 0.0, %v135
  %v137 = vpop.f32.mrf.mxu0
  %138 = vmatprep.mubr.bf16.mxu0 0
  %139 = vmatmul.mubr.bf16.gmra.mxu0 %v47
  %v140 = vpop.f32.mrf.mxu0
  %v141 = vadd.f32 0.0, %v140
  %v142 = vpop.f32.mrf.mxu0
  %v143 = vpop.f32.mrf.mxu0
  %v144 = vadd.f32 0.0, %v143
  %v145 = vpop.f32.mrf.mxu0
  %146 = vdwg.mxu0
  %v147 = vld [vmem:[%s2] sm:$0x1]
  %v149 = vlaneseq
  %v150 = vshrl.u32 %v149, 7
  %v151 = vsub.s32 0, %v150
  %v152 = vrot.slane %v147, %v151
  %v154 = vmul.f32 %v133, %v152
  %v155 = vmul.f32 %v136, %v152
  %v156 = vmul.f32 %v141, %v152
  %v157 = vmul.f32 %v144, %v152
  %v158 = vld [vmem:[%s3] sm:$0x1]
  %v160 = vlaneseq
  %v161 = vshrl.u32 %v160, 7
  %v162 = vsub.s32 0, %v161
  %v163 = vrot.slane %v158, %v162
  %v165 = vadd.f32 %v154, %v163
  %v166 = vadd.f32 %v155, %v163
  %v167 = vadd.f32 %v156, %v163
  %v168 = vadd.f32 %v157, %v163
  %v169 = vpack.c.bf16 %v166, %v165
  %v170 = vpack.c.bf16 %v168, %v167
  %v173 = vunpack.c.l.b16 %v169
  %v174 = vunpack.c.h.b16 %v169
  %v175 = vunpack.c.l.b16 %v170
  %v176 = vunpack.c.h.b16 %v170
  %v177 = vpack.c.b16 %v173, %v173
  %v178 = vpack.c.b16 %v174, %v174
  %v179 = vpack.c.b16 %v175, %v175
  %v180 = vpack.c.b16 %v176, %v176
  %vm185 = vcmask 519168
  %186 = vst.msk [vmem:[%s4] sm:$0xf] %vm185, %v177
  %187 = vst.msk [vmem:[%s4 + $0x4] sm:$0xf] %vm185, %v178
  %188 = vst.msk [vmem:[%s4 + $0x8] sm:$0xf] %vm185, %v179
  %189 = vst.msk [vmem:[%s4 + $0xc] sm:$0xf] %vm185, %v180
  // Predicated region
  $region18: #{enet_forward.158} parent=0 // pred_check
    _
  $region19: #{enet_forward.158} parent=0 // pred_check_branch
    %191 = sbr.rel (0) target = $region21
  $region20: #{enet_forward.158} parent=0 // pred_region
    _
  $region21: #{enet_forward.158} parent=0 // pred_fallthru
    _
  // Predicated region
  $region22: #{enet_forward.158} parent=0 // pred_check
    _
  $region23: #{enet_forward.158} parent=0 // pred_check_branch
    %193 = sbr.rel (0) target = $region25
  $region24: #{enet_forward.158} parent=0 // pred_region
    _
  $region25: #{enet_forward.158} parent=0 // pred_fallthru
    _

// kernel: enet_forward.159
$region0: #{enet_forward.159}
  #allocation0 [shape = 'u32[]', space=smem, size = 0x4, offset = 0x4, fixed_abs, tag = 'smem constant byte address 0x4 - core index']
  #allocation1 [shape = 'u32[144,128]{1,0:T(1,128)}', space=vmem, size = 0x12000, scoped, tag = 'internal scratch']
  %s0 = inlined_call_operand.vmem [shape: bf16[32,128], index: 0, kind: input, shape index: {}]
  %s1 = inlined_call_operand.vmem [shape: bf16[128,16], index: 1, kind: input, shape index: {}]
  %s2 = inlined_call_operand.vmem [shape: f32[1,16], index: 2, kind: input, shape index: {}]
  %s3 = inlined_call_operand.vmem [shape: f32[1,16], index: 3, kind: input, shape index: {}]
  %s4 = inlined_call_operand.vmem [shape: bf16[32,16], index: 4, kind: output, shape index: {}]
  %s5 = sld [smem:[#allocation0]]
  $region26: #{enet_forward.159} parent=0
    _
  %s7 = ssub.s32 1, %s5
  %s8 = scalar_select 0, %s7, %s5
  // Predicated region
  $region2: #{enet_forward.159} parent=0 // pred_check
    _
  $region3: #{enet_forward.159} parent=0 // pred_check_branch
    %10 = sbr.rel (0) target = $region5
  $region4: #{enet_forward.159} parent=0 // pred_region
    _
  $region5: #{enet_forward.159} parent=0 // pred_fallthru
    _
  // Predicated region
  $region6: #{enet_forward.159} parent=0 // pred_check
    _
  $region7: #{enet_forward.159} parent=0 // pred_check_branch
    %12 = sbr.rel (0) target = $region9
  $region8: #{enet_forward.159} parent=0 // pred_region
    _
  $region9: #{enet_forward.159} parent=0 // pred_fallthru
    _
  // Predicated region
  $region10: #{enet_forward.159} parent=0 // pred_check
    _
  $region11: #{enet_forward.159} parent=0 // pred_check_branch
    %14 = sbr.rel (0) target = $region13
  $region12: #{enet_forward.159} parent=0 // pred_region
    _
  $region13: #{enet_forward.159} parent=0 // pred_fallthru
    _
  // Predicated region
  $region14: #{enet_forward.159} parent=0 // pred_check
    _
  $region15: #{enet_forward.159} parent=0 // pred_check_branch
    %16 = sbr.rel (0) target = $region17
  $region16: #{enet_forward.159} parent=0 // pred_region
    _
  $region17: #{enet_forward.159} parent=0 // pred_fallthru
    _
  %v18 = vld [vmem:[%s0] sm:$0xf]
  %v19 = vld [vmem:[%s0 + $0x4] sm:$0xf]
  %v20 = vld [vmem:[%s0 + $0x8] sm:$0xf]
  %v21 = vld [vmem:[%s0 + $0xc] sm:$0xf]
  %v22 = vld [vmem:[%s1] sm:$0xf]
  %v23 = vld [vmem:[%s1 + $0x4] sm:$0xf]
  %v24 = vld [vmem:[%s1 + $0x8] sm:$0xf]
  %v25 = vld [vmem:[%s1 + $0xc] sm:$0xf]
  %v26 = vld [vmem:[%s1 + $0x10] sm:$0xf]
  %v27 = vld [vmem:[%s1 + $0x14] sm:$0xf]
  %v28 = vld [vmem:[%s1 + $0x18] sm:$0xf]
  %v29 = vld [vmem:[%s1 + $0x1c] sm:$0xf]
  %v30 = vld [vmem:[%s1 + $0x20] sm:$0xf]
  %v31 = vld [vmem:[%s1 + $0x24] sm:$0xf]
  %v32 = vld [vmem:[%s1 + $0x28] sm:$0xf]
  %v33 = vld [vmem:[%s1 + $0x2c] sm:$0xf]
  %v34 = vld [vmem:[%s1 + $0x30] sm:$0xf]
  %v35 = vld [vmem:[%s1 + $0x34] sm:$0xf]
  %v36 = vld [vmem:[%s1 + $0x38] sm:$0xf]
  %v37 = vld [vmem:[%s1 + $0x3c] sm:$0xf]
  %v42 = vunpack.c.l.b16 %v18
  %v43 = vunpack.c.l.b16 %v19
  %v44 = vunpack.c.l.b16 %v20
  %v45 = vunpack.c.l.b16 %v21
  %v46 = vpack.c.b16 %v43, %v42
  %v47 = vpack.c.b16 %v45, %v44
  %v66 = vunpack.c.l.b16 %v22
  %v67 = vunpack.c.l.b16 %v23
  %v68 = vunpack.c.l.b16 %v24
  %v69 = vunpack.c.l.b16 %v25
  %v70 = vunpack.c.l.b16 %v26
  %v71 = vunpack.c.l.b16 %v27
  %v72 = vunpack.c.l.b16 %v28
  %v73 = vunpack.c.l.b16 %v29
  %v74 = vunpack.c.l.b16 %v30
  %v75 = vunpack.c.l.b16 %v31
  %v76 = vunpack.c.l.b16 %v32
  %v77 = vunpack.c.l.b16 %v33
  %v78 = vunpack.c.l.b16 %v34
  %v79 = vunpack.c.l.b16 %v35
  %v80 = vunpack.c.l.b16 %v36
  %v81 = vunpack.c.l.b16 %v37
  %v82 = vpack.c.b16 %v67, %v66
  %v83 = vpack.c.b16 %v69, %v68
  %v84 = vpack.c.b16 %v71, %v70
  %v85 = vpack.c.b16 %v73, %v72
  %v86 = vpack.c.b16 %v75, %v74
  %v87 = vpack.c.b16 %v77, %v76
  %v88 = vpack.c.b16 %v79, %v78
  %v89 = vpack.c.b16 %v81, %v80
  %98 = vmatprep.subr.bf16.mxu0 0
  %99 = vmatpush1.bf16.msra.mxu0 %v89
  %100 = vmatprep.subr.bf16.mxu0 0
  %101 = vmatpush1.bf16.msra.mxu0 %v88
  %102 = vmatprep.subr.bf16.mxu0 0
  %103 = vmatpush1.bf16.msra.mxu0 %v87
  %104 = vmatprep.subr.bf16.mxu0 0
  %105 = vmatpush1.bf16.msra.mxu0 %v86
  %106 = vmatprep.subr.bf16.mxu0 0
  %107 = vmatpush1.bf16.msra.mxu0 %v85
  %108 = vmatprep.subr.bf16.mxu0 0
  %109 = vmatpush1.bf16.msra.mxu0 %v84
  %110 = vmatprep.subr.bf16.mxu0 0
  %111 = vmatpush1.bf16.msra.mxu0 %v83
  %112 = vmatprep.subr.bf16.mxu0 0
  %113 = vmatpush1.bf16.msra.mxu0 %v82
  %114 = vmatprep.subr.bf16.mxu0 0
  %115 = vmatpush2.bf16.msra.mxu0 0
  %116 = vmatprep.subr.bf16.mxu0 0
  %117 = vmatpush2.bf16.msra.mxu0 0
  %118 = vmatprep.subr.bf16.mxu0 0
  %119 = vmatpush2.bf16.msra.mxu0 0
  %120 = vmatprep.subr.bf16.mxu0 0
  %121 = vmatpush2.bf16.msra.mxu0 0
  %122 = vmatprep.subr.bf16.mxu0 0
  %123 = vmatpush2.bf16.msra.mxu0 0
  %124 = vmatprep.subr.bf16.mxu0 0
  %125 = vmatpush2.bf16.msra.mxu0 0
  %126 = vmatprep.subr.bf16.mxu0 0
  %127 = vmatpush2.bf16.msra.mxu0 0
  %128 = vmatprep.subr.bf16.mxu0 0
  %129 = vmatpush2.bf16.msra.mxu0 0
  %130 = vmatprep.mubr.bf16.mxu0 0
  %131 = vmatmul.mubr.bf16.gmra.mxu0 %v46
  %v132 = vpop.f32.mrf.mxu0
  %v133 = vadd.f32 0.0, %v132
  %v134 = vpop.f32.mrf.mxu0
  %v135 = vpop.f32.mrf.mxu0
  %v136 = vadd.f32 0.0, %v135
  %v137 = vpop.f32.mrf.mxu0
  %138 = vmatprep.mubr.bf16.mxu0 0
  %139 = vmatmul.mubr.bf16.gmra.mxu0 %v47
  %v140 = vpop.f32.mrf.mxu0
  %v141 = vadd.f32 0.0, %v140
  %v142 = vpop.f32.mrf.mxu0
  %v143 = vpop.f32.mrf.mxu0
  %v144 = vadd.f32 0.0, %v143
  %v145 = vpop.f32.mrf.mxu0
  %146 = vdwg.mxu0
  %v147 = vld [vmem:[%s2] sm:$0x1]
  %v149 = vlaneseq
  %v150 = vshrl.u32 %v149, 7
  %v151 = vsub.s32 0, %v150
  %v152 = vrot.slane %v147, %v151
  %v154 = vmul.f32 %v133, %v152
  %v155 = vmul.f32 %v136, %v152
  %v156 = vmul.f32 %v141, %v152
  %v157 = vmul.f32 %v144, %v152
  %v158 = vld [vmem:[%s3] sm:$0x1]
  %v160 = vlaneseq
  %v161 = vshrl.u32 %v160, 7
  %v162 = vsub.s32 0, %v161
  %v163 = vrot.slane %v158, %v162
  %v165 = vadd.f32 %v154, %v163
  %v166 = vadd.f32 %v155, %v163
  %v167 = vadd.f32 %v156, %v163
  %v168 = vadd.f32 %v157, %v163
  %vm169 = vcmp.ge.f32.partialorder %v165, 0.0
  %vm170 = vcmp.ge.f32.partialorder %v166, 0.0
  %vm171 = vcmp.ge.f32.partialorder %v167, 0.0
  %vm172 = vcmp.ge.f32.partialorder %v168, 0.0
  %v173 = vmul.f32 %v165, 0.25
  %v174 = vmul.f32 %v166, 0.25
  %v175 = vmul.f32 %v167, 0.25
  %v176 = vmul.f32 %v168, 0.25
  %v177 = vsel %vm169, %v165, %v173
  %v178 = vsel %vm170, %v166, %v174
  %v179 = vsel %vm171, %v167, %v175
  %v180 = vsel %vm172, %v168, %v176
  %v181 = vpack.c.bf16 %v178, %v177
  %v182 = vpack.c.bf16 %v180, %v179
  %v185 = vunpack.c.l.b16 %v181
  %v186 = vunpack.c.h.b16 %v181
  %v187 = vunpack.c.l.b16 %v182
  %v188 = vunpack.c.h.b16 %v182
  %v189 = vpack.c.b16 %v185, %v185
  %v190 = vpack.c.b16 %v186, %v186
  %v191 = vpack.c.b16 %v187, %v187
  %v192 = vpack.c.b16 %v188, %v188
  %vm197 = vcmask 125952
  %198 = vst.msk [vmem:[%s4] sm:$0xf] %vm197, %v189
  %199 = vst.msk [vmem:[%s4 + $0x4] sm:$0xf] %vm197, %v190
  %200 = vst.msk [vmem:[%s4 + $0x8] sm:$0xf] %vm197, %v191
  %201 = vst.msk [vmem:[%s4 + $0xc] sm:$0xf] %vm197, %v192
  // Predicated region
  $region18: #{enet_forward.159} parent=0 // pred_check
    _
  $region19: #{enet_forward.159} parent=0 // pred_check_branch
    %203 = sbr.rel (0) target = $region21
  $region20: #{enet_forward.159} parent=0 // pred_region
    _
  $region21: #{enet_forward.159} parent=0 // pred_fallthru
    _
  // Predicated region
  $region22: #{enet_forward.159} parent=0 // pred_check
    _
  $region23: #{enet_forward.159} parent=0 // pred_check_branch
    %205 = sbr.rel (0) target = $region25
  $region24: #{enet_forward.159} parent=0 // pred_region
    _
  $region25: #{enet_forward.159} parent=0 // pred_fallthru
    _

// kernel: enet_forward.160
$region0: #{enet_forward.160}
  #allocation0 [shape = 'u32[]', space=smem, size = 0x4, offset = 0x4, fixed_abs, tag = 'smem constant byte address 0x4 - core index']
  #allocation1 [shape = 'u32[144,128]{1,0:T(1,128)}', space=vmem, size = 0x12000, scoped, tag = 'internal scratch']
  %s0 = inlined_call_operand.vmem [shape: bf16[32,16], index: 0, kind: input, shape index: {}]
  %s1 = inlined_call_operand.vmem [shape: bf16[16,64], index: 1, kind: input, shape index: {}]
  %s2 = inlined_call_operand.vmem [shape: f32[1,64], index: 2, kind: input, shape index: {}]
  %s3 = inlined_call_operand.vmem [shape: f32[1,64], index: 3, kind: input, shape index: {}]
  %s4 = inlined_call_operand.vmem [shape: bf16[32,64], index: 4, kind: output, shape index: {}]
  %s5 = sld [smem:[#allocation0]]
  $region26: #{enet_forward.160} parent=0
    _
  %s7 = ssub.s32 1, %s5
  %s8 = scalar_select 0, %s7, %s5
  // Predicated region
  $region2: #{enet_forward.160} parent=0 // pred_check
    _
  $region3: #{enet_forward.160} parent=0 // pred_check_branch
    %10 = sbr.rel (0) target = $region5
  $region4: #{enet_forward.160} parent=0 // pred_region
    _
  $region5: #{enet_forward.160} parent=0 // pred_fallthru
    _
  // Predicated region
  $region6: #{enet_forward.160} parent=0 // pred_check
    _
  $region7: #{enet_forward.160} parent=0 // pred_check_branch
    %12 = sbr.rel (0) target = $region9
  $region8: #{enet_forward.160} parent=0 // pred_region
    _
  $region9: #{enet_forward.160} parent=0 // pred_fallthru
    _
  // Predicated region
  $region10: #{enet_forward.160} parent=0 // pred_check
    _
  $region11: #{enet_forward.160} parent=0 // pred_check_branch
    %14 = sbr.rel (0) target = $region13
  $region12: #{enet_forward.160} parent=0 // pred_region
    _
  $region13: #{enet_forward.160} parent=0 // pred_fallthru
    _
  // Predicated region
  $region14: #{enet_forward.160} parent=0 // pred_check
    _
  $region15: #{enet_forward.160} parent=0 // pred_check_branch
    %16 = sbr.rel (0) target = $region17
  $region16: #{enet_forward.160} parent=0 // pred_region
    _
  $region17: #{enet_forward.160} parent=0 // pred_fallthru
    _
  %v18 = vld [vmem:[%s0] sm:$0xf]
  %v19 = vld [vmem:[%s0 + $0x4] sm:$0xf]
  %v20 = vld [vmem:[%s0 + $0x8] sm:$0xf]
  %v21 = vld [vmem:[%s0 + $0xc] sm:$0xf]
  %v22 = vld [vmem:[%s1] sm:$0xf]
  %v23 = vld [vmem:[%s1 + $0x4] sm:$0xf]
  %v28 = vunpack.c.l.b16 %v18
  %v29 = vunpack.c.l.b16 %v19
  %v30 = vunpack.c.l.b16 %v20
  %v31 = vunpack.c.l.b16 %v21
  %v32 = vpack.c.b16 %v29, %v28
  %v33 = vpack.c.b16 %v31, %v30
  %v36 = vunpack.c.l.b16 %v22
  %v37 = vunpack.c.l.b16 %v23
  %v38 = vpack.c.b16 %v37, %v36
  %vm40 = vcmask 130048
  %v42 = vsel %vm40, %v32, 0
  %v45 = vsel %vm40, %v33, 0
  %47 = vmatprep.subr.bf16.mxu0 0
  %48 = vmatpush1.bf16.msra.mxu0 0
  %49 = vmatprep.subr.bf16.mxu0 0
  %50 = vmatpush1.bf16.msra.mxu0 0
  %51 = vmatprep.subr.bf16.mxu0 0
  %52 = vmatpush1.bf16.msra.mxu0 0
  %53 = vmatprep.subr.bf16.mxu0 0
  %54 = vmatpush1.bf16.msra.mxu0 0
  %55 = vmatprep.subr.bf16.mxu0 0
  %56 = vmatpush1.bf16.msra.mxu0 0
  %57 = vmatprep.subr.bf16.mxu0 0
  %58 = vmatpush1.bf16.msra.mxu0 0
  %59 = vmatprep.subr.bf16.mxu0 0
  %60 = vmatpush1.bf16.msra.mxu0 0
  %61 = vmatprep.subr.bf16.mxu0 0
  %62 = vmatpush1.bf16.msra.mxu0 %v38
  %63 = vmatprep.subr.bf16.mxu0 0
  %64 = vmatpush2.bf16.msra.mxu0 0
  %65 = vmatprep.subr.bf16.mxu0 0
  %66 = vmatpush2.bf16.msra.mxu0 0
  %67 = vmatprep.subr.bf16.mxu0 0
  %68 = vmatpush2.bf16.msra.mxu0 0
  %69 = vmatprep.subr.bf16.mxu0 0
  %70 = vmatpush2.bf16.msra.mxu0 0
  %71 = vmatprep.subr.bf16.mxu0 0
  %72 = vmatpush2.bf16.msra.mxu0 0
  %73 = vmatprep.subr.bf16.mxu0 0
  %74 = vmatpush2.bf16.msra.mxu0 0
  %75 = vmatprep.subr.bf16.mxu0 0
  %76 = vmatpush2.bf16.msra.mxu0 0
  %77 = vmatprep.subr.bf16.mxu0 0
  %78 = vmatpush2.bf16.msra.mxu0 0
  %79 = vmatprep.mubr.bf16.mxu0 0
  %80 = vmatmul.mubr.bf16.gmra.mxu0 %v42
  %v81 = vpop.f32.mrf.mxu0
  %v82 = vadd.f32 0.0, %v81
  %v83 = vpop.f32.mrf.mxu0
  %v84 = vpop.f32.mrf.mxu0
  %v85 = vadd.f32 0.0, %v84
  %v86 = vpop.f32.mrf.mxu0
  %87 = vmatprep.mubr.bf16.mxu0 0
  %88 = vmatmul.mubr.bf16.gmra.mxu0 %v45
  %v89 = vpop.f32.mrf.mxu0
  %v90 = vadd.f32 0.0, %v89
  %v91 = vpop.f32.mrf.mxu0
  %v92 = vpop.f32.mrf.mxu0
  %v93 = vadd.f32 0.0, %v92
  %v94 = vpop.f32.mrf.mxu0
  %95 = vdwg.mxu0
  %v96 = vld [vmem:[%s2] sm:$0x1]
  %v98 = vlaneseq
  %v99 = vshrl.u32 %v98, 7
  %v100 = vsub.s32 0, %v99
  %v101 = vrot.slane %v96, %v100
  %v103 = vmul.f32 %v82, %v101
  %v104 = vmul.f32 %v85, %v101
  %v105 = vmul.f32 %v90, %v101
  %v106 = vmul.f32 %v93, %v101
  %v107 = vld [vmem:[%s3] sm:$0x1]
  %v109 = vlaneseq
  %v110 = vshrl.u32 %v109, 7
  %v111 = vsub.s32 0, %v110
  %v112 = vrot.slane %v107, %v111
  %v114 = vadd.f32 %v103, %v112
  %v115 = vadd.f32 %v104, %v112
  %v116 = vadd.f32 %v105, %v112
  %v117 = vadd.f32 %v106, %v112
  %vm118 = vcmp.ge.f32.partialorder %v114, 0.0
  %vm119 = vcmp.ge.f32.partialorder %v115, 0.0
  %vm120 = vcmp.ge.f32.partialorder %v116, 0.0
  %vm121 = vcmp.ge.f32.partialorder %v117, 0.0
  %v122 = vmul.f32 %v114, 0.25
  %v123 = vmul.f32 %v115, 0.25
  %v124 = vmul.f32 %v116, 0.25
  %v125 = vmul.f32 %v117, 0.25
  %v126 = vsel %vm118, %v114, %v122
  %v127 = vsel %vm119, %v115, %v123
  %v128 = vsel %vm120, %v116, %v124
  %v129 = vsel %vm121, %v117, %v125
  %v130 = vpack.c.bf16 %v127, %v126
  %v131 = vpack.c.bf16 %v129, %v128
  %v134 = vunpack.c.l.b16 %v130
  %v135 = vunpack.c.h.b16 %v130
  %v136 = vunpack.c.l.b16 %v131
  %v137 = vunpack.c.h.b16 %v131
  %v138 = vpack.c.b16 %v134, %v134
  %v139 = vpack.c.b16 %v135, %v135
  %v140 = vpack.c.b16 %v136, %v136
  %v141 = vpack.c.b16 %v137, %v137
  %vm146 = vcmask 519168
  %147 = vst.msk [vmem:[%s4] sm:$0xf] %vm146, %v138
  %148 = vst.msk [vmem:[%s4 + $0x4] sm:$0xf] %vm146, %v139
  %149 = vst.msk [vmem:[%s4 + $0x8] sm:$0xf] %vm146, %v140
  %150 = vst.msk [vmem:[%s4 + $0xc] sm:$0xf] %vm146, %v141
  // Predicated region
  $region18: #{enet_forward.160} parent=0 // pred_check
    _
  $region19: #{enet_forward.160} parent=0 // pred_check_branch
    %152 = sbr.rel (0) target = $region21
  $region20: #{enet_forward.160} parent=0 // pred_region
    _
  $region21: #{enet_forward.160} parent=0 // pred_fallthru
    _
  // Predicated region
  $region22: #{enet_forward.160} parent=0 // pred_check
    _
  $region23: #{enet_forward.160} parent=0 // pred_check_branch
    %154 = sbr.rel (0) target = $region25
  $region24: #{enet_forward.160} parent=0 // pred_region
    _
  $region25: #{enet_forward.160} parent=0 // pred_fallthru
    _

// kernel: enet_forward.168
$region0: #{enet_forward.168}
  #allocation0 [shape = 'u32[]', space=smem, size = 0x4, offset = 0x4, fixed_abs, tag = 'smem constant byte address 0x4 - core index']
  #allocation1 [shape = 'u32[144,128]{1,0:T(1,128)}', space=vmem, size = 0x12000, scoped, tag = 'internal scratch']
  %s0 = inlined_call_operand.vmem [shape: bf16[128,64], index: 0, kind: input, shape index: {}]
  %s1 = inlined_call_operand.vmem [shape: bf16[64,16], index: 1, kind: input, shape index: {}]
  %s2 = inlined_call_operand.vmem [shape: f32[1,16], index: 2, kind: input, shape index: {}]
  %s3 = inlined_call_operand.vmem [shape: f32[1,16], index: 3, kind: input, shape index: {}]
  %s4 = inlined_call_operand.vmem [shape: bf16[128,16], index: 4, kind: output, shape index: {}]
  %s5 = sld [smem:[#allocation0]]
  $region26: #{enet_forward.168} parent=0
    _
  %s7 = ssub.s32 1, %s5
  %s8 = scalar_select 0, %s7, %s5
  // Predicated region
  $region2: #{enet_forward.168} parent=0 // pred_check
    _
  $region3: #{enet_forward.168} parent=0 // pred_check_branch
    %10 = sbr.rel (0) target = $region5
  $region4: #{enet_forward.168} parent=0 // pred_region
    _
  $region5: #{enet_forward.168} parent=0 // pred_fallthru
    _
  // Predicated region
  $region6: #{enet_forward.168} parent=0 // pred_check
    _
  $region7: #{enet_forward.168} parent=0 // pred_check_branch
    %12 = sbr.rel (0) target = $region9
  $region8: #{enet_forward.168} parent=0 // pred_region
    _
  $region9: #{enet_forward.168} parent=0 // pred_fallthru
    _
  // Predicated region
  $region10: #{enet_forward.168} parent=0 // pred_check
    _
  $region11: #{enet_forward.168} parent=0 // pred_check_branch
    %14 = sbr.rel (0) target = $region13
  $region12: #{enet_forward.168} parent=0 // pred_region
    _
  $region13: #{enet_forward.168} parent=0 // pred_fallthru
    _
  // Predicated region
  $region14: #{enet_forward.168} parent=0 // pred_check
    _
  $region15: #{enet_forward.168} parent=0 // pred_check_branch
    %16 = sbr.rel (0) target = $region17
  $region16: #{enet_forward.168} parent=0 // pred_region
    _
  $region17: #{enet_forward.168} parent=0 // pred_fallthru
    _
  %v18 = vld [vmem:[%s0] sm:$0xf]
  %v19 = vld [vmem:[%s0 + $0x4] sm:$0xf]
  %v20 = vld [vmem:[%s0 + $0x8] sm:$0xf]
  %v21 = vld [vmem:[%s0 + $0xc] sm:$0xf]
  %v22 = vld [vmem:[%s0 + $0x10] sm:$0xf]
  %v23 = vld [vmem:[%s0 + $0x14] sm:$0xf]
  %v24 = vld [vmem:[%s0 + $0x18] sm:$0xf]
  %v25 = vld [vmem:[%s0 + $0x1c] sm:$0xf]
  %v26 = vld [vmem:[%s0 + $0x20] sm:$0xf]
  %v27 = vld [vmem:[%s0 + $0x24] sm:$0xf]
  %v28 = vld [vmem:[%s0 + $0x28] sm:$0xf]
  %v29 = vld [vmem:[%s0 + $0x2c] sm:$0xf]
  %v30 = vld [vmem:[%s0 + $0x30] sm:$0xf]
  %v31 = vld [vmem:[%s0 + $0x34] sm:$0xf]
  %v32 = vld [vmem:[%s0 + $0x38] sm:$0xf]
  %v33 = vld [vmem:[%s0 + $0x3c] sm:$0xf]
  %v34 = vld [vmem:[%s1] sm:$0xf]
  %v35 = vld [vmem:[%s1 + $0x4] sm:$0xf]
  %v36 = vld [vmem:[%s1 + $0x8] sm:$0xf]
  %v37 = vld [vmem:[%s1 + $0xc] sm:$0xf]
  %v38 = vld [vmem:[%s1 + $0x10] sm:$0xf]
  %v39 = vld [vmem:[%s1 + $0x14] sm:$0xf]
  %v40 = vld [vmem:[%s1 + $0x18] sm:$0xf]
  %v41 = vld [vmem:[%s1 + $0x1c] sm:$0xf]
  %v58 = vunpack.c.l.b16 %v18
  %v59 = vunpack.c.l.b16 %v19
  %v60 = vunpack.c.l.b16 %v20
  %v61 = vunpack.c.l.b16 %v21
  %v62 = vunpack.c.l.b16 %v22
  %v63 = vunpack.c.l.b16 %v23
  %v64 = vunpack.c.l.b16 %v24
  %v65 = vunpack.c.l.b16 %v25
  %v66 = vunpack.c.l.b16 %v26
  %v67 = vunpack.c.l.b16 %v27
  %v68 = vunpack.c.l.b16 %v28
  %v69 = vunpack.c.l.b16 %v29
  %v70 = vunpack.c.l.b16 %v30
  %v71 = vunpack.c.l.b16 %v31
  %v72 = vunpack.c.l.b16 %v32
  %v73 = vunpack.c.l.b16 %v33
  %v74 = vpack.c.b16 %v59, %v58
  %v75 = vpack.c.b16 %v61, %v60
  %v76 = vpack.c.b16 %v63, %v62
  %v77 = vpack.c.b16 %v65, %v64
  %v78 = vpack.c.b16 %v67, %v66
  %v79 = vpack.c.b16 %v69, %v68
  %v80 = vpack.c.b16 %v71, %v70
  %v81 = vpack.c.b16 %v73, %v72
  %v90 = vunpack.c.l.b16 %v34
  %v91 = vunpack.c.l.b16 %v35
  %v92 = vunpack.c.l.b16 %v36
  %v93 = vunpack.c.l.b16 %v37
  %v94 = vunpack.c.l.b16 %v38
  %v95 = vunpack.c.l.b16 %v39
  %v96 = vunpack.c.l.b16 %v40
  %v97 = vunpack.c.l.b16 %v41
  %v98 = vpack.c.b16 %v91, %v90
  %v99 = vpack.c.b16 %v93, %v92
  %v100 = vpack.c.b16 %v95, %v94
  %v101 = vpack.c.b16 %v97, %v96
  %vm106 = vcmask 523264
  %v108 = vsel %vm106, %v74, 0
  %v111 = vsel %vm106, %v75, 0
  %v114 = vsel %vm106, %v76, 0
  %v117 = vsel %vm106, %v77, 0
  %v120 = vsel %vm106, %v78, 0
  %v123 = vsel %vm106, %v79, 0
  %v126 = vsel %vm106, %v80, 0
  %v129 = vsel %vm106, %v81, 0
  %131 = vmatprep.subr.bf16.mxu0 0
  %132 = vmatpush1.bf16.msra.mxu0 0
  %133 = vmatprep.subr.bf16.mxu0 0
  %134 = vmatpush1.bf16.msra.mxu0 0
  %135 = vmatprep.subr.bf16.mxu0 0
  %136 = vmatpush1.bf16.msra.mxu0 0
  %137 = vmatprep.subr.bf16.mxu0 0
  %138 = vmatpush1.bf16.msra.mxu0 0
  %139 = vmatprep.subr.bf16.mxu0 0
  %140 = vmatpush1.bf16.msra.mxu0 %v101
  %141 = vmatprep.subr.bf16.mxu0 0
  %142 = vmatpush1.bf16.msra.mxu0 %v100
  %143 = vmatprep.subr.bf16.mxu0 0
  %144 = vmatpush1.bf16.msra.mxu0 %v99
  %145 = vmatprep.subr.bf16.mxu0 0
  %146 = vmatpush1.bf16.msra.mxu0 %v98
  %147 = vmatprep.subr.bf16.mxu0 0
  %148 = vmatpush2.bf16.msra.mxu0 0
  %149 = vmatprep.subr.bf16.mxu0 0
  %150 = vmatpush2.bf16.msra.mxu0 0
  %151 = vmatprep.subr.bf16.mxu0 0
  %152 = vmatpush2.bf16.msra.mxu0 0
  %153 = vmatprep.subr.bf16.mxu0 0
  %154 = vmatpush2.bf16.msra.mxu0 0
  %155 = vmatprep.subr.bf16.mxu0 0
  %156 = vmatpush2.bf16.msra.mxu0 0
  %157 = vmatprep.subr.bf16.mxu0 0
  %158 = vmatpush2.bf16.msra.mxu0 0
  %159 = vmatprep.subr.bf16.mxu0 0
  %160 = vmatpush2.bf16.msra.mxu0 0
  %161 = vmatprep.subr.bf16.mxu0 0
  %162 = vmatpush2.bf16.msra.mxu0 0
  %163 = vmatprep.mubr.bf16.mxu0 0
  %164 = vmatmul.mubr.bf16.gmra.mxu0 %v108
  %v165 = vpop.f32.mrf.mxu0
  %v166 = vadd.f32 0.0, %v165
  %v167 = vpop.f32.mrf.mxu0
  %v168 = vpop.f32.mrf.mxu0
  %v169 = vadd.f32 0.0, %v168
  %v170 = vpop.f32.mrf.mxu0
  %171 = vmatprep.mubr.bf16.mxu0 0
  %172 = vmatmul.mubr.bf16.gmra.mxu0 %v111
  %v173 = vpop.f32.mrf.mxu0
  %v174 = vadd.f32 0.0, %v173
  %v175 = vpop.f32.mrf.mxu0
  %v176 = vpop.f32.mrf.mxu0
  %v177 = vadd.f32 0.0, %v176
  %v178 = vpop.f32.mrf.mxu0
  %179 = vmatprep.mubr.bf16.mxu0 0
  %180 = vmatmul.mubr.bf16.gmra.mxu0 %v114
  %v181 = vpop.f32.mrf.mxu0
  %v182 = vadd.f32 0.0, %v181
  %v183 = vpop.f32.mrf.mxu0
  %v184 = vpop.f32.mrf.mxu0
  %v185 = vadd.f32 0.0, %v184
  %v186 = vpop.f32.mrf.mxu0
  %187 = vmatprep.mubr.bf16.mxu0 0
  %188 = vmatmul.mubr.bf16.gmra.mxu0 %v117
  %v189 = vpop.f32.mrf.mxu0
  %v190 = vadd.f32 0.0, %v189
  %v191 = vpop.f32.mrf.mxu0
  %v192 = vpop.f32.mrf.mxu0
  %v193 = vadd.f32 0.0, %v192
  %v194 = vpop.f32.mrf.mxu0
  %195 = vmatprep.mubr.bf16.mxu0 0
  %196 = vmatmul.mubr.bf16.gmra.mxu0 %v120
  %v197 = vpop.f32.mrf.mxu0
  %v198 = vadd.f32 0.0, %v197
  %v199 = vpop.f32.mrf.mxu0
  %v200 = vpop.f32.mrf.mxu0
  %v201 = vadd.f32 0.0, %v200
  %v202 = vpop.f32.mrf.mxu0
  %203 = vmatprep.mubr.bf16.mxu0 0
  %204 = vmatmul.mubr.bf16.gmra.mxu0 %v123
  %v205 = vpop.f32.mrf.mxu0
  %v206 = vadd.f32 0.0, %v205
  %v207 = vpop.f32.mrf.mxu0
  %v208 = vpop.f32.mrf.mxu0
  %v209 = vadd.f32 0.0, %v208
  %v210 = vpop.f32.mrf.mxu0
  %211 = vmatprep.mubr.bf16.mxu0 0
  %212 = vmatmul.mubr.bf16.gmra.mxu0 %v126
  %v213 = vpop.f32.mrf.mxu0
  %v214 = vadd.f32 0.0, %v213
  %v215 = vpop.f32.mrf.mxu0
  %v216 = vpop.f32.mrf.mxu0
  %v217 = vadd.f32 0.0, %v216
  %v218 = vpop.f32.mrf.mxu0
  %219 = vmatprep.mubr.bf16.mxu0 0
  %220 = vmatmul.mubr.bf16.gmra.mxu0 %v129
  %v221 = vpop.f32.mrf.mxu0
  %v222 = vadd.f32 0.0, %v221
  %v223 = vpop.f32.mrf.mxu0
  %v224 = vpop.f32.mrf.mxu0
  %v225 = vadd.f32 0.0, %v224
  %v226 = vpop.f32.mrf.mxu0
  %227 = vdwg.mxu0
  %v228 = vld [vmem:[%s2] sm:$0x1]
  %v230 = vlaneseq
  %v231 = vshrl.u32 %v230, 7
  %v232 = vsub.s32 0, %v231
  %v233 = vrot.slane %v228, %v232
  %v235 = vmul.f32 %v166, %v233
  %v236 = vmul.f32 %v169, %v233
  %v237 = vmul.f32 %v174, %v233
  %v238 = vmul.f32 %v177, %v233
  %v239 = vmul.f32 %v182, %v233
  %v240 = vmul.f32 %v185, %v233
  %v241 = vmul.f32 %v190, %v233
  %v242 = vmul.f32 %v193, %v233
  %v243 = vmul.f32 %v198, %v233
  %v244 = vmul.f32 %v201, %v233
  %v245 = vmul.f32 %v206, %v233
  %v246 = vmul.f32 %v209, %v233
  %v247 = vmul.f32 %v214, %v233
  %v248 = vmul.f32 %v217, %v233
  %v249 = vmul.f32 %v222, %v233
  %v250 = vmul.f32 %v225, %v233
  %v251 = vld [vmem:[%s3] sm:$0x1]
  %v253 = vlaneseq
  %v254 = vshrl.u32 %v253, 7
  %v255 = vsub.s32 0, %v254
  %v256 = vrot.slane %v251, %v255
  %v258 = vadd.f32 %v235, %v256
  %v259 = vadd.f32 %v236, %v256
  %v260 = vadd.f32 %v237, %v256
  %v261 = vadd.f32 %v238, %v256
  %v262 = vadd.f32 %v239, %v256
  %v263 = vadd.f32 %v240, %v256
  %v264 = vadd.f32 %v241, %v256
  %v265 = vadd.f32 %v242, %v256
  %v266 = vadd.f32 %v243, %v256
  %v267 = vadd.f32 %v244, %v256
  %v268 = vadd.f32 %v245, %v256
  %v269 = vadd.f32 %v246, %v256
  %v270 = vadd.f32 %v247, %v256
  %v271 = vadd.f32 %v248, %v256
  %v272 = vadd.f32 %v249, %v256
  %v273 = vadd.f32 %v250, %v256
  %v274 = vpack.c.bf16 %v259, %v258
  %v275 = vpack.c.bf16 %v261, %v260
  %v276 = vpack.c.bf16 %v263, %v262
  %v277 = vpack.c.bf16 %v265, %v264
  %v278 = vpack.c.bf16 %v267, %v266
  %v279 = vpack.c.bf16 %v269, %v268
  %v280 = vpack.c.bf16 %v271, %v270
  %v281 = vpack.c.bf16 %v273, %v272
  %v290 = vunpack.c.l.b16 %v274
  %v291 = vunpack.c.h.b16 %v274
  %v292 = vunpack.c.l.b16 %v275
  %v293 = vunpack.c.h.b16 %v275
  %v294 = vunpack.c.l.b16 %v276
  %v295 = vunpack.c.h.b16 %v276
  %v296 = vunpack.c.l.b16 %v277
  %v297 = vunpack.c.h.b16 %v277
  %v298 = vunpack.c.l.b16 %v278
  %v299 = vunpack.c.h.b16 %v278
  %v300 = vunpack.c.l.b16 %v279
  %v301 = vunpack.c.h.b16 %v279
  %v302 = vunpack.c.l.b16 %v280
  %v303 = vunpack.c.h.b16 %v280
  %v304 = vunpack.c.l.b16 %v281
  %v305 = vunpack.c.h.b16 %v281
  %v306 = vpack.c.b16 %v290, %v290
  %v307 = vpack.c.b16 %v291, %v291
  %v308 = vpack.c.b16 %v292, %v292
  %v309 = vpack.c.b16 %v293, %v293
  %v310 = vpack.c.b16 %v294, %v294
  %v311 = vpack.c.b16 %v295, %v295
  %v312 = vpack.c.b16 %v296, %v296
  %v313 = vpack.c.b16 %v297, %v297
  %v314 = vpack.c.b16 %v298, %v298
  %v315 = vpack.c.b16 %v299, %v299
  %v316 = vpack.c.b16 %v300, %v300
  %v317 = vpack.c.b16 %v301, %v301
  %v318 = vpack.c.b16 %v302, %v302
  %v319 = vpack.c.b16 %v303, %v303
  %v320 = vpack.c.b16 %v304, %v304
  %v321 = vpack.c.b16 %v305, %v305
  %vm338 = vcmask 125952
  %339 = vst.msk [vmem:[%s4] sm:$0xf] %vm338, %v306
  %340 = vst.msk [vmem:[%s4 + $0x4] sm:$0xf] %vm338, %v307
  %341 = vst.msk [vmem:[%s4 + $0x8] sm:$0xf] %vm338, %v308
  %342 = vst.msk [vmem:[%s4 + $0xc] sm:$0xf] %vm338, %v309
  %343 = vst.msk [vmem:[%s4 + $0x10] sm:$0xf] %vm338, %v310
  %344 = vst.msk [vmem:[%s4 + $0x14] sm:$0xf] %vm338, %v311
  %345 = vst.msk [vmem:[%s4 + $0x18] sm:$0xf] %vm338, %v312
  %346 = vst.msk [vmem:[%s4 + $0x1c] sm:$0xf] %vm338, %v313
  %347 = vst.msk [vmem:[%s4 + $0x20] sm:$0xf] %vm338, %v314
  %348 = vst.msk [vmem:[%s4 + $0x24] sm:$0xf] %vm338, %v315
  %349 = vst.msk [vmem:[%s4 + $0x28] sm:$0xf] %vm338, %v316
  %350 = vst.msk [vmem:[%s4 + $0x2c] sm:$0xf] %vm338, %v317
  %351 = vst.msk [vmem:[%s4 + $0x30] sm:$0xf] %vm338, %v318
  %352 = vst.msk [vmem:[%s4 + $0x34] sm:$0xf] %vm338, %v319
  %353 = vst.msk [vmem:[%s4 + $0x38] sm:$0xf] %vm338, %v320
  %354 = vst.msk [vmem:[%s4 + $0x3c] sm:$0xf] %vm338, %v321
  // Predicated region
  $region18: #{enet_forward.168} parent=0 // pred_check
    _
  $region19: #{enet_forward.168} parent=0 // pred_check_branch
    %356 = sbr.rel (0) target = $region21
  $region20: #{enet_forward.168} parent=0 // pred_region
    _
  $region21: #{enet_forward.168} parent=0 // pred_fallthru
    _
  // Predicated region
  $region22: #{enet_forward.168} parent=0 // pred_check
    _
  $region23: #{enet_forward.168} parent=0 // pred_check_branch
    %358 = sbr.rel (0) target = $region25
  $region24: #{enet_forward.168} parent=0 // pred_region
    _
  $region25: #{enet_forward.168} parent=0 // pred_fallthru
    _

// kernel: enet_forward.169
$region0: #{enet_forward.169}
  #allocation0 [shape = 'u32[]', space=smem, size = 0x4, offset = 0x4, fixed_abs, tag = 'smem constant byte address 0x4 - core index']
  #allocation1 [shape = 'u32[144,128]{1,0:T(1,128)}', space=vmem, size = 0x12000, scoped, tag = 'internal scratch']
  %s0 = inlined_call_operand.vmem [shape: bf16[128,64], index: 0, kind: input, shape index: {}]
  %s1 = inlined_call_operand.vmem [shape: bf16[64,4], index: 1, kind: input, shape index: {}]
  %s2 = inlined_call_operand.vmem [shape: f32[1,4], index: 2, kind: input, shape index: {}]
  %s3 = inlined_call_operand.vmem [shape: f32[1,4], index: 3, kind: input, shape index: {}]
  %s4 = inlined_call_operand.vmem [shape: bf16[128,4], index: 4, kind: output, shape index: {}]
  %s5 = sld [smem:[#allocation0]]
  $region26: #{enet_forward.169} parent=0
    _
  %s7 = ssub.s32 1, %s5
  %s8 = scalar_select 0, %s7, %s5
  // Predicated region
  $region2: #{enet_forward.169} parent=0 // pred_check
    _
  $region3: #{enet_forward.169} parent=0 // pred_check_branch
    %10 = sbr.rel (0) target = $region5
  $region4: #{enet_forward.169} parent=0 // pred_region
    _
  $region5: #{enet_forward.169} parent=0 // pred_fallthru
    _
  // Predicated region
  $region6: #{enet_forward.169} parent=0 // pred_check
    _
  $region7: #{enet_forward.169} parent=0 // pred_check_branch
    %12 = sbr.rel (0) target = $region9
  $region8: #{enet_forward.169} parent=0 // pred_region
    _
  $region9: #{enet_forward.169} parent=0 // pred_fallthru
    _
  // Predicated region
  $region10: #{enet_forward.169} parent=0 // pred_check
    _
  $region11: #{enet_forward.169} parent=0 // pred_check_branch
    %14 = sbr.rel (0) target = $region13
  $region12: #{enet_forward.169} parent=0 // pred_region
    _
  $region13: #{enet_forward.169} parent=0 // pred_fallthru
    _
  // Predicated region
  $region14: #{enet_forward.169} parent=0 // pred_check
    _
  $region15: #{enet_forward.169} parent=0 // pred_check_branch
    %16 = sbr.rel (0) target = $region17
  $region16: #{enet_forward.169} parent=0 // pred_region
    _
  $region17: #{enet_forward.169} parent=0 // pred_fallthru
    _
  %v18 = vld [vmem:[%s0] sm:$0xf]
  %v19 = vld [vmem:[%s0 + $0x4] sm:$0xf]
  %v20 = vld [vmem:[%s0 + $0x8] sm:$0xf]
  %v21 = vld [vmem:[%s0 + $0xc] sm:$0xf]
  %v22 = vld [vmem:[%s0 + $0x10] sm:$0xf]
  %v23 = vld [vmem:[%s0 + $0x14] sm:$0xf]
  %v24 = vld [vmem:[%s0 + $0x18] sm:$0xf]
  %v25 = vld [vmem:[%s0 + $0x1c] sm:$0xf]
  %v26 = vld [vmem:[%s0 + $0x20] sm:$0xf]
  %v27 = vld [vmem:[%s0 + $0x24] sm:$0xf]
  %v28 = vld [vmem:[%s0 + $0x28] sm:$0xf]
  %v29 = vld [vmem:[%s0 + $0x2c] sm:$0xf]
  %v30 = vld [vmem:[%s0 + $0x30] sm:$0xf]
  %v31 = vld [vmem:[%s0 + $0x34] sm:$0xf]
  %v32 = vld [vmem:[%s0 + $0x38] sm:$0xf]
  %v33 = vld [vmem:[%s0 + $0x3c] sm:$0xf]
  %v34 = vld [vmem:[%s1] sm:$0xf]
  %v35 = vld [vmem:[%s1 + $0x4] sm:$0xf]
  %v36 = vld [vmem:[%s1 + $0x8] sm:$0xf]
  %v37 = vld [vmem:[%s1 + $0xc] sm:$0xf]
  %v38 = vld [vmem:[%s1 + $0x10] sm:$0xf]
  %v39 = vld [vmem:[%s1 + $0x14] sm:$0xf]
  %v40 = vld [vmem:[%s1 + $0x18] sm:$0xf]
  %v41 = vld [vmem:[%s1 + $0x1c] sm:$0xf]
  %v58 = vunpack.c.l.b16 %v18
  %v59 = vunpack.c.l.b16 %v19
  %v60 = vunpack.c.l.b16 %v20
  %v61 = vunpack.c.l.b16 %v21
  %v62 = vunpack.c.l.b16 %v22
  %v63 = vunpack.c.l.b16 %v23
  %v64 = vunpack.c.l.b16 %v24
  %v65 = vunpack.c.l.b16 %v25
  %v66 = vunpack.c.l.b16 %v26
  %v67 = vunpack.c.l.b16 %v27
  %v68 = vunpack.c.l.b16 %v28
  %v69 = vunpack.c.l.b16 %v29
  %v70 = vunpack.c.l.b16 %v30
  %v71 = vunpack.c.l.b16 %v31
  %v72 = vunpack.c.l.b16 %v32
  %v73 = vunpack.c.l.b16 %v33
  %v74 = vpack.c.b16 %v59, %v58
  %v75 = vpack.c.b16 %v61, %v60
  %v76 = vpack.c.b16 %v63, %v62
  %v77 = vpack.c.b16 %v65, %v64
  %v78 = vpack.c.b16 %v67, %v66
  %v79 = vpack.c.b16 %v69, %v68
  %v80 = vpack.c.b16 %v71, %v70
  %v81 = vpack.c.b16 %v73, %v72
  %v90 = vunpack.c.l.b16 %v34
  %v91 = vunpack.c.l.b16 %v35
  %v92 = vunpack.c.l.b16 %v36
  %v93 = vunpack.c.l.b16 %v37
  %v94 = vunpack.c.l.b16 %v38
  %v95 = vunpack.c.l.b16 %v39
  %v96 = vunpack.c.l.b16 %v40
  %v97 = vunpack.c.l.b16 %v41
  %v98 = vpack.c.b16 %v91, %v90
  %v99 = vpack.c.b16 %v93, %v92
  %v100 = vpack.c.b16 %v95, %v94
  %v101 = vpack.c.b16 %v97, %v96
  %vm106 = vcmask 523264
  %v108 = vsel %vm106, %v74, 0
  %v111 = vsel %vm106, %v75, 0
  %v114 = vsel %vm106, %v76, 0
  %v117 = vsel %vm106, %v77, 0
  %v120 = vsel %vm106, %v78, 0
  %v123 = vsel %vm106, %v79, 0
  %v126 = vsel %vm106, %v80, 0
  %v129 = vsel %vm106, %v81, 0
  %131 = vmatprep.subr.bf16.mxu0 0
  %132 = vmatpush1.bf16.msra.mxu0 0
  %133 = vmatprep.subr.bf16.mxu0 0
  %134 = vmatpush1.bf16.msra.mxu0 0
  %135 = vmatprep.subr.bf16.mxu0 0
  %136 = vmatpush1.bf16.msra.mxu0 0
  %137 = vmatprep.subr.bf16.mxu0 0
  %138 = vmatpush1.bf16.msra.mxu0 0
  %139 = vmatprep.subr.bf16.mxu0 0
  %140 = vmatpush1.bf16.msra.mxu0 %v101
  %141 = vmatprep.subr.bf16.mxu0 0
  %142 = vmatpush1.bf16.msra.mxu0 %v100
  %143 = vmatprep.subr.bf16.mxu0 0
  %144 = vmatpush1.bf16.msra.mxu0 %v99
  %145 = vmatprep.subr.bf16.mxu0 0
  %146 = vmatpush1.bf16.msra.mxu0 %v98
  %147 = vmatprep.subr.bf16.mxu0 0
  %148 = vmatpush2.bf16.msra.mxu0 0
  %149 = vmatprep.subr.bf16.mxu0 0
  %150 = vmatpush2.bf16.msra.mxu0 0
  %151 = vmatprep.subr.bf16.mxu0 0
  %152 = vmatpush2.bf16.msra.mxu0 0
  %153 = vmatprep.subr.bf16.mxu0 0
  %154 = vmatpush2.bf16.msra.mxu0 0
  %155 = vmatprep.subr.bf16.mxu0 0
  %156 = vmatpush2.bf16.msra.mxu0 0
  %157 = vmatprep.subr.bf16.mxu0 0
  %158 = vmatpush2.bf16.msra.mxu0 0
  %159 = vmatprep.subr.bf16.mxu0 0
  %160 = vmatpush2.bf16.msra.mxu0 0
  %161 = vmatprep.subr.bf16.mxu0 0
  %162 = vmatpush2.bf16.msra.mxu0 0
  %163 = vmatprep.mubr.bf16.mxu0 0
  %164 = vmatmul.mubr.bf16.gmra.mxu0 %v108
  %v165 = vpop.f32.mrf.mxu0
  %v166 = vadd.f32 0.0, %v165
  %v167 = vpop.f32.mrf.mxu0
  %v168 = vpop.f32.mrf.mxu0
  %v169 = vadd.f32 0.0, %v168
  %v170 = vpop.f32.mrf.mxu0
  %171 = vmatprep.mubr.bf16.mxu0 0
  %172 = vmatmul.mubr.bf16.gmra.mxu0 %v111
  %v173 = vpop.f32.mrf.mxu0
  %v174 = vadd.f32 0.0, %v173
  %v175 = vpop.f32.mrf.mxu0
  %v176 = vpop.f32.mrf.mxu0
  %v177 = vadd.f32 0.0, %v176
  %v178 = vpop.f32.mrf.mxu0
  %179 = vmatprep.mubr.bf16.mxu0 0
  %180 = vmatmul.mubr.bf16.gmra.mxu0 %v114
  %v181 = vpop.f32.mrf.mxu0
  %v182 = vadd.f32 0.0, %v181
  %v183 = vpop.f32.mrf.mxu0
  %v184 = vpop.f32.mrf.mxu0
  %v185 = vadd.f32 0.0, %v184
  %v186 = vpop.f32.mrf.mxu0
  %187 = vmatprep.mubr.bf16.mxu0 0
  %188 = vmatmul.mubr.bf16.gmra.mxu0 %v117
  %v189 = vpop.f32.mrf.mxu0
  %v190 = vadd.f32 0.0, %v189
  %v191 = vpop.f32.mrf.mxu0
  %v192 = vpop.f32.mrf.mxu0
  %v193 = vadd.f32 0.0, %v192
  %v194 = vpop.f32.mrf.mxu0
  %195 = vmatprep.mubr.bf16.mxu0 0
  %196 = vmatmul.mubr.bf16.gmra.mxu0 %v120
  %v197 = vpop.f32.mrf.mxu0
  %v198 = vadd.f32 0.0, %v197
  %v199 = vpop.f32.mrf.mxu0
  %v200 = vpop.f32.mrf.mxu0
  %v201 = vadd.f32 0.0, %v200
  %v202 = vpop.f32.mrf.mxu0
  %203 = vmatprep.mubr.bf16.mxu0 0
  %204 = vmatmul.mubr.bf16.gmra.mxu0 %v123
  %v205 = vpop.f32.mrf.mxu0
  %v206 = vadd.f32 0.0, %v205
  %v207 = vpop.f32.mrf.mxu0
  %v208 = vpop.f32.mrf.mxu0
  %v209 = vadd.f32 0.0, %v208
  %v210 = vpop.f32.mrf.mxu0
  %211 = vmatprep.mubr.bf16.mxu0 0
  %212 = vmatmul.mubr.bf16.gmra.mxu0 %v126
  %v213 = vpop.f32.mrf.mxu0
  %v214 = vadd.f32 0.0, %v213
  %v215 = vpop.f32.mrf.mxu0
  %v216 = vpop.f32.mrf.mxu0
  %v217 = vadd.f32 0.0, %v216
  %v218 = vpop.f32.mrf.mxu0
  %219 = vmatprep.mubr.bf16.mxu0 0
  %220 = vmatmul.mubr.bf16.gmra.mxu0 %v129
  %v221 = vpop.f32.mrf.mxu0
  %v222 = vadd.f32 0.0, %v221
  %v223 = vpop.f32.mrf.mxu0
  %v224 = vpop.f32.mrf.mxu0
  %v225 = vadd.f32 0.0, %v224
  %v226 = vpop.f32.mrf.mxu0
  %227 = vdwg.mxu0
  %v228 = vld [vmem:[%s2] sm:$0x1]
  %v230 = vlaneseq
  %v231 = vshrl.u32 %v230, 7
  %v232 = vsub.s32 0, %v231
  %v233 = vrot.slane %v228, %v232
  %v235 = vmul.f32 %v166, %v233
  %v236 = vmul.f32 %v169, %v233
  %v237 = vmul.f32 %v174, %v233
  %v238 = vmul.f32 %v177, %v233
  %v239 = vmul.f32 %v182, %v233
  %v240 = vmul.f32 %v185, %v233
  %v241 = vmul.f32 %v190, %v233
  %v242 = vmul.f32 %v193, %v233
  %v243 = vmul.f32 %v198, %v233
  %v244 = vmul.f32 %v201, %v233
  %v245 = vmul.f32 %v206, %v233
  %v246 = vmul.f32 %v209, %v233
  %v247 = vmul.f32 %v214, %v233
  %v248 = vmul.f32 %v217, %v233
  %v249 = vmul.f32 %v222, %v233
  %v250 = vmul.f32 %v225, %v233
  %v251 = vld [vmem:[%s3] sm:$0x1]
  %v253 = vlaneseq
  %v254 = vshrl.u32 %v253, 7
  %v255 = vsub.s32 0, %v254
  %v256 = vrot.slane %v251, %v255
  %v258 = vadd.f32 %v235, %v256
  %v259 = vadd.f32 %v236, %v256
  %v260 = vadd.f32 %v237, %v256
  %v261 = vadd.f32 %v238, %v256
  %v262 = vadd.f32 %v239, %v256
  %v263 = vadd.f32 %v240, %v256
  %v264 = vadd.f32 %v241, %v256
  %v265 = vadd.f32 %v242, %v256
  %v266 = vadd.f32 %v243, %v256
  %v267 = vadd.f32 %v244, %v256
  %v268 = vadd.f32 %v245, %v256
  %v269 = vadd.f32 %v246, %v256
  %v270 = vadd.f32 %v247, %v256
  %v271 = vadd.f32 %v248, %v256
  %v272 = vadd.f32 %v249, %v256
  %v273 = vadd.f32 %v250, %v256
  %vm274 = vcmp.ge.f32.partialorder %v258, 0.0
  %vm275 = vcmp.ge.f32.partialorder %v259, 0.0
  %vm276 = vcmp.ge.f32.partialorder %v260, 0.0
  %vm277 = vcmp.ge.f32.partialorder %v261, 0.0
  %vm278 = vcmp.ge.f32.partialorder %v262, 0.0
  %vm279 = vcmp.ge.f32.partialorder %v263, 0.0
  %vm280 = vcmp.ge.f32.partialorder %v264, 0.0
  %vm281 = vcmp.ge.f32.partialorder %v265, 0.0
  %vm282 = vcmp.ge.f32.partialorder %v266, 0.0
  %vm283 = vcmp.ge.f32.partialorder %v267, 0.0
  %vm284 = vcmp.ge.f32.partialorder %v268, 0.0
  %vm285 = vcmp.ge.f32.partialorder %v269, 0.0
  %vm286 = vcmp.ge.f32.partialorder %v270, 0.0
  %vm287 = vcmp.ge.f32.partialorder %v271, 0.0
  %vm288 = vcmp.ge.f32.partialorder %v272, 0.0
  %vm289 = vcmp.ge.f32.partialorder %v273, 0.0
  %v290 = vmul.f32 %v258, 0.25
  %v291 = vmul.f32 %v259, 0.25
  %v292 = vmul.f32 %v260, 0.25
  %v293 = vmul.f32 %v261, 0.25
  %v294 = vmul.f32 %v262, 0.25
  %v295 = vmul.f32 %v263, 0.25
  %v296 = vmul.f32 %v264, 0.25
  %v297 = vmul.f32 %v265, 0.25
  %v298 = vmul.f32 %v266, 0.25
  %v299 = vmul.f32 %v267, 0.25
  %v300 = vmul.f32 %v268, 0.25
  %v301 = vmul.f32 %v269, 0.25
  %v302 = vmul.f32 %v270, 0.25
  %v303 = vmul.f32 %v271, 0.25
  %v304 = vmul.f32 %v272, 0.25
  %v305 = vmul.f32 %v273, 0.25
  %v306 = vsel %vm274, %v258, %v290
  %v307 = vsel %vm275, %v259, %v291
  %v308 = vsel %vm276, %v260, %v292
  %v309 = vsel %vm277, %v261, %v293
  %v310 = vsel %vm278, %v262, %v294
  %v311 = vsel %vm279, %v263, %v295
  %v312 = vsel %vm280, %v264, %v296
  %v313 = vsel %vm281, %v265, %v297
  %v314 = vsel %vm282, %v266, %v298
  %v315 = vsel %vm283, %v267, %v299
  %v316 = vsel %vm284, %v268, %v300
  %v317 = vsel %vm285, %v269, %v301
  %v318 = vsel %vm286, %v270, %v302
  %v319 = vsel %vm287, %v271, %v303
  %v320 = vsel %vm288, %v272, %v304
  %v321 = vsel %vm289, %v273, %v305
  %v322 = vpack.c.bf16 %v307, %v306
  %v323 = vpack.c.bf16 %v309, %v308
  %v324 = vpack.c.bf16 %v311, %v310
  %v325 = vpack.c.bf16 %v313, %v312
  %v326 = vpack.c.bf16 %v315, %v314
  %v327 = vpack.c.bf16 %v317, %v316
  %v328 = vpack.c.bf16 %v319, %v318
  %v329 = vpack.c.bf16 %v321, %v320
  %v338 = vunpack.c.l.b16 %v322
  %v339 = vunpack.c.h.b16 %v322
  %v340 = vunpack.c.l.b16 %v323
  %v341 = vunpack.c.h.b16 %v323
  %v342 = vunpack.c.l.b16 %v324
  %v343 = vunpack.c.h.b16 %v324
  %v344 = vunpack.c.l.b16 %v325
  %v345 = vunpack.c.h.b16 %v325
  %v346 = vunpack.c.l.b16 %v326
  %v347 = vunpack.c.h.b16 %v326
  %v348 = vunpack.c.l.b16 %v327
  %v349 = vunpack.c.h.b16 %v327
  %v350 = vunpack.c.l.b16 %v328
  %v351 = vunpack.c.h.b16 %v328
  %v352 = vunpack.c.l.b16 %v329
  %v353 = vunpack.c.h.b16 %v329
  %v354 = vpack.c.b16 %v338, %v338
  %v355 = vpack.c.b16 %v339, %v339
  %v356 = vpack.c.b16 %v340, %v340
  %v357 = vpack.c.b16 %v341, %v341
  %v358 = vpack.c.b16 %v342, %v342
  %v359 = vpack.c.b16 %v343, %v343
  %v360 = vpack.c.b16 %v344, %v344
  %v361 = vpack.c.b16 %v345, %v345
  %v362 = vpack.c.b16 %v346, %v346
  %v363 = vpack.c.b16 %v347, %v347
  %v364 = vpack.c.b16 %v348, %v348
  %v365 = vpack.c.b16 %v349, %v349
  %v366 = vpack.c.b16 %v350, %v350
  %v367 = vpack.c.b16 %v351, %v351
  %v368 = vpack.c.b16 %v352, %v352
  %v369 = vpack.c.b16 %v353, %v353
  %vm386 = vcmask 27648
  %387 = vst.msk [vmem:[%s4] sm:$0xf] %vm386, %v354
  %388 = vst.msk [vmem:[%s4 + $0x4] sm:$0xf] %vm386, %v355
  %389 = vst.msk [vmem:[%s4 + $0x8] sm:$0xf] %vm386, %v356
  %390 = vst.msk [vmem:[%s4 + $0xc] sm:$0xf] %vm386, %v357
  %391 = vst.msk [vmem:[%s4 + $0x10] sm:$0xf] %vm386, %v358
  %392 = vst.msk [vmem:[%s4 + $0x14] sm:$0xf] %vm386, %v359
  %393 = vst.msk [vmem:[%s4 + $0x18] sm:$0xf] %vm386, %v360
  %394 = vst.msk [vmem:[%s4 + $0x1c] sm:$0xf] %vm386, %v361
  %395 = vst.msk [vmem:[%s4 + $0x20] sm:$0xf] %vm386, %v362
  %396 = vst.msk [vmem:[%s4 + $0x24] sm:$0xf] %vm386, %v363
  %397 = vst.msk [vmem:[%s4 + $0x28] sm:$0xf] %vm386, %v364
  %398 = vst.msk [vmem:[%s4 + $0x2c] sm:$0xf] %vm386, %v365
  %399 = vst.msk [vmem:[%s4 + $0x30] sm:$0xf] %vm386, %v366
  %400 = vst.msk [vmem:[%s4 + $0x34] sm:$0xf] %vm386, %v367
  %401 = vst.msk [vmem:[%s4 + $0x38] sm:$0xf] %vm386, %v368
  %402 = vst.msk [vmem:[%s4 + $0x3c] sm:$0xf] %vm386, %v369
  // Predicated region
  $region18: #{enet_forward.169} parent=0 // pred_check
    _
  $region19: #{enet_forward.169} parent=0 // pred_check_branch
    %404 = sbr.rel (0) target = $region21
  $region20: #{enet_forward.169} parent=0 // pred_region
    _
  $region21: #{enet_forward.169} parent=0 // pred_fallthru
    _
  // Predicated region
  $region22: #{enet_forward.169} parent=0 // pred_check
    _
  $region23: #{enet_forward.169} parent=0 // pred_check_branch
    %406 = sbr.rel (0) target = $region25
  $region24: #{enet_forward.169} parent=0 // pred_region
    _
  $region25: #{enet_forward.169} parent=0 // pred_fallthru
    _

// kernel: enet_forward.170
$region0: #{enet_forward.170}
  #allocation0 [shape = 'u32[]', space=smem, size = 0x4, offset = 0x4, fixed_abs, tag = 'smem constant byte address 0x4 - core index']
  #allocation1 [shape = 'u32[144,128]{1,0:T(1,128)}', space=vmem, size = 0x12000, scoped, tag = 'internal scratch']
  %s0 = inlined_call_operand.vmem [shape: bf16[128,4], index: 0, kind: input, shape index: {}]
  %s1 = inlined_call_operand.vmem [shape: bf16[4,16], index: 1, kind: input, shape index: {}]
  %s2 = inlined_call_operand.vmem [shape: f32[1,16], index: 2, kind: input, shape index: {}]
  %s3 = inlined_call_operand.vmem [shape: f32[1,16], index: 3, kind: input, shape index: {}]
  %s4 = inlined_call_operand.vmem [shape: bf16[128,16], index: 4, kind: output, shape index: {}]
  %s5 = sld [smem:[#allocation0]]
  $region26: #{enet_forward.170} parent=0
    _
  %s7 = ssub.s32 1, %s5
  %s8 = scalar_select 0, %s7, %s5
  // Predicated region
  $region2: #{enet_forward.170} parent=0 // pred_check
    _
  $region3: #{enet_forward.170} parent=0 // pred_check_branch
    %10 = sbr.rel (0) target = $region5
  $region4: #{enet_forward.170} parent=0 // pred_region
    _
  $region5: #{enet_forward.170} parent=0 // pred_fallthru
    _
  // Predicated region
  $region6: #{enet_forward.170} parent=0 // pred_check
    _
  $region7: #{enet_forward.170} parent=0 // pred_check_branch
    %12 = sbr.rel (0) target = $region9
  $region8: #{enet_forward.170} parent=0 // pred_region
    _
  $region9: #{enet_forward.170} parent=0 // pred_fallthru
    _
  // Predicated region
  $region10: #{enet_forward.170} parent=0 // pred_check
    _
  $region11: #{enet_forward.170} parent=0 // pred_check_branch
    %14 = sbr.rel (0) target = $region13
  $region12: #{enet_forward.170} parent=0 // pred_region
    _
  $region13: #{enet_forward.170} parent=0 // pred_fallthru
    _
  // Predicated region
  $region14: #{enet_forward.170} parent=0 // pred_check
    _
  $region15: #{enet_forward.170} parent=0 // pred_check_branch
    %16 = sbr.rel (0) target = $region17
  $region16: #{enet_forward.170} parent=0 // pred_region
    _
  $region17: #{enet_forward.170} parent=0 // pred_fallthru
    _
  %v18 = vld [vmem:[%s0] sm:$0xf]
  %v19 = vld [vmem:[%s0 + $0x4] sm:$0xf]
  %v20 = vld [vmem:[%s0 + $0x8] sm:$0xf]
  %v21 = vld [vmem:[%s0 + $0xc] sm:$0xf]
  %v22 = vld [vmem:[%s0 + $0x10] sm:$0xf]
  %v23 = vld [vmem:[%s0 + $0x14] sm:$0xf]
  %v24 = vld [vmem:[%s0 + $0x18] sm:$0xf]
  %v25 = vld [vmem:[%s0 + $0x1c] sm:$0xf]
  %v26 = vld [vmem:[%s0 + $0x20] sm:$0xf]
  %v27 = vld [vmem:[%s0 + $0x24] sm:$0xf]
  %v28 = vld [vmem:[%s0 + $0x28] sm:$0xf]
  %v29 = vld [vmem:[%s0 + $0x2c] sm:$0xf]
  %v30 = vld [vmem:[%s0 + $0x30] sm:$0xf]
  %v31 = vld [vmem:[%s0 + $0x34] sm:$0xf]
  %v32 = vld [vmem:[%s0 + $0x38] sm:$0xf]
  %v33 = vld [vmem:[%s0 + $0x3c] sm:$0xf]
  %v34 = vld [vmem:[%s1] sm:$0x3]
  %v51 = vunpack.c.l.b16 %v18
  %v52 = vunpack.c.l.b16 %v19
  %v53 = vunpack.c.l.b16 %v20
  %v54 = vunpack.c.l.b16 %v21
  %v55 = vunpack.c.l.b16 %v22
  %v56 = vunpack.c.l.b16 %v23
  %v57 = vunpack.c.l.b16 %v24
  %v58 = vunpack.c.l.b16 %v25
  %v59 = vunpack.c.l.b16 %v26
  %v60 = vunpack.c.l.b16 %v27
  %v61 = vunpack.c.l.b16 %v28
  %v62 = vunpack.c.l.b16 %v29
  %v63 = vunpack.c.l.b16 %v30
  %v64 = vunpack.c.l.b16 %v31
  %v65 = vunpack.c.l.b16 %v32
  %v66 = vunpack.c.l.b16 %v33
  %v67 = vpack.c.b16 %v52, %v51
  %v68 = vpack.c.b16 %v54, %v53
  %v69 = vpack.c.b16 %v56, %v55
  %v70 = vpack.c.b16 %v58, %v57
  %v71 = vpack.c.b16 %v60, %v59
  %v72 = vpack.c.b16 %v62, %v61
  %v73 = vpack.c.b16 %v64, %v63
  %v74 = vpack.c.b16 %v66, %v65
  %vm75 = vcmask 31744
  %v77 = vsel %vm75, %v67, 0
  %v80 = vsel %vm75, %v68, 0
  %v83 = vsel %vm75, %v69, 0
  %v86 = vsel %vm75, %v70, 0
  %v89 = vsel %vm75, %v71, 0
  %v92 = vsel %vm75, %v72, 0
  %v95 = vsel %vm75, %v73, 0
  %v98 = vsel %vm75, %v74, 0
  %vm100 = vcmask 1041408
  %v102 = vsel %vm100, %v34, 0
  %104 = vmatprep.subr.bf16.mxu0 0
  %105 = vmatpush1.bf16.msra.mxu0 0
  %106 = vmatprep.subr.bf16.mxu0 0
  %107 = vmatpush1.bf16.msra.mxu0 0
  %108 = vmatprep.subr.bf16.mxu0 0
  %109 = vmatpush1.bf16.msra.mxu0 0
  %110 = vmatprep.subr.bf16.mxu0 0
  %111 = vmatpush1.bf16.msra.mxu0 0
  %112 = vmatprep.subr.bf16.mxu0 0
  %113 = vmatpush1.bf16.msra.mxu0 0
  %114 = vmatprep.subr.bf16.mxu0 0
  %115 = vmatpush1.bf16.msra.mxu0 0
  %116 = vmatprep.subr.bf16.mxu0 0
  %117 = vmatpush1.bf16.msra.mxu0 0
  %118 = vmatprep.subr.bf16.mxu0 0
  %119 = vmatpush1.bf16.msra.mxu0 %v102
  %120 = vmatprep.subr.bf16.mxu0 0
  %121 = vmatpush2.bf16.msra.mxu0 0
  %122 = vmatprep.subr.bf16.mxu0 0
  %123 = vmatpush2.bf16.msra.mxu0 0
  %124 = vmatprep.subr.bf16.mxu0 0
  %125 = vmatpush2.bf16.msra.mxu0 0
  %126 = vmatprep.subr.bf16.mxu0 0
  %127 = vmatpush2.bf16.msra.mxu0 0
  %128 = vmatprep.subr.bf16.mxu0 0
  %129 = vmatpush2.bf16.msra.mxu0 0
  %130 = vmatprep.subr.bf16.mxu0 0
  %131 = vmatpush2.bf16.msra.mxu0 0
  %132 = vmatprep.subr.bf16.mxu0 0
  %133 = vmatpush2.bf16.msra.mxu0 0
  %134 = vmatprep.subr.bf16.mxu0 0
  %135 = vmatpush2.bf16.msra.mxu0 0
  %136 = vmatprep.mubr.bf16.mxu0 0
  %137 = vmatmul.mubr.bf16.gmra.mxu0 %v77
  %v138 = vpop.f32.mrf.mxu0
  %v139 = vadd.f32 0.0, %v138
  %v140 = vpop.f32.mrf.mxu0
  %v141 = vpop.f32.mrf.mxu0
  %v142 = vadd.f32 0.0, %v141
  %v143 = vpop.f32.mrf.mxu0
  %144 = vmatprep.mubr.bf16.mxu0 0
  %145 = vmatmul.mubr.bf16.gmra.mxu0 %v80
  %v146 = vpop.f32.mrf.mxu0
  %v147 = vadd.f32 0.0, %v146
  %v148 = vpop.f32.mrf.mxu0
  %v149 = vpop.f32.mrf.mxu0
  %v150 = vadd.f32 0.0, %v149
  %v151 = vpop.f32.mrf.mxu0
  %152 = vmatprep.mubr.bf16.mxu0 0
  %153 = vmatmul.mubr.bf16.gmra.mxu0 %v83
  %v154 = vpop.f32.mrf.mxu0
  %v155 = vadd.f32 0.0, %v154
  %v156 = vpop.f32.mrf.mxu0
  %v157 = vpop.f32.mrf.mxu0
  %v158 = vadd.f32 0.0, %v157
  %v159 = vpop.f32.mrf.mxu0
  %160 = vmatprep.mubr.bf16.mxu0 0
  %161 = vmatmul.mubr.bf16.gmra.mxu0 %v86
  %v162 = vpop.f32.mrf.mxu0
  %v163 = vadd.f32 0.0, %v162
  %v164 = vpop.f32.mrf.mxu0
  %v165 = vpop.f32.mrf.mxu0
  %v166 = vadd.f32 0.0, %v165
  %v167 = vpop.f32.mrf.mxu0
  %168 = vmatprep.mubr.bf16.mxu0 0
  %169 = vmatmul.mubr.bf16.gmra.mxu0 %v89
  %v170 = vpop.f32.mrf.mxu0
  %v171 = vadd.f32 0.0, %v170
  %v172 = vpop.f32.mrf.mxu0
  %v173 = vpop.f32.mrf.mxu0
  %v174 = vadd.f32 0.0, %v173
  %v175 = vpop.f32.mrf.mxu0
  %176 = vmatprep.mubr.bf16.mxu0 0
  %177 = vmatmul.mubr.bf16.gmra.mxu0 %v92
  %v178 = vpop.f32.mrf.mxu0
  %v179 = vadd.f32 0.0, %v178
  %v180 = vpop.f32.mrf.mxu0
  %v181 = vpop.f32.mrf.mxu0
  %v182 = vadd.f32 0.0, %v181
  %v183 = vpop.f32.mrf.mxu0
  %184 = vmatprep.mubr.bf16.mxu0 0
  %185 = vmatmul.mubr.bf16.gmra.mxu0 %v95
  %v186 = vpop.f32.mrf.mxu0
  %v187 = vadd.f32 0.0, %v186
  %v188 = vpop.f32.mrf.mxu0
  %v189 = vpop.f32.mrf.mxu0
  %v190 = vadd.f32 0.0, %v189
  %v191 = vpop.f32.mrf.mxu0
  %192 = vmatprep.mubr.bf16.mxu0 0
  %193 = vmatmul.mubr.bf16.gmra.mxu0 %v98
  %v194 = vpop.f32.mrf.mxu0
  %v195 = vadd.f32 0.0, %v194
  %v196 = vpop.f32.mrf.mxu0
  %v197 = vpop.f32.mrf.mxu0
  %v198 = vadd.f32 0.0, %v197
  %v199 = vpop.f32.mrf.mxu0
  %200 = vdwg.mxu0
  %v201 = vld [vmem:[%s2] sm:$0x1]
  %v203 = vlaneseq
  %v204 = vshrl.u32 %v203, 7
  %v205 = vsub.s32 0, %v204
  %v206 = vrot.slane %v201, %v205
  %v208 = vmul.f32 %v139, %v206
  %v209 = vmul.f32 %v142, %v206
  %v210 = vmul.f32 %v147, %v206
  %v211 = vmul.f32 %v150, %v206
  %v212 = vmul.f32 %v155, %v206
  %v213 = vmul.f32 %v158, %v206
  %v214 = vmul.f32 %v163, %v206
  %v215 = vmul.f32 %v166, %v206
  %v216 = vmul.f32 %v171, %v206
  %v217 = vmul.f32 %v174, %v206
  %v218 = vmul.f32 %v179, %v206
  %v219 = vmul.f32 %v182, %v206
  %v220 = vmul.f32 %v187, %v206
  %v221 = vmul.f32 %v190, %v206
  %v222 = vmul.f32 %v195, %v206
  %v223 = vmul.f32 %v198, %v206
  %v224 = vld [vmem:[%s3] sm:$0x1]
  %v226 = vlaneseq
  %v227 = vshrl.u32 %v226, 7
  %v228 = vsub.s32 0, %v227
  %v229 = vrot.slane %v224, %v228
  %v231 = vadd.f32 %v208, %v229
  %v232 = vadd.f32 %v209, %v229
  %v233 = vadd.f32 %v210, %v229
  %v234 = vadd.f32 %v211, %v229
  %v235 = vadd.f32 %v212, %v229
  %v236 = vadd.f32 %v213, %v229
  %v237 = vadd.f32 %v214, %v229
  %v238 = vadd.f32 %v215, %v229
  %v239 = vadd.f32 %v216, %v229
  %v240 = vadd.f32 %v217, %v229
  %v241 = vadd.f32 %v218, %v229
  %v242 = vadd.f32 %v219, %v229
  %v243 = vadd.f32 %v220, %v229
  %v244 = vadd.f32 %v221, %v229
  %v245 = vadd.f32 %v222, %v229
  %v246 = vadd.f32 %v223, %v229
  %vm247 = vcmp.ge.f32.partialorder %v231, 0.0
  %vm248 = vcmp.ge.f32.partialorder %v232, 0.0
  %vm249 = vcmp.ge.f32.partialorder %v233, 0.0
  %vm250 = vcmp.ge.f32.partialorder %v234, 0.0
  %vm251 = vcmp.ge.f32.partialorder %v235, 0.0
  %vm252 = vcmp.ge.f32.partialorder %v236, 0.0
  %vm253 = vcmp.ge.f32.partialorder %v237, 0.0
  %vm254 = vcmp.ge.f32.partialorder %v238, 0.0
  %vm255 = vcmp.ge.f32.partialorder %v239, 0.0
  %vm256 = vcmp.ge.f32.partialorder %v240, 0.0
  %vm257 = vcmp.ge.f32.partialorder %v241, 0.0
  %vm258 = vcmp.ge.f32.partialorder %v242, 0.0
  %vm259 = vcmp.ge.f32.partialorder %v243, 0.0
  %vm260 = vcmp.ge.f32.partialorder %v244, 0.0
  %vm261 = vcmp.ge.f32.partialorder %v245, 0.0
  %vm262 = vcmp.ge.f32.partialorder %v246, 0.0
  %v263 = vmul.f32 %v231, 0.25
  %v264 = vmul.f32 %v232, 0.25
  %v265 = vmul.f32 %v233, 0.25
  %v266 = vmul.f32 %v234, 0.25
  %v267 = vmul.f32 %v235, 0.25
  %v268 = vmul.f32 %v236, 0.25
  %v269 = vmul.f32 %v237, 0.25
  %v270 = vmul.f32 %v238, 0.25
  %v271 = vmul.f32 %v239, 0.25
  %v272 = vmul.f32 %v240, 0.25
  %v273 = vmul.f32 %v241, 0.25
  %v274 = vmul.f32 %v242, 0.25
  %v275 = vmul.f32 %v243, 0.25
  %v276 = vmul.f32 %v244, 0.25
  %v277 = vmul.f32 %v245, 0.25
  %v278 = vmul.f32 %v246, 0.25
  %v279 = vsel %vm247, %v231, %v263
  %v280 = vsel %vm248, %v232, %v264
  %v281 = vsel %vm249, %v233, %v265
  %v282 = vsel %vm250, %v234, %v266
  %v283 = vsel %vm251, %v235, %v267
  %v284 = vsel %vm252, %v236, %v268
  %v285 = vsel %vm253, %v237, %v269
  %v286 = vsel %vm254, %v238, %v270
  %v287 = vsel %vm255, %v239, %v271
  %v288 = vsel %vm256, %v240, %v272
  %v289 = vsel %vm257, %v241, %v273
  %v290 = vsel %vm258, %v242, %v274
  %v291 = vsel %vm259, %v243, %v275
  %v292 = vsel %vm260, %v244, %v276
  %v293 = vsel %vm261, %v245, %v277
  %v294 = vsel %vm262, %v246, %v278
  %v295 = vpack.c.bf16 %v280, %v279
  %v296 = vpack.c.bf16 %v282, %v281
  %v297 = vpack.c.bf16 %v284, %v283
  %v298 = vpack.c.bf16 %v286, %v285
  %v299 = vpack.c.bf16 %v288, %v287
  %v300 = vpack.c.bf16 %v290, %v289
  %v301 = vpack.c.bf16 %v292, %v291
  %v302 = vpack.c.bf16 %v294, %v293
  %v311 = vunpack.c.l.b16 %v295
  %v312 = vunpack.c.h.b16 %v295
  %v313 = vunpack.c.l.b16 %v296
  %v314 = vunpack.c.h.b16 %v296
  %v315 = vunpack.c.l.b16 %v297
  %v316 = vunpack.c.h.b16 %v297
  %v317 = vunpack.c.l.b16 %v298
  %v318 = vunpack.c.h.b16 %v298
  %v319 = vunpack.c.l.b16 %v299
  %v320 = vunpack.c.h.b16 %v299
  %v321 = vunpack.c.l.b16 %v300
  %v322 = vunpack.c.h.b16 %v300
  %v323 = vunpack.c.l.b16 %v301
  %v324 = vunpack.c.h.b16 %v301
  %v325 = vunpack.c.l.b16 %v302
  %v326 = vunpack.c.h.b16 %v302
  %v327 = vpack.c.b16 %v311, %v311
  %v328 = vpack.c.b16 %v312, %v312
  %v329 = vpack.c.b16 %v313, %v313
  %v330 = vpack.c.b16 %v314, %v314
  %v331 = vpack.c.b16 %v315, %v315
  %v332 = vpack.c.b16 %v316, %v316
  %v333 = vpack.c.b16 %v317, %v317
  %v334 = vpack.c.b16 %v318, %v318
  %v335 = vpack.c.b16 %v319, %v319
  %v336 = vpack.c.b16 %v320, %v320
  %v337 = vpack.c.b16 %v321, %v321
  %v338 = vpack.c.b16 %v322, %v322
  %v339 = vpack.c.b16 %v323, %v323
  %v340 = vpack.c.b16 %v324, %v324
  %v341 = vpack.c.b16 %v325, %v325
  %v342 = vpack.c.b16 %v326, %v326
  %vm359 = vcmask 125952
  %360 = vst.msk [vmem:[%s4] sm:$0xf] %vm359, %v327
  %361 = vst.msk [vmem:[%s4 + $0x4] sm:$0xf] %vm359, %v328
  %362 = vst.msk [vmem:[%s4 + $0x8] sm:$0xf] %vm359, %v329
  %363 = vst.msk [vmem:[%s4 + $0xc] sm:$0xf] %vm359, %v330
  %364 = vst.msk [vmem:[%s4 + $0x10] sm:$0xf] %vm359, %v331
  %365 = vst.msk [vmem:[%s4 + $0x14] sm:$0xf] %vm359, %v332
  %366 = vst.msk [vmem:[%s4 + $0x18] sm:$0xf] %vm359, %v333
  %367 = vst.msk [vmem:[%s4 + $0x1c] sm:$0xf] %vm359, %v334
  %368 = vst.msk [vmem:[%s4 + $0x20] sm:$0xf] %vm359, %v335
  %369 = vst.msk [vmem:[%s4 + $0x24] sm:$0xf] %vm359, %v336
  %370 = vst.msk [vmem:[%s4 + $0x28] sm:$0xf] %vm359, %v337
  %371 = vst.msk [vmem:[%s4 + $0x2c] sm:$0xf] %vm359, %v338
  %372 = vst.msk [vmem:[%s4 + $0x30] sm:$0xf] %vm359, %v339
  %373 = vst.msk [vmem:[%s4 + $0x34] sm:$0xf] %vm359, %v340
  %374 = vst.msk [vmem:[%s4 + $0x38] sm:$0xf] %vm359, %v341
  %375 = vst.msk [vmem:[%s4 + $0x3c] sm:$0xf] %vm359, %v342
  // Predicated region
  $region18: #{enet_forward.170} parent=0 // pred_check
    _
  $region19: #{enet_forward.170} parent=0 // pred_check_branch
    %377 = sbr.rel (0) target = $region21
  $region20: #{enet_forward.170} parent=0 // pred_region
    _
  $region21: #{enet_forward.170} parent=0 // pred_fallthru
    _
  // Predicated region
  $region22: #{enet_forward.170} parent=0 // pred_check
    _
  $region23: #{enet_forward.170} parent=0 // pred_check_branch
    %379 = sbr.rel (0) target = $region25
  $region24: #{enet_forward.170} parent=0 // pred_region
    _
  $region25: #{enet_forward.170} parent=0 // pred_fallthru
    _

// kernel: enet_forward.171
$region0: #{enet_forward.171}
  #allocation0 [shape = 'u32[]', space=smem, size = 0x4, offset = 0x4, fixed_abs, tag = 'smem constant byte address 0x4 - core index']
  #allocation1 [shape = 'u32[144,128]{1,0:T(1,128)}', space=vmem, size = 0x12000, scoped, tag = 'internal scratch']
  %s0 = inlined_call_operand.vmem [shape: bf16[512,4], index: 0, kind: input, shape index: {}]
  %s1 = inlined_call_operand.vmem [shape: bf16[4,16], index: 1, kind: input, shape index: {}]
  %s2 = inlined_call_operand.vmem [shape: f32[1,16], index: 2, kind: input, shape index: {}]
  %s3 = inlined_call_operand.vmem [shape: f32[1,16], index: 3, kind: input, shape index: {}]
  %s4 = inlined_call_operand.vmem [shape: bf16[512,16], index: 4, kind: input, shape index: {}]
  %s5 = inlined_call_operand.vmem [shape: bf16[512,16], index: 5, kind: output, shape index: {}]
  %s6 = sld [smem:[#allocation0]]
  $region53: #{enet_forward.171} parent=0
    _
  %s8 = ssub.s32 1, %s6
  %s9 = scalar_select 0, %s8, %s6
  loop: start=0, step=1, limit=4
  $region2: #{enet_forward.171} parent=0 // loop_pre_header
    _
  $region3: #{enet_forward.171} parent=0 // loop_header
    %s11 = sphi 0, %s15
    %p12 = scmp.ge.s32.totalorder %s11, 4
    %s21 = sphi 0, %s23
    %s24 = sphi 0, %s21
    %s25 = sphi 0, %s24
    %s41 = sphi 0, %s25
    %s45 = sphi 0, %s45
    %s47 = sphi 0, %s45
    %s48 = sphi 0, %s47
    %s62 = sphi 0, %s48
    %s66 = sphi 0, %s66
    %s68 = sphi 0, %s66
    %s69 = sphi 0, %s68
    %s83 = sphi 0, %s69
    %s87 = sphi 0, %s87
    %s89 = sphi 0, %s87
    %s90 = sphi 0, %s89
    %s104 = sphi 0, %s90
    %s110 = sphi 0, %s112
    %s113 = sphi 0, %s110
    %s114 = sphi 0, %s113
    %s130 = sphi 0, %s114
    %s136 = sphi 0, %s138
    %s139 = sphi 0, %s136
    %s140 = sphi 0, %s139
    %s156 = sphi 0, %s140
  $region4: #{enet_forward.171} parent=0 // loop_header_branch
    %14 = sbr.rel (%p12) target = $region8
  $region5: #{enet_forward.171} parent=0 // loop_body
    %s16 = ssub.s32 %s11, 1
    %s17 = ssub.s32 %s11, 2
    %s18 = sadd.s32 %s11, 1
    %s19 = ssub.s32 %s11, %s18
    %p20 = scmp.eq.s32.totalorder %s19, 0
    %s22 = sadd.s32 %s21, 1
    %s23 = scalar_select %p20, %s21, %s22
    %p26 = pneg %p20
    %p27 = scmp.eq.s32.totalorder %s11, 1
    %p28 = por %p26, %p27
    %p29 = scmp.ne.s32.totalorder %s21, %s24
    %p30 = scmp.eq.s32.totalorder %s11, 0
    %p31 = por %p29, %p30
    %p32 = scmp.ne.s32.totalorder %s21, %s24
    %p33 = scmp.eq.s32.totalorder %s16, 1
    %p34 = por %p32, %p33
    %p35 = scmp.ne.s32.totalorder %s24, %s25
    %p36 = scmp.eq.s32.totalorder %s16, 0
    %p37 = por %p35, %p36
    %p38 = scmp.ne.s32.totalorder %s24, %s25
    %p39 = scmp.eq.s32.totalorder %s17, 1
    %p40 = por %p38, %p39
    %p42 = scmp.ne.s32.totalorder %s25, %s41
    %p43 = scmp.eq.s32.totalorder %s17, 0
    %p44 = por %p42, %p43
    %s46 = sadd.s32 %s45, 1
    %p49 = scmp.eq.s32.totalorder %s11, 1
    %p50 = scmp.ne.s32.totalorder %s45, %s47
    %p51 = scmp.eq.s32.totalorder %s11, 0
    %p52 = por %p50, %p51
    %p53 = scmp.ne.s32.totalorder %s45, %s47
    %p54 = scmp.eq.s32.totalorder %s16, 1
    %p55 = por %p53, %p54
    %p56 = scmp.ne.s32.totalorder %s47, %s48
    %p57 = scmp.eq.s32.totalorder %s16, 0
    %p58 = por %p56, %p57
    %p59 = scmp.ne.s32.totalorder %s47, %s48
    %p60 = scmp.eq.s32.totalorder %s17, 1
    %p61 = por %p59, %p60
    %p63 = scmp.ne.s32.totalorder %s48, %s62
    %p64 = scmp.eq.s32.totalorder %s17, 0
    %p65 = por %p63, %p64
    %s67 = sadd.s32 %s66, 1
    %p70 = scmp.eq.s32.totalorder %s11, 1
    %p71 = scmp.ne.s32.totalorder %s66, %s68
    %p72 = scmp.eq.s32.totalorder %s11, 0
    %p73 = por %p71, %p72
    %p74 = scmp.ne.s32.totalorder %s66, %s68
    %p75 = scmp.eq.s32.totalorder %s16, 1
    %p76 = por %p74, %p75
    %p77 = scmp.ne.s32.totalorder %s68, %s69
    %p78 = scmp.eq.s32.totalorder %s16, 0
    %p79 = por %p77, %p78
    %p80 = scmp.ne.s32.totalorder %s68, %s69
    %p81 = scmp.eq.s32.totalorder %s17, 1
    %p82 = por %p80, %p81
    %p84 = scmp.ne.s32.totalorder %s69, %s83
    %p85 = scmp.eq.s32.totalorder %s17, 0
    %p86 = por %p84, %p85
    %s88 = sadd.s32 %s87, 1
    %p91 = scmp.eq.s32.totalorder %s11, 1
    %p92 = scmp.ne.s32.totalorder %s87, %s89
    %p93 = scmp.eq.s32.totalorder %s11, 0
    %p94 = por %p92, %p93
    %p95 = scmp.ne.s32.totalorder %s87, %s89
    %p96 = scmp.eq.s32.totalorder %s16, 1
    %p97 = por %p95, %p96
    %p98 = scmp.ne.s32.totalorder %s89, %s90
    %p99 = scmp.eq.s32.totalorder %s16, 0
    %p100 = por %p98, %p99
    %p101 = scmp.ne.s32.totalorder %s89, %s90
    %p102 = scmp.eq.s32.totalorder %s17, 1
    %p103 = por %p101, %p102
    %p105 = scmp.ne.s32.totalorder %s90, %s104
    %p106 = scmp.eq.s32.totalorder %s17, 0
    %p107 = por %p105, %p106
    %s108 = ssub.s32 %s11, %s18
    %p109 = scmp.eq.s32.totalorder %s108, 0
    %s111 = sadd.s32 %s110, 1
    %s112 = scalar_select %p109, %s110, %s111
    %p115 = pneg %p109
    %p116 = scmp.eq.s32.totalorder %s11, 1
    %p117 = por %p115, %p116
    %p118 = scmp.ne.s32.totalorder %s110, %s113
    %p119 = scmp.eq.s32.totalorder %s11, 0
    %p120 = por %p118, %p119
    %p121 = scmp.ne.s32.totalorder %s110, %s113
    %p122 = scmp.eq.s32.totalorder %s16, 1
    %p123 = por %p121, %p122
    %p124 = scmp.ne.s32.totalorder %s113, %s114
    %p125 = scmp.eq.s32.totalorder %s16, 0
    %p126 = por %p124, %p125
    %p127 = scmp.ne.s32.totalorder %s113, %s114
    %p128 = scmp.eq.s32.totalorder %s17, 1
    %p129 = por %p127, %p128
    %p131 = scmp.ne.s32.totalorder %s114, %s130
    %p132 = scmp.eq.s32.totalorder %s17, 0
    %p133 = por %p131, %p132
    %s134 = ssub.s32 %s11, %s18
    %p135 = scmp.eq.s32.totalorder %s134, 0
    %s137 = sadd.s32 %s136, 1
    %s138 = scalar_select %p135, %s136, %s137
    %p141 = pneg %p135
    %p142 = scmp.eq.s32.totalorder %s11, 1
    %p143 = por %p141, %p142
    %p144 = scmp.ne.s32.totalorder %s136, %s139
    %p145 = scmp.eq.s32.totalorder %s11, 0
    %p146 = por %p144, %p145
    %p147 = scmp.ne.s32.totalorder %s136, %s139
    %p148 = scmp.eq.s32.totalorder %s16, 1
    %p149 = por %p147, %p148
    %p150 = scmp.ne.s32.totalorder %s139, %s140
    %p151 = scmp.eq.s32.totalorder %s16, 0
    %p152 = por %p150, %p151
    %p153 = scmp.ne.s32.totalorder %s139, %s140
    %p154 = scmp.eq.s32.totalorder %s17, 1
    %p155 = por %p153, %p154
    %p157 = scmp.ne.s32.totalorder %s140, %s156
    %p158 = scmp.eq.s32.totalorder %s17, 0
    %p159 = por %p157, %p158
    %p160 = scmp.le.s32.totalorder 1, %s11
    %p161 = scmp.lt.s32.totalorder %s11, 3
    %p162 = pnand %p160, %p161
    %p163 = pneg %p162
    // Predicated region
    $region9: #{enet_forward.171} parent=5 // pred_check
      _
    $region10: #{enet_forward.171} parent=5 // pred_check_branch
      %165 = sbr.rel (%p162) target = $region12
    $region11: #{enet_forward.171} parent=5 // pred_region
      %s166 = ssub.s32 %s11, 1
      // Predicated region
      $region13: #{enet_forward.171} parent=11 // pred_check
        %p167 = pneg %p58
      $region14: #{enet_forward.171} parent=11 // pred_check_branch
        %169 = sbr.rel (%p167) target = $region16
      $region15: #{enet_forward.171} parent=11 // pred_region
        _
      $region16: #{enet_forward.171} parent=11 // pred_fallthru
        _
      // Predicated region
      $region17: #{enet_forward.171} parent=11 // pred_check
        %p170 = pneg %p79
      $region18: #{enet_forward.171} parent=11 // pred_check_branch
        %172 = sbr.rel (%p170) target = $region20
      $region19: #{enet_forward.171} parent=11 // pred_region
        _
      $region20: #{enet_forward.171} parent=11 // pred_fallthru
        _
      // Predicated region
      $region21: #{enet_forward.171} parent=11 // pred_check
        %p173 = pneg %p100
      $region22: #{enet_forward.171} parent=11 // pred_check_branch
        %175 = sbr.rel (%p173) target = $region24
      $region23: #{enet_forward.171} parent=11 // pred_region
        _
      $region24: #{enet_forward.171} parent=11 // pred_fallthru
        _
    $region12: #{enet_forward.171} parent=5 // pred_fallthru
      _
    %p176 = scmp.lt.s32.totalorder %s11, 2
    // Predicated region
    $region25: #{enet_forward.171} parent=5 // pred_check
      %p177 = pneg %p176
    $region26: #{enet_forward.171} parent=5 // pred_check_branch
      %179 = sbr.rel (%p177) target = $region28
    $region27: #{enet_forward.171} parent=5 // pred_region
      // Predicated region
      $region29: #{enet_forward.171} parent=27 // pred_check
        %p180 = pneg %p31
      $region30: #{enet_forward.171} parent=27 // pred_check_branch
        %182 = sbr.rel (%p180) target = $region32
      $region31: #{enet_forward.171} parent=27 // pred_region
        %s183 = smul.u32 32, %s11
        %p184 = scmp.lt.s32.totalorder %s183, 63
        %s185 = scalar_select %p184, %s183, 63
        %s186 = smul.addr %s185, 4
        %s187 = scalar_lea.vmem %s0, %s186
        %s188 = smul.u32 32, %s11
      $region32: #{enet_forward.171} parent=27 // pred_fallthru
        _
      // Predicated region
      $region33: #{enet_forward.171} parent=27 // pred_check
        %p189 = pneg %p120
      $region34: #{enet_forward.171} parent=27 // pred_check_branch
        %191 = sbr.rel (%p189) target = $region36
      $region35: #{enet_forward.171} parent=27 // pred_region
        %s192 = smul.u32 32, %s11
        %p193 = scmp.lt.s32.totalorder %s192, 63
        %s194 = scalar_select %p193, %s192, 63
        %s195 = smul.addr %s194, 4
        %s196 = scalar_lea.vmem %s4, %s195
        %s197 = smul.u32 32, %s11
      $region36: #{enet_forward.171} parent=27 // pred_fallthru
        _
    $region28: #{enet_forward.171} parent=5 // pred_fallthru
      _
    %p198 = scmp.le.s32.totalorder 1, %s11
    %p199 = scmp.lt.s32.totalorder %s11, 3
    %p200 = pnand %p198, %p199
    %p201 = pneg %p200
    // Predicated region
    $region37: #{enet_forward.171} parent=5 // pred_check
      _
    $region38: #{enet_forward.171} parent=5 // pred_check_branch
      %203 = sbr.rel (%p200) target = $region40
    $region39: #{enet_forward.171} parent=5 // pred_region
      %s204 = ssub.s32 %s11, 1
      %s205 = smul.u32 32, %s16
      %p206 = scmp.lt.s32.totalorder %s205, 63
      %s207 = scalar_select %p206, %s205, 63
      %s208 = smul.addr %s207, 4
      %s209 = scalar_lea.vmem %s0, %s208
      %p210 = pneg %p37
      %p211 = pneg %p34
      %p212 = pneg %p58
      %p213 = pneg %p55
      %p214 = pneg %p79
      %p215 = pneg %p76
      %p216 = pneg %p100
      %p217 = pneg %p97
      %s218 = smul.u32 32, %s16
      %p219 = scmp.lt.s32.totalorder %s218, 63
      %s220 = scalar_select %p219, %s218, 63
      %s221 = smul.addr %s220, 4
      %s222 = scalar_lea.vmem %s4, %s221
      %p223 = pneg %p126
      %p224 = pneg %p123
      %p225 = pneg %p152
      %p226 = pneg %p149
      %s227 = smul.u32 32, %s16
      %p228 = scmp.lt.s32.totalorder %s227, 63
      %s229 = scalar_select %p228, %s227, 63
      %s230 = smul.addr %s229, 4
      %s231 = scalar_lea.vmem %s5, %s230
      %s232 = smul.u32 32, %s16
      %p233 = scmp.lt.s32.totalorder %s232, 63
      %s234 = scalar_select %p233, %s232, 63
      %s235 = smul.addr %s234, 4
      %s236 = scalar_lea.vmem %s0, %s235
      %s237 = smul.u32 32, %s16
      %s238 = smul.u32 32, %s16
      %p239 = scmp.lt.s32.totalorder %s238, 63
      %s240 = scalar_select %p239, %s238, 63
      %s241 = smul.addr %s240, 4
      %s242 = scalar_lea.vmem %s4, %s241
      %s243 = smul.u32 32, %s16
      %s244 = smul.u32 32, %s16
      %p245 = scmp.lt.s32.totalorder %s244, 63
      %s246 = scalar_select %p245, %s244, 63
      %s247 = smul.addr %s246, 4
      %s248 = scalar_lea.vmem %s5, %s247
      %s249 = smul.u32 32, %s16
      %v251 = vld [vmem:[%s236] sm:$0xf]
      %v252 = vld [vmem:[%s236 + $0x4] sm:$0xf]
      %v253 = vld [vmem:[%s236 + $0x8] sm:$0xf]
      %v254 = vld [vmem:[%s236 + $0xc] sm:$0xf]
      %v255 = vld [vmem:[%s236 + $0x10] sm:$0xf]
      %v256 = vld [vmem:[%s236 + $0x14] sm:$0xf]
      %v257 = vld [vmem:[%s236 + $0x18] sm:$0xf]
      %v258 = vld [vmem:[%s236 + $0x1c] sm:$0xf]
      %v259 = vld [vmem:[%s236 + $0x20] sm:$0xf]
      %v260 = vld [vmem:[%s236 + $0x24] sm:$0xf]
      %v261 = vld [vmem:[%s236 + $0x28] sm:$0xf]
      %v262 = vld [vmem:[%s236 + $0x2c] sm:$0xf]
      %v263 = vld [vmem:[%s236 + $0x30] sm:$0xf]
      %v264 = vld [vmem:[%s236 + $0x34] sm:$0xf]
      %v265 = vld [vmem:[%s236 + $0x38] sm:$0xf]
      %v266 = vld [vmem:[%s236 + $0x3c] sm:$0xf]
      %v267 = vld [vmem:[%s236 + $0x40] sm:$0xf]
      %v268 = vld [vmem:[%s236 + $0x44] sm:$0xf]
      %v269 = vld [vmem:[%s236 + $0x48] sm:$0xf]
      %v270 = vld [vmem:[%s236 + $0x4c] sm:$0xf]
      %v271 = vld [vmem:[%s236 + $0x50] sm:$0xf]
      %v272 = vld [vmem:[%s236 + $0x54] sm:$0xf]
      %v273 = vld [vmem:[%s236 + $0x58] sm:$0xf]
      %v274 = vld [vmem:[%s236 + $0x5c] sm:$0xf]
      %v275 = vld [vmem:[%s236 + $0x60] sm:$0xf]
      %v276 = vld [vmem:[%s236 + $0x64] sm:$0xf]
      %v277 = vld [vmem:[%s236 + $0x68] sm:$0xf]
      %v278 = vld [vmem:[%s236 + $0x6c] sm:$0xf]
      %v279 = vld [vmem:[%s236 + $0x70] sm:$0xf]
      %v280 = vld [vmem:[%s236 + $0x74] sm:$0xf]
      %v281 = vld [vmem:[%s236 + $0x78] sm:$0xf]
      %v282 = vld [vmem:[%s236 + $0x7c] sm:$0xf]
      %v283 = vld [vmem:[%s1] sm:$0x3]
      %v316 = vunpack.c.l.b16 %v251
      %v317 = vunpack.c.l.b16 %v252
      %v318 = vunpack.c.l.b16 %v253
      %v319 = vunpack.c.l.b16 %v254
      %v320 = vunpack.c.l.b16 %v255
      %v321 = vunpack.c.l.b16 %v256
      %v322 = vunpack.c.l.b16 %v257
      %v323 = vunpack.c.l.b16 %v258
      %v324 = vunpack.c.l.b16 %v259
      %v325 = vunpack.c.l.b16 %v260
      %v326 = vunpack.c.l.b16 %v261
      %v327 = vunpack.c.l.b16 %v262
      %v328 = vunpack.c.l.b16 %v263
      %v329 = vunpack.c.l.b16 %v264
      %v330 = vunpack.c.l.b16 %v265
      %v331 = vunpack.c.l.b16 %v266
      %v332 = vunpack.c.l.b16 %v267
      %v333 = vunpack.c.l.b16 %v268
      %v334 = vunpack.c.l.b16 %v269
      %v335 = vunpack.c.l.b16 %v270
      %v336 = vunpack.c.l.b16 %v271
      %v337 = vunpack.c.l.b16 %v272
      %v338 = vunpack.c.l.b16 %v273
      %v339 = vunpack.c.l.b16 %v274
      %v340 = vunpack.c.l.b16 %v275
      %v341 = vunpack.c.l.b16 %v276
      %v342 = vunpack.c.l.b16 %v277
      %v343 = vunpack.c.l.b16 %v278
      %v344 = vunpack.c.l.b16 %v279
      %v345 = vunpack.c.l.b16 %v280
      %v346 = vunpack.c.l.b16 %v281
      %v347 = vunpack.c.l.b16 %v282
      %v348 = vpack.c.b16 %v317, %v316
      %v349 = vpack.c.b16 %v319, %v318
      %v350 = vpack.c.b16 %v321, %v320
      %v351 = vpack.c.b16 %v323, %v322
      %v352 = vpack.c.b16 %v325, %v324
      %v353 = vpack.c.b16 %v327, %v326
      %v354 = vpack.c.b16 %v329, %v328
      %v355 = vpack.c.b16 %v331, %v330
      %v356 = vpack.c.b16 %v333, %v332
      %v357 = vpack.c.b16 %v335, %v334
      %v358 = vpack.c.b16 %v337, %v336
      %v359 = vpack.c.b16 %v339, %v338
      %v360 = vpack.c.b16 %v341, %v340
      %v361 = vpack.c.b16 %v343, %v342
      %v362 = vpack.c.b16 %v345, %v344
      %v363 = vpack.c.b16 %v347, %v346
      %vm364 = vcmask 31744
      %v366 = vsel %vm364, %v348, 0
      %v369 = vsel %vm364, %v349, 0
      %v372 = vsel %vm364, %v350, 0
      %v375 = vsel %vm364, %v351, 0
      %v378 = vsel %vm364, %v352, 0
      %v381 = vsel %vm364, %v353, 0
      %v384 = vsel %vm364, %v354, 0
      %v387 = vsel %vm364, %v355, 0
      %v390 = vsel %vm364, %v356, 0
      %v393 = vsel %vm364, %v357, 0
      %v396 = vsel %vm364, %v358, 0
      %v399 = vsel %vm364, %v359, 0
      %v402 = vsel %vm364, %v360, 0
      %v405 = vsel %vm364, %v361, 0
      %v408 = vsel %vm364, %v362, 0
      %v411 = vsel %vm364, %v363, 0
      %vm413 = vcmask 1041408
      %v415 = vsel %vm413, %v283, 0
      %417 = vmatprep.subr.bf16.mxu0 0
      %418 = vmatpush1.bf16.msra.mxu0 0
      %419 = vmatprep.subr.bf16.mxu0 0
      %420 = vmatpush1.bf16.msra.mxu0 0
      %421 = vmatprep.subr.bf16.mxu0 0
      %422 = vmatpush1.bf16.msra.mxu0 0
      %423 = vmatprep.subr.bf16.mxu0 0
      %424 = vmatpush1.bf16.msra.mxu0 0
      %425 = vmatprep.subr.bf16.mxu0 0
      %426 = vmatpush1.bf16.msra.mxu0 0
      %427 = vmatprep.subr.bf16.mxu0 0
      %428 = vmatpush1.bf16.msra.mxu0 0
      %429 = vmatprep.subr.bf16.mxu0 0
      %430 = vmatpush1.bf16.msra.mxu0 0
      %431 = vmatprep.subr.bf16.mxu0 0
      %432 = vmatpush1.bf16.msra.mxu0 %v415
      %433 = vmatprep.subr.bf16.mxu0 0
      %434 = vmatpush2.bf16.msra.mxu0 0
      %435 = vmatprep.subr.bf16.mxu0 0
      %436 = vmatpush2.bf16.msra.mxu0 0
      %437 = vmatprep.subr.bf16.mxu0 0
      %438 = vmatpush2.bf16.msra.mxu0 0
      %439 = vmatprep.subr.bf16.mxu0 0
      %440 = vmatpush2.bf16.msra.mxu0 0
      %441 = vmatprep.subr.bf16.mxu0 0
      %442 = vmatpush2.bf16.msra.mxu0 0
      %443 = vmatprep.subr.bf16.mxu0 0
      %444 = vmatpush2.bf16.msra.mxu0 0
      %445 = vmatprep.subr.bf16.mxu0 0
      %446 = vmatpush2.bf16.msra.mxu0 0
      %447 = vmatprep.subr.bf16.mxu0 0
      %448 = vmatpush2.bf16.msra.mxu0 0
      %449 = vmatprep.mubr.bf16.mxu0 0
      %450 = vmatmul.mubr.bf16.gmra.mxu0 %v366
      %v451 = vpop.f32.mrf.mxu0
      %v452 = vadd.f32 0.0, %v451
      %v453 = vpop.f32.mrf.mxu0
      %v454 = vpop.f32.mrf.mxu0
      %v455 = vadd.f32 0.0, %v454
      %v456 = vpop.f32.mrf.mxu0
      %457 = vmatprep.mubr.bf16.mxu0 0
      %458 = vmatmul.mubr.bf16.gmra.mxu0 %v369
      %v459 = vpop.f32.mrf.mxu0
      %v460 = vadd.f32 0.0, %v459
      %v461 = vpop.f32.mrf.mxu0
      %v462 = vpop.f32.mrf.mxu0
      %v463 = vadd.f32 0.0, %v462
      %v464 = vpop.f32.mrf.mxu0
      %465 = vmatprep.mubr.bf16.mxu0 0
      %466 = vmatmul.mubr.bf16.gmra.mxu0 %v372
      %v467 = vpop.f32.mrf.mxu0
      %v468 = vadd.f32 0.0, %v467
      %v469 = vpop.f32.mrf.mxu0
      %v470 = vpop.f32.mrf.mxu0
      %v471 = vadd.f32 0.0, %v470
      %v472 = vpop.f32.mrf.mxu0
      %473 = vmatprep.mubr.bf16.mxu0 0
      %474 = vmatmul.mubr.bf16.gmra.mxu0 %v375
      %v475 = vpop.f32.mrf.mxu0
      %v476 = vadd.f32 0.0, %v475
      %v477 = vpop.f32.mrf.mxu0
      %v478 = vpop.f32.mrf.mxu0
      %v479 = vadd.f32 0.0, %v478
      %v480 = vpop.f32.mrf.mxu0
      %481 = vmatprep.mubr.bf16.mxu0 0
      %482 = vmatmul.mubr.bf16.gmra.mxu0 %v378
      %v483 = vpop.f32.mrf.mxu0
      %v484 = vadd.f32 0.0, %v483
      %v485 = vpop.f32.mrf.mxu0
      %v486 = vpop.f32.mrf.mxu0
      %v487 = vadd.f32 0.0, %v486
      %v488 = vpop.f32.mrf.mxu0
      %489 = vmatprep.mubr.bf16.mxu0 0
      %490 = vmatmul.mubr.bf16.gmra.mxu0 %v381
      %v491 = vpop.f32.mrf.mxu0
      %v492 = vadd.f32 0.0, %v491
      %v493 = vpop.f32.mrf.mxu0
      %v494 = vpop.f32.mrf.mxu0
      %v495 = vadd.f32 0.0, %v494
      %v496 = vpop.f32.mrf.mxu0
      %497 = vmatprep.mubr.bf16.mxu0 0
      %498 = vmatmul.mubr.bf16.gmra.mxu0 %v384
      %v499 = vpop.f32.mrf.mxu0
      %v500 = vadd.f32 0.0, %v499
      %v501 = vpop.f32.mrf.mxu0
      %v502 = vpop.f32.mrf.mxu0
      %v503 = vadd.f32 0.0, %v502
      %v504 = vpop.f32.mrf.mxu0
      %505 = vmatprep.mubr.bf16.mxu0 0
      %506 = vmatmul.mubr.bf16.gmra.mxu0 %v387
      %v507 = vpop.f32.mrf.mxu0
      %v508 = vadd.f32 0.0, %v507
      %v509 = vpop.f32.mrf.mxu0
      %v510 = vpop.f32.mrf.mxu0
      %v511 = vadd.f32 0.0, %v510
      %v512 = vpop.f32.mrf.mxu0
      %513 = vmatprep.mubr.bf16.mxu0 0
      %514 = vmatmul.mubr.bf16.gmra.mxu0 %v390
      %v515 = vpop.f32.mrf.mxu0
      %v516 = vadd.f32 0.0, %v515
      %v517 = vpop.f32.mrf.mxu0
      %v518 = vpop.f32.mrf.mxu0
      %v519 = vadd.f32 0.0, %v518
      %v520 = vpop.f32.mrf.mxu0
      %521 = vmatprep.mubr.bf16.mxu0 0
      %522 = vmatmul.mubr.bf16.gmra.mxu0 %v393
      %v523 = vpop.f32.mrf.mxu0
      %v524 = vadd.f32 0.0, %v523
      %v525 = vpop.f32.mrf.mxu0
      %v526 = vpop.f32.mrf.mxu0
      %v527 = vadd.f32 0.0, %v526
      %v528 = vpop.f32.mrf.mxu0
      %529 = vmatprep.mubr.bf16.mxu0 0
      %530 = vmatmul.mubr.bf16.gmra.mxu0 %v396
      %v531 = vpop.f32.mrf.mxu0
      %v532 = vadd.f32 0.0, %v531
      %v533 = vpop.f32.mrf.mxu0
      %v534 = vpop.f32.mrf.mxu0
      %v535 = vadd.f32 0.0, %v534
      %v536 = vpop.f32.mrf.mxu0
      %537 = vmatprep.mubr.bf16.mxu0 0
      %538 = vmatmul.mubr.bf16.gmra.mxu0 %v399
      %v539 = vpop.f32.mrf.mxu0
      %v540 = vadd.f32 0.0, %v539
      %v541 = vpop.f32.mrf.mxu0
      %v542 = vpop.f32.mrf.mxu0
      %v543 = vadd.f32 0.0, %v542
      %v544 = vpop.f32.mrf.mxu0
      %545 = vmatprep.mubr.bf16.mxu0 0
      %546 = vmatmul.mubr.bf16.gmra.mxu0 %v402
      %v547 = vpop.f32.mrf.mxu0
      %v548 = vadd.f32 0.0, %v547
      %v549 = vpop.f32.mrf.mxu0
      %v550 = vpop.f32.mrf.mxu0
      %v551 = vadd.f32 0.0, %v550
      %v552 = vpop.f32.mrf.mxu0
      %553 = vmatprep.mubr.bf16.mxu0 0
      %554 = vmatmul.mubr.bf16.gmra.mxu0 %v405
      %v555 = vpop.f32.mrf.mxu0
      %v556 = vadd.f32 0.0, %v555
      %v557 = vpop.f32.mrf.mxu0
      %v558 = vpop.f32.mrf.mxu0
      %v559 = vadd.f32 0.0, %v558
      %v560 = vpop.f32.mrf.mxu0
      %561 = vmatprep.mubr.bf16.mxu0 0
      %562 = vmatmul.mubr.bf16.gmra.mxu0 %v408
      %v563 = vpop.f32.mrf.mxu0
      %v564 = vadd.f32 0.0, %v563
      %v565 = vpop.f32.mrf.mxu0
      %v566 = vpop.f32.mrf.mxu0
      %v567 = vadd.f32 0.0, %v566
      %v568 = vpop.f32.mrf.mxu0
      %569 = vmatprep.mubr.bf16.mxu0 0
      %570 = vmatmul.mubr.bf16.gmra.mxu0 %v411
      %v571 = vpop.f32.mrf.mxu0
      %v572 = vadd.f32 0.0, %v571
      %v573 = vpop.f32.mrf.mxu0
      %v574 = vpop.f32.mrf.mxu0
      %v575 = vadd.f32 0.0, %v574
      %v576 = vpop.f32.mrf.mxu0
      %577 = vdwg.mxu0
      %v578 = vld [vmem:[%s2] sm:$0x1]
      %v580 = vlaneseq
      %v581 = vshrl.u32 %v580, 7
      %v582 = vsub.s32 0, %v581
      %v583 = vrot.slane %v578, %v582
      %v585 = vmul.f32 %v452, %v583
      %v586 = vmul.f32 %v455, %v583
      %v587 = vmul.f32 %v460, %v583
      %v588 = vmul.f32 %v463, %v583
      %v589 = vmul.f32 %v468, %v583
      %v590 = vmul.f32 %v471, %v583
      %v591 = vmul.f32 %v476, %v583
      %v592 = vmul.f32 %v479, %v583
      %v593 = vmul.f32 %v484, %v583
      %v594 = vmul.f32 %v487, %v583
      %v595 = vmul.f32 %v492, %v583
      %v596 = vmul.f32 %v495, %v583
      %v597 = vmul.f32 %v500, %v583
      %v598 = vmul.f32 %v503, %v583
      %v599 = vmul.f32 %v508, %v583
      %v600 = vmul.f32 %v511, %v583
      %v601 = vmul.f32 %v516, %v583
      %v602 = vmul.f32 %v519, %v583
      %v603 = vmul.f32 %v524, %v583
      %v604 = vmul.f32 %v527, %v583
      %v605 = vmul.f32 %v532, %v583
      %v606 = vmul.f32 %v535, %v583
      %v607 = vmul.f32 %v540, %v583
      %v608 = vmul.f32 %v543, %v583
      %v609 = vmul.f32 %v548, %v583
      %v610 = vmul.f32 %v551, %v583
      %v611 = vmul.f32 %v556, %v583
      %v612 = vmul.f32 %v559, %v583
      %v613 = vmul.f32 %v564, %v583
      %v614 = vmul.f32 %v567, %v583
      %v615 = vmul.f32 %v572, %v583
      %v616 = vmul.f32 %v575, %v583
      %v617 = vld [vmem:[%s3] sm:$0x1]
      %v619 = vlaneseq
      %v620 = vshrl.u32 %v619, 7
      %v621 = vsub.s32 0, %v620
      %v622 = vrot.slane %v617, %v621
      %v624 = vadd.f32 %v585, %v622
      %v625 = vadd.f32 %v586, %v622
      %v626 = vadd.f32 %v587, %v622
      %v627 = vadd.f32 %v588, %v622
      %v628 = vadd.f32 %v589, %v622
      %v629 = vadd.f32 %v590, %v622
      %v630 = vadd.f32 %v591, %v622
      %v631 = vadd.f32 %v592, %v622
      %v632 = vadd.f32 %v593, %v622
      %v633 = vadd.f32 %v594, %v622
      %v634 = vadd.f32 %v595, %v622
      %v635 = vadd.f32 %v596, %v622
      %v636 = vadd.f32 %v597, %v622
      %v637 = vadd.f32 %v598, %v622
      %v638 = vadd.f32 %v599, %v622
      %v639 = vadd.f32 %v600, %v622
      %v640 = vadd.f32 %v601, %v622
      %v641 = vadd.f32 %v602, %v622
      %v642 = vadd.f32 %v603, %v622
      %v643 = vadd.f32 %v604, %v622
      %v644 = vadd.f32 %v605, %v622
      %v645 = vadd.f32 %v606, %v622
      %v646 = vadd.f32 %v607, %v622
      %v647 = vadd.f32 %v608, %v622
      %v648 = vadd.f32 %v609, %v622
      %v649 = vadd.f32 %v610, %v622
      %v650 = vadd.f32 %v611, %v622
      %v651 = vadd.f32 %v612, %v622
      %v652 = vadd.f32 %v613, %v622
      %v653 = vadd.f32 %v614, %v622
      %v654 = vadd.f32 %v615, %v622
      %v655 = vadd.f32 %v616, %v622
      %v656 = vld [vmem:[%s242] sm:$0xf]
      %v657 = vld [vmem:[%s242 + $0x4] sm:$0xf]
      %v658 = vld [vmem:[%s242 + $0x8] sm:$0xf]
      %v659 = vld [vmem:[%s242 + $0xc] sm:$0xf]
      %v660 = vld [vmem:[%s242 + $0x10] sm:$0xf]
      %v661 = vld [vmem:[%s242 + $0x14] sm:$0xf]
      %v662 = vld [vmem:[%s242 + $0x18] sm:$0xf]
      %v663 = vld [vmem:[%s242 + $0x1c] sm:$0xf]
      %v664 = vld [vmem:[%s242 + $0x20] sm:$0xf]
      %v665 = vld [vmem:[%s242 + $0x24] sm:$0xf]
      %v666 = vld [vmem:[%s242 + $0x28] sm:$0xf]
      %v667 = vld [vmem:[%s242 + $0x2c] sm:$0xf]
      %v668 = vld [vmem:[%s242 + $0x30] sm:$0xf]
      %v669 = vld [vmem:[%s242 + $0x34] sm:$0xf]
      %v670 = vld [vmem:[%s242 + $0x38] sm:$0xf]
      %v671 = vld [vmem:[%s242 + $0x3c] sm:$0xf]
      %v672 = vld [vmem:[%s242 + $0x40] sm:$0xf]
      %v673 = vld [vmem:[%s242 + $0x44] sm:$0xf]
      %v674 = vld [vmem:[%s242 + $0x48] sm:$0xf]
      %v675 = vld [vmem:[%s242 + $0x4c] sm:$0xf]
      %v676 = vld [vmem:[%s242 + $0x50] sm:$0xf]
      %v677 = vld [vmem:[%s242 + $0x54] sm:$0xf]
      %v678 = vld [vmem:[%s242 + $0x58] sm:$0xf]
      %v679 = vld [vmem:[%s242 + $0x5c] sm:$0xf]
      %v680 = vld [vmem:[%s242 + $0x60] sm:$0xf]
      %v681 = vld [vmem:[%s242 + $0x64] sm:$0xf]
      %v682 = vld [vmem:[%s242 + $0x68] sm:$0xf]
      %v683 = vld [vmem:[%s242 + $0x6c] sm:$0xf]
      %v684 = vld [vmem:[%s242 + $0x70] sm:$0xf]
      %v685 = vld [vmem:[%s242 + $0x74] sm:$0xf]
      %v686 = vld [vmem:[%s242 + $0x78] sm:$0xf]
      %v687 = vld [vmem:[%s242 + $0x7c] sm:$0xf]
      %v688 = vunpack.c.l.bf16 %v656
      %v689 = vunpack.c.l.bf16 %v657
      %v690 = vunpack.c.l.bf16 %v658
      %v691 = vunpack.c.l.bf16 %v659
      %v692 = vunpack.c.l.bf16 %v660
      %v693 = vunpack.c.l.bf16 %v661
      %v694 = vunpack.c.l.bf16 %v662
      %v695 = vunpack.c.l.bf16 %v663
      %v696 = vunpack.c.l.bf16 %v664
      %v697 = vunpack.c.l.bf16 %v665
      %v698 = vunpack.c.l.bf16 %v666
      %v699 = vunpack.c.l.bf16 %v667
      %v700 = vunpack.c.l.bf16 %v668
      %v701 = vunpack.c.l.bf16 %v669
      %v702 = vunpack.c.l.bf16 %v670
      %v703 = vunpack.c.l.bf16 %v671
      %v704 = vunpack.c.l.bf16 %v672
      %v705 = vunpack.c.l.bf16 %v673
      %v706 = vunpack.c.l.bf16 %v674
      %v707 = vunpack.c.l.bf16 %v675
      %v708 = vunpack.c.l.bf16 %v676
      %v709 = vunpack.c.l.bf16 %v677
      %v710 = vunpack.c.l.bf16 %v678
      %v711 = vunpack.c.l.bf16 %v679
      %v712 = vunpack.c.l.bf16 %v680
      %v713 = vunpack.c.l.bf16 %v681
      %v714 = vunpack.c.l.bf16 %v682
      %v715 = vunpack.c.l.bf16 %v683
      %v716 = vunpack.c.l.bf16 %v684
      %v717 = vunpack.c.l.bf16 %v685
      %v718 = vunpack.c.l.bf16 %v686
      %v719 = vunpack.c.l.bf16 %v687
      %v720 = vadd.f32 %v624, %v688
      %v721 = vadd.f32 %v625, %v689
      %v722 = vadd.f32 %v626, %v690
      %v723 = vadd.f32 %v627, %v691
      %v724 = vadd.f32 %v628, %v692
      %v725 = vadd.f32 %v629, %v693
      %v726 = vadd.f32 %v630, %v694
      %v727 = vadd.f32 %v631, %v695
      %v728 = vadd.f32 %v632, %v696
      %v729 = vadd.f32 %v633, %v697
      %v730 = vadd.f32 %v634, %v698
      %v731 = vadd.f32 %v635, %v699
      %v732 = vadd.f32 %v636, %v700
      %v733 = vadd.f32 %v637, %v701
      %v734 = vadd.f32 %v638, %v702
      %v735 = vadd.f32 %v639, %v703
      %v736 = vadd.f32 %v640, %v704
      %v737 = vadd.f32 %v641, %v705
      %v738 = vadd.f32 %v642, %v706
      %v739 = vadd.f32 %v643, %v707
      %v740 = vadd.f32 %v644, %v708
      %v741 = vadd.f32 %v645, %v709
      %v742 = vadd.f32 %v646, %v710
      %v743 = vadd.f32 %v647, %v711
      %v744 = vadd.f32 %v648, %v712
      %v745 = vadd.f32 %v649, %v713
      %v746 = vadd.f32 %v650, %v714
      %v747 = vadd.f32 %v651, %v715
      %v748 = vadd.f32 %v652, %v716
      %v749 = vadd.f32 %v653, %v717
      %v750 = vadd.f32 %v654, %v718
      %v751 = vadd.f32 %v655, %v719
      %vm752 = vcmp.ge.f32.partialorder %v720, 0.0
      %vm753 = vcmp.ge.f32.partialorder %v721, 0.0
      %vm754 = vcmp.ge.f32.partialorder %v722, 0.0
      %vm755 = vcmp.ge.f32.partialorder %v723, 0.0
      %vm756 = vcmp.ge.f32.partialorder %v724, 0.0
      %vm757 = vcmp.ge.f32.partialorder %v725, 0.0
      %vm758 = vcmp.ge.f32.partialorder %v726, 0.0
      %vm759 = vcmp.ge.f32.partialorder %v727, 0.0
      %vm760 = vcmp.ge.f32.partialorder %v728, 0.0
      %vm761 = vcmp.ge.f32.partialorder %v729, 0.0
      %vm762 = vcmp.ge.f32.partialorder %v730, 0.0
      %vm763 = vcmp.ge.f32.partialorder %v731, 0.0
      %vm764 = vcmp.ge.f32.partialorder %v732, 0.0
      %vm765 = vcmp.ge.f32.partialorder %v733, 0.0
      %vm766 = vcmp.ge.f32.partialorder %v734, 0.0
      %vm767 = vcmp.ge.f32.partialorder %v735, 0.0
      %vm768 = vcmp.ge.f32.partialorder %v736, 0.0
      %vm769 = vcmp.ge.f32.partialorder %v737, 0.0
      %vm770 = vcmp.ge.f32.partialorder %v738, 0.0
      %vm771 = vcmp.ge.f32.partialorder %v739, 0.0
      %vm772 = vcmp.ge.f32.partialorder %v740, 0.0
      %vm773 = vcmp.ge.f32.partialorder %v741, 0.0
      %vm774 = vcmp.ge.f32.partialorder %v742, 0.0
      %vm775 = vcmp.ge.f32.partialorder %v743, 0.0
      %vm776 = vcmp.ge.f32.partialorder %v744, 0.0
      %vm777 = vcmp.ge.f32.partialorder %v745, 0.0
      %vm778 = vcmp.ge.f32.partialorder %v746, 0.0
      %vm779 = vcmp.ge.f32.partialorder %v747, 0.0
      %vm780 = vcmp.ge.f32.partialorder %v748, 0.0
      %vm781 = vcmp.ge.f32.partialorder %v749, 0.0
      %vm782 = vcmp.ge.f32.partialorder %v750, 0.0
      %vm783 = vcmp.ge.f32.partialorder %v751, 0.0
      %v784 = vmul.f32 %v720, 0.25
      %v785 = vmul.f32 %v721, 0.25
      %v786 = vmul.f32 %v722, 0.25
      %v787 = vmul.f32 %v723, 0.25
      %v788 = vmul.f32 %v724, 0.25
      %v789 = vmul.f32 %v725, 0.25
      %v790 = vmul.f32 %v726, 0.25
      %v791 = vmul.f32 %v727, 0.25
      %v792 = vmul.f32 %v728, 0.25
      %v793 = vmul.f32 %v729, 0.25
      %v794 = vmul.f32 %v730, 0.25
      %v795 = vmul.f32 %v731, 0.25
      %v796 = vmul.f32 %v732, 0.25
      %v797 = vmul.f32 %v733, 0.25
      %v798 = vmul.f32 %v734, 0.25
      %v799 = vmul.f32 %v735, 0.25
      %v800 = vmul.f32 %v736, 0.25
      %v801 = vmul.f32 %v737, 0.25
      %v802 = vmul.f32 %v738, 0.25
      %v803 = vmul.f32 %v739, 0.25
      %v804 = vmul.f32 %v740, 0.25
      %v805 = vmul.f32 %v741, 0.25
      %v806 = vmul.f32 %v742, 0.25
      %v807 = vmul.f32 %v743, 0.25
      %v808 = vmul.f32 %v744, 0.25
      %v809 = vmul.f32 %v745, 0.25
      %v810 = vmul.f32 %v746, 0.25
      %v811 = vmul.f32 %v747, 0.25
      %v812 = vmul.f32 %v748, 0.25
      %v813 = vmul.f32 %v749, 0.25
      %v814 = vmul.f32 %v750, 0.25
      %v815 = vmul.f32 %v751, 0.25
      %v816 = vsel %vm752, %v720, %v784
      %v817 = vsel %vm753, %v721, %v785
      %v818 = vsel %vm754, %v722, %v786
      %v819 = vsel %vm755, %v723, %v787
      %v820 = vsel %vm756, %v724, %v788
      %v821 = vsel %vm757, %v725, %v789
      %v822 = vsel %vm758, %v726, %v790
      %v823 = vsel %vm759, %v727, %v791
      %v824 = vsel %vm760, %v728, %v792
      %v825 = vsel %vm761, %v729, %v793
      %v826 = vsel %vm762, %v730, %v794
      %v827 = vsel %vm763, %v731, %v795
      %v828 = vsel %vm764, %v732, %v796
      %v829 = vsel %vm765, %v733, %v797
      %v830 = vsel %vm766, %v734, %v798
      %v831 = vsel %vm767, %v735, %v799
      %v832 = vsel %vm768, %v736, %v800
      %v833 = vsel %vm769, %v737, %v801
      %v834 = vsel %vm770, %v738, %v802
      %v835 = vsel %vm771, %v739, %v803
      %v836 = vsel %vm772, %v740, %v804
      %v837 = vsel %vm773, %v741, %v805
      %v838 = vsel %vm774, %v742, %v806
      %v839 = vsel %vm775, %v743, %v807
      %v840 = vsel %vm776, %v744, %v808
      %v841 = vsel %vm777, %v745, %v809
      %v842 = vsel %vm778, %v746, %v810
      %v843 = vsel %vm779, %v747, %v811
      %v844 = vsel %vm780, %v748, %v812
      %v845 = vsel %vm781, %v749, %v813
      %v846 = vsel %vm782, %v750, %v814
      %v847 = vsel %vm783, %v751, %v815
      %v848 = vpack.c.bf16 %v817, %v816
      %v849 = vpack.c.bf16 %v819, %v818
      %v850 = vpack.c.bf16 %v821, %v820
      %v851 = vpack.c.bf16 %v823, %v822
      %v852 = vpack.c.bf16 %v825, %v824
      %v853 = vpack.c.bf16 %v827, %v826
      %v854 = vpack.c.bf16 %v829, %v828
      %v855 = vpack.c.bf16 %v831, %v830
      %v856 = vpack.c.bf16 %v833, %v832
      %v857 = vpack.c.bf16 %v835, %v834
      %v858 = vpack.c.bf16 %v837, %v836
      %v859 = vpack.c.bf16 %v839, %v838
      %v860 = vpack.c.bf16 %v841, %v840
      %v861 = vpack.c.bf16 %v843, %v842
      %v862 = vpack.c.bf16 %v845, %v844
      %v863 = vpack.c.bf16 %v847, %v846
      %v880 = vunpack.c.l.b16 %v848
      %v881 = vunpack.c.h.b16 %v848
      %v882 = vunpack.c.l.b16 %v849
      %v883 = vunpack.c.h.b16 %v849
      %v884 = vunpack.c.l.b16 %v850
      %v885 = vunpack.c.h.b16 %v850
      %v886 = vunpack.c.l.b16 %v851
      %v887 = vunpack.c.h.b16 %v851
      %v888 = vunpack.c.l.b16 %v852
      %v889 = vunpack.c.h.b16 %v852
      %v890 = vunpack.c.l.b16 %v853
      %v891 = vunpack.c.h.b16 %v853
      %v892 = vunpack.c.l.b16 %v854
      %v893 = vunpack.c.h.b16 %v854
      %v894 = vunpack.c.l.b16 %v855
      %v895 = vunpack.c.h.b16 %v855
      %v896 = vunpack.c.l.b16 %v856
      %v897 = vunpack.c.h.b16 %v856
      %v898 = vunpack.c.l.b16 %v857
      %v899 = vunpack.c.h.b16 %v857
      %v900 = vunpack.c.l.b16 %v858
      %v901 = vunpack.c.h.b16 %v858
      %v902 = vunpack.c.l.b16 %v859
      %v903 = vunpack.c.h.b16 %v859
      %v904 = vunpack.c.l.b16 %v860
      %v905 = vunpack.c.h.b16 %v860
      %v906 = vunpack.c.l.b16 %v861
      %v907 = vunpack.c.h.b16 %v861
      %v908 = vunpack.c.l.b16 %v862
      %v909 = vunpack.c.h.b16 %v862
      %v910 = vunpack.c.l.b16 %v863
      %v911 = vunpack.c.h.b16 %v863
      %v912 = vpack.c.b16 %v880, %v880
      %v913 = vpack.c.b16 %v881, %v881
      %v914 = vpack.c.b16 %v882, %v882
      %v915 = vpack.c.b16 %v883, %v883
      %v916 = vpack.c.b16 %v884, %v884
      %v917 = vpack.c.b16 %v885, %v885
      %v918 = vpack.c.b16 %v886, %v886
      %v919 = vpack.c.b16 %v887, %v887
      %v920 = vpack.c.b16 %v888, %v888
      %v921 = vpack.c.b16 %v889, %v889
      %v922 = vpack.c.b16 %v890, %v890
      %v923 = vpack.c.b16 %v891, %v891
      %v924 = vpack.c.b16 %v892, %v892
      %v925 = vpack.c.b16 %v893, %v893
      %v926 = vpack.c.b16 %v894, %v894
      %v927 = vpack.c.b16 %v895, %v895
      %v928 = vpack.c.b16 %v896, %v896
      %v929 = vpack.c.b16 %v897, %v897
      %v930 = vpack.c.b16 %v898, %v898
      %v931 = vpack.c.b16 %v899, %v899
      %v932 = vpack.c.b16 %v900, %v900
      %v933 = vpack.c.b16 %v901, %v901
      %v934 = vpack.c.b16 %v902, %v902
      %v935 = vpack.c.b16 %v903, %v903
      %v936 = vpack.c.b16 %v904, %v904
      %v937 = vpack.c.b16 %v905, %v905
      %v938 = vpack.c.b16 %v906, %v906
      %v939 = vpack.c.b16 %v907, %v907
      %v940 = vpack.c.b16 %v908, %v908
      %v941 = vpack.c.b16 %v909, %v909
      %v942 = vpack.c.b16 %v910, %v910
      %v943 = vpack.c.b16 %v911, %v911
      %vm976 = vcmask 125952
      %977 = vst.msk [vmem:[%s248] sm:$0xf] %vm976, %v912
      %978 = vst.msk [vmem:[%s248 + $0x4] sm:$0xf] %vm976, %v913
      %979 = vst.msk [vmem:[%s248 + $0x8] sm:$0xf] %vm976, %v914
      %980 = vst.msk [vmem:[%s248 + $0xc] sm:$0xf] %vm976, %v915
      %981 = vst.msk [vmem:[%s248 + $0x10] sm:$0xf] %vm976, %v916
      %982 = vst.msk [vmem:[%s248 + $0x14] sm:$0xf] %vm976, %v917
      %983 = vst.msk [vmem:[%s248 + $0x18] sm:$0xf] %vm976, %v918
      %984 = vst.msk [vmem:[%s248 + $0x1c] sm:$0xf] %vm976, %v919
      %985 = vst.msk [vmem:[%s248 + $0x20] sm:$0xf] %vm976, %v920
      %986 = vst.msk [vmem:[%s248 + $0x24] sm:$0xf] %vm976, %v921
      %987 = vst.msk [vmem:[%s248 + $0x28] sm:$0xf] %vm976, %v922
      %988 = vst.msk [vmem:[%s248 + $0x2c] sm:$0xf] %vm976, %v923
      %989 = vst.msk [vmem:[%s248 + $0x30] sm:$0xf] %vm976, %v924
      %990 = vst.msk [vmem:[%s248 + $0x34] sm:$0xf] %vm976, %v925
      %991 = vst.msk [vmem:[%s248 + $0x38] sm:$0xf] %vm976, %v926
      %992 = vst.msk [vmem:[%s248 + $0x3c] sm:$0xf] %vm976, %v927
      %993 = vst.msk [vmem:[%s248 + $0x40] sm:$0xf] %vm976, %v928
      %994 = vst.msk [vmem:[%s248 + $0x44] sm:$0xf] %vm976, %v929
      %995 = vst.msk [vmem:[%s248 + $0x48] sm:$0xf] %vm976, %v930
      %996 = vst.msk [vmem:[%s248 + $0x4c] sm:$0xf] %vm976, %v931
      %997 = vst.msk [vmem:[%s248 + $0x50] sm:$0xf] %vm976, %v932
      %998 = vst.msk [vmem:[%s248 + $0x54] sm:$0xf] %vm976, %v933
      %999 = vst.msk [vmem:[%s248 + $0x58] sm:$0xf] %vm976, %v934
      %1000 = vst.msk [vmem:[%s248 + $0x5c] sm:$0xf] %vm976, %v935
      %1001 = vst.msk [vmem:[%s248 + $0x60] sm:$0xf] %vm976, %v936
      %1002 = vst.msk [vmem:[%s248 + $0x64] sm:$0xf] %vm976, %v937
      %1003 = vst.msk [vmem:[%s248 + $0x68] sm:$0xf] %vm976, %v938
      %1004 = vst.msk [vmem:[%s248 + $0x6c] sm:$0xf] %vm976, %v939
      %1005 = vst.msk [vmem:[%s248 + $0x70] sm:$0xf] %vm976, %v940
      %1006 = vst.msk [vmem:[%s248 + $0x74] sm:$0xf] %vm976, %v941
      %1007 = vst.msk [vmem:[%s248 + $0x78] sm:$0xf] %vm976, %v942
      %1008 = vst.msk [vmem:[%s248 + $0x7c] sm:$0xf] %vm976, %v943
      %s1009 = smul.u32 32, %s16
      %p1010 = scmp.lt.s32.totalorder %s1009, 63
      %s1011 = scalar_select %p1010, %s1009, 63
      %s1012 = smul.addr %s1011, 4
      %s1013 = scalar_lea.vmem %s5, %s1012
      // Predicated region
      $region41: #{enet_forward.171} parent=39 // pred_check
        %p1014 = pneg %p149
      $region42: #{enet_forward.171} parent=39 // pred_check_branch
        %1016 = sbr.rel (%p1014) target = $region44
      $region43: #{enet_forward.171} parent=39 // pred_region
        %s1017 = smul.u32 32, %s16
      $region44: #{enet_forward.171} parent=39 // pred_fallthru
        _
    $region40: #{enet_forward.171} parent=5 // pred_fallthru
      _
    %p1018 = scmp.le.s32.totalorder 2, %s11
    // Predicated region
    $region45: #{enet_forward.171} parent=5 // pred_check
      %p1019 = pneg %p1018
    $region46: #{enet_forward.171} parent=5 // pred_check_branch
      %1021 = sbr.rel (%p1019) target = $region48
    $region47: #{enet_forward.171} parent=5 // pred_region
      %s1022 = ssub.s32 %s11, 2
      // Predicated region
      $region49: #{enet_forward.171} parent=47 // pred_check
        %p1023 = pneg %p155
      $region50: #{enet_forward.171} parent=47 // pred_check_branch
        %1025 = sbr.rel (%p1023) target = $region52
      $region51: #{enet_forward.171} parent=47 // pred_region
        %s1026 = smul.u32 32, %s17
        %p1027 = scmp.lt.s32.totalorder %s1026, 63
        %s1028 = scalar_select %p1027, %s1026, 63
        %s1029 = smul.addr %s1028, 4
        %s1030 = scalar_lea.vmem %s5, %s1029
      $region52: #{enet_forward.171} parent=47 // pred_fallthru
        _
    $region48: #{enet_forward.171} parent=5 // pred_fallthru
      _
  $region6: #{enet_forward.171} parent=0 // loop_footer
    %s15 = sadd.s32 1, %s11
  $region7: #{enet_forward.171} parent=0 // loop_footer_branch
    %10 = sbr.rel target = $region3
  $region8: #{enet_forward.171} parent=0 // loop_exit
    _

// kernel: enet_forward.172
$region0: #{enet_forward.172}
  #allocation0 [shape = 'u32[]', space=smem, size = 0x4, offset = 0x4, fixed_abs, tag = 'smem constant byte address 0x4 - core index']
  #allocation1 [shape = 'u32[144,128]{1,0:T(1,128)}', space=vmem, size = 0x12000, scoped, tag = 'internal scratch']
  %s0 = inlined_call_operand.vmem [shape: bf16[512,16], index: 0, kind: input, shape index: {}]
  %s1 = inlined_call_operand.vmem [shape: bf16[16,4], index: 1, kind: input, shape index: {}]
  %s2 = inlined_call_operand.vmem [shape: f32[1,4], index: 2, kind: input, shape index: {}]
  %s3 = inlined_call_operand.vmem [shape: f32[1,4], index: 3, kind: input, shape index: {}]
  %s4 = inlined_call_operand.vmem [shape: bf16[512,4], index: 4, kind: output, shape index: {}]
  %s5 = sld [smem:[#allocation0]]
  $region49: #{enet_forward.172} parent=0
    _
  %s7 = ssub.s32 1, %s5
  %s8 = scalar_select 0, %s7, %s5
  loop: start=0, step=1, limit=4
  $region2: #{enet_forward.172} parent=0 // loop_pre_header
    _
  $region3: #{enet_forward.172} parent=0 // loop_header
    %s10 = sphi 0, %s14
    %p11 = scmp.ge.s32.totalorder %s10, 4
    %s20 = sphi 0, %s22
    %s23 = sphi 0, %s20
    %s24 = sphi 0, %s23
    %s40 = sphi 0, %s24
    %s44 = sphi 0, %s44
    %s46 = sphi 0, %s44
    %s47 = sphi 0, %s46
    %s61 = sphi 0, %s47
    %s65 = sphi 0, %s65
    %s67 = sphi 0, %s65
    %s68 = sphi 0, %s67
    %s82 = sphi 0, %s68
    %s86 = sphi 0, %s86
    %s88 = sphi 0, %s86
    %s89 = sphi 0, %s88
    %s103 = sphi 0, %s89
    %s109 = sphi 0, %s111
    %s112 = sphi 0, %s109
    %s113 = sphi 0, %s112
    %s129 = sphi 0, %s113
  $region4: #{enet_forward.172} parent=0 // loop_header_branch
    %13 = sbr.rel (%p11) target = $region8
  $region5: #{enet_forward.172} parent=0 // loop_body
    %s15 = ssub.s32 %s10, 1
    %s16 = ssub.s32 %s10, 2
    %s17 = sadd.s32 %s10, 1
    %s18 = ssub.s32 %s10, %s17
    %p19 = scmp.eq.s32.totalorder %s18, 0
    %s21 = sadd.s32 %s20, 1
    %s22 = scalar_select %p19, %s20, %s21
    %p25 = pneg %p19
    %p26 = scmp.eq.s32.totalorder %s10, 1
    %p27 = por %p25, %p26
    %p28 = scmp.ne.s32.totalorder %s20, %s23
    %p29 = scmp.eq.s32.totalorder %s10, 0
    %p30 = por %p28, %p29
    %p31 = scmp.ne.s32.totalorder %s20, %s23
    %p32 = scmp.eq.s32.totalorder %s15, 1
    %p33 = por %p31, %p32
    %p34 = scmp.ne.s32.totalorder %s23, %s24
    %p35 = scmp.eq.s32.totalorder %s15, 0
    %p36 = por %p34, %p35
    %p37 = scmp.ne.s32.totalorder %s23, %s24
    %p38 = scmp.eq.s32.totalorder %s16, 1
    %p39 = por %p37, %p38
    %p41 = scmp.ne.s32.totalorder %s24, %s40
    %p42 = scmp.eq.s32.totalorder %s16, 0
    %p43 = por %p41, %p42
    %s45 = sadd.s32 %s44, 1
    %p48 = scmp.eq.s32.totalorder %s10, 1
    %p49 = scmp.ne.s32.totalorder %s44, %s46
    %p50 = scmp.eq.s32.totalorder %s10, 0
    %p51 = por %p49, %p50
    %p52 = scmp.ne.s32.totalorder %s44, %s46
    %p53 = scmp.eq.s32.totalorder %s15, 1
    %p54 = por %p52, %p53
    %p55 = scmp.ne.s32.totalorder %s46, %s47
    %p56 = scmp.eq.s32.totalorder %s15, 0
    %p57 = por %p55, %p56
    %p58 = scmp.ne.s32.totalorder %s46, %s47
    %p59 = scmp.eq.s32.totalorder %s16, 1
    %p60 = por %p58, %p59
    %p62 = scmp.ne.s32.totalorder %s47, %s61
    %p63 = scmp.eq.s32.totalorder %s16, 0
    %p64 = por %p62, %p63
    %s66 = sadd.s32 %s65, 1
    %p69 = scmp.eq.s32.totalorder %s10, 1
    %p70 = scmp.ne.s32.totalorder %s65, %s67
    %p71 = scmp.eq.s32.totalorder %s10, 0
    %p72 = por %p70, %p71
    %p73 = scmp.ne.s32.totalorder %s65, %s67
    %p74 = scmp.eq.s32.totalorder %s15, 1
    %p75 = por %p73, %p74
    %p76 = scmp.ne.s32.totalorder %s67, %s68
    %p77 = scmp.eq.s32.totalorder %s15, 0
    %p78 = por %p76, %p77
    %p79 = scmp.ne.s32.totalorder %s67, %s68
    %p80 = scmp.eq.s32.totalorder %s16, 1
    %p81 = por %p79, %p80
    %p83 = scmp.ne.s32.totalorder %s68, %s82
    %p84 = scmp.eq.s32.totalorder %s16, 0
    %p85 = por %p83, %p84
    %s87 = sadd.s32 %s86, 1
    %p90 = scmp.eq.s32.totalorder %s10, 1
    %p91 = scmp.ne.s32.totalorder %s86, %s88
    %p92 = scmp.eq.s32.totalorder %s10, 0
    %p93 = por %p91, %p92
    %p94 = scmp.ne.s32.totalorder %s86, %s88
    %p95 = scmp.eq.s32.totalorder %s15, 1
    %p96 = por %p94, %p95
    %p97 = scmp.ne.s32.totalorder %s88, %s89
    %p98 = scmp.eq.s32.totalorder %s15, 0
    %p99 = por %p97, %p98
    %p100 = scmp.ne.s32.totalorder %s88, %s89
    %p101 = scmp.eq.s32.totalorder %s16, 1
    %p102 = por %p100, %p101
    %p104 = scmp.ne.s32.totalorder %s89, %s103
    %p105 = scmp.eq.s32.totalorder %s16, 0
    %p106 = por %p104, %p105
    %s107 = ssub.s32 %s10, %s17
    %p108 = scmp.eq.s32.totalorder %s107, 0
    %s110 = sadd.s32 %s109, 1
    %s111 = scalar_select %p108, %s109, %s110
    %p114 = pneg %p108
    %p115 = scmp.eq.s32.totalorder %s10, 1
    %p116 = por %p114, %p115
    %p117 = scmp.ne.s32.totalorder %s109, %s112
    %p118 = scmp.eq.s32.totalorder %s10, 0
    %p119 = por %p117, %p118
    %p120 = scmp.ne.s32.totalorder %s109, %s112
    %p121 = scmp.eq.s32.totalorder %s15, 1
    %p122 = por %p120, %p121
    %p123 = scmp.ne.s32.totalorder %s112, %s113
    %p124 = scmp.eq.s32.totalorder %s15, 0
    %p125 = por %p123, %p124
    %p126 = scmp.ne.s32.totalorder %s112, %s113
    %p127 = scmp.eq.s32.totalorder %s16, 1
    %p128 = por %p126, %p127
    %p130 = scmp.ne.s32.totalorder %s113, %s129
    %p131 = scmp.eq.s32.totalorder %s16, 0
    %p132 = por %p130, %p131
    %p133 = scmp.le.s32.totalorder 1, %s10
    %p134 = scmp.lt.s32.totalorder %s10, 3
    %p135 = pnand %p133, %p134
    %p136 = pneg %p135
    // Predicated region
    $region9: #{enet_forward.172} parent=5 // pred_check
      _
    $region10: #{enet_forward.172} parent=5 // pred_check_branch
      %138 = sbr.rel (%p135) target = $region12
    $region11: #{enet_forward.172} parent=5 // pred_region
      %s139 = ssub.s32 %s10, 1
      // Predicated region
      $region13: #{enet_forward.172} parent=11 // pred_check
        %p140 = pneg %p57
      $region14: #{enet_forward.172} parent=11 // pred_check_branch
        %142 = sbr.rel (%p140) target = $region16
      $region15: #{enet_forward.172} parent=11 // pred_region
        _
      $region16: #{enet_forward.172} parent=11 // pred_fallthru
        _
      // Predicated region
      $region17: #{enet_forward.172} parent=11 // pred_check
        %p143 = pneg %p78
      $region18: #{enet_forward.172} parent=11 // pred_check_branch
        %145 = sbr.rel (%p143) target = $region20
      $region19: #{enet_forward.172} parent=11 // pred_region
        _
      $region20: #{enet_forward.172} parent=11 // pred_fallthru
        _
      // Predicated region
      $region21: #{enet_forward.172} parent=11 // pred_check
        %p146 = pneg %p99
      $region22: #{enet_forward.172} parent=11 // pred_check_branch
        %148 = sbr.rel (%p146) target = $region24
      $region23: #{enet_forward.172} parent=11 // pred_region
        _
      $region24: #{enet_forward.172} parent=11 // pred_fallthru
        _
    $region12: #{enet_forward.172} parent=5 // pred_fallthru
      _
    %p149 = scmp.lt.s32.totalorder %s10, 2
    // Predicated region
    $region25: #{enet_forward.172} parent=5 // pred_check
      %p150 = pneg %p149
    $region26: #{enet_forward.172} parent=5 // pred_check_branch
      %152 = sbr.rel (%p150) target = $region28
    $region27: #{enet_forward.172} parent=5 // pred_region
      // Predicated region
      $region29: #{enet_forward.172} parent=27 // pred_check
        %p153 = pneg %p30
      $region30: #{enet_forward.172} parent=27 // pred_check_branch
        %155 = sbr.rel (%p153) target = $region32
      $region31: #{enet_forward.172} parent=27 // pred_region
        %s156 = smul.u32 32, %s10
        %p157 = scmp.lt.s32.totalorder %s156, 63
        %s158 = scalar_select %p157, %s156, 63
        %s159 = smul.addr %s158, 4
        %s160 = scalar_lea.vmem %s0, %s159
        %s161 = smul.u32 32, %s10
      $region32: #{enet_forward.172} parent=27 // pred_fallthru
        _
    $region28: #{enet_forward.172} parent=5 // pred_fallthru
      _
    %p162 = scmp.le.s32.totalorder 1, %s10
    %p163 = scmp.lt.s32.totalorder %s10, 3
    %p164 = pnand %p162, %p163
    %p165 = pneg %p164
    // Predicated region
    $region33: #{enet_forward.172} parent=5 // pred_check
      _
    $region34: #{enet_forward.172} parent=5 // pred_check_branch
      %167 = sbr.rel (%p164) target = $region36
    $region35: #{enet_forward.172} parent=5 // pred_region
      %s168 = ssub.s32 %s10, 1
      %s169 = smul.u32 32, %s15
      %p170 = scmp.lt.s32.totalorder %s169, 63
      %s171 = scalar_select %p170, %s169, 63
      %s172 = smul.addr %s171, 4
      %s173 = scalar_lea.vmem %s0, %s172
      %p174 = pneg %p36
      %p175 = pneg %p33
      %p176 = pneg %p57
      %p177 = pneg %p54
      %p178 = pneg %p78
      %p179 = pneg %p75
      %p180 = pneg %p99
      %p181 = pneg %p96
      %p182 = pneg %p125
      %p183 = pneg %p122
      %s184 = smul.u32 32, %s15
      %p185 = scmp.lt.s32.totalorder %s184, 63
      %s186 = scalar_select %p185, %s184, 63
      %s187 = smul.addr %s186, 4
      %s188 = scalar_lea.vmem %s4, %s187
      %s189 = smul.u32 32, %s15
      %p190 = scmp.lt.s32.totalorder %s189, 63
      %s191 = scalar_select %p190, %s189, 63
      %s192 = smul.addr %s191, 4
      %s193 = scalar_lea.vmem %s0, %s192
      %s194 = smul.u32 32, %s15
      %s195 = smul.u32 32, %s15
      %p196 = scmp.lt.s32.totalorder %s195, 63
      %s197 = scalar_select %p196, %s195, 63
      %s198 = smul.addr %s197, 4
      %s199 = scalar_lea.vmem %s4, %s198
      %s200 = smul.u32 32, %s15
      %v202 = vld [vmem:[%s193] sm:$0xf]
      %v203 = vld [vmem:[%s193 + $0x4] sm:$0xf]
      %v204 = vld [vmem:[%s193 + $0x8] sm:$0xf]
      %v205 = vld [vmem:[%s193 + $0xc] sm:$0xf]
      %v206 = vld [vmem:[%s193 + $0x10] sm:$0xf]
      %v207 = vld [vmem:[%s193 + $0x14] sm:$0xf]
      %v208 = vld [vmem:[%s193 + $0x18] sm:$0xf]
      %v209 = vld [vmem:[%s193 + $0x1c] sm:$0xf]
      %v210 = vld [vmem:[%s193 + $0x20] sm:$0xf]
      %v211 = vld [vmem:[%s193 + $0x24] sm:$0xf]
      %v212 = vld [vmem:[%s193 + $0x28] sm:$0xf]
      %v213 = vld [vmem:[%s193 + $0x2c] sm:$0xf]
      %v214 = vld [vmem:[%s193 + $0x30] sm:$0xf]
      %v215 = vld [vmem:[%s193 + $0x34] sm:$0xf]
      %v216 = vld [vmem:[%s193 + $0x38] sm:$0xf]
      %v217 = vld [vmem:[%s193 + $0x3c] sm:$0xf]
      %v218 = vld [vmem:[%s193 + $0x40] sm:$0xf]
      %v219 = vld [vmem:[%s193 + $0x44] sm:$0xf]
      %v220 = vld [vmem:[%s193 + $0x48] sm:$0xf]
      %v221 = vld [vmem:[%s193 + $0x4c] sm:$0xf]
      %v222 = vld [vmem:[%s193 + $0x50] sm:$0xf]
      %v223 = vld [vmem:[%s193 + $0x54] sm:$0xf]
      %v224 = vld [vmem:[%s193 + $0x58] sm:$0xf]
      %v225 = vld [vmem:[%s193 + $0x5c] sm:$0xf]
      %v226 = vld [vmem:[%s193 + $0x60] sm:$0xf]
      %v227 = vld [vmem:[%s193 + $0x64] sm:$0xf]
      %v228 = vld [vmem:[%s193 + $0x68] sm:$0xf]
      %v229 = vld [vmem:[%s193 + $0x6c] sm:$0xf]
      %v230 = vld [vmem:[%s193 + $0x70] sm:$0xf]
      %v231 = vld [vmem:[%s193 + $0x74] sm:$0xf]
      %v232 = vld [vmem:[%s193 + $0x78] sm:$0xf]
      %v233 = vld [vmem:[%s193 + $0x7c] sm:$0xf]
      %v234 = vld [vmem:[%s1] sm:$0xf]
      %v235 = vld [vmem:[%s1 + $0x4] sm:$0xf]
      %v268 = vunpack.c.l.b16 %v202
      %v269 = vunpack.c.l.b16 %v203
      %v270 = vunpack.c.l.b16 %v204
      %v271 = vunpack.c.l.b16 %v205
      %v272 = vunpack.c.l.b16 %v206
      %v273 = vunpack.c.l.b16 %v207
      %v274 = vunpack.c.l.b16 %v208
      %v275 = vunpack.c.l.b16 %v209
      %v276 = vunpack.c.l.b16 %v210
      %v277 = vunpack.c.l.b16 %v211
      %v278 = vunpack.c.l.b16 %v212
      %v279 = vunpack.c.l.b16 %v213
      %v280 = vunpack.c.l.b16 %v214
      %v281 = vunpack.c.l.b16 %v215
      %v282 = vunpack.c.l.b16 %v216
      %v283 = vunpack.c.l.b16 %v217
      %v284 = vunpack.c.l.b16 %v218
      %v285 = vunpack.c.l.b16 %v219
      %v286 = vunpack.c.l.b16 %v220
      %v287 = vunpack.c.l.b16 %v221
      %v288 = vunpack.c.l.b16 %v222
      %v289 = vunpack.c.l.b16 %v223
      %v290 = vunpack.c.l.b16 %v224
      %v291 = vunpack.c.l.b16 %v225
      %v292 = vunpack.c.l.b16 %v226
      %v293 = vunpack.c.l.b16 %v227
      %v294 = vunpack.c.l.b16 %v228
      %v295 = vunpack.c.l.b16 %v229
      %v296 = vunpack.c.l.b16 %v230
      %v297 = vunpack.c.l.b16 %v231
      %v298 = vunpack.c.l.b16 %v232
      %v299 = vunpack.c.l.b16 %v233
      %v300 = vpack.c.b16 %v269, %v268
      %v301 = vpack.c.b16 %v271, %v270
      %v302 = vpack.c.b16 %v273, %v272
      %v303 = vpack.c.b16 %v275, %v274
      %v304 = vpack.c.b16 %v277, %v276
      %v305 = vpack.c.b16 %v279, %v278
      %v306 = vpack.c.b16 %v281, %v280
      %v307 = vpack.c.b16 %v283, %v282
      %v308 = vpack.c.b16 %v285, %v284
      %v309 = vpack.c.b16 %v287, %v286
      %v310 = vpack.c.b16 %v289, %v288
      %v311 = vpack.c.b16 %v291, %v290
      %v312 = vpack.c.b16 %v293, %v292
      %v313 = vpack.c.b16 %v295, %v294
      %v314 = vpack.c.b16 %v297, %v296
      %v315 = vpack.c.b16 %v299, %v298
      %v318 = vunpack.c.l.b16 %v234
      %v319 = vunpack.c.l.b16 %v235
      %v320 = vpack.c.b16 %v319, %v318
      %vm322 = vcmask 130048
      %v324 = vsel %vm322, %v300, 0
      %v327 = vsel %vm322, %v301, 0
      %v330 = vsel %vm322, %v302, 0
      %v333 = vsel %vm322, %v303, 0
      %v336 = vsel %vm322, %v304, 0
      %v339 = vsel %vm322, %v305, 0
      %v342 = vsel %vm322, %v306, 0
      %v345 = vsel %vm322, %v307, 0
      %v348 = vsel %vm322, %v308, 0
      %v351 = vsel %vm322, %v309, 0
      %v354 = vsel %vm322, %v310, 0
      %v357 = vsel %vm322, %v311, 0
      %v360 = vsel %vm322, %v312, 0
      %v363 = vsel %vm322, %v313, 0
      %v366 = vsel %vm322, %v314, 0
      %v369 = vsel %vm322, %v315, 0
      %371 = vmatprep.subr.bf16.mxu0 0
      %372 = vmatpush1.bf16.msra.mxu0 0
      %373 = vmatprep.subr.bf16.mxu0 0
      %374 = vmatpush1.bf16.msra.mxu0 0
      %375 = vmatprep.subr.bf16.mxu0 0
      %376 = vmatpush1.bf16.msra.mxu0 0
      %377 = vmatprep.subr.bf16.mxu0 0
      %378 = vmatpush1.bf16.msra.mxu0 0
      %379 = vmatprep.subr.bf16.mxu0 0
      %380 = vmatpush1.bf16.msra.mxu0 0
      %381 = vmatprep.subr.bf16.mxu0 0
      %382 = vmatpush1.bf16.msra.mxu0 0
      %383 = vmatprep.subr.bf16.mxu0 0
      %384 = vmatpush1.bf16.msra.mxu0 0
      %385 = vmatprep.subr.bf16.mxu0 0
      %386 = vmatpush1.bf16.msra.mxu0 %v320
      %387 = vmatprep.subr.bf16.mxu0 0
      %388 = vmatpush2.bf16.msra.mxu0 0
      %389 = vmatprep.subr.bf16.mxu0 0
      %390 = vmatpush2.bf16.msra.mxu0 0
      %391 = vmatprep.subr.bf16.mxu0 0
      %392 = vmatpush2.bf16.msra.mxu0 0
      %393 = vmatprep.subr.bf16.mxu0 0
      %394 = vmatpush2.bf16.msra.mxu0 0
      %395 = vmatprep.subr.bf16.mxu0 0
      %396 = vmatpush2.bf16.msra.mxu0 0
      %397 = vmatprep.subr.bf16.mxu0 0
      %398 = vmatpush2.bf16.msra.mxu0 0
      %399 = vmatprep.subr.bf16.mxu0 0
      %400 = vmatpush2.bf16.msra.mxu0 0
      %401 = vmatprep.subr.bf16.mxu0 0
      %402 = vmatpush2.bf16.msra.mxu0 0
      %403 = vmatprep.mubr.bf16.mxu0 0
      %404 = vmatmul.mubr.bf16.gmra.mxu0 %v324
      %v405 = vpop.f32.mrf.mxu0
      %v406 = vadd.f32 0.0, %v405
      %v407 = vpop.f32.mrf.mxu0
      %v408 = vpop.f32.mrf.mxu0
      %v409 = vadd.f32 0.0, %v408
      %v410 = vpop.f32.mrf.mxu0
      %411 = vmatprep.mubr.bf16.mxu0 0
      %412 = vmatmul.mubr.bf16.gmra.mxu0 %v327
      %v413 = vpop.f32.mrf.mxu0
      %v414 = vadd.f32 0.0, %v413
      %v415 = vpop.f32.mrf.mxu0
      %v416 = vpop.f32.mrf.mxu0
      %v417 = vadd.f32 0.0, %v416
      %v418 = vpop.f32.mrf.mxu0
      %419 = vmatprep.mubr.bf16.mxu0 0
      %420 = vmatmul.mubr.bf16.gmra.mxu0 %v330
      %v421 = vpop.f32.mrf.mxu0
      %v422 = vadd.f32 0.0, %v421
      %v423 = vpop.f32.mrf.mxu0
      %v424 = vpop.f32.mrf.mxu0
      %v425 = vadd.f32 0.0, %v424
      %v426 = vpop.f32.mrf.mxu0
      %427 = vmatprep.mubr.bf16.mxu0 0
      %428 = vmatmul.mubr.bf16.gmra.mxu0 %v333
      %v429 = vpop.f32.mrf.mxu0
      %v430 = vadd.f32 0.0, %v429
      %v431 = vpop.f32.mrf.mxu0
      %v432 = vpop.f32.mrf.mxu0
      %v433 = vadd.f32 0.0, %v432
      %v434 = vpop.f32.mrf.mxu0
      %435 = vmatprep.mubr.bf16.mxu0 0
      %436 = vmatmul.mubr.bf16.gmra.mxu0 %v336
      %v437 = vpop.f32.mrf.mxu0
      %v438 = vadd.f32 0.0, %v437
      %v439 = vpop.f32.mrf.mxu0
      %v440 = vpop.f32.mrf.mxu0
      %v441 = vadd.f32 0.0, %v440
      %v442 = vpop.f32.mrf.mxu0
      %443 = vmatprep.mubr.bf16.mxu0 0
      %444 = vmatmul.mubr.bf16.gmra.mxu0 %v339
      %v445 = vpop.f32.mrf.mxu0
      %v446 = vadd.f32 0.0, %v445
      %v447 = vpop.f32.mrf.mxu0
      %v448 = vpop.f32.mrf.mxu0
      %v449 = vadd.f32 0.0, %v448
      %v450 = vpop.f32.mrf.mxu0
      %451 = vmatprep.mubr.bf16.mxu0 0
      %452 = vmatmul.mubr.bf16.gmra.mxu0 %v342
      %v453 = vpop.f32.mrf.mxu0
      %v454 = vadd.f32 0.0, %v453
      %v455 = vpop.f32.mrf.mxu0
      %v456 = vpop.f32.mrf.mxu0
      %v457 = vadd.f32 0.0, %v456
      %v458 = vpop.f32.mrf.mxu0
      %459 = vmatprep.mubr.bf16.mxu0 0
      %460 = vmatmul.mubr.bf16.gmra.mxu0 %v345
      %v461 = vpop.f32.mrf.mxu0
      %v462 = vadd.f32 0.0, %v461
      %v463 = vpop.f32.mrf.mxu0
      %v464 = vpop.f32.mrf.mxu0
      %v465 = vadd.f32 0.0, %v464
      %v466 = vpop.f32.mrf.mxu0
      %467 = vmatprep.mubr.bf16.mxu0 0
      %468 = vmatmul.mubr.bf16.gmra.mxu0 %v348
      %v469 = vpop.f32.mrf.mxu0
      %v470 = vadd.f32 0.0, %v469
      %v471 = vpop.f32.mrf.mxu0
      %v472 = vpop.f32.mrf.mxu0
      %v473 = vadd.f32 0.0, %v472
      %v474 = vpop.f32.mrf.mxu0
      %475 = vmatprep.mubr.bf16.mxu0 0
      %476 = vmatmul.mubr.bf16.gmra.mxu0 %v351
      %v477 = vpop.f32.mrf.mxu0
      %v478 = vadd.f32 0.0, %v477
      %v479 = vpop.f32.mrf.mxu0
      %v480 = vpop.f32.mrf.mxu0
      %v481 = vadd.f32 0.0, %v480
      %v482 = vpop.f32.mrf.mxu0
      %483 = vmatprep.mubr.bf16.mxu0 0
      %484 = vmatmul.mubr.bf16.gmra.mxu0 %v354
      %v485 = vpop.f32.mrf.mxu0
      %v486 = vadd.f32 0.0, %v485
      %v487 = vpop.f32.mrf.mxu0
      %v488 = vpop.f32.mrf.mxu0
      %v489 = vadd.f32 0.0, %v488
      %v490 = vpop.f32.mrf.mxu0
      %491 = vmatprep.mubr.bf16.mxu0 0
      %492 = vmatmul.mubr.bf16.gmra.mxu0 %v357
      %v493 = vpop.f32.mrf.mxu0
      %v494 = vadd.f32 0.0, %v493
      %v495 = vpop.f32.mrf.mxu0
      %v496 = vpop.f32.mrf.mxu0
      %v497 = vadd.f32 0.0, %v496
      %v498 = vpop.f32.mrf.mxu0
      %499 = vmatprep.mubr.bf16.mxu0 0
      %500 = vmatmul.mubr.bf16.gmra.mxu0 %v360
      %v501 = vpop.f32.mrf.mxu0
      %v502 = vadd.f32 0.0, %v501
      %v503 = vpop.f32.mrf.mxu0
      %v504 = vpop.f32.mrf.mxu0
      %v505 = vadd.f32 0.0, %v504
      %v506 = vpop.f32.mrf.mxu0
      %507 = vmatprep.mubr.bf16.mxu0 0
      %508 = vmatmul.mubr.bf16.gmra.mxu0 %v363
      %v509 = vpop.f32.mrf.mxu0
      %v510 = vadd.f32 0.0, %v509
      %v511 = vpop.f32.mrf.mxu0
      %v512 = vpop.f32.mrf.mxu0
      %v513 = vadd.f32 0.0, %v512
      %v514 = vpop.f32.mrf.mxu0
      %515 = vmatprep.mubr.bf16.mxu0 0
      %516 = vmatmul.mubr.bf16.gmra.mxu0 %v366
      %v517 = vpop.f32.mrf.mxu0
      %v518 = vadd.f32 0.0, %v517
      %v519 = vpop.f32.mrf.mxu0
      %v520 = vpop.f32.mrf.mxu0
      %v521 = vadd.f32 0.0, %v520
      %v522 = vpop.f32.mrf.mxu0
      %523 = vmatprep.mubr.bf16.mxu0 0
      %524 = vmatmul.mubr.bf16.gmra.mxu0 %v369
      %v525 = vpop.f32.mrf.mxu0
      %v526 = vadd.f32 0.0, %v525
      %v527 = vpop.f32.mrf.mxu0
      %v528 = vpop.f32.mrf.mxu0
      %v529 = vadd.f32 0.0, %v528
      %v530 = vpop.f32.mrf.mxu0
      %531 = vdwg.mxu0
      %v532 = vld [vmem:[%s2] sm:$0x1]
      %v534 = vlaneseq
      %v535 = vshrl.u32 %v534, 7
      %v536 = vsub.s32 0, %v535
      %v537 = vrot.slane %v532, %v536
      %v539 = vmul.f32 %v406, %v537
      %v540 = vmul.f32 %v409, %v537
      %v541 = vmul.f32 %v414, %v537
      %v542 = vmul.f32 %v417, %v537
      %v543 = vmul.f32 %v422, %v537
      %v544 = vmul.f32 %v425, %v537
      %v545 = vmul.f32 %v430, %v537
      %v546 = vmul.f32 %v433, %v537
      %v547 = vmul.f32 %v438, %v537
      %v548 = vmul.f32 %v441, %v537
      %v549 = vmul.f32 %v446, %v537
      %v550 = vmul.f32 %v449, %v537
      %v551 = vmul.f32 %v454, %v537
      %v552 = vmul.f32 %v457, %v537
      %v553 = vmul.f32 %v462, %v537
      %v554 = vmul.f32 %v465, %v537
      %v555 = vmul.f32 %v470, %v537
      %v556 = vmul.f32 %v473, %v537
      %v557 = vmul.f32 %v478, %v537
      %v558 = vmul.f32 %v481, %v537
      %v559 = vmul.f32 %v486, %v537
      %v560 = vmul.f32 %v489, %v537
      %v561 = vmul.f32 %v494, %v537
      %v562 = vmul.f32 %v497, %v537
      %v563 = vmul.f32 %v502, %v537
      %v564 = vmul.f32 %v505, %v537
      %v565 = vmul.f32 %v510, %v537
      %v566 = vmul.f32 %v513, %v537
      %v567 = vmul.f32 %v518, %v537
      %v568 = vmul.f32 %v521, %v537
      %v569 = vmul.f32 %v526, %v537
      %v570 = vmul.f32 %v529, %v537
      %v571 = vld [vmem:[%s3] sm:$0x1]
      %v573 = vlaneseq
      %v574 = vshrl.u32 %v573, 7
      %v575 = vsub.s32 0, %v574
      %v576 = vrot.slane %v571, %v575
      %v578 = vadd.f32 %v539, %v576
      %v579 = vadd.f32 %v540, %v576
      %v580 = vadd.f32 %v541, %v576
      %v581 = vadd.f32 %v542, %v576
      %v582 = vadd.f32 %v543, %v576
      %v583 = vadd.f32 %v544, %v576
      %v584 = vadd.f32 %v545, %v576
      %v585 = vadd.f32 %v546, %v576
      %v586 = vadd.f32 %v547, %v576
      %v587 = vadd.f32 %v548, %v576
      %v588 = vadd.f32 %v549, %v576
      %v589 = vadd.f32 %v550, %v576
      %v590 = vadd.f32 %v551, %v576
      %v591 = vadd.f32 %v552, %v576
      %v592 = vadd.f32 %v553, %v576
      %v593 = vadd.f32 %v554, %v576
      %v594 = vadd.f32 %v555, %v576
      %v595 = vadd.f32 %v556, %v576
      %v596 = vadd.f32 %v557, %v576
      %v597 = vadd.f32 %v558, %v576
      %v598 = vadd.f32 %v559, %v576
      %v599 = vadd.f32 %v560, %v576
      %v600 = vadd.f32 %v561, %v576
      %v601 = vadd.f32 %v562, %v576
      %v602 = vadd.f32 %v563, %v576
      %v603 = vadd.f32 %v564, %v576
      %v604 = vadd.f32 %v565, %v576
      %v605 = vadd.f32 %v566, %v576
      %v606 = vadd.f32 %v567, %v576
      %v607 = vadd.f32 %v568, %v576
      %v608 = vadd.f32 %v569, %v576
      %v609 = vadd.f32 %v570, %v576
      %vm610 = vcmp.ge.f32.partialorder %v578, 0.0
      %vm611 = vcmp.ge.f32.partialorder %v579, 0.0
      %vm612 = vcmp.ge.f32.partialorder %v580, 0.0
      %vm613 = vcmp.ge.f32.partialorder %v581, 0.0
      %vm614 = vcmp.ge.f32.partialorder %v582, 0.0
      %vm615 = vcmp.ge.f32.partialorder %v583, 0.0
      %vm616 = vcmp.ge.f32.partialorder %v584, 0.0
      %vm617 = vcmp.ge.f32.partialorder %v585, 0.0
      %vm618 = vcmp.ge.f32.partialorder %v586, 0.0
      %vm619 = vcmp.ge.f32.partialorder %v587, 0.0
      %vm620 = vcmp.ge.f32.partialorder %v588, 0.0
      %vm621 = vcmp.ge.f32.partialorder %v589, 0.0
      %vm622 = vcmp.ge.f32.partialorder %v590, 0.0
      %vm623 = vcmp.ge.f32.partialorder %v591, 0.0
      %vm624 = vcmp.ge.f32.partialorder %v592, 0.0
      %vm625 = vcmp.ge.f32.partialorder %v593, 0.0
      %vm626 = vcmp.ge.f32.partialorder %v594, 0.0
      %vm627 = vcmp.ge.f32.partialorder %v595, 0.0
      %vm628 = vcmp.ge.f32.partialorder %v596, 0.0
      %vm629 = vcmp.ge.f32.partialorder %v597, 0.0
      %vm630 = vcmp.ge.f32.partialorder %v598, 0.0
      %vm631 = vcmp.ge.f32.partialorder %v599, 0.0
      %vm632 = vcmp.ge.f32.partialorder %v600, 0.0
      %vm633 = vcmp.ge.f32.partialorder %v601, 0.0
      %vm634 = vcmp.ge.f32.partialorder %v602, 0.0
      %vm635 = vcmp.ge.f32.partialorder %v603, 0.0
      %vm636 = vcmp.ge.f32.partialorder %v604, 0.0
      %vm637 = vcmp.ge.f32.partialorder %v605, 0.0
      %vm638 = vcmp.ge.f32.partialorder %v606, 0.0
      %vm639 = vcmp.ge.f32.partialorder %v607, 0.0
      %vm640 = vcmp.ge.f32.partialorder %v608, 0.0
      %vm641 = vcmp.ge.f32.partialorder %v609, 0.0
      %v642 = vmul.f32 %v578, 0.25
      %v643 = vmul.f32 %v579, 0.25
      %v644 = vmul.f32 %v580, 0.25
      %v645 = vmul.f32 %v581, 0.25
      %v646 = vmul.f32 %v582, 0.25
      %v647 = vmul.f32 %v583, 0.25
      %v648 = vmul.f32 %v584, 0.25
      %v649 = vmul.f32 %v585, 0.25
      %v650 = vmul.f32 %v586, 0.25
      %v651 = vmul.f32 %v587, 0.25
      %v652 = vmul.f32 %v588, 0.25
      %v653 = vmul.f32 %v589, 0.25
      %v654 = vmul.f32 %v590, 0.25
      %v655 = vmul.f32 %v591, 0.25
      %v656 = vmul.f32 %v592, 0.25
      %v657 = vmul.f32 %v593, 0.25
      %v658 = vmul.f32 %v594, 0.25
      %v659 = vmul.f32 %v595, 0.25
      %v660 = vmul.f32 %v596, 0.25
      %v661 = vmul.f32 %v597, 0.25
      %v662 = vmul.f32 %v598, 0.25
      %v663 = vmul.f32 %v599, 0.25
      %v664 = vmul.f32 %v600, 0.25
      %v665 = vmul.f32 %v601, 0.25
      %v666 = vmul.f32 %v602, 0.25
      %v667 = vmul.f32 %v603, 0.25
      %v668 = vmul.f32 %v604, 0.25
      %v669 = vmul.f32 %v605, 0.25
      %v670 = vmul.f32 %v606, 0.25
      %v671 = vmul.f32 %v607, 0.25
      %v672 = vmul.f32 %v608, 0.25
      %v673 = vmul.f32 %v609, 0.25
      %v674 = vsel %vm610, %v578, %v642
      %v675 = vsel %vm611, %v579, %v643
      %v676 = vsel %vm612, %v580, %v644
      %v677 = vsel %vm613, %v581, %v645
      %v678 = vsel %vm614, %v582, %v646
      %v679 = vsel %vm615, %v583, %v647
      %v680 = vsel %vm616, %v584, %v648
      %v681 = vsel %vm617, %v585, %v649
      %v682 = vsel %vm618, %v586, %v650
      %v683 = vsel %vm619, %v587, %v651
      %v684 = vsel %vm620, %v588, %v652
      %v685 = vsel %vm621, %v589, %v653
      %v686 = vsel %vm622, %v590, %v654
      %v687 = vsel %vm623, %v591, %v655
      %v688 = vsel %vm624, %v592, %v656
      %v689 = vsel %vm625, %v593, %v657
      %v690 = vsel %vm626, %v594, %v658
      %v691 = vsel %vm627, %v595, %v659
      %v692 = vsel %vm628, %v596, %v660
      %v693 = vsel %vm629, %v597, %v661
      %v694 = vsel %vm630, %v598, %v662
      %v695 = vsel %vm631, %v599, %v663
      %v696 = vsel %vm632, %v600, %v664
      %v697 = vsel %vm633, %v601, %v665
      %v698 = vsel %vm634, %v602, %v666
      %v699 = vsel %vm635, %v603, %v667
      %v700 = vsel %vm636, %v604, %v668
      %v701 = vsel %vm637, %v605, %v669
      %v702 = vsel %vm638, %v606, %v670
      %v703 = vsel %vm639, %v607, %v671
      %v704 = vsel %vm640, %v608, %v672
      %v705 = vsel %vm641, %v609, %v673
      %v706 = vpack.c.bf16 %v675, %v674
      %v707 = vpack.c.bf16 %v677, %v676
      %v708 = vpack.c.bf16 %v679, %v678
      %v709 = vpack.c.bf16 %v681, %v680
      %v710 = vpack.c.bf16 %v683, %v682
      %v711 = vpack.c.bf16 %v685, %v684
      %v712 = vpack.c.bf16 %v687, %v686
      %v713 = vpack.c.bf16 %v689, %v688
      %v714 = vpack.c.bf16 %v691, %v690
      %v715 = vpack.c.bf16 %v693, %v692
      %v716 = vpack.c.bf16 %v695, %v694
      %v717 = vpack.c.bf16 %v697, %v696
      %v718 = vpack.c.bf16 %v699, %v698
      %v719 = vpack.c.bf16 %v701, %v700
      %v720 = vpack.c.bf16 %v703, %v702
      %v721 = vpack.c.bf16 %v705, %v704
      %v738 = vunpack.c.l.b16 %v706
      %v739 = vunpack.c.h.b16 %v706
      %v740 = vunpack.c.l.b16 %v707
      %v741 = vunpack.c.h.b16 %v707
      %v742 = vunpack.c.l.b16 %v708
      %v743 = vunpack.c.h.b16 %v708
      %v744 = vunpack.c.l.b16 %v709
      %v745 = vunpack.c.h.b16 %v709
      %v746 = vunpack.c.l.b16 %v710
      %v747 = vunpack.c.h.b16 %v710
      %v748 = vunpack.c.l.b16 %v711
      %v749 = vunpack.c.h.b16 %v711
      %v750 = vunpack.c.l.b16 %v712
      %v751 = vunpack.c.h.b16 %v712
      %v752 = vunpack.c.l.b16 %v713
      %v753 = vunpack.c.h.b16 %v713
      %v754 = vunpack.c.l.b16 %v714
      %v755 = vunpack.c.h.b16 %v714
      %v756 = vunpack.c.l.b16 %v715
      %v757 = vunpack.c.h.b16 %v715
      %v758 = vunpack.c.l.b16 %v716
      %v759 = vunpack.c.h.b16 %v716
      %v760 = vunpack.c.l.b16 %v717
      %v761 = vunpack.c.h.b16 %v717
      %v762 = vunpack.c.l.b16 %v718
      %v763 = vunpack.c.h.b16 %v718
      %v764 = vunpack.c.l.b16 %v719
      %v765 = vunpack.c.h.b16 %v719
      %v766 = vunpack.c.l.b16 %v720
      %v767 = vunpack.c.h.b16 %v720
      %v768 = vunpack.c.l.b16 %v721
      %v769 = vunpack.c.h.b16 %v721
      %v770 = vpack.c.b16 %v738, %v738
      %v771 = vpack.c.b16 %v739, %v739
      %v772 = vpack.c.b16 %v740, %v740
      %v773 = vpack.c.b16 %v741, %v741
      %v774 = vpack.c.b16 %v742, %v742
      %v775 = vpack.c.b16 %v743, %v743
      %v776 = vpack.c.b16 %v744, %v744
      %v777 = vpack.c.b16 %v745, %v745
      %v778 = vpack.c.b16 %v746, %v746
      %v779 = vpack.c.b16 %v747, %v747
      %v780 = vpack.c.b16 %v748, %v748
      %v781 = vpack.c.b16 %v749, %v749
      %v782 = vpack.c.b16 %v750, %v750
      %v783 = vpack.c.b16 %v751, %v751
      %v784 = vpack.c.b16 %v752, %v752
      %v785 = vpack.c.b16 %v753, %v753
      %v786 = vpack.c.b16 %v754, %v754
      %v787 = vpack.c.b16 %v755, %v755
      %v788 = vpack.c.b16 %v756, %v756
      %v789 = vpack.c.b16 %v757, %v757
      %v790 = vpack.c.b16 %v758, %v758
      %v791 = vpack.c.b16 %v759, %v759
      %v792 = vpack.c.b16 %v760, %v760
      %v793 = vpack.c.b16 %v761, %v761
      %v794 = vpack.c.b16 %v762, %v762
      %v795 = vpack.c.b16 %v763, %v763
      %v796 = vpack.c.b16 %v764, %v764
      %v797 = vpack.c.b16 %v765, %v765
      %v798 = vpack.c.b16 %v766, %v766
      %v799 = vpack.c.b16 %v767, %v767
      %v800 = vpack.c.b16 %v768, %v768
      %v801 = vpack.c.b16 %v769, %v769
      %vm834 = vcmask 27648
      %835 = vst.msk [vmem:[%s199] sm:$0xf] %vm834, %v770
      %836 = vst.msk [vmem:[%s199 + $0x4] sm:$0xf] %vm834, %v771
      %837 = vst.msk [vmem:[%s199 + $0x8] sm:$0xf] %vm834, %v772
      %838 = vst.msk [vmem:[%s199 + $0xc] sm:$0xf] %vm834, %v773
      %839 = vst.msk [vmem:[%s199 + $0x10] sm:$0xf] %vm834, %v774
      %840 = vst.msk [vmem:[%s199 + $0x14] sm:$0xf] %vm834, %v775
      %841 = vst.msk [vmem:[%s199 + $0x18] sm:$0xf] %vm834, %v776
      %842 = vst.msk [vmem:[%s199 + $0x1c] sm:$0xf] %vm834, %v777
      %843 = vst.msk [vmem:[%s199 + $0x20] sm:$0xf] %vm834, %v778
      %844 = vst.msk [vmem:[%s199 + $0x24] sm:$0xf] %vm834, %v779
      %845 = vst.msk [vmem:[%s199 + $0x28] sm:$0xf] %vm834, %v780
      %846 = vst.msk [vmem:[%s199 + $0x2c] sm:$0xf] %vm834, %v781
      %847 = vst.msk [vmem:[%s199 + $0x30] sm:$0xf] %vm834, %v782
      %848 = vst.msk [vmem:[%s199 + $0x34] sm:$0xf] %vm834, %v783
      %849 = vst.msk [vmem:[%s199 + $0x38] sm:$0xf] %vm834, %v784
      %850 = vst.msk [vmem:[%s199 + $0x3c] sm:$0xf] %vm834, %v785
      %851 = vst.msk [vmem:[%s199 + $0x40] sm:$0xf] %vm834, %v786
      %852 = vst.msk [vmem:[%s199 + $0x44] sm:$0xf] %vm834, %v787
      %853 = vst.msk [vmem:[%s199 + $0x48] sm:$0xf] %vm834, %v788
      %854 = vst.msk [vmem:[%s199 + $0x4c] sm:$0xf] %vm834, %v789
      %855 = vst.msk [vmem:[%s199 + $0x50] sm:$0xf] %vm834, %v790
      %856 = vst.msk [vmem:[%s199 + $0x54] sm:$0xf] %vm834, %v791
      %857 = vst.msk [vmem:[%s199 + $0x58] sm:$0xf] %vm834, %v792
      %858 = vst.msk [vmem:[%s199 + $0x5c] sm:$0xf] %vm834, %v793
      %859 = vst.msk [vmem:[%s199 + $0x60] sm:$0xf] %vm834, %v794
      %860 = vst.msk [vmem:[%s199 + $0x64] sm:$0xf] %vm834, %v795
      %861 = vst.msk [vmem:[%s199 + $0x68] sm:$0xf] %vm834, %v796
      %862 = vst.msk [vmem:[%s199 + $0x6c] sm:$0xf] %vm834, %v797
      %863 = vst.msk [vmem:[%s199 + $0x70] sm:$0xf] %vm834, %v798
      %864 = vst.msk [vmem:[%s199 + $0x74] sm:$0xf] %vm834, %v799
      %865 = vst.msk [vmem:[%s199 + $0x78] sm:$0xf] %vm834, %v800
      %866 = vst.msk [vmem:[%s199 + $0x7c] sm:$0xf] %vm834, %v801
      %s867 = smul.u32 32, %s15
      %p868 = scmp.lt.s32.totalorder %s867, 63
      %s869 = scalar_select %p868, %s867, 63
      %s870 = smul.addr %s869, 4
      %s871 = scalar_lea.vmem %s4, %s870
      // Predicated region
      $region37: #{enet_forward.172} parent=35 // pred_check
        %p872 = pneg %p122
      $region38: #{enet_forward.172} parent=35 // pred_check_branch
        %874 = sbr.rel (%p872) target = $region40
      $region39: #{enet_forward.172} parent=35 // pred_region
        %s875 = smul.u32 32, %s15
      $region40: #{enet_forward.172} parent=35 // pred_fallthru
        _
    $region36: #{enet_forward.172} parent=5 // pred_fallthru
      _
    %p876 = scmp.le.s32.totalorder 2, %s10
    // Predicated region
    $region41: #{enet_forward.172} parent=5 // pred_check
      %p877 = pneg %p876
    $region42: #{enet_forward.172} parent=5 // pred_check_branch
      %879 = sbr.rel (%p877) target = $region44
    $region43: #{enet_forward.172} parent=5 // pred_region
      %s880 = ssub.s32 %s10, 2
      // Predicated region
      $region45: #{enet_forward.172} parent=43 // pred_check
        %p881 = pneg %p128
      $region46: #{enet_forward.172} parent=43 // pred_check_branch
        %883 = sbr.rel (%p881) target = $region48
      $region47: #{enet_forward.172} parent=43 // pred_region
        %s884 = smul.u32 32, %s16
        %p885 = scmp.lt.s32.totalorder %s884, 63
        %s886 = scalar_select %p885, %s884, 63
        %s887 = smul.addr %s886, 4
        %s888 = scalar_lea.vmem %s4, %s887
      $region48: #{enet_forward.172} parent=43 // pred_fallthru
        _
    $region44: #{enet_forward.172} parent=5 // pred_fallthru
      _
  $region6: #{enet_forward.172} parent=0 // loop_footer
    %s14 = sadd.s32 1, %s10
  $region7: #{enet_forward.172} parent=0 // loop_footer_branch
    %9 = sbr.rel target = $region3
  $region8: #{enet_forward.172} parent=0 // loop_exit
    _

// kernel: enet_forward.175
$region0: #{enet_forward.175}
  #allocation0 [shape = 'u32[]', space=smem, size = 0x4, offset = 0x4, fixed_abs, tag = 'smem constant byte address 0x4 - core index']
  #allocation1 [shape = 'u32[144,128]{1,0:T(1,128)}', space=vmem, size = 0x12000, scoped, tag = 'internal scratch']
  %s0 = inlined_call_operand.vmem [shape: bf16[512,16], index: 0, kind: input, shape index: {}]
  %s1 = inlined_call_operand.vmem [shape: bf16[16,16], index: 1, kind: input, shape index: {}]
  %s2 = inlined_call_operand.vmem [shape: f32[1,16], index: 2, kind: input, shape index: {}]
  %s3 = inlined_call_operand.vmem [shape: f32[1,16], index: 3, kind: input, shape index: {}]
  %s4 = inlined_call_operand.vmem [shape: f32[512,16], index: 4, kind: output, shape index: {}]
  %s5 = sld [smem:[#allocation0]]
  $region49: #{enet_forward.175} parent=0
    _
  %s7 = ssub.s32 1, %s5
  %s8 = scalar_select 0, %s7, %s5
  loop: start=0, step=1, limit=4
  $region2: #{enet_forward.175} parent=0 // loop_pre_header
    _
  $region3: #{enet_forward.175} parent=0 // loop_header
    %s10 = sphi 0, %s14
    %p11 = scmp.ge.s32.totalorder %s10, 4
    %s20 = sphi 0, %s22
    %s23 = sphi 0, %s20
    %s24 = sphi 0, %s23
    %s40 = sphi 0, %s24
    %s44 = sphi 0, %s44
    %s46 = sphi 0, %s44
    %s47 = sphi 0, %s46
    %s61 = sphi 0, %s47
    %s65 = sphi 0, %s65
    %s67 = sphi 0, %s65
    %s68 = sphi 0, %s67
    %s82 = sphi 0, %s68
    %s86 = sphi 0, %s86
    %s88 = sphi 0, %s86
    %s89 = sphi 0, %s88
    %s103 = sphi 0, %s89
    %s109 = sphi 0, %s111
    %s112 = sphi 0, %s109
    %s113 = sphi 0, %s112
    %s129 = sphi 0, %s113
  $region4: #{enet_forward.175} parent=0 // loop_header_branch
    %13 = sbr.rel (%p11) target = $region8
  $region5: #{enet_forward.175} parent=0 // loop_body
    %s15 = ssub.s32 %s10, 1
    %s16 = ssub.s32 %s10, 2
    %s17 = sadd.s32 %s10, 1
    %s18 = ssub.s32 %s10, %s17
    %p19 = scmp.eq.s32.totalorder %s18, 0
    %s21 = sadd.s32 %s20, 1
    %s22 = scalar_select %p19, %s20, %s21
    %p25 = pneg %p19
    %p26 = scmp.eq.s32.totalorder %s10, 1
    %p27 = por %p25, %p26
    %p28 = scmp.ne.s32.totalorder %s20, %s23
    %p29 = scmp.eq.s32.totalorder %s10, 0
    %p30 = por %p28, %p29
    %p31 = scmp.ne.s32.totalorder %s20, %s23
    %p32 = scmp.eq.s32.totalorder %s15, 1
    %p33 = por %p31, %p32
    %p34 = scmp.ne.s32.totalorder %s23, %s24
    %p35 = scmp.eq.s32.totalorder %s15, 0
    %p36 = por %p34, %p35
    %p37 = scmp.ne.s32.totalorder %s23, %s24
    %p38 = scmp.eq.s32.totalorder %s16, 1
    %p39 = por %p37, %p38
    %p41 = scmp.ne.s32.totalorder %s24, %s40
    %p42 = scmp.eq.s32.totalorder %s16, 0
    %p43 = por %p41, %p42
    %s45 = sadd.s32 %s44, 1
    %p48 = scmp.eq.s32.totalorder %s10, 1
    %p49 = scmp.ne.s32.totalorder %s44, %s46
    %p50 = scmp.eq.s32.totalorder %s10, 0
    %p51 = por %p49, %p50
    %p52 = scmp.ne.s32.totalorder %s44, %s46
    %p53 = scmp.eq.s32.totalorder %s15, 1
    %p54 = por %p52, %p53
    %p55 = scmp.ne.s32.totalorder %s46, %s47
    %p56 = scmp.eq.s32.totalorder %s15, 0
    %p57 = por %p55, %p56
    %p58 = scmp.ne.s32.totalorder %s46, %s47
    %p59 = scmp.eq.s32.totalorder %s16, 1
    %p60 = por %p58, %p59
    %p62 = scmp.ne.s32.totalorder %s47, %s61
    %p63 = scmp.eq.s32.totalorder %s16, 0
    %p64 = por %p62, %p63
    %s66 = sadd.s32 %s65, 1
    %p69 = scmp.eq.s32.totalorder %s10, 1
    %p70 = scmp.ne.s32.totalorder %s65, %s67
    %p71 = scmp.eq.s32.totalorder %s10, 0
    %p72 = por %p70, %p71
    %p73 = scmp.ne.s32.totalorder %s65, %s67
    %p74 = scmp.eq.s32.totalorder %s15, 1
    %p75 = por %p73, %p74
    %p76 = scmp.ne.s32.totalorder %s67, %s68
    %p77 = scmp.eq.s32.totalorder %s15, 0
    %p78 = por %p76, %p77
    %p79 = scmp.ne.s32.totalorder %s67, %s68
    %p80 = scmp.eq.s32.totalorder %s16, 1
    %p81 = por %p79, %p80
    %p83 = scmp.ne.s32.totalorder %s68, %s82
    %p84 = scmp.eq.s32.totalorder %s16, 0
    %p85 = por %p83, %p84
    %s87 = sadd.s32 %s86, 1
    %p90 = scmp.eq.s32.totalorder %s10, 1
    %p91 = scmp.ne.s32.totalorder %s86, %s88
    %p92 = scmp.eq.s32.totalorder %s10, 0
    %p93 = por %p91, %p92
    %p94 = scmp.ne.s32.totalorder %s86, %s88
    %p95 = scmp.eq.s32.totalorder %s15, 1
    %p96 = por %p94, %p95
    %p97 = scmp.ne.s32.totalorder %s88, %s89
    %p98 = scmp.eq.s32.totalorder %s15, 0
    %p99 = por %p97, %p98
    %p100 = scmp.ne.s32.totalorder %s88, %s89
    %p101 = scmp.eq.s32.totalorder %s16, 1
    %p102 = por %p100, %p101
    %p104 = scmp.ne.s32.totalorder %s89, %s103
    %p105 = scmp.eq.s32.totalorder %s16, 0
    %p106 = por %p104, %p105
    %s107 = ssub.s32 %s10, %s17
    %p108 = scmp.eq.s32.totalorder %s107, 0
    %s110 = sadd.s32 %s109, 1
    %s111 = scalar_select %p108, %s109, %s110
    %p114 = pneg %p108
    %p115 = scmp.eq.s32.totalorder %s10, 1
    %p116 = por %p114, %p115
    %p117 = scmp.ne.s32.totalorder %s109, %s112
    %p118 = scmp.eq.s32.totalorder %s10, 0
    %p119 = por %p117, %p118
    %p120 = scmp.ne.s32.totalorder %s109, %s112
    %p121 = scmp.eq.s32.totalorder %s15, 1
    %p122 = por %p120, %p121
    %p123 = scmp.ne.s32.totalorder %s112, %s113
    %p124 = scmp.eq.s32.totalorder %s15, 0
    %p125 = por %p123, %p124
    %p126 = scmp.ne.s32.totalorder %s112, %s113
    %p127 = scmp.eq.s32.totalorder %s16, 1
    %p128 = por %p126, %p127
    %p130 = scmp.ne.s32.totalorder %s113, %s129
    %p131 = scmp.eq.s32.totalorder %s16, 0
    %p132 = por %p130, %p131
    %p133 = scmp.le.s32.totalorder 1, %s10
    %p134 = scmp.lt.s32.totalorder %s10, 3
    %p135 = pnand %p133, %p134
    %p136 = pneg %p135
    // Predicated region
    $region9: #{enet_forward.175} parent=5 // pred_check
      _
    $region10: #{enet_forward.175} parent=5 // pred_check_branch
      %138 = sbr.rel (%p135) target = $region12
    $region11: #{enet_forward.175} parent=5 // pred_region
      %s139 = ssub.s32 %s10, 1
      // Predicated region
      $region13: #{enet_forward.175} parent=11 // pred_check
        %p140 = pneg %p57
      $region14: #{enet_forward.175} parent=11 // pred_check_branch
        %142 = sbr.rel (%p140) target = $region16
      $region15: #{enet_forward.175} parent=11 // pred_region
        _
      $region16: #{enet_forward.175} parent=11 // pred_fallthru
        _
      // Predicated region
      $region17: #{enet_forward.175} parent=11 // pred_check
        %p143 = pneg %p78
      $region18: #{enet_forward.175} parent=11 // pred_check_branch
        %145 = sbr.rel (%p143) target = $region20
      $region19: #{enet_forward.175} parent=11 // pred_region
        _
      $region20: #{enet_forward.175} parent=11 // pred_fallthru
        _
      // Predicated region
      $region21: #{enet_forward.175} parent=11 // pred_check
        %p146 = pneg %p99
      $region22: #{enet_forward.175} parent=11 // pred_check_branch
        %148 = sbr.rel (%p146) target = $region24
      $region23: #{enet_forward.175} parent=11 // pred_region
        _
      $region24: #{enet_forward.175} parent=11 // pred_fallthru
        _
    $region12: #{enet_forward.175} parent=5 // pred_fallthru
      _
    %p149 = scmp.lt.s32.totalorder %s10, 2
    // Predicated region
    $region25: #{enet_forward.175} parent=5 // pred_check
      %p150 = pneg %p149
    $region26: #{enet_forward.175} parent=5 // pred_check_branch
      %152 = sbr.rel (%p150) target = $region28
    $region27: #{enet_forward.175} parent=5 // pred_region
      // Predicated region
      $region29: #{enet_forward.175} parent=27 // pred_check
        %p153 = pneg %p30
      $region30: #{enet_forward.175} parent=27 // pred_check_branch
        %155 = sbr.rel (%p153) target = $region32
      $region31: #{enet_forward.175} parent=27 // pred_region
        %s156 = smul.u32 32, %s10
        %p157 = scmp.lt.s32.totalorder %s156, 63
        %s158 = scalar_select %p157, %s156, 63
        %s159 = smul.addr %s158, 4
        %s160 = scalar_lea.vmem %s0, %s159
        %s161 = smul.u32 32, %s10
      $region32: #{enet_forward.175} parent=27 // pred_fallthru
        _
    $region28: #{enet_forward.175} parent=5 // pred_fallthru
      _
    %p162 = scmp.le.s32.totalorder 1, %s10
    %p163 = scmp.lt.s32.totalorder %s10, 3
    %p164 = pnand %p162, %p163
    %p165 = pneg %p164
    // Predicated region
    $region33: #{enet_forward.175} parent=5 // pred_check
      _
    $region34: #{enet_forward.175} parent=5 // pred_check_branch
      %167 = sbr.rel (%p164) target = $region36
    $region35: #{enet_forward.175} parent=5 // pred_region
      %s168 = ssub.s32 %s10, 1
      %s169 = smul.u32 32, %s15
      %p170 = scmp.lt.s32.totalorder %s169, 63
      %s171 = scalar_select %p170, %s169, 63
      %s172 = smul.addr %s171, 4
      %s173 = scalar_lea.vmem %s0, %s172
      %p174 = pneg %p36
      %p175 = pneg %p33
      %p176 = pneg %p57
      %p177 = pneg %p54
      %p178 = pneg %p78
      %p179 = pneg %p75
      %p180 = pneg %p99
      %p181 = pneg %p96
      %p182 = pneg %p125
      %p183 = pneg %p122
      %s184 = smul.u32 32, %s15
      %p185 = scmp.lt.s32.totalorder %s184, 63
      %s186 = scalar_select %p185, %s184, 63
      %s187 = smul.addr %s186, 8
      %s188 = scalar_lea.vmem %s4, %s187
      %s189 = smul.u32 32, %s15
      %p190 = scmp.lt.s32.totalorder %s189, 63
      %s191 = scalar_select %p190, %s189, 63
      %s192 = smul.addr %s191, 4
      %s193 = scalar_lea.vmem %s0, %s192
      %s194 = smul.u32 32, %s15
      %s195 = smul.u32 32, %s15
      %p196 = scmp.lt.s32.totalorder %s195, 63
      %s197 = scalar_select %p196, %s195, 63
      %s198 = smul.addr %s197, 8
      %s199 = scalar_lea.vmem %s4, %s198
      %s200 = smul.u32 32, %s15
      %v202 = vld [vmem:[%s193] sm:$0xf]
      %v203 = vld [vmem:[%s193 + $0x4] sm:$0xf]
      %v204 = vld [vmem:[%s193 + $0x8] sm:$0xf]
      %v205 = vld [vmem:[%s193 + $0xc] sm:$0xf]
      %v206 = vld [vmem:[%s193 + $0x10] sm:$0xf]
      %v207 = vld [vmem:[%s193 + $0x14] sm:$0xf]
      %v208 = vld [vmem:[%s193 + $0x18] sm:$0xf]
      %v209 = vld [vmem:[%s193 + $0x1c] sm:$0xf]
      %v210 = vld [vmem:[%s193 + $0x20] sm:$0xf]
      %v211 = vld [vmem:[%s193 + $0x24] sm:$0xf]
      %v212 = vld [vmem:[%s193 + $0x28] sm:$0xf]
      %v213 = vld [vmem:[%s193 + $0x2c] sm:$0xf]
      %v214 = vld [vmem:[%s193 + $0x30] sm:$0xf]
      %v215 = vld [vmem:[%s193 + $0x34] sm:$0xf]
      %v216 = vld [vmem:[%s193 + $0x38] sm:$0xf]
      %v217 = vld [vmem:[%s193 + $0x3c] sm:$0xf]
      %v218 = vld [vmem:[%s193 + $0x40] sm:$0xf]
      %v219 = vld [vmem:[%s193 + $0x44] sm:$0xf]
      %v220 = vld [vmem:[%s193 + $0x48] sm:$0xf]
      %v221 = vld [vmem:[%s193 + $0x4c] sm:$0xf]
      %v222 = vld [vmem:[%s193 + $0x50] sm:$0xf]
      %v223 = vld [vmem:[%s193 + $0x54] sm:$0xf]
      %v224 = vld [vmem:[%s193 + $0x58] sm:$0xf]
      %v225 = vld [vmem:[%s193 + $0x5c] sm:$0xf]
      %v226 = vld [vmem:[%s193 + $0x60] sm:$0xf]
      %v227 = vld [vmem:[%s193 + $0x64] sm:$0xf]
      %v228 = vld [vmem:[%s193 + $0x68] sm:$0xf]
      %v229 = vld [vmem:[%s193 + $0x6c] sm:$0xf]
      %v230 = vld [vmem:[%s193 + $0x70] sm:$0xf]
      %v231 = vld [vmem:[%s193 + $0x74] sm:$0xf]
      %v232 = vld [vmem:[%s193 + $0x78] sm:$0xf]
      %v233 = vld [vmem:[%s193 + $0x7c] sm:$0xf]
      %v234 = vld [vmem:[%s1] sm:$0xf]
      %v235 = vld [vmem:[%s1 + $0x4] sm:$0xf]
      %v268 = vunpack.c.l.b16 %v202
      %v269 = vunpack.c.l.b16 %v203
      %v270 = vunpack.c.l.b16 %v204
      %v271 = vunpack.c.l.b16 %v205
      %v272 = vunpack.c.l.b16 %v206
      %v273 = vunpack.c.l.b16 %v207
      %v274 = vunpack.c.l.b16 %v208
      %v275 = vunpack.c.l.b16 %v209
      %v276 = vunpack.c.l.b16 %v210
      %v277 = vunpack.c.l.b16 %v211
      %v278 = vunpack.c.l.b16 %v212
      %v279 = vunpack.c.l.b16 %v213
      %v280 = vunpack.c.l.b16 %v214
      %v281 = vunpack.c.l.b16 %v215
      %v282 = vunpack.c.l.b16 %v216
      %v283 = vunpack.c.l.b16 %v217
      %v284 = vunpack.c.l.b16 %v218
      %v285 = vunpack.c.l.b16 %v219
      %v286 = vunpack.c.l.b16 %v220
      %v287 = vunpack.c.l.b16 %v221
      %v288 = vunpack.c.l.b16 %v222
      %v289 = vunpack.c.l.b16 %v223
      %v290 = vunpack.c.l.b16 %v224
      %v291 = vunpack.c.l.b16 %v225
      %v292 = vunpack.c.l.b16 %v226
      %v293 = vunpack.c.l.b16 %v227
      %v294 = vunpack.c.l.b16 %v228
      %v295 = vunpack.c.l.b16 %v229
      %v296 = vunpack.c.l.b16 %v230
      %v297 = vunpack.c.l.b16 %v231
      %v298 = vunpack.c.l.b16 %v232
      %v299 = vunpack.c.l.b16 %v233
      %v300 = vpack.c.b16 %v269, %v268
      %v301 = vpack.c.b16 %v271, %v270
      %v302 = vpack.c.b16 %v273, %v272
      %v303 = vpack.c.b16 %v275, %v274
      %v304 = vpack.c.b16 %v277, %v276
      %v305 = vpack.c.b16 %v279, %v278
      %v306 = vpack.c.b16 %v281, %v280
      %v307 = vpack.c.b16 %v283, %v282
      %v308 = vpack.c.b16 %v285, %v284
      %v309 = vpack.c.b16 %v287, %v286
      %v310 = vpack.c.b16 %v289, %v288
      %v311 = vpack.c.b16 %v291, %v290
      %v312 = vpack.c.b16 %v293, %v292
      %v313 = vpack.c.b16 %v295, %v294
      %v314 = vpack.c.b16 %v297, %v296
      %v315 = vpack.c.b16 %v299, %v298
      %v318 = vunpack.c.l.b16 %v234
      %v319 = vunpack.c.l.b16 %v235
      %v320 = vpack.c.b16 %v319, %v318
      %vm322 = vcmask 130048
      %v324 = vsel %vm322, %v300, 0
      %v327 = vsel %vm322, %v301, 0
      %v330 = vsel %vm322, %v302, 0
      %v333 = vsel %vm322, %v303, 0
      %v336 = vsel %vm322, %v304, 0
      %v339 = vsel %vm322, %v305, 0
      %v342 = vsel %vm322, %v306, 0
      %v345 = vsel %vm322, %v307, 0
      %v348 = vsel %vm322, %v308, 0
      %v351 = vsel %vm322, %v309, 0
      %v354 = vsel %vm322, %v310, 0
      %v357 = vsel %vm322, %v311, 0
      %v360 = vsel %vm322, %v312, 0
      %v363 = vsel %vm322, %v313, 0
      %v366 = vsel %vm322, %v314, 0
      %v369 = vsel %vm322, %v315, 0
      %371 = vmatprep.subr.bf16.mxu0 0
      %372 = vmatpush1.bf16.msra.mxu0 0
      %373 = vmatprep.subr.bf16.mxu0 0
      %374 = vmatpush1.bf16.msra.mxu0 0
      %375 = vmatprep.subr.bf16.mxu0 0
      %376 = vmatpush1.bf16.msra.mxu0 0
      %377 = vmatprep.subr.bf16.mxu0 0
      %378 = vmatpush1.bf16.msra.mxu0 0
      %379 = vmatprep.subr.bf16.mxu0 0
      %380 = vmatpush1.bf16.msra.mxu0 0
      %381 = vmatprep.subr.bf16.mxu0 0
      %382 = vmatpush1.bf16.msra.mxu0 0
      %383 = vmatprep.subr.bf16.mxu0 0
      %384 = vmatpush1.bf16.msra.mxu0 0
      %385 = vmatprep.subr.bf16.mxu0 0
      %386 = vmatpush1.bf16.msra.mxu0 %v320
      %387 = vmatprep.subr.bf16.mxu0 0
      %388 = vmatpush2.bf16.msra.mxu0 0
      %389 = vmatprep.subr.bf16.mxu0 0
      %390 = vmatpush2.bf16.msra.mxu0 0
      %391 = vmatprep.subr.bf16.mxu0 0
      %392 = vmatpush2.bf16.msra.mxu0 0
      %393 = vmatprep.subr.bf16.mxu0 0
      %394 = vmatpush2.bf16.msra.mxu0 0
      %395 = vmatprep.subr.bf16.mxu0 0
      %396 = vmatpush2.bf16.msra.mxu0 0
      %397 = vmatprep.subr.bf16.mxu0 0
      %398 = vmatpush2.bf16.msra.mxu0 0
      %399 = vmatprep.subr.bf16.mxu0 0
      %400 = vmatpush2.bf16.msra.mxu0 0
      %401 = vmatprep.subr.bf16.mxu0 0
      %402 = vmatpush2.bf16.msra.mxu0 0
      %403 = vmatprep.mubr.bf16.mxu0 0
      %404 = vmatmul.mubr.bf16.gmra.mxu0 %v324
      %v405 = vpop.f32.mrf.mxu0
      %v406 = vadd.f32 0.0, %v405
      %v407 = vpop.f32.mrf.mxu0
      %v408 = vpop.f32.mrf.mxu0
      %v409 = vadd.f32 0.0, %v408
      %v410 = vpop.f32.mrf.mxu0
      %411 = vmatprep.mubr.bf16.mxu0 0
      %412 = vmatmul.mubr.bf16.gmra.mxu0 %v327
      %v413 = vpop.f32.mrf.mxu0
      %v414 = vadd.f32 0.0, %v413
      %v415 = vpop.f32.mrf.mxu0
      %v416 = vpop.f32.mrf.mxu0
      %v417 = vadd.f32 0.0, %v416
      %v418 = vpop.f32.mrf.mxu0
      %419 = vmatprep.mubr.bf16.mxu0 0
      %420 = vmatmul.mubr.bf16.gmra.mxu0 %v330
      %v421 = vpop.f32.mrf.mxu0
      %v422 = vadd.f32 0.0, %v421
      %v423 = vpop.f32.mrf.mxu0
      %v424 = vpop.f32.mrf.mxu0
      %v425 = vadd.f32 0.0, %v424
      %v426 = vpop.f32.mrf.mxu0
      %427 = vmatprep.mubr.bf16.mxu0 0
      %428 = vmatmul.mubr.bf16.gmra.mxu0 %v333
      %v429 = vpop.f32.mrf.mxu0
      %v430 = vadd.f32 0.0, %v429
      %v431 = vpop.f32.mrf.mxu0
      %v432 = vpop.f32.mrf.mxu0
      %v433 = vadd.f32 0.0, %v432
      %v434 = vpop.f32.mrf.mxu0
      %435 = vmatprep.mubr.bf16.mxu0 0
      %436 = vmatmul.mubr.bf16.gmra.mxu0 %v336
      %v437 = vpop.f32.mrf.mxu0
      %v438 = vadd.f32 0.0, %v437
      %v439 = vpop.f32.mrf.mxu0
      %v440 = vpop.f32.mrf.mxu0
      %v441 = vadd.f32 0.0, %v440
      %v442 = vpop.f32.mrf.mxu0
      %443 = vmatprep.mubr.bf16.mxu0 0
      %444 = vmatmul.mubr.bf16.gmra.mxu0 %v339
      %v445 = vpop.f32.mrf.mxu0
      %v446 = vadd.f32 0.0, %v445
      %v447 = vpop.f32.mrf.mxu0
      %v448 = vpop.f32.mrf.mxu0
      %v449 = vadd.f32 0.0, %v448
      %v450 = vpop.f32.mrf.mxu0
      %451 = vmatprep.mubr.bf16.mxu0 0
      %452 = vmatmul.mubr.bf16.gmra.mxu0 %v342
      %v453 = vpop.f32.mrf.mxu0
      %v454 = vadd.f32 0.0, %v453
      %v455 = vpop.f32.mrf.mxu0
      %v456 = vpop.f32.mrf.mxu0
      %v457 = vadd.f32 0.0, %v456
      %v458 = vpop.f32.mrf.mxu0
      %459 = vmatprep.mubr.bf16.mxu0 0
      %460 = vmatmul.mubr.bf16.gmra.mxu0 %v345
      %v461 = vpop.f32.mrf.mxu0
      %v462 = vadd.f32 0.0, %v461
      %v463 = vpop.f32.mrf.mxu0
      %v464 = vpop.f32.mrf.mxu0
      %v465 = vadd.f32 0.0, %v464
      %v466 = vpop.f32.mrf.mxu0
      %467 = vmatprep.mubr.bf16.mxu0 0
      %468 = vmatmul.mubr.bf16.gmra.mxu0 %v348
      %v469 = vpop.f32.mrf.mxu0
      %v470 = vadd.f32 0.0, %v469
      %v471 = vpop.f32.mrf.mxu0
      %v472 = vpop.f32.mrf.mxu0
      %v473 = vadd.f32 0.0, %v472
      %v474 = vpop.f32.mrf.mxu0
      %475 = vmatprep.mubr.bf16.mxu0 0
      %476 = vmatmul.mubr.bf16.gmra.mxu0 %v351
      %v477 = vpop.f32.mrf.mxu0
      %v478 = vadd.f32 0.0, %v477
      %v479 = vpop.f32.mrf.mxu0
      %v480 = vpop.f32.mrf.mxu0
      %v481 = vadd.f32 0.0, %v480
      %v482 = vpop.f32.mrf.mxu0
      %483 = vmatprep.mubr.bf16.mxu0 0
      %484 = vmatmul.mubr.bf16.gmra.mxu0 %v354
      %v485 = vpop.f32.mrf.mxu0
      %v486 = vadd.f32 0.0, %v485
      %v487 = vpop.f32.mrf.mxu0
      %v488 = vpop.f32.mrf.mxu0
      %v489 = vadd.f32 0.0, %v488
      %v490 = vpop.f32.mrf.mxu0
      %491 = vmatprep.mubr.bf16.mxu0 0
      %492 = vmatmul.mubr.bf16.gmra.mxu0 %v357
      %v493 = vpop.f32.mrf.mxu0
      %v494 = vadd.f32 0.0, %v493
      %v495 = vpop.f32.mrf.mxu0
      %v496 = vpop.f32.mrf.mxu0
      %v497 = vadd.f32 0.0, %v496
      %v498 = vpop.f32.mrf.mxu0
      %499 = vmatprep.mubr.bf16.mxu0 0
      %500 = vmatmul.mubr.bf16.gmra.mxu0 %v360
      %v501 = vpop.f32.mrf.mxu0
      %v502 = vadd.f32 0.0, %v501
      %v503 = vpop.f32.mrf.mxu0
      %v504 = vpop.f32.mrf.mxu0
      %v505 = vadd.f32 0.0, %v504
      %v506 = vpop.f32.mrf.mxu0
      %507 = vmatprep.mubr.bf16.mxu0 0
      %508 = vmatmul.mubr.bf16.gmra.mxu0 %v363
      %v509 = vpop.f32.mrf.mxu0
      %v510 = vadd.f32 0.0, %v509
      %v511 = vpop.f32.mrf.mxu0
      %v512 = vpop.f32.mrf.mxu0
      %v513 = vadd.f32 0.0, %v512
      %v514 = vpop.f32.mrf.mxu0
      %515 = vmatprep.mubr.bf16.mxu0 0
      %516 = vmatmul.mubr.bf16.gmra.mxu0 %v366
      %v517 = vpop.f32.mrf.mxu0
      %v518 = vadd.f32 0.0, %v517
      %v519 = vpop.f32.mrf.mxu0
      %v520 = vpop.f32.mrf.mxu0
      %v521 = vadd.f32 0.0, %v520
      %v522 = vpop.f32.mrf.mxu0
      %523 = vmatprep.mubr.bf16.mxu0 0
      %524 = vmatmul.mubr.bf16.gmra.mxu0 %v369
      %v525 = vpop.f32.mrf.mxu0
      %v526 = vadd.f32 0.0, %v525
      %v527 = vpop.f32.mrf.mxu0
      %v528 = vpop.f32.mrf.mxu0
      %v529 = vadd.f32 0.0, %v528
      %v530 = vpop.f32.mrf.mxu0
      %531 = vdwg.mxu0
      %v532 = vld [vmem:[%s2] sm:$0x1]
      %v534 = vlaneseq
      %v535 = vshrl.u32 %v534, 7
      %v536 = vsub.s32 0, %v535
      %v537 = vrot.slane %v532, %v536
      %v539 = vmul.f32 %v406, %v537
      %v540 = vmul.f32 %v409, %v537
      %v541 = vmul.f32 %v414, %v537
      %v542 = vmul.f32 %v417, %v537
      %v543 = vmul.f32 %v422, %v537
      %v544 = vmul.f32 %v425, %v537
      %v545 = vmul.f32 %v430, %v537
      %v546 = vmul.f32 %v433, %v537
      %v547 = vmul.f32 %v438, %v537
      %v548 = vmul.f32 %v441, %v537
      %v549 = vmul.f32 %v446, %v537
      %v550 = vmul.f32 %v449, %v537
      %v551 = vmul.f32 %v454, %v537
      %v552 = vmul.f32 %v457, %v537
      %v553 = vmul.f32 %v462, %v537
      %v554 = vmul.f32 %v465, %v537
      %v555 = vmul.f32 %v470, %v537
      %v556 = vmul.f32 %v473, %v537
      %v557 = vmul.f32 %v478, %v537
      %v558 = vmul.f32 %v481, %v537
      %v559 = vmul.f32 %v486, %v537
      %v560 = vmul.f32 %v489, %v537
      %v561 = vmul.f32 %v494, %v537
      %v562 = vmul.f32 %v497, %v537
      %v563 = vmul.f32 %v502, %v537
      %v564 = vmul.f32 %v505, %v537
      %v565 = vmul.f32 %v510, %v537
      %v566 = vmul.f32 %v513, %v537
      %v567 = vmul.f32 %v518, %v537
      %v568 = vmul.f32 %v521, %v537
      %v569 = vmul.f32 %v526, %v537
      %v570 = vmul.f32 %v529, %v537
      %v571 = vld [vmem:[%s3] sm:$0x1]
      %v573 = vlaneseq
      %v574 = vshrl.u32 %v573, 7
      %v575 = vsub.s32 0, %v574
      %v576 = vrot.slane %v571, %v575
      %v578 = vadd.f32 %v539, %v576
      %v579 = vadd.f32 %v540, %v576
      %v580 = vadd.f32 %v541, %v576
      %v581 = vadd.f32 %v542, %v576
      %v582 = vadd.f32 %v543, %v576
      %v583 = vadd.f32 %v544, %v576
      %v584 = vadd.f32 %v545, %v576
      %v585 = vadd.f32 %v546, %v576
      %v586 = vadd.f32 %v547, %v576
      %v587 = vadd.f32 %v548, %v576
      %v588 = vadd.f32 %v549, %v576
      %v589 = vadd.f32 %v550, %v576
      %v590 = vadd.f32 %v551, %v576
      %v591 = vadd.f32 %v552, %v576
      %v592 = vadd.f32 %v553, %v576
      %v593 = vadd.f32 %v554, %v576
      %v594 = vadd.f32 %v555, %v576
      %v595 = vadd.f32 %v556, %v576
      %v596 = vadd.f32 %v557, %v576
      %v597 = vadd.f32 %v558, %v576
      %v598 = vadd.f32 %v559, %v576
      %v599 = vadd.f32 %v560, %v576
      %v600 = vadd.f32 %v561, %v576
      %v601 = vadd.f32 %v562, %v576
      %v602 = vadd.f32 %v563, %v576
      %v603 = vadd.f32 %v564, %v576
      %v604 = vadd.f32 %v565, %v576
      %v605 = vadd.f32 %v566, %v576
      %v606 = vadd.f32 %v567, %v576
      %v607 = vadd.f32 %v568, %v576
      %v608 = vadd.f32 %v569, %v576
      %v609 = vadd.f32 %v570, %v576
      %610 = vst.msk [vmem:[%s199] sm:$0xff] %vm322, %v578
      %611 = vst.msk [vmem:[%s199 + $0x8] sm:$0xff] %vm322, %v579
      %612 = vst.msk [vmem:[%s199 + $0x10] sm:$0xff] %vm322, %v580
      %613 = vst.msk [vmem:[%s199 + $0x18] sm:$0xff] %vm322, %v581
      %614 = vst.msk [vmem:[%s199 + $0x20] sm:$0xff] %vm322, %v582
      %615 = vst.msk [vmem:[%s199 + $0x28] sm:$0xff] %vm322, %v583
      %616 = vst.msk [vmem:[%s199 + $0x30] sm:$0xff] %vm322, %v584
      %617 = vst.msk [vmem:[%s199 + $0x38] sm:$0xff] %vm322, %v585
      %618 = vst.msk [vmem:[%s199 + $0x40] sm:$0xff] %vm322, %v586
      %619 = vst.msk [vmem:[%s199 + $0x48] sm:$0xff] %vm322, %v587
      %620 = vst.msk [vmem:[%s199 + $0x50] sm:$0xff] %vm322, %v588
      %621 = vst.msk [vmem:[%s199 + $0x58] sm:$0xff] %vm322, %v589
      %622 = vst.msk [vmem:[%s199 + $0x60] sm:$0xff] %vm322, %v590
      %623 = vst.msk [vmem:[%s199 + $0x68] sm:$0xff] %vm322, %v591
      %624 = vst.msk [vmem:[%s199 + $0x70] sm:$0xff] %vm322, %v592
      %625 = vst.msk [vmem:[%s199 + $0x78] sm:$0xff] %vm322, %v593
      %626 = vst.msk [vmem:[%s199 + $0x80] sm:$0xff] %vm322, %v594
      %627 = vst.msk [vmem:[%s199 + $0x88] sm:$0xff] %vm322, %v595
      %628 = vst.msk [vmem:[%s199 + $0x90] sm:$0xff] %vm322, %v596
      %629 = vst.msk [vmem:[%s199 + $0x98] sm:$0xff] %vm322, %v597
      %630 = vst.msk [vmem:[%s199 + $0xa0] sm:$0xff] %vm322, %v598
      %631 = vst.msk [vmem:[%s199 + $0xa8] sm:$0xff] %vm322, %v599
      %632 = vst.msk [vmem:[%s199 + $0xb0] sm:$0xff] %vm322, %v600
      %633 = vst.msk [vmem:[%s199 + $0xb8] sm:$0xff] %vm322, %v601
      %634 = vst.msk [vmem:[%s199 + $0xc0] sm:$0xff] %vm322, %v602
      %635 = vst.msk [vmem:[%s199 + $0xc8] sm:$0xff] %vm322, %v603
      %636 = vst.msk [vmem:[%s199 + $0xd0] sm:$0xff] %vm322, %v604
      %637 = vst.msk [vmem:[%s199 + $0xd8] sm:$0xff] %vm322, %v605
      %638 = vst.msk [vmem:[%s199 + $0xe0] sm:$0xff] %vm322, %v606
      %639 = vst.msk [vmem:[%s199 + $0xe8] sm:$0xff] %vm322, %v607
      %640 = vst.msk [vmem:[%s199 + $0xf0] sm:$0xff] %vm322, %v608
      %641 = vst.msk [vmem:[%s199 + $0xf8] sm:$0xff] %vm322, %v609
      %s642 = smul.u32 32, %s15
      %p643 = scmp.lt.s32.totalorder %s642, 63
      %s644 = scalar_select %p643, %s642, 63
      %s645 = smul.addr %s644, 8
      %s646 = scalar_lea.vmem %s4, %s645
      // Predicated region
      $region37: #{enet_forward.175} parent=35 // pred_check
        %p647 = pneg %p122
      $region38: #{enet_forward.175} parent=35 // pred_check_branch
        %649 = sbr.rel (%p647) target = $region40
      $region39: #{enet_forward.175} parent=35 // pred_region
        %s650 = smul.u32 32, %s15
      $region40: #{enet_forward.175} parent=35 // pred_fallthru
        _
    $region36: #{enet_forward.175} parent=5 // pred_fallthru
      _
    %p651 = scmp.le.s32.totalorder 2, %s10
    // Predicated region
    $region41: #{enet_forward.175} parent=5 // pred_check
      %p652 = pneg %p651
    $region42: #{enet_forward.175} parent=5 // pred_check_branch
      %654 = sbr.rel (%p652) target = $region44
    $region43: #{enet_forward.175} parent=5 // pred_region
      %s655 = ssub.s32 %s10, 2
      // Predicated region
      $region45: #{enet_forward.175} parent=43 // pred_check
        %p656 = pneg %p128
      $region46: #{enet_forward.175} parent=43 // pred_check_branch
        %658 = sbr.rel (%p656) target = $region48
      $region47: #{enet_forward.175} parent=43 // pred_region
        %s659 = smul.u32 32, %s16
        %p660 = scmp.lt.s32.totalorder %s659, 63
        %s661 = scalar_select %p660, %s659, 63
        %s662 = smul.addr %s661, 8
        %s663 = scalar_lea.vmem %s4, %s662
      $region48: #{enet_forward.175} parent=43 // pred_fallthru
        _
    $region44: #{enet_forward.175} parent=5 // pred_fallthru
      _
  $region6: #{enet_forward.175} parent=0 // loop_footer
    %s14 = sadd.s32 1, %s10
  $region7: #{enet_forward.175} parent=0 // loop_footer_branch
    %9 = sbr.rel target = $region3
  $region8: #{enet_forward.175} parent=0 // loop_exit
    _

// kernel: enet_forward.173
$region0: #{enet_forward.173}
  #allocation0 [shape = 'u32[]', space=smem, size = 0x4, offset = 0x4, fixed_abs, tag = 'smem constant byte address 0x4 - core index']
  #allocation1 [shape = 'u32[144,128]{1,0:T(1,128)}', space=vmem, size = 0x12000, scoped, tag = 'internal scratch']
  %s0 = inlined_call_operand.vmem [shape: bf16[512,36], index: 0, kind: input, shape index: {}]
  %s1 = inlined_call_operand.vmem [shape: bf16[36,4], index: 1, kind: input, shape index: {}]
  %s2 = inlined_call_operand.vmem [shape: f32[1,4], index: 2, kind: input, shape index: {}]
  %s3 = inlined_call_operand.vmem [shape: f32[1,4], index: 3, kind: input, shape index: {}]
  %s4 = inlined_call_operand.vmem [shape: bf16[512,4], index: 4, kind: output, shape index: {}]
  %s5 = sld [smem:[#allocation0]]
  $region49: #{enet_forward.173} parent=0
    _
  %s7 = ssub.s32 1, %s5
  %s8 = scalar_select 0, %s7, %s5
  loop: start=0, step=1, limit=4
  $region2: #{enet_forward.173} parent=0 // loop_pre_header
    _
  $region3: #{enet_forward.173} parent=0 // loop_header
    %s10 = sphi 0, %s14
    %p11 = scmp.ge.s32.totalorder %s10, 4
    %s20 = sphi 0, %s22
    %s23 = sphi 0, %s20
    %s24 = sphi 0, %s23
    %s40 = sphi 0, %s24
    %s44 = sphi 0, %s44
    %s46 = sphi 0, %s44
    %s47 = sphi 0, %s46
    %s61 = sphi 0, %s47
    %s65 = sphi 0, %s65
    %s67 = sphi 0, %s65
    %s68 = sphi 0, %s67
    %s82 = sphi 0, %s68
    %s86 = sphi 0, %s86
    %s88 = sphi 0, %s86
    %s89 = sphi 0, %s88
    %s103 = sphi 0, %s89
    %s109 = sphi 0, %s111
    %s112 = sphi 0, %s109
    %s113 = sphi 0, %s112
    %s129 = sphi 0, %s113
  $region4: #{enet_forward.173} parent=0 // loop_header_branch
    %13 = sbr.rel (%p11) target = $region8
  $region5: #{enet_forward.173} parent=0 // loop_body
    %s15 = ssub.s32 %s10, 1
    %s16 = ssub.s32 %s10, 2
    %s17 = sadd.s32 %s10, 1
    %s18 = ssub.s32 %s10, %s17
    %p19 = scmp.eq.s32.totalorder %s18, 0
    %s21 = sadd.s32 %s20, 1
    %s22 = scalar_select %p19, %s20, %s21
    %p25 = pneg %p19
    %p26 = scmp.eq.s32.totalorder %s10, 1
    %p27 = por %p25, %p26
    %p28 = scmp.ne.s32.totalorder %s20, %s23
    %p29 = scmp.eq.s32.totalorder %s10, 0
    %p30 = por %p28, %p29
    %p31 = scmp.ne.s32.totalorder %s20, %s23
    %p32 = scmp.eq.s32.totalorder %s15, 1
    %p33 = por %p31, %p32
    %p34 = scmp.ne.s32.totalorder %s23, %s24
    %p35 = scmp.eq.s32.totalorder %s15, 0
    %p36 = por %p34, %p35
    %p37 = scmp.ne.s32.totalorder %s23, %s24
    %p38 = scmp.eq.s32.totalorder %s16, 1
    %p39 = por %p37, %p38
    %p41 = scmp.ne.s32.totalorder %s24, %s40
    %p42 = scmp.eq.s32.totalorder %s16, 0
    %p43 = por %p41, %p42
    %s45 = sadd.s32 %s44, 1
    %p48 = scmp.eq.s32.totalorder %s10, 1
    %p49 = scmp.ne.s32.totalorder %s44, %s46
    %p50 = scmp.eq.s32.totalorder %s10, 0
    %p51 = por %p49, %p50
    %p52 = scmp.ne.s32.totalorder %s44, %s46
    %p53 = scmp.eq.s32.totalorder %s15, 1
    %p54 = por %p52, %p53
    %p55 = scmp.ne.s32.totalorder %s46, %s47
    %p56 = scmp.eq.s32.totalorder %s15, 0
    %p57 = por %p55, %p56
    %p58 = scmp.ne.s32.totalorder %s46, %s47
    %p59 = scmp.eq.s32.totalorder %s16, 1
    %p60 = por %p58, %p59
    %p62 = scmp.ne.s32.totalorder %s47, %s61
    %p63 = scmp.eq.s32.totalorder %s16, 0
    %p64 = por %p62, %p63
    %s66 = sadd.s32 %s65, 1
    %p69 = scmp.eq.s32.totalorder %s10, 1
    %p70 = scmp.ne.s32.totalorder %s65, %s67
    %p71 = scmp.eq.s32.totalorder %s10, 0
    %p72 = por %p70, %p71
    %p73 = scmp.ne.s32.totalorder %s65, %s67
    %p74 = scmp.eq.s32.totalorder %s15, 1
    %p75 = por %p73, %p74
    %p76 = scmp.ne.s32.totalorder %s67, %s68
    %p77 = scmp.eq.s32.totalorder %s15, 0
    %p78 = por %p76, %p77
    %p79 = scmp.ne.s32.totalorder %s67, %s68
    %p80 = scmp.eq.s32.totalorder %s16, 1
    %p81 = por %p79, %p80
    %p83 = scmp.ne.s32.totalorder %s68, %s82
    %p84 = scmp.eq.s32.totalorder %s16, 0
    %p85 = por %p83, %p84
    %s87 = sadd.s32 %s86, 1
    %p90 = scmp.eq.s32.totalorder %s10, 1
    %p91 = scmp.ne.s32.totalorder %s86, %s88
    %p92 = scmp.eq.s32.totalorder %s10, 0
    %p93 = por %p91, %p92
    %p94 = scmp.ne.s32.totalorder %s86, %s88
    %p95 = scmp.eq.s32.totalorder %s15, 1
    %p96 = por %p94, %p95
    %p97 = scmp.ne.s32.totalorder %s88, %s89
    %p98 = scmp.eq.s32.totalorder %s15, 0
    %p99 = por %p97, %p98
    %p100 = scmp.ne.s32.totalorder %s88, %s89
    %p101 = scmp.eq.s32.totalorder %s16, 1
    %p102 = por %p100, %p101
    %p104 = scmp.ne.s32.totalorder %s89, %s103
    %p105 = scmp.eq.s32.totalorder %s16, 0
    %p106 = por %p104, %p105
    %s107 = ssub.s32 %s10, %s17
    %p108 = scmp.eq.s32.totalorder %s107, 0
    %s110 = sadd.s32 %s109, 1
    %s111 = scalar_select %p108, %s109, %s110
    %p114 = pneg %p108
    %p115 = scmp.eq.s32.totalorder %s10, 1
    %p116 = por %p114, %p115
    %p117 = scmp.ne.s32.totalorder %s109, %s112
    %p118 = scmp.eq.s32.totalorder %s10, 0
    %p119 = por %p117, %p118
    %p120 = scmp.ne.s32.totalorder %s109, %s112
    %p121 = scmp.eq.s32.totalorder %s15, 1
    %p122 = por %p120, %p121
    %p123 = scmp.ne.s32.totalorder %s112, %s113
    %p124 = scmp.eq.s32.totalorder %s15, 0
    %p125 = por %p123, %p124
    %p126 = scmp.ne.s32.totalorder %s112, %s113
    %p127 = scmp.eq.s32.totalorder %s16, 1
    %p128 = por %p126, %p127
    %p130 = scmp.ne.s32.totalorder %s113, %s129
    %p131 = scmp.eq.s32.totalorder %s16, 0
    %p132 = por %p130, %p131
    %p133 = scmp.le.s32.totalorder 1, %s10
    %p134 = scmp.lt.s32.totalorder %s10, 3
    %p135 = pnand %p133, %p134
    %p136 = pneg %p135
    // Predicated region
    $region9: #{enet_forward.173} parent=5 // pred_check
      _
    $region10: #{enet_forward.173} parent=5 // pred_check_branch
      %138 = sbr.rel (%p135) target = $region12
    $region11: #{enet_forward.173} parent=5 // pred_region
      %s139 = ssub.s32 %s10, 1
      // Predicated region
      $region13: #{enet_forward.173} parent=11 // pred_check
        %p140 = pneg %p57
      $region14: #{enet_forward.173} parent=11 // pred_check_branch
        %142 = sbr.rel (%p140) target = $region16
      $region15: #{enet_forward.173} parent=11 // pred_region
        _
      $region16: #{enet_forward.173} parent=11 // pred_fallthru
        _
      // Predicated region
      $region17: #{enet_forward.173} parent=11 // pred_check
        %p143 = pneg %p78
      $region18: #{enet_forward.173} parent=11 // pred_check_branch
        %145 = sbr.rel (%p143) target = $region20
      $region19: #{enet_forward.173} parent=11 // pred_region
        _
      $region20: #{enet_forward.173} parent=11 // pred_fallthru
        _
      // Predicated region
      $region21: #{enet_forward.173} parent=11 // pred_check
        %p146 = pneg %p99
      $region22: #{enet_forward.173} parent=11 // pred_check_branch
        %148 = sbr.rel (%p146) target = $region24
      $region23: #{enet_forward.173} parent=11 // pred_region
        _
      $region24: #{enet_forward.173} parent=11 // pred_fallthru
        _
    $region12: #{enet_forward.173} parent=5 // pred_fallthru
      _
    %p149 = scmp.lt.s32.totalorder %s10, 2
    // Predicated region
    $region25: #{enet_forward.173} parent=5 // pred_check
      %p150 = pneg %p149
    $region26: #{enet_forward.173} parent=5 // pred_check_branch
      %152 = sbr.rel (%p150) target = $region28
    $region27: #{enet_forward.173} parent=5 // pred_region
      // Predicated region
      $region29: #{enet_forward.173} parent=27 // pred_check
        %p153 = pneg %p30
      $region30: #{enet_forward.173} parent=27 // pred_check_branch
        %155 = sbr.rel (%p153) target = $region32
      $region31: #{enet_forward.173} parent=27 // pred_region
        %s156 = smul.u32 32, %s10
        %p157 = scmp.lt.s32.totalorder %s156, 63
        %s158 = scalar_select %p157, %s156, 63
        %s159 = smul.addr %s158, 4
        %s160 = scalar_lea.vmem %s0, %s159
        %s161 = smul.u32 32, %s10
      $region32: #{enet_forward.173} parent=27 // pred_fallthru
        _
    $region28: #{enet_forward.173} parent=5 // pred_fallthru
      _
    %p162 = scmp.le.s32.totalorder 1, %s10
    %p163 = scmp.lt.s32.totalorder %s10, 3
    %p164 = pnand %p162, %p163
    %p165 = pneg %p164
    // Predicated region
    $region33: #{enet_forward.173} parent=5 // pred_check
      _
    $region34: #{enet_forward.173} parent=5 // pred_check_branch
      %167 = sbr.rel (%p164) target = $region36
    $region35: #{enet_forward.173} parent=5 // pred_region
      %s168 = ssub.s32 %s10, 1
      %s169 = smul.u32 32, %s15
      %p170 = scmp.lt.s32.totalorder %s169, 63
      %s171 = scalar_select %p170, %s169, 63
      %s172 = smul.addr %s171, 4
      %s173 = scalar_lea.vmem %s0, %s172
      %p174 = pneg %p36
      %p175 = pneg %p33
      %p176 = pneg %p57
      %p177 = pneg %p54
      %p178 = pneg %p78
      %p179 = pneg %p75
      %p180 = pneg %p99
      %p181 = pneg %p96
      %p182 = pneg %p125
      %p183 = pneg %p122
      %s184 = smul.u32 32, %s15
      %p185 = scmp.lt.s32.totalorder %s184, 63
      %s186 = scalar_select %p185, %s184, 63
      %s187 = smul.addr %s186, 4
      %s188 = scalar_lea.vmem %s4, %s187
      %s189 = smul.u32 32, %s15
      %p190 = scmp.lt.s32.totalorder %s189, 63
      %s191 = scalar_select %p190, %s189, 63
      %s192 = smul.addr %s191, 4
      %s193 = scalar_lea.vmem %s0, %s192
      %s194 = smul.u32 32, %s15
      %s195 = smul.u32 32, %s15
      %p196 = scmp.lt.s32.totalorder %s195, 63
      %s197 = scalar_select %p196, %s195, 63
      %s198 = smul.addr %s197, 4
      %s199 = scalar_lea.vmem %s4, %s198
      %s200 = smul.u32 32, %s15
      %v202 = vld [vmem:[%s193] sm:$0xf]
      %v203 = vld [vmem:[%s193 + $0x4] sm:$0xf]
      %v204 = vld [vmem:[%s193 + $0x8] sm:$0xf]
      %v205 = vld [vmem:[%s193 + $0xc] sm:$0xf]
      %v206 = vld [vmem:[%s193 + $0x10] sm:$0xf]
      %v207 = vld [vmem:[%s193 + $0x14] sm:$0xf]
      %v208 = vld [vmem:[%s193 + $0x18] sm:$0xf]
      %v209 = vld [vmem:[%s193 + $0x1c] sm:$0xf]
      %v210 = vld [vmem:[%s193 + $0x20] sm:$0xf]
      %v211 = vld [vmem:[%s193 + $0x24] sm:$0xf]
      %v212 = vld [vmem:[%s193 + $0x28] sm:$0xf]
      %v213 = vld [vmem:[%s193 + $0x2c] sm:$0xf]
      %v214 = vld [vmem:[%s193 + $0x30] sm:$0xf]
      %v215 = vld [vmem:[%s193 + $0x34] sm:$0xf]
      %v216 = vld [vmem:[%s193 + $0x38] sm:$0xf]
      %v217 = vld [vmem:[%s193 + $0x3c] sm:$0xf]
      %v218 = vld [vmem:[%s193 + $0x40] sm:$0xf]
      %v219 = vld [vmem:[%s193 + $0x44] sm:$0xf]
      %v220 = vld [vmem:[%s193 + $0x48] sm:$0xf]
      %v221 = vld [vmem:[%s193 + $0x4c] sm:$0xf]
      %v222 = vld [vmem:[%s193 + $0x50] sm:$0xf]
      %v223 = vld [vmem:[%s193 + $0x54] sm:$0xf]
      %v224 = vld [vmem:[%s193 + $0x58] sm:$0xf]
      %v225 = vld [vmem:[%s193 + $0x5c] sm:$0xf]
      %v226 = vld [vmem:[%s193 + $0x60] sm:$0xf]
      %v227 = vld [vmem:[%s193 + $0x64] sm:$0xf]
      %v228 = vld [vmem:[%s193 + $0x68] sm:$0xf]
      %v229 = vld [vmem:[%s193 + $0x6c] sm:$0xf]
      %v230 = vld [vmem:[%s193 + $0x70] sm:$0xf]
      %v231 = vld [vmem:[%s193 + $0x74] sm:$0xf]
      %v232 = vld [vmem:[%s193 + $0x78] sm:$0xf]
      %v233 = vld [vmem:[%s193 + $0x7c] sm:$0xf]
      %v234 = vld [vmem:[%s1] sm:$0xf]
      %v235 = vld [vmem:[%s1 + $0x4] sm:$0xf]
      %v236 = vld [vmem:[%s1 + $0x8] sm:$0xf]
      %v237 = vld [vmem:[%s1 + $0xc] sm:$0xf]
      %v238 = vld [vmem:[%s1 + $0x10] sm:$0x3]
      %v271 = vunpack.c.l.b16 %v202
      %v272 = vunpack.c.l.b16 %v203
      %v273 = vunpack.c.l.b16 %v204
      %v274 = vunpack.c.l.b16 %v205
      %v275 = vunpack.c.l.b16 %v206
      %v276 = vunpack.c.l.b16 %v207
      %v277 = vunpack.c.l.b16 %v208
      %v278 = vunpack.c.l.b16 %v209
      %v279 = vunpack.c.l.b16 %v210
      %v280 = vunpack.c.l.b16 %v211
      %v281 = vunpack.c.l.b16 %v212
      %v282 = vunpack.c.l.b16 %v213
      %v283 = vunpack.c.l.b16 %v214
      %v284 = vunpack.c.l.b16 %v215
      %v285 = vunpack.c.l.b16 %v216
      %v286 = vunpack.c.l.b16 %v217
      %v287 = vunpack.c.l.b16 %v218
      %v288 = vunpack.c.l.b16 %v219
      %v289 = vunpack.c.l.b16 %v220
      %v290 = vunpack.c.l.b16 %v221
      %v291 = vunpack.c.l.b16 %v222
      %v292 = vunpack.c.l.b16 %v223
      %v293 = vunpack.c.l.b16 %v224
      %v294 = vunpack.c.l.b16 %v225
      %v295 = vunpack.c.l.b16 %v226
      %v296 = vunpack.c.l.b16 %v227
      %v297 = vunpack.c.l.b16 %v228
      %v298 = vunpack.c.l.b16 %v229
      %v299 = vunpack.c.l.b16 %v230
      %v300 = vunpack.c.l.b16 %v231
      %v301 = vunpack.c.l.b16 %v232
      %v302 = vunpack.c.l.b16 %v233
      %v303 = vpack.c.b16 %v272, %v271
      %v304 = vpack.c.b16 %v274, %v273
      %v305 = vpack.c.b16 %v276, %v275
      %v306 = vpack.c.b16 %v278, %v277
      %v307 = vpack.c.b16 %v280, %v279
      %v308 = vpack.c.b16 %v282, %v281
      %v309 = vpack.c.b16 %v284, %v283
      %v310 = vpack.c.b16 %v286, %v285
      %v311 = vpack.c.b16 %v288, %v287
      %v312 = vpack.c.b16 %v290, %v289
      %v313 = vpack.c.b16 %v292, %v291
      %v314 = vpack.c.b16 %v294, %v293
      %v315 = vpack.c.b16 %v296, %v295
      %v316 = vpack.c.b16 %v298, %v297
      %v317 = vpack.c.b16 %v300, %v299
      %v318 = vpack.c.b16 %v302, %v301
      %v324 = vunpack.c.l.b16 %v234
      %v325 = vunpack.c.l.b16 %v235
      %v326 = vunpack.c.l.b16 %v236
      %v327 = vunpack.c.l.b16 %v237
      %v328 = vunpack.c.l.b16 %v238
      %v329 = vpack.c.b16 %v325, %v324
      %v330 = vpack.c.b16 %v327, %v326
      %v331 = vpack.c.b16 %v328, %v328
      %vm334 = vcmask 293888
      %v336 = vsel %vm334, %v303, 0
      %v339 = vsel %vm334, %v304, 0
      %v342 = vsel %vm334, %v305, 0
      %v345 = vsel %vm334, %v306, 0
      %v348 = vsel %vm334, %v307, 0
      %v351 = vsel %vm334, %v308, 0
      %v354 = vsel %vm334, %v309, 0
      %v357 = vsel %vm334, %v310, 0
      %v360 = vsel %vm334, %v311, 0
      %v363 = vsel %vm334, %v312, 0
      %v366 = vsel %vm334, %v313, 0
      %v369 = vsel %vm334, %v314, 0
      %v372 = vsel %vm334, %v315, 0
      %v375 = vsel %vm334, %v316, 0
      %v378 = vsel %vm334, %v317, 0
      %v381 = vsel %vm334, %v318, 0
      %vm383 = vcmask 1041408
      %v385 = vsel %vm383, %v331, 0
      %387 = vmatprep.subr.bf16.mxu0 0
      %388 = vmatpush1.bf16.msra.mxu0 0
      %389 = vmatprep.subr.bf16.mxu0 0
      %390 = vmatpush1.bf16.msra.mxu0 0
      %391 = vmatprep.subr.bf16.mxu0 0
      %392 = vmatpush1.bf16.msra.mxu0 0
      %393 = vmatprep.subr.bf16.mxu0 0
      %394 = vmatpush1.bf16.msra.mxu0 0
      %395 = vmatprep.subr.bf16.mxu0 0
      %396 = vmatpush1.bf16.msra.mxu0 0
      %397 = vmatprep.subr.bf16.mxu0 0
      %398 = vmatpush1.bf16.msra.mxu0 %v385
      %399 = vmatprep.subr.bf16.mxu0 0
      %400 = vmatpush1.bf16.msra.mxu0 %v330
      %401 = vmatprep.subr.bf16.mxu0 0
      %402 = vmatpush1.bf16.msra.mxu0 %v329
      %403 = vmatprep.subr.bf16.mxu0 0
      %404 = vmatpush2.bf16.msra.mxu0 0
      %405 = vmatprep.subr.bf16.mxu0 0
      %406 = vmatpush2.bf16.msra.mxu0 0
      %407 = vmatprep.subr.bf16.mxu0 0
      %408 = vmatpush2.bf16.msra.mxu0 0
      %409 = vmatprep.subr.bf16.mxu0 0
      %410 = vmatpush2.bf16.msra.mxu0 0
      %411 = vmatprep.subr.bf16.mxu0 0
      %412 = vmatpush2.bf16.msra.mxu0 0
      %413 = vmatprep.subr.bf16.mxu0 0
      %414 = vmatpush2.bf16.msra.mxu0 0
      %415 = vmatprep.subr.bf16.mxu0 0
      %416 = vmatpush2.bf16.msra.mxu0 0
      %417 = vmatprep.subr.bf16.mxu0 0
      %418 = vmatpush2.bf16.msra.mxu0 0
      %419 = vmatprep.mubr.bf16.mxu0 0
      %420 = vmatmul.mubr.bf16.gmra.mxu0 %v336
      %v421 = vpop.f32.mrf.mxu0
      %v422 = vadd.f32 0.0, %v421
      %v423 = vpop.f32.mrf.mxu0
      %v424 = vpop.f32.mrf.mxu0
      %v425 = vadd.f32 0.0, %v424
      %v426 = vpop.f32.mrf.mxu0
      %427 = vmatprep.mubr.bf16.mxu0 0
      %428 = vmatmul.mubr.bf16.gmra.mxu0 %v339
      %v429 = vpop.f32.mrf.mxu0
      %v430 = vadd.f32 0.0, %v429
      %v431 = vpop.f32.mrf.mxu0
      %v432 = vpop.f32.mrf.mxu0
      %v433 = vadd.f32 0.0, %v432
      %v434 = vpop.f32.mrf.mxu0
      %435 = vmatprep.mubr.bf16.mxu0 0
      %436 = vmatmul.mubr.bf16.gmra.mxu0 %v342
      %v437 = vpop.f32.mrf.mxu0
      %v438 = vadd.f32 0.0, %v437
      %v439 = vpop.f32.mrf.mxu0
      %v440 = vpop.f32.mrf.mxu0
      %v441 = vadd.f32 0.0, %v440
      %v442 = vpop.f32.mrf.mxu0
      %443 = vmatprep.mubr.bf16.mxu0 0
      %444 = vmatmul.mubr.bf16.gmra.mxu0 %v345
      %v445 = vpop.f32.mrf.mxu0
      %v446 = vadd.f32 0.0, %v445
      %v447 = vpop.f32.mrf.mxu0
      %v448 = vpop.f32.mrf.mxu0
      %v449 = vadd.f32 0.0, %v448
      %v450 = vpop.f32.mrf.mxu0
      %451 = vmatprep.mubr.bf16.mxu0 0
      %452 = vmatmul.mubr.bf16.gmra.mxu0 %v348
      %v453 = vpop.f32.mrf.mxu0
      %v454 = vadd.f32 0.0, %v453
      %v455 = vpop.f32.mrf.mxu0
      %v456 = vpop.f32.mrf.mxu0
      %v457 = vadd.f32 0.0, %v456
      %v458 = vpop.f32.mrf.mxu0
      %459 = vmatprep.mubr.bf16.mxu0 0
      %460 = vmatmul.mubr.bf16.gmra.mxu0 %v351
      %v461 = vpop.f32.mrf.mxu0
      %v462 = vadd.f32 0.0, %v461
      %v463 = vpop.f32.mrf.mxu0
      %v464 = vpop.f32.mrf.mxu0
      %v465 = vadd.f32 0.0, %v464
      %v466 = vpop.f32.mrf.mxu0
      %467 = vmatprep.mubr.bf16.mxu0 0
      %468 = vmatmul.mubr.bf16.gmra.mxu0 %v354
      %v469 = vpop.f32.mrf.mxu0
      %v470 = vadd.f32 0.0, %v469
      %v471 = vpop.f32.mrf.mxu0
      %v472 = vpop.f32.mrf.mxu0
      %v473 = vadd.f32 0.0, %v472
      %v474 = vpop.f32.mrf.mxu0
      %475 = vmatprep.mubr.bf16.mxu0 0
      %476 = vmatmul.mubr.bf16.gmra.mxu0 %v357
      %v477 = vpop.f32.mrf.mxu0
      %v478 = vadd.f32 0.0, %v477
      %v479 = vpop.f32.mrf.mxu0
      %v480 = vpop.f32.mrf.mxu0
      %v481 = vadd.f32 0.0, %v480
      %v482 = vpop.f32.mrf.mxu0
      %483 = vmatprep.mubr.bf16.mxu0 0
      %484 = vmatmul.mubr.bf16.gmra.mxu0 %v360
      %v485 = vpop.f32.mrf.mxu0
      %v486 = vadd.f32 0.0, %v485
      %v487 = vpop.f32.mrf.mxu0
      %v488 = vpop.f32.mrf.mxu0
      %v489 = vadd.f32 0.0, %v488
      %v490 = vpop.f32.mrf.mxu0
      %491 = vmatprep.mubr.bf16.mxu0 0
      %492 = vmatmul.mubr.bf16.gmra.mxu0 %v363
      %v493 = vpop.f32.mrf.mxu0
      %v494 = vadd.f32 0.0, %v493
      %v495 = vpop.f32.mrf.mxu0
      %v496 = vpop.f32.mrf.mxu0
      %v497 = vadd.f32 0.0, %v496
      %v498 = vpop.f32.mrf.mxu0
      %499 = vmatprep.mubr.bf16.mxu0 0
      %500 = vmatmul.mubr.bf16.gmra.mxu0 %v366
      %v501 = vpop.f32.mrf.mxu0
      %v502 = vadd.f32 0.0, %v501
      %v503 = vpop.f32.mrf.mxu0
      %v504 = vpop.f32.mrf.mxu0
      %v505 = vadd.f32 0.0, %v504
      %v506 = vpop.f32.mrf.mxu0
      %507 = vmatprep.mubr.bf16.mxu0 0
      %508 = vmatmul.mubr.bf16.gmra.mxu0 %v369
      %v509 = vpop.f32.mrf.mxu0
      %v510 = vadd.f32 0.0, %v509
      %v511 = vpop.f32.mrf.mxu0
      %v512 = vpop.f32.mrf.mxu0
      %v513 = vadd.f32 0.0, %v512
      %v514 = vpop.f32.mrf.mxu0
      %515 = vmatprep.mubr.bf16.mxu0 0
      %516 = vmatmul.mubr.bf16.gmra.mxu0 %v372
      %v517 = vpop.f32.mrf.mxu0
      %v518 = vadd.f32 0.0, %v517
      %v519 = vpop.f32.mrf.mxu0
      %v520 = vpop.f32.mrf.mxu0
      %v521 = vadd.f32 0.0, %v520
      %v522 = vpop.f32.mrf.mxu0
      %523 = vmatprep.mubr.bf16.mxu0 0
      %524 = vmatmul.mubr.bf16.gmra.mxu0 %v375
      %v525 = vpop.f32.mrf.mxu0
      %v526 = vadd.f32 0.0, %v525
      %v527 = vpop.f32.mrf.mxu0
      %v528 = vpop.f32.mrf.mxu0
      %v529 = vadd.f32 0.0, %v528
      %v530 = vpop.f32.mrf.mxu0
      %531 = vmatprep.mubr.bf16.mxu0 0
      %532 = vmatmul.mubr.bf16.gmra.mxu0 %v378
      %v533 = vpop.f32.mrf.mxu0
      %v534 = vadd.f32 0.0, %v533
      %v535 = vpop.f32.mrf.mxu0
      %v536 = vpop.f32.mrf.mxu0
      %v537 = vadd.f32 0.0, %v536
      %v538 = vpop.f32.mrf.mxu0
      %539 = vmatprep.mubr.bf16.mxu0 0
      %540 = vmatmul.mubr.bf16.gmra.mxu0 %v381
      %v541 = vpop.f32.mrf.mxu0
      %v542 = vadd.f32 0.0, %v541
      %v543 = vpop.f32.mrf.mxu0
      %v544 = vpop.f32.mrf.mxu0
      %v545 = vadd.f32 0.0, %v544
      %v546 = vpop.f32.mrf.mxu0
      %547 = vdwg.mxu0
      %v548 = vld [vmem:[%s2] sm:$0x1]
      %v550 = vlaneseq
      %v551 = vshrl.u32 %v550, 7
      %v552 = vsub.s32 0, %v551
      %v553 = vrot.slane %v548, %v552
      %v555 = vmul.f32 %v422, %v553
      %v556 = vmul.f32 %v425, %v553
      %v557 = vmul.f32 %v430, %v553
      %v558 = vmul.f32 %v433, %v553
      %v559 = vmul.f32 %v438, %v553
      %v560 = vmul.f32 %v441, %v553
      %v561 = vmul.f32 %v446, %v553
      %v562 = vmul.f32 %v449, %v553
      %v563 = vmul.f32 %v454, %v553
      %v564 = vmul.f32 %v457, %v553
      %v565 = vmul.f32 %v462, %v553
      %v566 = vmul.f32 %v465, %v553
      %v567 = vmul.f32 %v470, %v553
      %v568 = vmul.f32 %v473, %v553
      %v569 = vmul.f32 %v478, %v553
      %v570 = vmul.f32 %v481, %v553
      %v571 = vmul.f32 %v486, %v553
      %v572 = vmul.f32 %v489, %v553
      %v573 = vmul.f32 %v494, %v553
      %v574 = vmul.f32 %v497, %v553
      %v575 = vmul.f32 %v502, %v553
      %v576 = vmul.f32 %v505, %v553
      %v577 = vmul.f32 %v510, %v553
      %v578 = vmul.f32 %v513, %v553
      %v579 = vmul.f32 %v518, %v553
      %v580 = vmul.f32 %v521, %v553
      %v581 = vmul.f32 %v526, %v553
      %v582 = vmul.f32 %v529, %v553
      %v583 = vmul.f32 %v534, %v553
      %v584 = vmul.f32 %v537, %v553
      %v585 = vmul.f32 %v542, %v553
      %v586 = vmul.f32 %v545, %v553
      %v587 = vld [vmem:[%s3] sm:$0x1]
      %v589 = vlaneseq
      %v590 = vshrl.u32 %v589, 7
      %v591 = vsub.s32 0, %v590
      %v592 = vrot.slane %v587, %v591
      %v594 = vadd.f32 %v555, %v592
      %v595 = vadd.f32 %v556, %v592
      %v596 = vadd.f32 %v557, %v592
      %v597 = vadd.f32 %v558, %v592
      %v598 = vadd.f32 %v559, %v592
      %v599 = vadd.f32 %v560, %v592
      %v600 = vadd.f32 %v561, %v592
      %v601 = vadd.f32 %v562, %v592
      %v602 = vadd.f32 %v563, %v592
      %v603 = vadd.f32 %v564, %v592
      %v604 = vadd.f32 %v565, %v592
      %v605 = vadd.f32 %v566, %v592
      %v606 = vadd.f32 %v567, %v592
      %v607 = vadd.f32 %v568, %v592
      %v608 = vadd.f32 %v569, %v592
      %v609 = vadd.f32 %v570, %v592
      %v610 = vadd.f32 %v571, %v592
      %v611 = vadd.f32 %v572, %v592
      %v612 = vadd.f32 %v573, %v592
      %v613 = vadd.f32 %v574, %v592
      %v614 = vadd.f32 %v575, %v592
      %v615 = vadd.f32 %v576, %v592
      %v616 = vadd.f32 %v577, %v592
      %v617 = vadd.f32 %v578, %v592
      %v618 = vadd.f32 %v579, %v592
      %v619 = vadd.f32 %v580, %v592
      %v620 = vadd.f32 %v581, %v592
      %v621 = vadd.f32 %v582, %v592
      %v622 = vadd.f32 %v583, %v592
      %v623 = vadd.f32 %v584, %v592
      %v624 = vadd.f32 %v585, %v592
      %v625 = vadd.f32 %v586, %v592
      %vm626 = vcmp.ge.f32.partialorder %v594, 0.0
      %vm627 = vcmp.ge.f32.partialorder %v595, 0.0
      %vm628 = vcmp.ge.f32.partialorder %v596, 0.0
      %vm629 = vcmp.ge.f32.partialorder %v597, 0.0
      %vm630 = vcmp.ge.f32.partialorder %v598, 0.0
      %vm631 = vcmp.ge.f32.partialorder %v599, 0.0
      %vm632 = vcmp.ge.f32.partialorder %v600, 0.0
      %vm633 = vcmp.ge.f32.partialorder %v601, 0.0
      %vm634 = vcmp.ge.f32.partialorder %v602, 0.0
      %vm635 = vcmp.ge.f32.partialorder %v603, 0.0
      %vm636 = vcmp.ge.f32.partialorder %v604, 0.0
      %vm637 = vcmp.ge.f32.partialorder %v605, 0.0
      %vm638 = vcmp.ge.f32.partialorder %v606, 0.0
      %vm639 = vcmp.ge.f32.partialorder %v607, 0.0
      %vm640 = vcmp.ge.f32.partialorder %v608, 0.0
      %vm641 = vcmp.ge.f32.partialorder %v609, 0.0
      %vm642 = vcmp.ge.f32.partialorder %v610, 0.0
      %vm643 = vcmp.ge.f32.partialorder %v611, 0.0
      %vm644 = vcmp.ge.f32.partialorder %v612, 0.0
      %vm645 = vcmp.ge.f32.partialorder %v613, 0.0
      %vm646 = vcmp.ge.f32.partialorder %v614, 0.0
      %vm647 = vcmp.ge.f32.partialorder %v615, 0.0
      %vm648 = vcmp.ge.f32.partialorder %v616, 0.0
      %vm649 = vcmp.ge.f32.partialorder %v617, 0.0
      %vm650 = vcmp.ge.f32.partialorder %v618, 0.0
      %vm651 = vcmp.ge.f32.partialorder %v619, 0.0
      %vm652 = vcmp.ge.f32.partialorder %v620, 0.0
      %vm653 = vcmp.ge.f32.partialorder %v621, 0.0
      %vm654 = vcmp.ge.f32.partialorder %v622, 0.0
      %vm655 = vcmp.ge.f32.partialorder %v623, 0.0
      %vm656 = vcmp.ge.f32.partialorder %v624, 0.0
      %vm657 = vcmp.ge.f32.partialorder %v625, 0.0
      %v658 = vmul.f32 %v594, 0.25
      %v659 = vmul.f32 %v595, 0.25
      %v660 = vmul.f32 %v596, 0.25
      %v661 = vmul.f32 %v597, 0.25
      %v662 = vmul.f32 %v598, 0.25
      %v663 = vmul.f32 %v599, 0.25
      %v664 = vmul.f32 %v600, 0.25
      %v665 = vmul.f32 %v601, 0.25
      %v666 = vmul.f32 %v602, 0.25
      %v667 = vmul.f32 %v603, 0.25
      %v668 = vmul.f32 %v604, 0.25
      %v669 = vmul.f32 %v605, 0.25
      %v670 = vmul.f32 %v606, 0.25
      %v671 = vmul.f32 %v607, 0.25
      %v672 = vmul.f32 %v608, 0.25
      %v673 = vmul.f32 %v609, 0.25
      %v674 = vmul.f32 %v610, 0.25
      %v675 = vmul.f32 %v611, 0.25
      %v676 = vmul.f32 %v612, 0.25
      %v677 = vmul.f32 %v613, 0.25
      %v678 = vmul.f32 %v614, 0.25
      %v679 = vmul.f32 %v615, 0.25
      %v680 = vmul.f32 %v616, 0.25
      %v681 = vmul.f32 %v617, 0.25
      %v682 = vmul.f32 %v618, 0.25
      %v683 = vmul.f32 %v619, 0.25
      %v684 = vmul.f32 %v620, 0.25
      %v685 = vmul.f32 %v621, 0.25
      %v686 = vmul.f32 %v622, 0.25
      %v687 = vmul.f32 %v623, 0.25
      %v688 = vmul.f32 %v624, 0.25
      %v689 = vmul.f32 %v625, 0.25
      %v690 = vsel %vm626, %v594, %v658
      %v691 = vsel %vm627, %v595, %v659
      %v692 = vsel %vm628, %v596, %v660
      %v693 = vsel %vm629, %v597, %v661
      %v694 = vsel %vm630, %v598, %v662
      %v695 = vsel %vm631, %v599, %v663
      %v696 = vsel %vm632, %v600, %v664
      %v697 = vsel %vm633, %v601, %v665
      %v698 = vsel %vm634, %v602, %v666
      %v699 = vsel %vm635, %v603, %v667
      %v700 = vsel %vm636, %v604, %v668
      %v701 = vsel %vm637, %v605, %v669
      %v702 = vsel %vm638, %v606, %v670
      %v703 = vsel %vm639, %v607, %v671
      %v704 = vsel %vm640, %v608, %v672
      %v705 = vsel %vm641, %v609, %v673
      %v706 = vsel %vm642, %v610, %v674
      %v707 = vsel %vm643, %v611, %v675
      %v708 = vsel %vm644, %v612, %v676
      %v709 = vsel %vm645, %v613, %v677
      %v710 = vsel %vm646, %v614, %v678
      %v711 = vsel %vm647, %v615, %v679
      %v712 = vsel %vm648, %v616, %v680
      %v713 = vsel %vm649, %v617, %v681
      %v714 = vsel %vm650, %v618, %v682
      %v715 = vsel %vm651, %v619, %v683
      %v716 = vsel %vm652, %v620, %v684
      %v717 = vsel %vm653, %v621, %v685
      %v718 = vsel %vm654, %v622, %v686
      %v719 = vsel %vm655, %v623, %v687
      %v720 = vsel %vm656, %v624, %v688
      %v721 = vsel %vm657, %v625, %v689
      %v722 = vpack.c.bf16 %v691, %v690
      %v723 = vpack.c.bf16 %v693, %v692
      %v724 = vpack.c.bf16 %v695, %v694
      %v725 = vpack.c.bf16 %v697, %v696
      %v726 = vpack.c.bf16 %v699, %v698
      %v727 = vpack.c.bf16 %v701, %v700
      %v728 = vpack.c.bf16 %v703, %v702
      %v729 = vpack.c.bf16 %v705, %v704
      %v730 = vpack.c.bf16 %v707, %v706
      %v731 = vpack.c.bf16 %v709, %v708
      %v732 = vpack.c.bf16 %v711, %v710
      %v733 = vpack.c.bf16 %v713, %v712
      %v734 = vpack.c.bf16 %v715, %v714
      %v735 = vpack.c.bf16 %v717, %v716
      %v736 = vpack.c.bf16 %v719, %v718
      %v737 = vpack.c.bf16 %v721, %v720
      %v754 = vunpack.c.l.b16 %v722
      %v755 = vunpack.c.h.b16 %v722
      %v756 = vunpack.c.l.b16 %v723
      %v757 = vunpack.c.h.b16 %v723
      %v758 = vunpack.c.l.b16 %v724
      %v759 = vunpack.c.h.b16 %v724
      %v760 = vunpack.c.l.b16 %v725
      %v761 = vunpack.c.h.b16 %v725
      %v762 = vunpack.c.l.b16 %v726
      %v763 = vunpack.c.h.b16 %v726
      %v764 = vunpack.c.l.b16 %v727
      %v765 = vunpack.c.h.b16 %v727
      %v766 = vunpack.c.l.b16 %v728
      %v767 = vunpack.c.h.b16 %v728
      %v768 = vunpack.c.l.b16 %v729
      %v769 = vunpack.c.h.b16 %v729
      %v770 = vunpack.c.l.b16 %v730
      %v771 = vunpack.c.h.b16 %v730
      %v772 = vunpack.c.l.b16 %v731
      %v773 = vunpack.c.h.b16 %v731
      %v774 = vunpack.c.l.b16 %v732
      %v775 = vunpack.c.h.b16 %v732
      %v776 = vunpack.c.l.b16 %v733
      %v777 = vunpack.c.h.b16 %v733
      %v778 = vunpack.c.l.b16 %v734
      %v779 = vunpack.c.h.b16 %v734
      %v780 = vunpack.c.l.b16 %v735
      %v781 = vunpack.c.h.b16 %v735
      %v782 = vunpack.c.l.b16 %v736
      %v783 = vunpack.c.h.b16 %v736
      %v784 = vunpack.c.l.b16 %v737
      %v785 = vunpack.c.h.b16 %v737
      %v786 = vpack.c.b16 %v754, %v754
      %v787 = vpack.c.b16 %v755, %v755
      %v788 = vpack.c.b16 %v756, %v756
      %v789 = vpack.c.b16 %v757, %v757
      %v790 = vpack.c.b16 %v758, %v758
      %v791 = vpack.c.b16 %v759, %v759
      %v792 = vpack.c.b16 %v760, %v760
      %v793 = vpack.c.b16 %v761, %v761
      %v794 = vpack.c.b16 %v762, %v762
      %v795 = vpack.c.b16 %v763, %v763
      %v796 = vpack.c.b16 %v764, %v764
      %v797 = vpack.c.b16 %v765, %v765
      %v798 = vpack.c.b16 %v766, %v766
      %v799 = vpack.c.b16 %v767, %v767
      %v800 = vpack.c.b16 %v768, %v768
      %v801 = vpack.c.b16 %v769, %v769
      %v802 = vpack.c.b16 %v770, %v770
      %v803 = vpack.c.b16 %v771, %v771
      %v804 = vpack.c.b16 %v772, %v772
      %v805 = vpack.c.b16 %v773, %v773
      %v806 = vpack.c.b16 %v774, %v774
      %v807 = vpack.c.b16 %v775, %v775
      %v808 = vpack.c.b16 %v776, %v776
      %v809 = vpack.c.b16 %v777, %v777
      %v810 = vpack.c.b16 %v778, %v778
      %v811 = vpack.c.b16 %v779, %v779
      %v812 = vpack.c.b16 %v780, %v780
      %v813 = vpack.c.b16 %v781, %v781
      %v814 = vpack.c.b16 %v782, %v782
      %v815 = vpack.c.b16 %v783, %v783
      %v816 = vpack.c.b16 %v784, %v784
      %v817 = vpack.c.b16 %v785, %v785
      %vm850 = vcmask 27648
      %851 = vst.msk [vmem:[%s199] sm:$0xf] %vm850, %v786
      %852 = vst.msk [vmem:[%s199 + $0x4] sm:$0xf] %vm850, %v787
      %853 = vst.msk [vmem:[%s199 + $0x8] sm:$0xf] %vm850, %v788
      %854 = vst.msk [vmem:[%s199 + $0xc] sm:$0xf] %vm850, %v789
      %855 = vst.msk [vmem:[%s199 + $0x10] sm:$0xf] %vm850, %v790
      %856 = vst.msk [vmem:[%s199 + $0x14] sm:$0xf] %vm850, %v791
      %857 = vst.msk [vmem:[%s199 + $0x18] sm:$0xf] %vm850, %v792
      %858 = vst.msk [vmem:[%s199 + $0x1c] sm:$0xf] %vm850, %v793
      %859 = vst.msk [vmem:[%s199 + $0x20] sm:$0xf] %vm850, %v794
      %860 = vst.msk [vmem:[%s199 + $0x24] sm:$0xf] %vm850, %v795
      %861 = vst.msk [vmem:[%s199 + $0x28] sm:$0xf] %vm850, %v796
      %862 = vst.msk [vmem:[%s199 + $0x2c] sm:$0xf] %vm850, %v797
      %863 = vst.msk [vmem:[%s199 + $0x30] sm:$0xf] %vm850, %v798
      %864 = vst.msk [vmem:[%s199 + $0x34] sm:$0xf] %vm850, %v799
      %865 = vst.msk [vmem:[%s199 + $0x38] sm:$0xf] %vm850, %v800
      %866 = vst.msk [vmem:[%s199 + $0x3c] sm:$0xf] %vm850, %v801
      %867 = vst.msk [vmem:[%s199 + $0x40] sm:$0xf] %vm850, %v802
      %868 = vst.msk [vmem:[%s199 + $0x44] sm:$0xf] %vm850, %v803
      %869 = vst.msk [vmem:[%s199 + $0x48] sm:$0xf] %vm850, %v804
      %870 = vst.msk [vmem:[%s199 + $0x4c] sm:$0xf] %vm850, %v805
      %871 = vst.msk [vmem:[%s199 + $0x50] sm:$0xf] %vm850, %v806
      %872 = vst.msk [vmem:[%s199 + $0x54] sm:$0xf] %vm850, %v807
      %873 = vst.msk [vmem:[%s199 + $0x58] sm:$0xf] %vm850, %v808
      %874 = vst.msk [vmem:[%s199 + $0x5c] sm:$0xf] %vm850, %v809
      %875 = vst.msk [vmem:[%s199 + $0x60] sm:$0xf] %vm850, %v810
      %876 = vst.msk [vmem:[%s199 + $0x64] sm:$0xf] %vm850, %v811
      %877 = vst.msk [vmem:[%s199 + $0x68] sm:$0xf] %vm850, %v812
      %878 = vst.msk [vmem:[%s199 + $0x6c] sm:$0xf] %vm850, %v813
      %879 = vst.msk [vmem:[%s199 + $0x70] sm:$0xf] %vm850, %v814
      %880 = vst.msk [vmem:[%s199 + $0x74] sm:$0xf] %vm850, %v815
      %881 = vst.msk [vmem:[%s199 + $0x78] sm:$0xf] %vm850, %v816
      %882 = vst.msk [vmem:[%s199 + $0x7c] sm:$0xf] %vm850, %v817
      %s883 = smul.u32 32, %s15
      %p884 = scmp.lt.s32.totalorder %s883, 63
      %s885 = scalar_select %p884, %s883, 63
      %s886 = smul.addr %s885, 4
      %s887 = scalar_lea.vmem %s4, %s886
      // Predicated region
      $region37: #{enet_forward.173} parent=35 // pred_check
        %p888 = pneg %p122
      $region38: #{enet_forward.173} parent=35 // pred_check_branch
        %890 = sbr.rel (%p888) target = $region40
      $region39: #{enet_forward.173} parent=35 // pred_region
        %s891 = smul.u32 32, %s15
      $region40: #{enet_forward.173} parent=35 // pred_fallthru
        _
    $region36: #{enet_forward.173} parent=5 // pred_fallthru
      _
    %p892 = scmp.le.s32.totalorder 2, %s10
    // Predicated region
    $region41: #{enet_forward.173} parent=5 // pred_check
      %p893 = pneg %p892
    $region42: #{enet_forward.173} parent=5 // pred_check_branch
      %895 = sbr.rel (%p893) target = $region44
    $region43: #{enet_forward.173} parent=5 // pred_region
      %s896 = ssub.s32 %s10, 2
      // Predicated region
      $region45: #{enet_forward.173} parent=43 // pred_check
        %p897 = pneg %p128
      $region46: #{enet_forward.173} parent=43 // pred_check_branch
        %899 = sbr.rel (%p897) target = $region48
      $region47: #{enet_forward.173} parent=43 // pred_region
        %s900 = smul.u32 32, %s16
        %p901 = scmp.lt.s32.totalorder %s900, 63
        %s902 = scalar_select %p901, %s900, 63
        %s903 = smul.addr %s902, 4
        %s904 = scalar_lea.vmem %s4, %s903
      $region48: #{enet_forward.173} parent=43 // pred_fallthru
        _
    $region44: #{enet_forward.173} parent=5 // pred_fallthru
      _
  $region6: #{enet_forward.173} parent=0 // loop_footer
    %s14 = sadd.s32 1, %s10
  $region7: #{enet_forward.173} parent=0 // loop_footer_branch
    %9 = sbr.rel target = $region3
  $region8: #{enet_forward.173} parent=0 // loop_exit
    _

</llo_original>
